<compile_context>
chip_gen: v7x
topology: tpu7x:2x2x1
jax: 0.10.0
libtpu: 0.0.40
codegen_flags: <defaults>
</compile_context>

<pallas_src>
import functools

import jax
import jax.numpy as jnp
from jax.experimental import pallas as pl
from jax.experimental.pallas import tpu as pltpu


def _round_up(x, m):
    return (x + m - 1) // m * m


_GUARD = 128  # zero guard (lanes) on each side of the padded-flat pixel axis


# ----------------------------------------------------------------------------
# Pallas kernel 1: FeatureNet PFN layer (one-shot).
#   y = relu((masked points) @ (W * bn_scale) + bn_shift); out = max over points.
# Points arrive flattened n-major (row = n*P8 + p), so the per-sector max is a
# max over N contiguous (P8, C) slabs — no reshapes / strided slices in-kernel.
# Masked (padded) points are zeroed upstream and still pass through shift+ReLU,
# matching the PyTorch/PointPillars PFN semantics (they contribute relu(shift)).
# ----------------------------------------------------------------------------
def _pfn_kernel(pts_ref, w_ref, b_ref, o_ref, *, n_pts, p8):
    y = jnp.dot(pts_ref[...], w_ref[...], preferred_element_type=jnp.float32)
    y = jnp.maximum(y + b_ref[...], 0.0)          # (N*P8, C), f32 epilogue
    acc = y[0:p8]
    for n in range(1, n_pts):
        acc = jnp.maximum(acc, y[n * p8:(n + 1) * p8])
    o_ref[...] = acc


def pfn_forward(pts_nm, w_scaled, shift, *, n_pts, p8):
    d = pts_nm.shape[1]
    c = w_scaled.shape[1]
    return pl.pallas_call(
        functools.partial(_pfn_kernel, n_pts=n_pts, p8=p8),
        out_shape=jax.ShapeDtypeStruct((p8, c), jnp.float32),
        grid_spec=pltpu.PrefetchScalarGridSpec(
            num_scalar_prefetch=0,
            grid=(1,),
            in_specs=[
                pl.BlockSpec((n_pts * p8, d), lambda i: (0, 0)),
                pl.BlockSpec((d, c), lambda i: (0, 0)),
                pl.BlockSpec((1, c), lambda i: (0, 0)),
            ],
            out_specs=pl.BlockSpec((p8, c), lambda i: (0, 0)),
        ),
        compiler_params=pltpu.CompilerParams(dimension_semantics=("arbitrary",)),
    )(pts_nm, w_scaled, shift)


# ----------------------------------------------------------------------------
# Pallas kernel 2: direct 3x3 conv + folded-BN shift + ReLU + halo zeroing,
# on the padded-flat layout.  9 shifted-window MXU dots into an f32 accumulator.
# ----------------------------------------------------------------------------
def _conv3x3_kernel(x_ref, w_ref, b_ref, m_ref, o_ref, *, wp, guard, lr, relu):
    cout = w_ref.shape[1]
    acc = jnp.zeros((cout, lr), jnp.float32)
    for kh in range(3):
        for kw in range(3):
            d = (kh - 1) * wp + (kw - 1)
            xs = x_ref[:, pl.ds(guard + d, lr)]               # shifted tap window
            acc = acc + jnp.dot(w_ref[kh * 3 + kw], xs,
                                preferred_element_type=jnp.float32)
    y = acc + b_ref[...]
    if relu:
        y = jnp.maximum(y, 0.0)
    y = y * m_ref[...]   # zero halo / slack -> output is conv-ready padded layout
    o_ref[...] = jnp.zeros(o_ref.shape, o_ref.dtype)
    o_ref[:, guard:guard + lr] = y.astype(o_ref.dtype)


def conv3x3_flat(x_flat, w9, shift, mask, *, wp, guard, lr, relu=True,
                 out_dtype=jnp.bfloat16):
    cin, nt = x_flat.shape
    cout = w9.shape[1]
    return pl.pallas_call(
        functools.partial(_conv3x3_kernel, wp=wp, guard=guard, lr=lr, relu=relu),
        out_shape=jax.ShapeDtypeStruct((cout, nt), out_dtype),
        grid_spec=pltpu.PrefetchScalarGridSpec(
            num_scalar_prefetch=0,
            grid=(1,),
            in_specs=[
                pl.BlockSpec((cin, nt), lambda i: (0, 0)),
                pl.BlockSpec((9, cout, cin), lambda i: (0, 0, 0)),
                pl.BlockSpec((cout, 1), lambda i: (0, 0)),
                pl.BlockSpec((1, lr), lambda i: (0, 0)),
            ],
            out_specs=pl.BlockSpec((cout, nt), lambda i: (0, 0)),
        ),
        compiler_params=pltpu.CompilerParams(dimension_semantics=("arbitrary",)),
    )(x_flat, w9, shift, mask)


# ----------------------------------------------------------------------------
# Pallas kernel 3: dec1 3x3 conv over [up(e2) | e1] (split weights, no concat)
# + folded-BN shift + ReLU, with the 2-class 1x1 head fused in the epilogue.
# ----------------------------------------------------------------------------
def _dec_head_kernel(xu_ref, xe_ref, wu_ref, we_ref, b_ref, m_ref, hw_ref,
                     hb_ref, o_ref, *, wp, guard, lr):
    cmid = wu_ref.shape[1]
    acc = jnp.zeros((cmid, lr), jnp.float32)
    for kh in range(3):
        for kw in range(3):
            d = (kh - 1) * wp + (kw - 1)
            t = kh * 3 + kw
            acc = acc + jnp.dot(wu_ref[t], xu_ref[:, pl.ds(guard + d, lr)],
                                preferred_element_type=jnp.float32)
            acc = acc + jnp.dot(we_ref[t], xe_ref[:, pl.ds(guard + d, lr)],
                                preferred_element_type=jnp.float32)
    d1 = jnp.maximum(acc + b_ref[...], 0.0) * m_ref[...]      # (32, lr) f32
    pred = jnp.dot(hw_ref[...], d1.astype(jnp.bfloat16),
                   preferred_element_type=jnp.float32) + hb_ref[...]
    o_ref[...] = pred


def dec_head_flat(xu, xe, wu9, we9, shift, mask, head_w, head_b, *, wp, guard, lr):
    cu, nt = xu.shape
    ce = xe.shape[0]
    cmid = wu9.shape[1]
    chead = head_w.shape[0]
    return pl.pallas_call(
        functools.partial(_dec_head_kernel, wp=wp, guard=guard, lr=lr),
        out_shape=jax.ShapeDtypeStruct((chead, lr), jnp.float32),
        grid_spec=pltpu.PrefetchScalarGridSpec(
            num_scalar_prefetch=0,
            grid=(1,),
            in_specs=[
                pl.BlockSpec((cu, nt), lambda i: (0, 0)),
                pl.BlockSpec((ce, nt), lambda i: (0, 0)),
                pl.BlockSpec((9, cmid, cu), lambda i: (0, 0, 0)),
                pl.BlockSpec((9, cmid, ce), lambda i: (0, 0, 0)),
                pl.BlockSpec((cmid, 1), lambda i: (0, 0)),
                pl.BlockSpec((1, lr), lambda i: (0, 0)),
                pl.BlockSpec((chead, cmid), lambda i: (0, 0)),
                pl.BlockSpec((chead, 1), lambda i: (0, 0)),
            ],
            out_specs=pl.BlockSpec((chead, lr), lambda i: (0, 0)),
        ),
        compiler_params=pltpu.CompilerParams(dimension_semantics=("arbitrary",)),
    )(xu, xe, wu9, we9, shift, mask, head_w, head_b)


# ----------------------------------------------------------------------------
# JAX glue: BN folding, layout helpers, scatter, pool / upsample
# ----------------------------------------------------------------------------
def bn_fold(gamma, beta, mean, var, eps=1e-5):
    scale = gamma / jnp.sqrt(var + eps)
    shift = beta - mean * scale
    return scale, shift


def prep_conv_weights(w, scale):
    """(Cout, Cin, 3, 3) * BN scale -> (9, Cout, Cin) bf16, tap index = kh*3+kw."""
    cout, cin = w.shape[0], w.shape[1]
    ws = w * scale[:, None, None, None]
    return ws.transpose(2, 3, 0, 1).reshape(9, cout, cin).astype(jnp.bfloat16)


def interior_mask(batch, h, w, lr):
    """(1, lr) mask: 1 at real output pixels, 0 at halo / slack columns."""
    hp, wp = h + 2, w + 2
    m = jnp.zeros((batch, hp, wp), jnp.float32).at[:, 1:h + 1, 1:w + 1].set(1.0)
    m = m.reshape(1, batch * hp * wp)
    return jnp.pad(m, ((0, 0), (0, lr - batch * hp * wp)))


def to_padded_flat(x, guard, lr):
    """(C, B, h, w) -> (C, guard + lr + guard) zero-halo / zero-guard flat layout."""
    c, b, h, w = x.shape
    hp, wp = h + 2, w + 2
    l = b * hp * wp
    xp = jnp.pad(x, ((0, 0), (0, 0), (1, 1), (1, 1))).reshape(c, l)
    return jnp.pad(xp, ((0, 0), (guard, guard + lr - l)))


def from_padded_flat(x_flat, batch, h, w, guard):
    """(C, NT) padded-flat -> (C, B, h, w) interior crop."""
    c = x_flat.shape[0]
    hp, wp = h + 2, w + 2
    img = x_flat[:, guard:guard + batch * hp * wp].reshape(c, batch, hp, wp)
    return img[:, :, 1:h + 1, 1:w + 1]


def sector_scatter_flat(features, coors, batch, h, w, guard, nt):
    """(P, C) sector features scattered straight into the (C, NT) conv layout."""
    # TODO(synk): move to a Pallas scalar-prefetch/DMA scatter if P grows large.
    hp, wp = h + 2, w + 2
    pos = guard + coors[:, 0] * (hp * wp) + (coors[:, 1] + 1) * wp + (coors[:, 2] + 1)
    canvas = jnp.zeros((nt, features.shape[1]), features.dtype)
    canvas = canvas.at[pos].set(features)
    return canvas.T


def maxpool2_flat(e_flat, batch, h, w, guard, lr_half):
    # TODO(synk): fuse into the enc1 kernel epilogue (strided lane reads).
    img = from_padded_flat(e_flat, batch, h, w, guard)
    c = img.shape[0]
    pooled = img.reshape(c, batch, h // 2, 2, w // 2, 2).max(axis=(3, 5))
    return to_padded_flat(pooled, guard, lr_half)


def upsample2_flat(e_flat, batch, h, w, guard, lr_full):
    # TODO(synk): fold the nearest-neighbour upsample into the dec tap indexing.
    img = from_padded_flat(e_flat, batch, h, w, guard)
    up = jnp.repeat(jnp.repeat(img, 2, axis=2), 2, axis=3)
    return to_padded_flat(up, guard, lr_full)


# ----------------------------------------------------------------------------
# This_Net forward
# ----------------------------------------------------------------------------
@functools.partial(jax.jit, static_argnames=("batch_size", "grid_hw"))
def this_net_forward(params, point_feature_in_sector, coors_sectors, num_sectors,
                     batch_size, grid_hw):
    P, N, D = point_feature_in_sector.shape
    H, W = grid_hw
    B = batch_size
    G = _GUARD
    f32, bf16 = jnp.float32, jnp.bfloat16

    Hp, Wp = H + 2, W + 2
    L1 = B * Hp * Wp
    Lr1 = _round_up(L1, 128)
    NT1 = G + Lr1 + G

    H2, W2 = H // 2, W // 2
    Hp2, Wp2 = H2 + 2, W2 + 2
    L2 = B * Hp2 * Wp2
    Lr2 = _round_up(L2, 128)
    NT2 = G + Lr2 + G

    # --- FeatureNet: mask padded points, fused Linear+BN+ReLU+max (Pallas) ----
    valid = (jnp.arange(N)[None, :] < num_sectors[:, None]).astype(f32)
    pts = point_feature_in_sector.astype(f32) * valid[:, :, None]
    P8 = _round_up(P, 8)
    pts = jnp.pad(pts, ((0, P8 - P), (0, 0), (0, 0)))
    pts_nm = pts.transpose(1, 0, 2).reshape(N * P8, D).astype(bf16)   # n-major rows

    s0, b0 = bn_fold(params["pfn_bn_g"], params["pfn_bn_b"],
                     params["pfn_bn_m"], params["pfn_bn_v"])
    w0 = (params["pfn_w"] * s0[None, :]).astype(bf16)
    sector_feats = pfn_forward(pts_nm, w0, b0.reshape(1, -1).astype(f32),
                               n_pts=N, p8=P8)[:P]                    # (P, Cpf)

    # --- PointSectorScatter (data-dependent scatter -> XLA glue) --------------
    spatial_flat = sector_scatter_flat(sector_feats.astype(bf16), coors_sectors,
                                       B, H, W, G, NT1)               # (Cpf, NT1)

    mask1 = interior_mask(B, H, W, Lr1)
    mask2 = interior_mask(B, H2, W2, Lr2)

    # --- MUNet_lite encoder-decoder (direct-conv Pallas kernels) --------------
    s1, b1 = bn_fold(params["enc1_bn_g"], params["enc1_bn_b"],
                     params["enc1_bn_m"], params["enc1_bn_v"])
    e1 = conv3x3_flat(spatial_flat, prep_conv_weights(params["enc1_w"], s1),
                      b1.reshape(-1, 1).astype(f32), mask1,
                      wp=Wp, guard=G, lr=Lr1)                         # (32, NT1)

    p1 = maxpool2_flat(e1, B, H, W, G, Lr2)                           # (32, NT2)

    s2, b2 = bn_fold(params["enc2_bn_g"], params["enc2_bn_b"],
                     params["enc2_bn_m"], params["enc2_bn_v"])
    e2 = conv3x3_flat(p1, prep_conv_weights(params["enc2_w"], s2),
                      b2.reshape(-1, 1).astype(f32), mask2,
                      wp=Wp2, guard=G, lr=Lr2)                        # (64, NT2)

    u = upsample2_flat(e2, B, H2, W2, G, Lr1)                         # (64, NT1)

    # dec1 conv (implicit concat via split weights) + fused 1x1 head.
    s3, b3 = bn_fold(params["dec1_bn_g"], params["dec1_bn_b"],
                     params["dec1_bn_m"], params["dec1_bn_v"])
    c_u = u.shape[0]
    wu9 = prep_conv_weights(params["dec1_w"][:, :c_u], s3)            # (9, 32, 64)
    we9 = prep_conv_weights(params["dec1_w"][:, c_u:], s3)            # (9, 32, 32)
    n_cls = params["head_w"].shape[0]
    hw = jnp.pad(params["head_w"], ((0, 8 - n_cls), (0, 0))).astype(bf16)
    hb = jnp.pad(params["head_b"], (0, 8 - n_cls)).reshape(-1, 1).astype(f32)

    pred_flat = dec_head_flat(u, e1, wu9, we9, b3.reshape(-1, 1).astype(f32),
                              mask1, hw, hb, wp=Wp, guard=G, lr=Lr1)  # (8, Lr1)

    pred = pred_flat[:n_cls, :L1].reshape(n_cls, B, Hp, Wp)[:, :, 1:H + 1, 1:W + 1]
    return pred.transpose(1, 0, 2, 3)                                 # (B, 2, H, W)


# ----------------------------------------------------------------------------
# Deterministic parameter construction (synthetic, no checkpoint)
# ----------------------------------------------------------------------------
def init_params(key, D, C_pf):
    ks = jax.random.split(key, 16)

    def bn(k, c):
        kg, kb = jax.random.split(k)
        return dict(g=0.5 + jax.random.uniform(kg, (c,), jnp.float32),
                    b=0.1 * jax.random.normal(kb, (c,), jnp.float32),
                    m=jnp.zeros((c,), jnp.float32),
                    v=jnp.ones((c,), jnp.float32))

    p = {}
    p["pfn_w"] = 0.1 * jax.random.normal(ks[0], (D, C_pf), jnp.float32)
    bn0 = bn(ks[1], C_pf)
    p.update(pfn_bn_g=bn0["g"], pfn_bn_b=bn0["b"], pfn_bn_m=bn0["m"], pfn_bn_v=bn0["v"])

    p["enc1_w"] = 0.1 * jax.random.normal(ks[2], (32, C_pf, 3, 3), jnp.float32)
    bn1 = bn(ks[3], 32)
    p.update(enc1_bn_g=bn1["g"], enc1_bn_b=bn1["b"], enc1_bn_m=bn1["m"], enc1_bn_v=bn1["v"])

    p["enc2_w"] = 0.1 * jax.random.normal(ks[4], (64, 32, 3, 3), jnp.float32)
    bn2 = bn(ks[5], 64)
    p.update(enc2_bn_g=bn2["g"], enc2_bn_b=bn2["b"], enc2_bn_m=bn2["m"], enc2_bn_v=bn2["v"])

    p["dec1_w"] = 0.1 * jax.random.normal(ks[6], (32, 96, 3, 3), jnp.float32)
    bn3 = bn(ks[7], 32)
    p.update(dec1_bn_g=bn3["g"], dec1_bn_b=bn3["b"], dec1_bn_m=bn3["m"], dec1_bn_v=bn3["v"])

    p["head_w"] = 0.1 * jax.random.normal(ks[8], (2, 32), jnp.float32)
    p["head_b"] = 0.1 * jax.random.normal(ks[9], (2,), jnp.float32)
    return p


if __name__ == "__main__":
    # Small config consistent with the module's forward:
    #   batch=2, pseudo_features=16, polar grid 16x16, 32 non-empty sectors,
    #   8 points max per sector, 8 raw point features.
    B = 2
    D = 8          # per-point feature dim
    C_PF = 16      # cfg.pseudo_features
    N = 8          # max points per sector
    P = 32         # total non-empty sectors across the batch
    H, W = 16, 16  # pseudo-image (ring x sector) grid

    key = jax.random.PRNGKey(0)
    k_pts, k_num, k_par = jax.random.split(key, 3)

    point_feature_in_sector = jax.random.normal(k_pts, (P, N, D), jnp.float32)
    num_sectors = jax.random.randint(k_num, (P,), 1, N + 1, jnp.int32)

    # Distinct (batch, y, x) coordinate per sector.
    sector_id = jnp.arange(P, dtype=jnp.int32)
    b_idx = sector_id % B
    lin = sector_id // B
    y_idx = (5 * lin) % H
    x_idx = (7 * lin) % W
    coors_sectors = jnp.stack([b_idx, y_idx, x_idx], axis=1).astype(jnp.int32)

    params = init_params(k_par, D, C_PF)

    pred = this_net_forward(params, point_feature_in_sector, coors_sectors,
                            num_sectors, batch_size=B, grid_hw=(H, W))
    pred = jax.block_until_ready(pred)
    assert pred.shape == (B, 2, H, W), pred.shape
    assert jnp.all(jnp.isfinite(pred))
    print("KERNEL_OK")
</pallas_src>

<mosaic_0001>
module attributes {stable_mosaic.version = 11 : i64} {
  func.func @_pfn_kernel(%arg0: i32, %arg1: memref<256x8xbf16, #tpu.memory_space<vmem>>, %arg2: memref<8x16xbf16, #tpu.memory_space<vmem>>, %arg3: memref<1x16xf32, #tpu.memory_space<vmem>>, %arg4: memref<32x16xf32, #tpu.memory_space<vmem>>) attributes {dimension_semantics = [#tpu.dimension_semantics<arbitrary>], iteration_bounds = array<i64: 1>, scalar_prefetch = 0 : i64, scratch_operands = 0 : i64, tpu.core_type = #tpu.core_type<tc>, window_params = [{pipeline_mode = #tpu.pipeline_mode<synchronous>, transform_indices = @transform_0, window_bounds = array<i64: 256, 8>}, {pipeline_mode = #tpu.pipeline_mode<synchronous>, transform_indices = @transform_1, window_bounds = array<i64: 8, 16>}, {pipeline_mode = #tpu.pipeline_mode<synchronous>, transform_indices = @transform_2, window_bounds = array<i64: 1, 16>}, {pipeline_mode = #tpu.pipeline_mode<synchronous>, transform_indices = @transform_3, window_bounds = array<i64: 32, 16>}]} {
    %c0 = arith.constant 0 : index
    %c0_0 = arith.constant 0 : index
    %0 = vector.load %arg1[%c0, %c0_0] : memref<256x8xbf16, #tpu.memory_space<vmem>>, vector<256x8xbf16>
    %c0_1 = arith.constant 0 : index
    %c0_2 = arith.constant 0 : index
    %1 = vector.load %arg2[%c0_1, %c0_2] : memref<8x16xbf16, #tpu.memory_space<vmem>>, vector<8x16xbf16>
    %cst = arith.constant dense<0.000000e+00> : vector<256x16xf32>
    %2 = tpu.matmul %0, %1, %cst {dimension_numbers = #tpu.dot_dimension_numbers<[1], [0], [0], [1], [0, 0, 1, 1], [], []>} : vector<256x8xbf16>, vector<8x16xbf16>, vector<256x16xf32> -> vector<256x16xf32>
    %c0_3 = arith.constant 0 : index
    %c0_4 = arith.constant 0 : index
    %3 = vector.load %arg3[%c0_3, %c0_4] : memref<1x16xf32, #tpu.memory_space<vmem>>, vector<1x16xf32>
    %4 = vector.broadcast %3 : vector<1x16xf32> to vector<256x16xf32>
    %5 = arith.addf %2, %4 : vector<256x16xf32>
    %cst_5 = arith.constant 0.000000e+00 : f32
    %6 = vector.broadcast %cst_5 : f32 to vector<256x16xf32>
    %7 = arith.maximumf %5, %6 : vector<256x16xf32>
    %8 = vector.extract_strided_slice %7 {offsets = [0, 0], sizes = [32, 16], strides = [1, 1]} : vector<256x16xf32> to vector<32x16xf32>
    %9 = vector.extract_strided_slice %7 {offsets = [32, 0], sizes = [32, 16], strides = [1, 1]} : vector<256x16xf32> to vector<32x16xf32>
    %10 = arith.maximumf %8, %9 : vector<32x16xf32>
    %11 = vector.extract_strided_slice %7 {offsets = [64, 0], sizes = [32, 16], strides = [1, 1]} : vector<256x16xf32> to vector<32x16xf32>
    %12 = arith.maximumf %10, %11 : vector<32x16xf32>
    %13 = vector.extract_strided_slice %7 {offsets = [96, 0], sizes = [32, 16], strides = [1, 1]} : vector<256x16xf32> to vector<32x16xf32>
    %14 = arith.maximumf %12, %13 : vector<32x16xf32>
    %15 = vector.extract_strided_slice %7 {offsets = [128, 0], sizes = [32, 16], strides = [1, 1]} : vector<256x16xf32> to vector<32x16xf32>
    %16 = arith.maximumf %14, %15 : vector<32x16xf32>
    %17 = vector.extract_strided_slice %7 {offsets = [160, 0], sizes = [32, 16], strides = [1, 1]} : vector<256x16xf32> to vector<32x16xf32>
    %18 = arith.maximumf %16, %17 : vector<32x16xf32>
    %19 = vector.extract_strided_slice %7 {offsets = [192, 0], sizes = [32, 16], strides = [1, 1]} : vector<256x16xf32> to vector<32x16xf32>
    %20 = arith.maximumf %18, %19 : vector<32x16xf32>
    %21 = vector.extract_strided_slice %7 {offsets = [224, 0], sizes = [32, 16], strides = [1, 1]} : vector<256x16xf32> to vector<32x16xf32>
    %22 = arith.maximumf %20, %21 : vector<32x16xf32>
    %c0_6 = arith.constant 0 : index
    %c0_7 = arith.constant 0 : index
    %23 = vector.load %arg4[%c0_6, %c0_7] : memref<32x16xf32, #tpu.memory_space<vmem>>, vector<32x16xf32>
    tpu.vector_store %arg4[%c0_6, %c0_7], %22 {strides = array<i32>} : memref<32x16xf32, #tpu.memory_space<vmem>>, vector<32x16xf32>,
    return
  }
  func.func @transform_0(%arg0: i32) -> (i32, i32) {
    %c0_i32 = arith.constant 0 : i32
    %c0_i32_0 = arith.constant 0 : i32
    %c0_i32_1 = arith.constant 0 : i32
    return %c0_i32, %c0_i32_0 : i32, i32
  }
  func.func @transform_1(%arg0: i32) -> (i32, i32) {
    %c0_i32 = arith.constant 0 : i32
    %c0_i32_0 = arith.constant 0 : i32
    %c0_i32_1 = arith.constant 0 : i32
    return %c0_i32, %c0_i32_0 : i32, i32
  }
  func.func @transform_2(%arg0: i32) -> (i32, i32) {
    %c0_i32 = arith.constant 0 : i32
    %c0_i32_0 = arith.constant 0 : i32
    %c0_i32_1 = arith.constant 0 : i32
    return %c0_i32, %c0_i32_0 : i32, i32
  }
  func.func @transform_3(%arg0: i32) -> (i32, i32) {
    %c0_i32 = arith.constant 0 : i32
    %c0_i32_0 = arith.constant 0 : i32
    %c0_i32_1 = arith.constant 0 : i32
    return %c0_i32, %c0_i32_0 : i32, i32
  }
}

module attributes {stable_mosaic.version = 11 : i64} {
  func.func @_conv3x3_kernel(%arg0: i32, %arg1: memref<16x1024xbf16, #tpu.memory_space<vmem>>, %arg2: memref<9x32x16xbf16, #tpu.memory_space<vmem>>, %arg3: memref<32x1xf32, #tpu.memory_space<vmem>>, %arg4: memref<1x768xf32, #tpu.memory_space<vmem>>, %arg5: memref<32x1024xbf16, #tpu.memory_space<vmem>>) attributes {dimension_semantics = [#tpu.dimension_semantics<arbitrary>], iteration_bounds = array<i64: 1>, scalar_prefetch = 0 : i64, scratch_operands = 0 : i64, tpu.core_type = #tpu.core_type<tc>, window_params = [{pipeline_mode = #tpu.pipeline_mode<synchronous>, transform_indices = @transform_0, window_bounds = array<i64: 16, 1024>}, {pipeline_mode = #tpu.pipeline_mode<synchronous>, transform_indices = @transform_1, window_bounds = array<i64: 9, 32, 16>}, {pipeline_mode = #tpu.pipeline_mode<synchronous>, transform_indices = @transform_2, window_bounds = array<i64: 32, 1>}, {pipeline_mode = #tpu.pipeline_mode<synchronous>, transform_indices = @transform_3, window_bounds = array<i64: 1, 768>}, {pipeline_mode = #tpu.pipeline_mode<synchronous>, transform_indices = @transform_4, window_bounds = array<i64: 32, 1024>}]} {
    %cst = arith.constant 0.000000e+00 : f32
    %0 = vector.broadcast %cst : f32 to vector<32x768xf32>
    %c0 = arith.constant 0 : index
    %c109 = arith.constant 109 : index
    %1 = vector.load %arg1[%c0, %c109] : memref<16x1024xbf16, #tpu.memory_space<vmem>>, vector<16x768xbf16>
    %c0_0 = arith.constant 0 : index
    %c0_1 = arith.constant 0 : index
    %c0_2 = arith.constant 0 : index
    %2 = vector.load %arg2[%c0_0, %c0_1, %c0_2] : memref<9x32x16xbf16, #tpu.memory_space<vmem>>, vector<1x32x16xbf16>
    %3 = vector.shape_cast %2 : vector<1x32x16xbf16> to vector<32x16xbf16>
    %cst_3 = arith.constant dense<0.000000e+00> : vector<32x768xf32>
    %4 = tpu.matmul %3, %1, %cst_3 {dimension_numbers = #tpu.dot_dimension_numbers<[1], [0], [0], [1], [0, 0, 1, 1], [], []>} : vector<32x16xbf16>, vector<16x768xbf16>, vector<32x768xf32> -> vector<32x768xf32>
    %5 = arith.addf %0, %4 : vector<32x768xf32>
    %c0_4 = arith.constant 0 : index
    %c110 = arith.constant 110 : index
    %6 = vector.load %arg1[%c0_4, %c110] : memref<16x1024xbf16, #tpu.memory_space<vmem>>, vector<16x768xbf16>
    %c1 = arith.constant 1 : index
    %c0_5 = arith.constant 0 : index
    %c0_6 = arith.constant 0 : index
    %7 = vector.load %arg2[%c1, %c0_5, %c0_6] : memref<9x32x16xbf16, #tpu.memory_space<vmem>>, vector<1x32x16xbf16>
    %8 = vector.shape_cast %7 : vector<1x32x16xbf16> to vector<32x16xbf16>
    %cst_7 = arith.constant dense<0.000000e+00> : vector<32x768xf32>
    %9 = tpu.matmul %8, %6, %cst_7 {dimension_numbers = #tpu.dot_dimension_numbers<[1], [0], [0], [1], [0, 0, 1, 1], [], []>} : vector<32x16xbf16>, vector<16x768xbf16>, vector<32x768xf32> -> vector<32x768xf32>
    %10 = arith.addf %5, %9 : vector<32x768xf32>
    %c0_8 = arith.constant 0 : index
    %c111 = arith.constant 111 : index
    %11 = vector.load %arg1[%c0_8, %c111] : memref<16x1024xbf16, #tpu.memory_space<vmem>>, vector<16x768xbf16>
    %c2 = arith.constant 2 : index
    %c0_9 = arith.constant 0 : index
    %c0_10 = arith.constant 0 : index
    %12 = vector.load %arg2[%c2, %c0_9, %c0_10] : memref<9x32x16xbf16, #tpu.memory_space<vmem>>, vector<1x32x16xbf16>
    %13 = vector.shape_cast %12 : vector<1x32x16xbf16> to vector<32x16xbf16>
    %cst_11 = arith.constant dense<0.000000e+00> : vector<32x768xf32>
    %14 = tpu.matmul %13, %11, %cst_11 {dimension_numbers = #tpu.dot_dimension_numbers<[1], [0], [0], [1], [0, 0, 1, 1], [], []>} : vector<32x16xbf16>, vector<16x768xbf16>, vector<32x768xf32> -> vector<32x768xf32>
    %15 = arith.addf %10, %14 : vector<32x768xf32>
    %c0_12 = arith.constant 0 : index
    %c127 = arith.constant 127 : index
    %16 = vector.load %arg1[%c0_12, %c127] : memref<16x1024xbf16, #tpu.memory_space<vmem>>, vector<16x768xbf16>
    %c3 = arith.constant 3 : index
    %c0_13 = arith.constant 0 : index
    %c0_14 = arith.constant 0 : index
    %17 = vector.load %arg2[%c3, %c0_13, %c0_14] : memref<9x32x16xbf16, #tpu.memory_space<vmem>>, vector<1x32x16xbf16>
    %18 = vector.shape_cast %17 : vector<1x32x16xbf16> to vector<32x16xbf16>
    %cst_15 = arith.constant dense<0.000000e+00> : vector<32x768xf32>
    %19 = tpu.matmul %18, %16, %cst_15 {dimension_numbers = #tpu.dot_dimension_numbers<[1], [0], [0], [1], [0, 0, 1, 1], [], []>} : vector<32x16xbf16>, vector<16x768xbf16>, vector<32x768xf32> -> vector<32x768xf32>
    %20 = arith.addf %15, %19 : vector<32x768xf32>
    %c0_16 = arith.constant 0 : index
    %c128 = arith.constant 128 : index
    %21 = vector.load %arg1[%c0_16, %c128] : memref<16x1024xbf16, #tpu.memory_space<vmem>>, vector<16x768xbf16>
    %c4 = arith.constant 4 : index
    %c0_17 = arith.constant 0 : index
    %c0_18 = arith.constant 0 : index
    %22 = vector.load %arg2[%c4, %c0_17, %c0_18] : memref<9x32x16xbf16, #tpu.memory_space<vmem>>, vector<1x32x16xbf16>
    %23 = vector.shape_cast %22 : vector<1x32x16xbf16> to vector<32x16xbf16>
    %cst_19 = arith.constant dense<0.000000e+00> : vector<32x768xf32>
    %24 = tpu.matmul %23, %21, %cst_19 {dimension_numbers = #tpu.dot_dimension_numbers<[1], [0], [0], [1], [0, 0, 1, 1], [], []>} : vector<32x16xbf16>, vector<16x768xbf16>, vector<32x768xf32> -> vector<32x768xf32>
    %25 = arith.addf %20, %24 : vector<32x768xf32>
    %c0_20 = arith.constant 0 : index
    %c129 = arith.constant 129 : index
    %26 = vector.load %arg1[%c0_20, %c129] : memref<16x1024xbf16, #tpu.memory_space<vmem>>, vector<16x768xbf16>
    %c5 = arith.constant 5 : index
    %c0_21 = arith.constant 0 : index
    %c0_22 = arith.constant 0 : index
    %27 = vector.load %arg2[%c5, %c0_21, %c0_22] : memref<9x32x16xbf16, #tpu.memory_space<vmem>>, vector<1x32x16xbf16>
    %28 = vector.shape_cast %27 : vector<1x32x16xbf16> to vector<32x16xbf16>
    %cst_23 = arith.constant dense<0.000000e+00> : vector<32x768xf32>
    %29 = tpu.matmul %28, %26, %cst_23 {dimension_numbers = #tpu.dot_dimension_numbers<[1], [0], [0], [1], [0, 0, 1, 1], [], []>} : vector<32x16xbf16>, vector<16x768xbf16>, vector<32x768xf32> -> vector<32x768xf32>
    %30 = arith.addf %25, %29 : vector<32x768xf32>
    %c0_24 = arith.constant 0 : index
    %c145 = arith.constant 145 : index
    %31 = vector.load %arg1[%c0_24, %c145] : memref<16x1024xbf16, #tpu.memory_space<vmem>>, vector<16x768xbf16>
    %c6 = arith.constant 6 : index
    %c0_25 = arith.constant 0 : index
    %c0_26 = arith.constant 0 : index
    %32 = vector.load %arg2[%c6, %c0_25, %c0_26] : memref<9x32x16xbf16, #tpu.memory_space<vmem>>, vector<1x32x16xbf16>
    %33 = vector.shape_cast %32 : vector<1x32x16xbf16> to vector<32x16xbf16>
    %cst_27 = arith.constant dense<0.000000e+00> : vector<32x768xf32>
    %34 = tpu.matmul %33, %31, %cst_27 {dimension_numbers = #tpu.dot_dimension_numbers<[1], [0], [0], [1], [0, 0, 1, 1], [], []>} : vector<32x16xbf16>, vector<16x768xbf16>, vector<32x768xf32> -> vector<32x768xf32>
    %35 = arith.addf %30, %34 : vector<32x768xf32>
    %c0_28 = arith.constant 0 : index
    %c146 = arith.constant 146 : index
    %36 = vector.load %arg1[%c0_28, %c146] : memref<16x1024xbf16, #tpu.memory_space<vmem>>, vector<16x768xbf16>
    %c7 = arith.constant 7 : index
    %c0_29 = arith.constant 0 : index
    %c0_30 = arith.constant 0 : index
    %37 = vector.load %arg2[%c7, %c0_29, %c0_30] : memref<9x32x16xbf16, #tpu.memory_space<vmem>>, vector<1x32x16xbf16>
    %38 = vector.shape_cast %37 : vector<1x32x16xbf16> to vector<32x16xbf16>
    %cst_31 = arith.constant dense<0.000000e+00> : vector<32x768xf32>
    %39 = tpu.matmul %38, %36, %cst_31 {dimension_numbers = #tpu.dot_dimension_numbers<[1], [0], [0], [1], [0, 0, 1, 1], [], []>} : vector<32x16xbf16>, vector<16x768xbf16>, vector<32x768xf32> -> vector<32x768xf32>
    %40 = arith.addf %35, %39 : vector<32x768xf32>
    %c0_32 = arith.constant 0 : index
    %c147 = arith.constant 147 : index
    %41 = vector.load %arg1[%c0_32, %c147] : memref<16x1024xbf16, #tpu.memory_space<vmem>>, vector<16x768xbf16>
    %c8 = arith.constant 8 : index
    %c0_33 = arith.constant 0 : index
    %c0_34 = arith.constant 0 : index
    %42 = vector.load %arg2[%c8, %c0_33, %c0_34] : memref<9x32x16xbf16, #tpu.memory_space<vmem>>, vector<1x32x16xbf16>
    %43 = vector.shape_cast %42 : vector<1x32x16xbf16> to vector<32x16xbf16>
    %cst_35 = arith.constant dense<0.000000e+00> : vector<32x768xf32>
    %44 = tpu.matmul %43, %41, %cst_35 {dimension_numbers = #tpu.dot_dimension_numbers<[1], [0], [0], [1], [0, 0, 1, 1], [], []>} : vector<32x16xbf16>, vector<16x768xbf16>, vector<32x768xf32> -> vector<32x768xf32>
    %45 = arith.addf %40, %44 : vector<32x768xf32>
    %c0_36 = arith.constant 0 : index
    %c0_37 = arith.constant 0 : index
    %46 = vector.load %arg3[%c0_36, %c0_37] : memref<32x1xf32, #tpu.memory_space<vmem>>, vector<32x1xf32>
    %47 = vector.broadcast %46 : vector<32x1xf32> to vector<32x768xf32>
    %48 = arith.addf %45, %47 : vector<32x768xf32>
    %cst_38 = arith.constant 0.000000e+00 : f32
    %49 = vector.broadcast %cst_38 : f32 to vector<32x768xf32>
    %50 = arith.maximumf %48, %49 : vector<32x768xf32>
    %c0_39 = arith.constant 0 : index
    %c0_40 = arith.constant 0 : index
    %51 = vector.load %arg4[%c0_39, %c0_40] : memref<1x768xf32, #tpu.memory_space<vmem>>, vector<1x768xf32>
    %52 = vector.broadcast %51 : vector<1x768xf32> to vector<32x768xf32>
    %53 = arith.mulf %50, %52 : vector<32x768xf32>
    %cst_41 = arith.constant 0.000000e+00 : bf16
    %54 = vector.broadcast %cst_41 : bf16 to vector<32x1024xbf16>
    %c0_42 = arith.constant 0 : index
    %c0_43 = arith.constant 0 : index
    %55 = vector.load %arg5[%c0_42, %c0_43] : memref<32x1024xbf16, #tpu.memory_space<vmem>>, vector<32x1024xbf16>
    tpu.vector_store %arg5[%c0_42, %c0_43], %54 {strides = array<i32>} : memref<32x1024xbf16, #tpu.memory_space<vmem>>, vector<32x1024xbf16>,
    %56 = arith.truncf %53 : vector<32x768xf32> to vector<32x768xbf16>
    %c0_44 = arith.constant 0 : index
    %c128_45 = arith.constant 128 : index
    %57 = vector.load %arg5[%c0_44, %c128_45] : memref<32x1024xbf16, #tpu.memory_space<vmem>>, vector<32x768xbf16>
    tpu.vector_store %arg5[%c0_44, %c128_45], %56 {strides = array<i32>} : memref<32x1024xbf16, #tpu.memory_space<vmem>>, vector<32x768xbf16>,
    return
  }
  func.func @transform_0(%arg0: i32) -> (i32, i32) {
    %c0_i32 = arith.constant 0 : i32
    %c0_i32_0 = arith.constant 0 : i32
    %c0_i32_1 = arith.constant 0 : i32
    return %c0_i32, %c0_i32_0 : i32, i32
  }
  func.func @transform_1(%arg0: i32) -> (i32, i32, i32) {
    %c0_i32 = arith.constant 0 : i32
    %c0_i32_0 = arith.constant 0 : i32
    %c0_i32_1 = arith.constant 0 : i32
    %c0_i32_2 = arith.constant 0 : i32
    return %c0_i32, %c0_i32_0, %c0_i32_1 : i32, i32, i32
  }
  func.func @transform_2(%arg0: i32) -> (i32, i32) {
    %c0_i32 = arith.constant 0 : i32
    %c0_i32_0 = arith.constant 0 : i32
    %c0_i32_1 = arith.constant 0 : i32
    return %c0_i32, %c0_i32_0 : i32, i32
  }
  func.func @transform_3(%arg0: i32) -> (i32, i32) {
    %c0_i32 = arith.constant 0 : i32
    %c0_i32_0 = arith.constant 0 : i32
    %c0_i32_1 = arith.constant 0 : i32
    return %c0_i32, %c0_i32_0 : i32, i32
  }
  func.func @transform_4(%arg0: i32) -> (i32, i32) {
    %c0_i32 = arith.constant 0 : i32
    %c0_i32_0 = arith.constant 0 : i32
    %c0_i32_1 = arith.constant 0 : i32
    return %c0_i32, %c0_i32_0 : i32, i32
  }
}

module attributes {stable_mosaic.version = 11 : i64} {
  func.func @_conv3x3_kernel(%arg0: i32, %arg1: memref<32x512xbf16, #tpu.memory_space<vmem>>, %arg2: memref<9x64x32xbf16, #tpu.memory_space<vmem>>, %arg3: memref<64x1xf32, #tpu.memory_space<vmem>>, %arg4: memref<1x256xf32, #tpu.memory_space<vmem>>, %arg5: memref<64x512xbf16, #tpu.memory_space<vmem>>) attributes {dimension_semantics = [#tpu.dimension_semantics<arbitrary>], iteration_bounds = array<i64: 1>, scalar_prefetch = 0 : i64, scratch_operands = 0 : i64, tpu.core_type = #tpu.core_type<tc>, window_params = [{pipeline_mode = #tpu.pipeline_mode<synchronous>, transform_indices = @transform_0, window_bounds = array<i64: 32, 512>}, {pipeline_mode = #tpu.pipeline_mode<synchronous>, transform_indices = @transform_1, window_bounds = array<i64: 9, 64, 32>}, {pipeline_mode = #tpu.pipeline_mode<synchronous>, transform_indices = @transform_2, window_bounds = array<i64: 64, 1>}, {pipeline_mode = #tpu.pipeline_mode<synchronous>, transform_indices = @transform_3, window_bounds = array<i64: 1, 256>}, {pipeline_mode = #tpu.pipeline_mode<synchronous>, transform_indices = @transform_4, window_bounds = array<i64: 64, 512>}]} {
    %cst = arith.constant 0.000000e+00 : f32
    %0 = vector.broadcast %cst : f32 to vector<64x256xf32>
    %c0 = arith.constant 0 : index
    %c117 = arith.constant 117 : index
    %1 = vector.load %arg1[%c0, %c117] : memref<32x512xbf16, #tpu.memory_space<vmem>>, vector<32x256xbf16>
    %c0_0 = arith.constant 0 : index
    %c0_1 = arith.constant 0 : index
    %c0_2 = arith.constant 0 : index
    %2 = vector.load %arg2[%c0_0, %c0_1, %c0_2] : memref<9x64x32xbf16, #tpu.memory_space<vmem>>, vector<1x64x32xbf16>
    %3 = vector.shape_cast %2 : vector<1x64x32xbf16> to vector<64x32xbf16>
    %cst_3 = arith.constant dense<0.000000e+00> : vector<64x256xf32>
    %4 = tpu.matmul %3, %1, %cst_3 {dimension_numbers = #tpu.dot_dimension_numbers<[1], [0], [0], [1], [0, 0, 1, 1], [], []>} : vector<64x32xbf16>, vector<32x256xbf16>, vector<64x256xf32> -> vector<64x256xf32>
    %5 = arith.addf %0, %4 : vector<64x256xf32>
    %c0_4 = arith.constant 0 : index
    %c118 = arith.constant 118 : index
    %6 = vector.load %arg1[%c0_4, %c118] : memref<32x512xbf16, #tpu.memory_space<vmem>>, vector<32x256xbf16>
    %c1 = arith.constant 1 : index
    %c0_5 = arith.constant 0 : index
    %c0_6 = arith.constant 0 : index
    %7 = vector.load %arg2[%c1, %c0_5, %c0_6] : memref<9x64x32xbf16, #tpu.memory_space<vmem>>, vector<1x64x32xbf16>
    %8 = vector.shape_cast %7 : vector<1x64x32xbf16> to vector<64x32xbf16>
    %cst_7 = arith.constant dense<0.000000e+00> : vector<64x256xf32>
    %9 = tpu.matmul %8, %6, %cst_7 {dimension_numbers = #tpu.dot_dimension_numbers<[1], [0], [0], [1], [0, 0, 1, 1], [], []>} : vector<64x32xbf16>, vector<32x256xbf16>, vector<64x256xf32> -> vector<64x256xf32>
    %10 = arith.addf %5, %9 : vector<64x256xf32>
    %c0_8 = arith.constant 0 : index
    %c119 = arith.constant 119 : index
    %11 = vector.load %arg1[%c0_8, %c119] : memref<32x512xbf16, #tpu.memory_space<vmem>>, vector<32x256xbf16>
    %c2 = arith.constant 2 : index
    %c0_9 = arith.constant 0 : index
    %c0_10 = arith.constant 0 : index
    %12 = vector.load %arg2[%c2, %c0_9, %c0_10] : memref<9x64x32xbf16, #tpu.memory_space<vmem>>, vector<1x64x32xbf16>
    %13 = vector.shape_cast %12 : vector<1x64x32xbf16> to vector<64x32xbf16>
    %cst_11 = arith.constant dense<0.000000e+00> : vector<64x256xf32>
    %14 = tpu.matmul %13, %11, %cst_11 {dimension_numbers = #tpu.dot_dimension_numbers<[1], [0], [0], [1], [0, 0, 1, 1], [], []>} : vector<64x32xbf16>, vector<32x256xbf16>, vector<64x256xf32> -> vector<64x256xf32>
    %15 = arith.addf %10, %14 : vector<64x256xf32>
    %c0_12 = arith.constant 0 : index
    %c127 = arith.constant 127 : index
    %16 = vector.load %arg1[%c0_12, %c127] : memref<32x512xbf16, #tpu.memory_space<vmem>>, vector<32x256xbf16>
    %c3 = arith.constant 3 : index
    %c0_13 = arith.constant 0 : index
    %c0_14 = arith.constant 0 : index
    %17 = vector.load %arg2[%c3, %c0_13, %c0_14] : memref<9x64x32xbf16, #tpu.memory_space<vmem>>, vector<1x64x32xbf16>
    %18 = vector.shape_cast %17 : vector<1x64x32xbf16> to vector<64x32xbf16>
    %cst_15 = arith.constant dense<0.000000e+00> : vector<64x256xf32>
    %19 = tpu.matmul %18, %16, %cst_15 {dimension_numbers = #tpu.dot_dimension_numbers<[1], [0], [0], [1], [0, 0, 1, 1], [], []>} : vector<64x32xbf16>, vector<32x256xbf16>, vector<64x256xf32> -> vector<64x256xf32>
    %20 = arith.addf %15, %19 : vector<64x256xf32>
    %c0_16 = arith.constant 0 : index
    %c128 = arith.constant 128 : index
    %21 = vector.load %arg1[%c0_16, %c128] : memref<32x512xbf16, #tpu.memory_space<vmem>>, vector<32x256xbf16>
    %c4 = arith.constant 4 : index
    %c0_17 = arith.constant 0 : index
    %c0_18 = arith.constant 0 : index
    %22 = vector.load %arg2[%c4, %c0_17, %c0_18] : memref<9x64x32xbf16, #tpu.memory_space<vmem>>, vector<1x64x32xbf16>
    %23 = vector.shape_cast %22 : vector<1x64x32xbf16> to vector<64x32xbf16>
    %cst_19 = arith.constant dense<0.000000e+00> : vector<64x256xf32>
    %24 = tpu.matmul %23, %21, %cst_19 {dimension_numbers = #tpu.dot_dimension_numbers<[1], [0], [0], [1], [0, 0, 1, 1], [], []>} : vector<64x32xbf16>, vector<32x256xbf16>, vector<64x256xf32> -> vector<64x256xf32>
    %25 = arith.addf %20, %24 : vector<64x256xf32>
    %c0_20 = arith.constant 0 : index
    %c129 = arith.constant 129 : index
    %26 = vector.load %arg1[%c0_20, %c129] : memref<32x512xbf16, #tpu.memory_space<vmem>>, vector<32x256xbf16>
    %c5 = arith.constant 5 : index
    %c0_21 = arith.constant 0 : index
    %c0_22 = arith.constant 0 : index
    %27 = vector.load %arg2[%c5, %c0_21, %c0_22] : memref<9x64x32xbf16, #tpu.memory_space<vmem>>, vector<1x64x32xbf16>
    %28 = vector.shape_cast %27 : vector<1x64x32xbf16> to vector<64x32xbf16>
    %cst_23 = arith.constant dense<0.000000e+00> : vector<64x256xf32>
    %29 = tpu.matmul %28, %26, %cst_23 {dimension_numbers = #tpu.dot_dimension_numbers<[1], [0], [0], [1], [0, 0, 1, 1], [], []>} : vector<64x32xbf16>, vector<32x256xbf16>, vector<64x256xf32> -> vector<64x256xf32>
    %30 = arith.addf %25, %29 : vector<64x256xf32>
    %c0_24 = arith.constant 0 : index
    %c137 = arith.constant 137 : index
    %31 = vector.load %arg1[%c0_24, %c137] : memref<32x512xbf16, #tpu.memory_space<vmem>>, vector<32x256xbf16>
    %c6 = arith.constant 6 : index
    %c0_25 = arith.constant 0 : index
    %c0_26 = arith.constant 0 : index
    %32 = vector.load %arg2[%c6, %c0_25, %c0_26] : memref<9x64x32xbf16, #tpu.memory_space<vmem>>, vector<1x64x32xbf16>
    %33 = vector.shape_cast %32 : vector<1x64x32xbf16> to vector<64x32xbf16>
    %cst_27 = arith.constant dense<0.000000e+00> : vector<64x256xf32>
    %34 = tpu.matmul %33, %31, %cst_27 {dimension_numbers = #tpu.dot_dimension_numbers<[1], [0], [0], [1], [0, 0, 1, 1], [], []>} : vector<64x32xbf16>, vector<32x256xbf16>, vector<64x256xf32> -> vector<64x256xf32>
    %35 = arith.addf %30, %34 : vector<64x256xf32>
    %c0_28 = arith.constant 0 : index
    %c138 = arith.constant 138 : index
    %36 = vector.load %arg1[%c0_28, %c138] : memref<32x512xbf16, #tpu.memory_space<vmem>>, vector<32x256xbf16>
    %c7 = arith.constant 7 : index
    %c0_29 = arith.constant 0 : index
    %c0_30 = arith.constant 0 : index
    %37 = vector.load %arg2[%c7, %c0_29, %c0_30] : memref<9x64x32xbf16, #tpu.memory_space<vmem>>, vector<1x64x32xbf16>
    %38 = vector.shape_cast %37 : vector<1x64x32xbf16> to vector<64x32xbf16>
    %cst_31 = arith.constant dense<0.000000e+00> : vector<64x256xf32>
    %39 = tpu.matmul %38, %36, %cst_31 {dimension_numbers = #tpu.dot_dimension_numbers<[1], [0], [0], [1], [0, 0, 1, 1], [], []>} : vector<64x32xbf16>, vector<32x256xbf16>, vector<64x256xf32> -> vector<64x256xf32>
    %40 = arith.addf %35, %39 : vector<64x256xf32>
    %c0_32 = arith.constant 0 : index
    %c139 = arith.constant 139 : index
    %41 = vector.load %arg1[%c0_32, %c139] : memref<32x512xbf16, #tpu.memory_space<vmem>>, vector<32x256xbf16>
    %c8 = arith.constant 8 : index
    %c0_33 = arith.constant 0 : index
    %c0_34 = arith.constant 0 : index
    %42 = vector.load %arg2[%c8, %c0_33, %c0_34] : memref<9x64x32xbf16, #tpu.memory_space<vmem>>, vector<1x64x32xbf16>
    %43 = vector.shape_cast %42 : vector<1x64x32xbf16> to vector<64x32xbf16>
    %cst_35 = arith.constant dense<0.000000e+00> : vector<64x256xf32>
    %44 = tpu.matmul %43, %41, %cst_35 {dimension_numbers = #tpu.dot_dimension_numbers<[1], [0], [0], [1], [0, 0, 1, 1], [], []>} : vector<64x32xbf16>, vector<32x256xbf16>, vector<64x256xf32> -> vector<64x256xf32>
    %45 = arith.addf %40, %44 : vector<64x256xf32>
    %c0_36 = arith.constant 0 : index
    %c0_37 = arith.constant 0 : index
    %46 = vector.load %arg3[%c0_36, %c0_37] : memref<64x1xf32, #tpu.memory_space<vmem>>, vector<64x1xf32>
    %47 = vector.broadcast %46 : vector<64x1xf32> to vector<64x256xf32>
    %48 = arith.addf %45, %47 : vector<64x256xf32>
    %cst_38 = arith.constant 0.000000e+00 : f32
    %49 = vector.broadcast %cst_38 : f32 to vector<64x256xf32>
    %50 = arith.maximumf %48, %49 : vector<64x256xf32>
    %c0_39 = arith.constant 0 : index
    %c0_40 = arith.constant 0 : index
    %51 = vector.load %arg4[%c0_39, %c0_40] : memref<1x256xf32, #tpu.memory_space<vmem>>, vector<1x256xf32>
    %52 = vector.broadcast %51 : vector<1x256xf32> to vector<64x256xf32>
    %53 = arith.mulf %50, %52 : vector<64x256xf32>
    %cst_41 = arith.constant 0.000000e+00 : bf16
    %54 = vector.broadcast %cst_41 : bf16 to vector<64x512xbf16>
    %c0_42 = arith.constant 0 : index
    %c0_43 = arith.constant 0 : index
    %55 = vector.load %arg5[%c0_42, %c0_43] : memref<64x512xbf16, #tpu.memory_space<vmem>>, vector<64x512xbf16>
    tpu.vector_store %arg5[%c0_42, %c0_43], %54 {strides = array<i32>} : memref<64x512xbf16, #tpu.memory_space<vmem>>, vector<64x512xbf16>,
    %56 = arith.truncf %53 : vector<64x256xf32> to vector<64x256xbf16>
    %c0_44 = arith.constant 0 : index
    %c128_45 = arith.constant 128 : index
    %57 = vector.load %arg5[%c0_44, %c128_45] : memref<64x512xbf16, #tpu.memory_space<vmem>>, vector<64x256xbf16>
    tpu.vector_store %arg5[%c0_44, %c128_45], %56 {strides = array<i32>} : memref<64x512xbf16, #tpu.memory_space<vmem>>, vector<64x256xbf16>,
    return
  }
  func.func @transform_0(%arg0: i32) -> (i32, i32) {
    %c0_i32 = arith.constant 0 : i32
    %c0_i32_0 = arith.constant 0 : i32
    %c0_i32_1 = arith.constant 0 : i32
    return %c0_i32, %c0_i32_0 : i32, i32
  }
  func.func @transform_1(%arg0: i32) -> (i32, i32, i32) {
    %c0_i32 = arith.constant 0 : i32
    %c0_i32_0 = arith.constant 0 : i32
    %c0_i32_1 = arith.constant 0 : i32
    %c0_i32_2 = arith.constant 0 : i32
    return %c0_i32, %c0_i32_0, %c0_i32_1 : i32, i32, i32
  }
  func.func @transform_2(%arg0: i32) -> (i32, i32) {
    %c0_i32 = arith.constant 0 : i32
    %c0_i32_0 = arith.constant 0 : i32
    %c0_i32_1 = arith.constant 0 : i32
    return %c0_i32, %c0_i32_0 : i32, i32
  }
  func.func @transform_3(%arg0: i32) -> (i32, i32) {
    %c0_i32 = arith.constant 0 : i32
    %c0_i32_0 = arith.constant 0 : i32
    %c0_i32_1 = arith.constant 0 : i32
    return %c0_i32, %c0_i32_0 : i32, i32
  }
  func.func @transform_4(%arg0: i32) -> (i32, i32) {
    %c0_i32 = arith.constant 0 : i32
    %c0_i32_0 = arith.constant 0 : i32
    %c0_i32_1 = arith.constant 0 : i32
    return %c0_i32, %c0_i32_0 : i32, i32
  }
}

module attributes {stable_mosaic.version = 11 : i64} {
  func.func @_dec_head_kernel(%arg0: i32, %arg1: memref<64x1024xbf16, #tpu.memory_space<vmem>>, %arg2: memref<32x1024xbf16, #tpu.memory_space<vmem>>, %arg3: memref<9x32x64xbf16, #tpu.memory_space<vmem>>, %arg4: memref<9x32x32xbf16, #tpu.memory_space<vmem>>, %arg5: memref<32x1xf32, #tpu.memory_space<vmem>>, %arg6: memref<1x768xf32, #tpu.memory_space<vmem>>, %arg7: memref<8x32xbf16, #tpu.memory_space<vmem>>, %arg8: memref<8x1xf32, #tpu.memory_space<vmem>>, %arg9: memref<8x768xf32, #tpu.memory_space<vmem>>) attributes {dimension_semantics = [#tpu.dimension_semantics<arbitrary>], iteration_bounds = array<i64: 1>, scalar_prefetch = 0 : i64, scratch_operands = 0 : i64, tpu.core_type = #tpu.core_type<tc>, window_params = [{pipeline_mode = #tpu.pipeline_mode<synchronous>, transform_indices = @transform_0, window_bounds = array<i64: 64, 1024>}, {pipeline_mode = #tpu.pipeline_mode<synchronous>, transform_indices = @transform_1, window_bounds = array<i64: 32, 1024>}, {pipeline_mode = #tpu.pipeline_mode<synchronous>, transform_indices = @transform_2, window_bounds = array<i64: 9, 32, 64>}, {pipeline_mode = #tpu.pipeline_mode<synchronous>, transform_indices = @transform_3, window_bounds = array<i64: 9, 32, 32>}, {pipeline_mode = #tpu.pipeline_mode<synchronous>, transform_indices = @transform_4, window_bounds = array<i64: 32, 1>}, {pipeline_mode = #tpu.pipeline_mode<synchronous>, transform_indices = @transform_5, window_bounds = array<i64: 1, 768>}, {pipeline_mode = #tpu.pipeline_mode<synchronous>, transform_indices = @transform_6, window_bounds = array<i64: 8, 32>}, {pipeline_mode = #tpu.pipeline_mode<synchronous>, transform_indices = @transform_7, window_bounds = array<i64: 8, 1>}, {pipeline_mode = #tpu.pipeline_mode<synchronous>, transform_indices = @transform_8, window_bounds = array<i64: 8, 768>}]} {
    %cst = arith.constant 0.000000e+00 : f32
    %0 = vector.broadcast %cst : f32 to vector<32x768xf32>
    %c0 = arith.constant 0 : index
    %c0_0 = arith.constant 0 : index
    %c0_1 = arith.constant 0 : index
    %1 = vector.load %arg3[%c0, %c0_0, %c0_1] : memref<9x32x64xbf16, #tpu.memory_space<vmem>>, vector<1x32x64xbf16>
    %2 = vector.shape_cast %1 : vector<1x32x64xbf16> to vector<32x64xbf16>
    %c0_2 = arith.constant 0 : index
    %c109 = arith.constant 109 : index
    %3 = vector.load %arg1[%c0_2, %c109] : memref<64x1024xbf16, #tpu.memory_space<vmem>>, vector<64x768xbf16>
    %cst_3 = arith.constant dense<0.000000e+00> : vector<32x768xf32>
    %4 = tpu.matmul %2, %3, %cst_3 {dimension_numbers = #tpu.dot_dimension_numbers<[1], [0], [0], [1], [0, 0, 1, 1], [], []>} : vector<32x64xbf16>, vector<64x768xbf16>, vector<32x768xf32> -> vector<32x768xf32>
    %5 = arith.addf %0, %4 : vector<32x768xf32>
    %c0_4 = arith.constant 0 : index
    %c0_5 = arith.constant 0 : index
    %c0_6 = arith.constant 0 : index
    %6 = vector.load %arg4[%c0_4, %c0_5, %c0_6] : memref<9x32x32xbf16, #tpu.memory_space<vmem>>, vector<1x32x32xbf16>
    %7 = vector.shape_cast %6 : vector<1x32x32xbf16> to vector<32x32xbf16>
    %c0_7 = arith.constant 0 : index
    %c109_8 = arith.constant 109 : index
    %8 = vector.load %arg2[%c0_7, %c109_8] : memref<32x1024xbf16, #tpu.memory_space<vmem>>, vector<32x768xbf16>
    %cst_9 = arith.constant dense<0.000000e+00> : vector<32x768xf32>
    %9 = tpu.matmul %7, %8, %cst_9 {dimension_numbers = #tpu.dot_dimension_numbers<[1], [0], [0], [1], [0, 0, 1, 1], [], []>} : vector<32x32xbf16>, vector<32x768xbf16>, vector<32x768xf32> -> vector<32x768xf32>
    %10 = arith.addf %5, %9 : vector<32x768xf32>
    %c1 = arith.constant 1 : index
    %c0_10 = arith.constant 0 : index
    %c0_11 = arith.constant 0 : index
    %11 = vector.load %arg3[%c1, %c0_10, %c0_11] : memref<9x32x64xbf16, #tpu.memory_space<vmem>>, vector<1x32x64xbf16>
    %12 = vector.shape_cast %11 : vector<1x32x64xbf16> to vector<32x64xbf16>
    %c0_12 = arith.constant 0 : index
    %c110 = arith.constant 110 : index
    %13 = vector.load %arg1[%c0_12, %c110] : memref<64x1024xbf16, #tpu.memory_space<vmem>>, vector<64x768xbf16>
    %cst_13 = arith.constant dense<0.000000e+00> : vector<32x768xf32>
    %14 = tpu.matmul %12, %13, %cst_13 {dimension_numbers = #tpu.dot_dimension_numbers<[1], [0], [0], [1], [0, 0, 1, 1], [], []>} : vector<32x64xbf16>, vector<64x768xbf16>, vector<32x768xf32> -> vector<32x768xf32>
    %15 = arith.addf %10, %14 : vector<32x768xf32>
    %c1_14 = arith.constant 1 : index
    %c0_15 = arith.constant 0 : index
    %c0_16 = arith.constant 0 : index
    %16 = vector.load %arg4[%c1_14, %c0_15, %c0_16] : memref<9x32x32xbf16, #tpu.memory_space<vmem>>, vector<1x32x32xbf16>
    %17 = vector.shape_cast %16 : vector<1x32x32xbf16> to vector<32x32xbf16>
    %c0_17 = arith.constant 0 : index
    %c110_18 = arith.constant 110 : index
    %18 = vector.load %arg2[%c0_17, %c110_18] : memref<32x1024xbf16, #tpu.memory_space<vmem>>, vector<32x768xbf16>
    %cst_19 = arith.constant dense<0.000000e+00> : vector<32x768xf32>
    %19 = tpu.matmul %17, %18, %cst_19 {dimension_numbers = #tpu.dot_dimension_numbers<[1], [0], [0], [1], [0, 0, 1, 1], [], []>} : vector<32x32xbf16>, vector<32x768xbf16>, vector<32x768xf32> -> vector<32x768xf32>
    %20 = arith.addf %15, %19 : vector<32x768xf32>
    %c2 = arith.constant 2 : index
    %c0_20 = arith.constant 0 : index
    %c0_21 = arith.constant 0 : index
    %21 = vector.load %arg3[%c2, %c0_20, %c0_21] : memref<9x32x64xbf16, #tpu.memory_space<vmem>>, vector<1x32x64xbf16>
    %22 = vector.shape_cast %21 : vector<1x32x64xbf16> to vector<32x64xbf16>
    %c0_22 = arith.constant 0 : index
    %c111 = arith.constant 111 : index
    %23 = vector.load %arg1[%c0_22, %c111] : memref<64x1024xbf16, #tpu.memory_space<vmem>>, vector<64x768xbf16>
    %cst_23 = arith.constant dense<0.000000e+00> : vector<32x768xf32>
    %24 = tpu.matmul %22, %23, %cst_23 {dimension_numbers = #tpu.dot_dimension_numbers<[1], [0], [0], [1], [0, 0, 1, 1], [], []>} : vector<32x64xbf16>, vector<64x768xbf16>, vector<32x768xf32> -> vector<32x768xf32>
    %25 = arith.addf %20, %24 : vector<32x768xf32>
    %c2_24 = arith.constant 2 : index
    %c0_25 = arith.constant 0 : index
    %c0_26 = arith.constant 0 : index
    %26 = vector.load %arg4[%c2_24, %c0_25, %c0_26] : memref<9x32x32xbf16, #tpu.memory_space<vmem>>, vector<1x32x32xbf16>
    %27 = vector.shape_cast %26 : vector<1x32x32xbf16> to vector<32x32xbf16>
    %c0_27 = arith.constant 0 : index
    %c111_28 = arith.constant 111 : index
    %28 = vector.load %arg2[%c0_27, %c111_28] : memref<32x1024xbf16, #tpu.memory_space<vmem>>, vector<32x768xbf16>
    %cst_29 = arith.constant dense<0.000000e+00> : vector<32x768xf32>
    %29 = tpu.matmul %27, %28, %cst_29 {dimension_numbers = #tpu.dot_dimension_numbers<[1], [0], [0], [1], [0, 0, 1, 1], [], []>} : vector<32x32xbf16>, vector<32x768xbf16>, vector<32x768xf32> -> vector<32x768xf32>
    %30 = arith.addf %25, %29 : vector<32x768xf32>
    %c3 = arith.constant 3 : index
    %c0_30 = arith.constant 0 : index
    %c0_31 = arith.constant 0 : index
    %31 = vector.load %arg3[%c3, %c0_30, %c0_31] : memref<9x32x64xbf16, #tpu.memory_space<vmem>>, vector<1x32x64xbf16>
    %32 = vector.shape_cast %31 : vector<1x32x64xbf16> to vector<32x64xbf16>
    %c0_32 = arith.constant 0 : index
    %c127 = arith.constant 127 : index
    %33 = vector.load %arg1[%c0_32, %c127] : memref<64x1024xbf16, #tpu.memory_space<vmem>>, vector<64x768xbf16>
    %cst_33 = arith.constant dense<0.000000e+00> : vector<32x768xf32>
    %34 = tpu.matmul %32, %33, %cst_33 {dimension_numbers = #tpu.dot_dimension_numbers<[1], [0], [0], [1], [0, 0, 1, 1], [], []>} : vector<32x64xbf16>, vector<64x768xbf16>, vector<32x768xf32> -> vector<32x768xf32>
    %35 = arith.addf %30, %34 : vector<32x768xf32>
    %c3_34 = arith.constant 3 : index
    %c0_35 = arith.constant 0 : index
    %c0_36 = arith.constant 0 : index
    %36 = vector.load %arg4[%c3_34, %c0_35, %c0_36] : memref<9x32x32xbf16, #tpu.memory_space<vmem>>, vector<1x32x32xbf16>
    %37 = vector.shape_cast %36 : vector<1x32x32xbf16> to vector<32x32xbf16>
    %c0_37 = arith.constant 0 : index
    %c127_38 = arith.constant 127 : index
    %38 = vector.load %arg2[%c0_37, %c127_38] : memref<32x1024xbf16, #tpu.memory_space<vmem>>, vector<32x768xbf16>
    %cst_39 = arith.constant dense<0.000000e+00> : vector<32x768xf32>
    %39 = tpu.matmul %37, %38, %cst_39 {dimension_numbers = #tpu.dot_dimension_numbers<[1], [0], [0], [1], [0, 0, 1, 1], [], []>} : vector<32x32xbf16>, vector<32x768xbf16>, vector<32x768xf32> -> vector<32x768xf32>
    %40 = arith.addf %35, %39 : vector<32x768xf32>
    %c4 = arith.constant 4 : index
    %c0_40 = arith.constant 0 : index
    %c0_41 = arith.constant 0 : index
    %41 = vector.load %arg3[%c4, %c0_40, %c0_41] : memref<9x32x64xbf16, #tpu.memory_space<vmem>>, vector<1x32x64xbf16>
    %42 = vector.shape_cast %41 : vector<1x32x64xbf16> to vector<32x64xbf16>
    %c0_42 = arith.constant 0 : index
    %c128 = arith.constant 128 : index
    %43 = vector.load %arg1[%c0_42, %c128] : memref<64x1024xbf16, #tpu.memory_space<vmem>>, vector<64x768xbf16>
    %cst_43 = arith.constant dense<0.000000e+00> : vector<32x768xf32>
    %44 = tpu.matmul %42, %43, %cst_43 {dimension_numbers = #tpu.dot_dimension_numbers<[1], [0], [0], [1], [0, 0, 1, 1], [], []>} : vector<32x64xbf16>, vector<64x768xbf16>, vector<32x768xf32> -> vector<32x768xf32>
    %45 = arith.addf %40, %44 : vector<32x768xf32>
    %c4_44 = arith.constant 4 : index
    %c0_45 = arith.constant 0 : index
    %c0_46 = arith.constant 0 : index
    %46 = vector.load %arg4[%c4_44, %c0_45, %c0_46] : memref<9x32x32xbf16, #tpu.memory_space<vmem>>, vector<1x32x32xbf16>
    %47 = vector.shape_cast %46 : vector<1x32x32xbf16> to vector<32x32xbf16>
    %c0_47 = arith.constant 0 : index
    %c128_48 = arith.constant 128 : index
    %48 = vector.load %arg2[%c0_47, %c128_48] : memref<32x1024xbf16, #tpu.memory_space<vmem>>, vector<32x768xbf16>
    %cst_49 = arith.constant dense<0.000000e+00> : vector<32x768xf32>
    %49 = tpu.matmul %47, %48, %cst_49 {dimension_numbers = #tpu.dot_dimension_numbers<[1], [0], [0], [1], [0, 0, 1, 1], [], []>} : vector<32x32xbf16>, vector<32x768xbf16>, vector<32x768xf32> -> vector<32x768xf32>
    %50 = arith.addf %45, %49 : vector<32x768xf32>
    %c5 = arith.constant 5 : index
    %c0_50 = arith.constant 0 : index
    %c0_51 = arith.constant 0 : index
    %51 = vector.load %arg3[%c5, %c0_50, %c0_51] : memref<9x32x64xbf16, #tpu.memory_space<vmem>>, vector<1x32x64xbf16>
    %52 = vector.shape_cast %51 : vector<1x32x64xbf16> to vector<32x64xbf16>
    %c0_52 = arith.constant 0 : index
    %c129 = arith.constant 129 : index
    %53 = vector.load %arg1[%c0_52, %c129] : memref<64x1024xbf16, #tpu.memory_space<vmem>>, vector<64x768xbf16>
    %cst_53 = arith.constant dense<0.000000e+00> : vector<32x768xf32>
    %54 = tpu.matmul %52, %53, %cst_53 {dimension_numbers = #tpu.dot_dimension_numbers<[1], [0], [0], [1], [0, 0, 1, 1], [], []>} : vector<32x64xbf16>, vector<64x768xbf16>, vector<32x768xf32> -> vector<32x768xf32>
    %55 = arith.addf %50, %54 : vector<32x768xf32>
    %c5_54 = arith.constant 5 : index
    %c0_55 = arith.constant 0 : index
    %c0_56 = arith.constant 0 : index
    %56 = vector.load %arg4[%c5_54, %c0_55, %c0_56] : memref<9x32x32xbf16, #tpu.memory_space<vmem>>, vector<1x32x32xbf16>
    %57 = vector.shape_cast %56 : vector<1x32x32xbf16> to vector<32x32xbf16>
    %c0_57 = arith.constant 0 : index
    %c129_58 = arith.constant 129 : index
    %58 = vector.load %arg2[%c0_57, %c129_58] : memref<32x1024xbf16, #tpu.memory_space<vmem>>, vector<32x768xbf16>
    %cst_59 = arith.constant dense<0.000000e+00> : vector<32x768xf32>
    %59 = tpu.matmul %57, %58, %cst_59 {dimension_numbers = #tpu.dot_dimension_numbers<[1], [0], [0], [1], [0, 0, 1, 1], [], []>} : vector<32x32xbf16>, vector<32x768xbf16>, vector<32x768xf32> -> vector<32x768xf32>
    %60 = arith.addf %55, %59 : vector<32x768xf32>
    %c6 = arith.constant 6 : index
    %c0_60 = arith.constant 0 : index
    %c0_61 = arith.constant 0 : index
    %61 = vector.load %arg3[%c6, %c0_60, %c0_61] : memref<9x32x64xbf16, #tpu.memory_space<vmem>>, vector<1x32x64xbf16>
    %62 = vector.shape_cast %61 : vector<1x32x64xbf16> to vector<32x64xbf16>
    %c0_62 = arith.constant 0 : index
    %c145 = arith.constant 145 : index
    %63 = vector.load %arg1[%c0_62, %c145] : memref<64x1024xbf16, #tpu.memory_space<vmem>>, vector<64x768xbf16>
    %cst_63 = arith.constant dense<0.000000e+00> : vector<32x768xf32>
    %64 = tpu.matmul %62, %63, %cst_63 {dimension_numbers = #tpu.dot_dimension_numbers<[1], [0], [0], [1], [0, 0, 1, 1], [], []>} : vector<32x64xbf16>, vector<64x768xbf16>, vector<32x768xf32> -> vector<32x768xf32>
    %65 = arith.addf %60, %64 : vector<32x768xf32>
    %c6_64 = arith.constant 6 : index
    %c0_65 = arith.constant 0 : index
    %c0_66 = arith.constant 0 : index
    %66 = vector.load %arg4[%c6_64, %c0_65, %c0_66] : memref<9x32x32xbf16, #tpu.memory_space<vmem>>, vector<1x32x32xbf16>
    %67 = vector.shape_cast %66 : vector<1x32x32xbf16> to vector<32x32xbf16>
    %c0_67 = arith.constant 0 : index
    %c145_68 = arith.constant 145 : index
    %68 = vector.load %arg2[%c0_67, %c145_68] : memref<32x1024xbf16, #tpu.memory_space<vmem>>, vector<32x768xbf16>
    %cst_69 = arith.constant dense<0.000000e+00> : vector<32x768xf32>
    %69 = tpu.matmul %67, %68, %cst_69 {dimension_numbers = #tpu.dot_dimension_numbers<[1], [0], [0], [1], [0, 0, 1, 1], [], []>} : vector<32x32xbf16>, vector<32x768xbf16>, vector<32x768xf32> -> vector<32x768xf32>
    %70 = arith.addf %65, %69 : vector<32x768xf32>
    %c7 = arith.constant 7 : index
    %c0_70 = arith.constant 0 : index
    %c0_71 = arith.constant 0 : index
    %71 = vector.load %arg3[%c7, %c0_70, %c0_71] : memref<9x32x64xbf16, #tpu.memory_space<vmem>>, vector<1x32x64xbf16>
    %72 = vector.shape_cast %71 : vector<1x32x64xbf16> to vector<32x64xbf16>
    %c0_72 = arith.constant 0 : index
    %c146 = arith.constant 146 : index
    %73 = vector.load %arg1[%c0_72, %c146] : memref<64x1024xbf16, #tpu.memory_space<vmem>>, vector<64x768xbf16>
    %cst_73 = arith.constant dense<0.000000e+00> : vector<32x768xf32>
    %74 = tpu.matmul %72, %73, %cst_73 {dimension_numbers = #tpu.dot_dimension_numbers<[1], [0], [0], [1], [0, 0, 1, 1], [], []>} : vector<32x64xbf16>, vector<64x768xbf16>, vector<32x768xf32> -> vector<32x768xf32>
    %75 = arith.addf %70, %74 : vector<32x768xf32>
    %c7_74 = arith.constant 7 : index
    %c0_75 = arith.constant 0 : index
    %c0_76 = arith.constant 0 : index
    %76 = vector.load %arg4[%c7_74, %c0_75, %c0_76] : memref<9x32x32xbf16, #tpu.memory_space<vmem>>, vector<1x32x32xbf16>
    %77 = vector.shape_cast %76 : vector<1x32x32xbf16> to vector<32x32xbf16>
    %c0_77 = arith.constant 0 : index
    %c146_78 = arith.constant 146 : index
    %78 = vector.load %arg2[%c0_77, %c146_78] : memref<32x1024xbf16, #tpu.memory_space<vmem>>, vector<32x768xbf16>
    %cst_79 = arith.constant dense<0.000000e+00> : vector<32x768xf32>
    %79 = tpu.matmul %77, %78, %cst_79 {dimension_numbers = #tpu.dot_dimension_numbers<[1], [0], [0], [1], [0, 0, 1, 1], [], []>} : vector<32x32xbf16>, vector<32x768xbf16>, vector<32x768xf32> -> vector<32x768xf32>
    %80 = arith.addf %75, %79 : vector<32x768xf32>
    %c8 = arith.constant 8 : index
    %c0_80 = arith.constant 0 : index
    %c0_81 = arith.constant 0 : index
    %81 = vector.load %arg3[%c8, %c0_80, %c0_81] : memref<9x32x64xbf16, #tpu.memory_space<vmem>>, vector<1x32x64xbf16>
    %82 = vector.shape_cast %81 : vector<1x32x64xbf16> to vector<32x64xbf16>
    %c0_82 = arith.constant 0 : index
    %c147 = arith.constant 147 : index
    %83 = vector.load %arg1[%c0_82, %c147] : memref<64x1024xbf16, #tpu.memory_space<vmem>>, vector<64x768xbf16>
    %cst_83 = arith.constant dense<0.000000e+00> : vector<32x768xf32>
    %84 = tpu.matmul %82, %83, %cst_83 {dimension_numbers = #tpu.dot_dimension_numbers<[1], [0], [0], [1], [0, 0, 1, 1], [], []>} : vector<32x64xbf16>, vector<64x768xbf16>, vector<32x768xf32> -> vector<32x768xf32>
    %85 = arith.addf %80, %84 : vector<32x768xf32>
    %c8_84 = arith.constant 8 : index
    %c0_85 = arith.constant 0 : index
    %c0_86 = arith.constant 0 : index
    %86 = vector.load %arg4[%c8_84, %c0_85, %c0_86] : memref<9x32x32xbf16, #tpu.memory_space<vmem>>, vector<1x32x32xbf16>
    %87 = vector.shape_cast %86 : vector<1x32x32xbf16> to vector<32x32xbf16>
    %c0_87 = arith.constant 0 : index
    %c147_88 = arith.constant 147 : index
    %88 = vector.load %arg2[%c0_87, %c147_88] : memref<32x1024xbf16, #tpu.memory_space<vmem>>, vector<32x768xbf16>
    %cst_89 = arith.constant dense<0.000000e+00> : vector<32x768xf32>
    %89 = tpu.matmul %87, %88, %cst_89 {dimension_numbers = #tpu.dot_dimension_numbers<[1], [0], [0], [1], [0, 0, 1, 1], [], []>} : vector<32x32xbf16>, vector<32x768xbf16>, vector<32x768xf32> -> vector<32x768xf32>
    %90 = arith.addf %85, %89 : vector<32x768xf32>
    %c0_90 = arith.constant 0 : index
    %c0_91 = arith.constant 0 : index
    %91 = vector.load %arg5[%c0_90, %c0_91] : memref<32x1xf32, #tpu.memory_space<vmem>>, vector<32x1xf32>
    %92 = vector.broadcast %91 : vector<32x1xf32> to vector<32x768xf32>
    %93 = arith.addf %90, %92 : vector<32x768xf32>
    %cst_92 = arith.constant 0.000000e+00 : f32
    %94 = vector.broadcast %cst_92 : f32 to vector<32x768xf32>
    %95 = arith.maximumf %93, %94 : vector<32x768xf32>
    %c0_93 = arith.constant 0 : index
    %c0_94 = arith.constant 0 : index
    %96 = vector.load %arg6[%c0_93, %c0_94] : memref<1x768xf32, #tpu.memory_space<vmem>>, vector<1x768xf32>
    %97 = vector.broadcast %96 : vector<1x768xf32> to vector<32x768xf32>
    %98 = arith.mulf %95, %97 : vector<32x768xf32>
    %c0_95 = arith.constant 0 : index
    %c0_96 = arith.constant 0 : index
    %99 = vector.load %arg7[%c0_95, %c0_96] : memref<8x32xbf16, #tpu.memory_space<vmem>>, vector<8x32xbf16>
    %100 = arith.truncf %98 : vector<32x768xf32> to vector<32x768xbf16>
    %cst_97 = arith.constant dense<0.000000e+00> : vector<8x768xf32>
    %101 = tpu.matmul %99, %100, %cst_97 {dimension_numbers = #tpu.dot_dimension_numbers<[1], [0], [0], [1], [0, 0, 1, 1], [], []>} : vector<8x32xbf16>, vector<32x768xbf16>, vector<8x768xf32> -> vector<8x768xf32>
    %c0_98 = arith.constant 0 : index
    %c0_99 = arith.constant 0 : index
    %102 = vector.load %arg8[%c0_98, %c0_99] : memref<8x1xf32, #tpu.memory_space<vmem>>, vector<8x1xf32>
    %103 = vector.broadcast %102 : vector<8x1xf32> to vector<8x768xf32>
    %104 = arith.addf %101, %103 : vector<8x768xf32>
    %c0_100 = arith.constant 0 : index
    %c0_101 = arith.constant 0 : index
    %105 = vector.load %arg9[%c0_100, %c0_101] : memref<8x768xf32, #tpu.memory_space<vmem>>, vector<8x768xf32>
    tpu.vector_store %arg9[%c0_100, %c0_101], %104 {strides = array<i32>} : memref<8x768xf32, #tpu.memory_space<vmem>>, vector<8x768xf32>,
    return
  }
  func.func @transform_0(%arg0: i32) -> (i32, i32) {
    %c0_i32 = arith.constant 0 : i32
    %c0_i32_0 = arith.constant 0 : i32
    %c0_i32_1 = arith.constant 0 : i32
    return %c0_i32, %c0_i32_0 : i32, i32
  }
  func.func @transform_1(%arg0: i32) -> (i32, i32) {
    %c0_i32 = arith.constant 0 : i32
    %c0_i32_0 = arith.constant 0 : i32
    %c0_i32_1 = arith.constant 0 : i32
    return %c0_i32, %c0_i32_0 : i32, i32
  }
  func.func @transform_2(%arg0: i32) -> (i32, i32, i32) {
    %c0_i32 = arith.constant 0 : i32
    %c0_i32_0 = arith.constant 0 : i32
    %c0_i32_1 = arith.constant 0 : i32
    %c0_i32_2 = arith.constant 0 : i32
    return %c0_i32, %c0_i32_0, %c0_i32_1 : i32, i32, i32
  }
  func.func @transform_3(%arg0: i32) -> (i32, i32, i32) {
    %c0_i32 = arith.constant 0 : i32
    %c0_i32_0 = arith.constant 0 : i32
    %c0_i32_1 = arith.constant 0 : i32
    %c0_i32_2 = arith.constant 0 : i32
    return %c0_i32, %c0_i32_0, %c0_i32_1 : i32, i32, i32
  }
  func.func @transform_4(%arg0: i32) -> (i32, i32) {
    %c0_i32 = arith.constant 0 : i32
    %c0_i32_0 = arith.constant 0 : i32
    %c0_i32_1 = arith.constant 0 : i32
    return %c0_i32, %c0_i32_0 : i32, i32
  }
  func.func @transform_5(%arg0: i32) -> (i32, i32) {
    %c0_i32 = arith.constant 0 : i32
    %c0_i32_0 = arith.constant 0 : i32
    %c0_i32_1 = arith.constant 0 : i32
    return %c0_i32, %c0_i32_0 : i32, i32
  }
  func.func @transform_6(%arg0: i32) -> (i32, i32) {
    %c0_i32 = arith.constant 0 : i32
    %c0_i32_0 = arith.constant 0 : i32
    %c0_i32_1 = arith.constant 0 : i32
    return %c0_i32, %c0_i32_0 : i32, i32
  }
  func.func @transform_7(%arg0: i32) -> (i32, i32) {
    %c0_i32 = arith.constant 0 : i32
    %c0_i32_0 = arith.constant 0 : i32
    %c0_i32_1 = arith.constant 0 : i32
    return %c0_i32, %c0_i32_0 : i32, i32
  }
  func.func @transform_8(%arg0: i32) -> (i32, i32) {
    %c0_i32 = arith.constant 0 : i32
    %c0_i32_0 = arith.constant 0 : i32
    %c0_i32_1 = arith.constant 0 : i32
    return %c0_i32, %c0_i32_0 : i32, i32
  }
}

</mosaic_0001>

<llo_original>
// kernel: this_net_forward.4
$region0: #{this_net_forward.4}
  #allocation0 [shape = 'u32[]', space=smem, size = 0x4, offset = 0x4, fixed_abs, tag = 'smem constant byte address 0x4 - core index']
  #allocation1 [shape = 'u32[144,128]{1,0:T(1,128)}', space=vmem, size = 0x12000, scoped, tag = 'internal scratch']
  %s0 = inlined_call_operand.vmem [shape: bf16[256,8], index: 0, kind: input, shape index: {}]
  %s1 = inlined_call_operand.vmem [shape: bf16[8,16], index: 1, kind: input, shape index: {}]
  %s2 = inlined_call_operand.vmem [shape: f32[1,16], index: 2, kind: input, shape index: {}]
  %s3 = inlined_call_operand.vmem [shape: f32[32,16], index: 3, kind: output, shape index: {}]
  %s4 = sld [smem:[#allocation0]]
  $region22: #{this_net_forward.4} parent=0
    _
  %s6 = ssub.s32 1, %s4
  %s7 = scalar_select 0, %s6, %s4
  // Predicated region
  $region2: #{this_net_forward.4} parent=0 // pred_check
    _
  $region3: #{this_net_forward.4} parent=0 // pred_check_branch
    %9 = sbr.rel (0) target = $region5
  $region4: #{this_net_forward.4} parent=0 // pred_region
    _
  $region5: #{this_net_forward.4} parent=0 // pred_fallthru
    _
  // Predicated region
  $region6: #{this_net_forward.4} parent=0 // pred_check
    _
  $region7: #{this_net_forward.4} parent=0 // pred_check_branch
    %11 = sbr.rel (0) target = $region9
  $region8: #{this_net_forward.4} parent=0 // pred_region
    _
  $region9: #{this_net_forward.4} parent=0 // pred_fallthru
    _
  // Predicated region
  $region10: #{this_net_forward.4} parent=0 // pred_check
    _
  $region11: #{this_net_forward.4} parent=0 // pred_check_branch
    %13 = sbr.rel (0) target = $region13
  $region12: #{this_net_forward.4} parent=0 // pred_region
    _
  $region13: #{this_net_forward.4} parent=0 // pred_fallthru
    _
  %v15 = vld [vmem:[%s0] sm:$0xf]
  %v16 = vld [vmem:[%s0 + $0x4] sm:$0xf]
  %v17 = vld [vmem:[%s0 + $0x8] sm:$0xf]
  %v18 = vld [vmem:[%s0 + $0xc] sm:$0xf]
  %v19 = vld [vmem:[%s0 + $0x10] sm:$0xf]
  %v20 = vld [vmem:[%s0 + $0x14] sm:$0xf]
  %v21 = vld [vmem:[%s0 + $0x18] sm:$0xf]
  %v22 = vld [vmem:[%s0 + $0x1c] sm:$0xf]
  %v23 = vld [vmem:[%s0 + $0x20] sm:$0xf]
  %v24 = vld [vmem:[%s0 + $0x24] sm:$0xf]
  %v25 = vld [vmem:[%s0 + $0x28] sm:$0xf]
  %v26 = vld [vmem:[%s0 + $0x2c] sm:$0xf]
  %v27 = vld [vmem:[%s0 + $0x30] sm:$0xf]
  %v28 = vld [vmem:[%s0 + $0x34] sm:$0xf]
  %v29 = vld [vmem:[%s0 + $0x38] sm:$0xf]
  %v30 = vld [vmem:[%s0 + $0x3c] sm:$0xf]
  %v31 = vld [vmem:[%s0 + $0x40] sm:$0xf]
  %v32 = vld [vmem:[%s0 + $0x44] sm:$0xf]
  %v33 = vld [vmem:[%s0 + $0x48] sm:$0xf]
  %v34 = vld [vmem:[%s0 + $0x4c] sm:$0xf]
  %v35 = vld [vmem:[%s0 + $0x50] sm:$0xf]
  %v36 = vld [vmem:[%s0 + $0x54] sm:$0xf]
  %v37 = vld [vmem:[%s0 + $0x58] sm:$0xf]
  %v38 = vld [vmem:[%s0 + $0x5c] sm:$0xf]
  %v39 = vld [vmem:[%s0 + $0x60] sm:$0xf]
  %v40 = vld [vmem:[%s0 + $0x64] sm:$0xf]
  %v41 = vld [vmem:[%s0 + $0x68] sm:$0xf]
  %v42 = vld [vmem:[%s0 + $0x6c] sm:$0xf]
  %v43 = vld [vmem:[%s0 + $0x70] sm:$0xf]
  %v44 = vld [vmem:[%s0 + $0x74] sm:$0xf]
  %v45 = vld [vmem:[%s0 + $0x78] sm:$0xf]
  %v46 = vld [vmem:[%s0 + $0x7c] sm:$0xf]
  %v47 = vld [vmem:[%s1] sm:$0xf]
  %v48 = vld [vmem:[%s2] sm:$0x1]
  %v50 = vlaneseq
  %v51 = vshrl.u32 %v50, 7
  %v52 = vsub.s32 0, %v51
  %v53 = vrot.slane %v48, %v52
  %v87 = vunpack.c.l.b16 %v15
  %v88 = vunpack.c.l.b16 %v16
  %v89 = vunpack.c.l.b16 %v17
  %v90 = vunpack.c.l.b16 %v18
  %v91 = vunpack.c.l.b16 %v19
  %v92 = vunpack.c.l.b16 %v20
  %v93 = vunpack.c.l.b16 %v21
  %v94 = vunpack.c.l.b16 %v22
  %v95 = vunpack.c.l.b16 %v23
  %v96 = vunpack.c.l.b16 %v24
  %v97 = vunpack.c.l.b16 %v25
  %v98 = vunpack.c.l.b16 %v26
  %v99 = vunpack.c.l.b16 %v27
  %v100 = vunpack.c.l.b16 %v28
  %v101 = vunpack.c.l.b16 %v29
  %v102 = vunpack.c.l.b16 %v30
  %v103 = vunpack.c.l.b16 %v31
  %v104 = vunpack.c.l.b16 %v32
  %v105 = vunpack.c.l.b16 %v33
  %v106 = vunpack.c.l.b16 %v34
  %v107 = vunpack.c.l.b16 %v35
  %v108 = vunpack.c.l.b16 %v36
  %v109 = vunpack.c.l.b16 %v37
  %v110 = vunpack.c.l.b16 %v38
  %v111 = vunpack.c.l.b16 %v39
  %v112 = vunpack.c.l.b16 %v40
  %v113 = vunpack.c.l.b16 %v41
  %v114 = vunpack.c.l.b16 %v42
  %v115 = vunpack.c.l.b16 %v43
  %v116 = vunpack.c.l.b16 %v44
  %v117 = vunpack.c.l.b16 %v45
  %v118 = vunpack.c.l.b16 %v46
  %v119 = vpack.c.b16 %v88, %v87
  %v120 = vpack.c.b16 %v90, %v89
  %v121 = vpack.c.b16 %v92, %v91
  %v122 = vpack.c.b16 %v94, %v93
  %v123 = vpack.c.b16 %v96, %v95
  %v124 = vpack.c.b16 %v98, %v97
  %v125 = vpack.c.b16 %v100, %v99
  %v126 = vpack.c.b16 %v102, %v101
  %v127 = vpack.c.b16 %v104, %v103
  %v128 = vpack.c.b16 %v106, %v105
  %v129 = vpack.c.b16 %v108, %v107
  %v130 = vpack.c.b16 %v110, %v109
  %v131 = vpack.c.b16 %v112, %v111
  %v132 = vpack.c.b16 %v114, %v113
  %v133 = vpack.c.b16 %v116, %v115
  %v134 = vpack.c.b16 %v118, %v117
  %vm135 = vcmask 64512
  %v137 = vsel %vm135, %v119, 0
  %v140 = vsel %vm135, %v120, 0
  %v143 = vsel %vm135, %v121, 0
  %v146 = vsel %vm135, %v122, 0
  %v149 = vsel %vm135, %v123, 0
  %v152 = vsel %vm135, %v124, 0
  %v155 = vsel %vm135, %v125, 0
  %v158 = vsel %vm135, %v126, 0
  %v161 = vsel %vm135, %v127, 0
  %v164 = vsel %vm135, %v128, 0
  %v167 = vsel %vm135, %v129, 0
  %v170 = vsel %vm135, %v130, 0
  %v173 = vsel %vm135, %v131, 0
  %v176 = vsel %vm135, %v132, 0
  %v179 = vsel %vm135, %v133, 0
  %v182 = vsel %vm135, %v134, 0
  %vm184 = vcmask 1043456
  %v186 = vsel %vm184, %v47, 0
  %188 = vmatprep.subr.bf16.mxu0 0
  %189 = vmatpush1.bf16.msra.mxu0 %v186
  %190 = vmatprep.subr.bf16.mxu0 0
  %191 = vmatpush1.bf16.msra.mxu0 0
  %192 = vmatprep.subr.bf16.mxu0 0
  %193 = vmatpush1.bf16.msra.mxu0 0
  %194 = vmatprep.subr.bf16.mxu0 0
  %195 = vmatpush1.bf16.msra.mxu0 0
  %196 = vmatprep.subr.bf16.mxu0 0
  %197 = vmatpush1.bf16.msra.mxu0 0
  %198 = vmatprep.subr.bf16.mxu0 0
  %199 = vmatpush1.bf16.msra.mxu0 0
  %200 = vmatprep.subr.bf16.mxu0 0
  %201 = vmatpush1.bf16.msra.mxu0 0
  %202 = vmatprep.subr.bf16.mxu0 0
  %203 = vmatpush1.bf16.msra.mxu0 0
  %204 = vmatprep.subr.bf16.mxu0 0
  %205 = vmatpush1.bf16.msra.mxu0 0
  %206 = vmatprep.subr.bf16.mxu0 0
  %207 = vmatpush1.bf16.msra.mxu0 0
  %208 = vmatprep.subr.bf16.mxu0 0
  %209 = vmatpush1.bf16.msra.mxu0 0
  %210 = vmatprep.subr.bf16.mxu0 0
  %211 = vmatpush1.bf16.msra.mxu0 0
  %212 = vmatprep.subr.bf16.mxu0 0
  %213 = vmatpush1.bf16.msra.mxu0 0
  %214 = vmatprep.subr.bf16.mxu0 0
  %215 = vmatpush1.bf16.msra.mxu0 0
  %216 = vmatprep.subr.bf16.mxu0 0
  %217 = vmatpush1.bf16.msra.mxu0 0
  %218 = vmatprep.subr.bf16.mxu0 0
  %219 = vmatpush1.bf16.msra.mxu0 0
  %220 = vmatprep.mubr.bf16.mxu0 0
  %221 = vmatmul.mubr.bf16.gmra.mrb[0].mxu0 %v137
  %v222 = vpop.f32.mrb[0].mxu0
  %v223 = vadd.f32 %v53, %v222
  %v224 = vpop.f32.mrb[0].mxu0
  %v225 = vpop.f32.mrb[0].mxu0
  %v226 = vadd.f32 %v53, %v225
  %v227 = vpop.f32.mrb[0].mxu0
  %228 = vmatprep.mubr.bf16.mxu0 0
  %229 = vmatmul.mubr.bf16.gmra.mrb[0].mxu0 %v140
  %v230 = vpop.f32.mrb[0].mxu0
  %v231 = vadd.f32 %v53, %v230
  %v232 = vpop.f32.mrb[0].mxu0
  %v233 = vpop.f32.mrb[0].mxu0
  %v234 = vadd.f32 %v53, %v233
  %v235 = vpop.f32.mrb[0].mxu0
  %236 = vmatprep.mubr.bf16.mxu0 0
  %237 = vmatmul.mubr.bf16.gmra.mrb[0].mxu0 %v143
  %v238 = vpop.f32.mrb[0].mxu0
  %v239 = vadd.f32 %v53, %v238
  %v240 = vpop.f32.mrb[0].mxu0
  %v241 = vpop.f32.mrb[0].mxu0
  %v242 = vadd.f32 %v53, %v241
  %v243 = vpop.f32.mrb[0].mxu0
  %244 = vmatprep.mubr.bf16.mxu0 0
  %245 = vmatmul.mubr.bf16.gmra.mrb[0].mxu0 %v146
  %v246 = vpop.f32.mrb[0].mxu0
  %v247 = vadd.f32 %v53, %v246
  %v248 = vpop.f32.mrb[0].mxu0
  %v249 = vpop.f32.mrb[0].mxu0
  %v250 = vadd.f32 %v53, %v249
  %v251 = vpop.f32.mrb[0].mxu0
  %252 = vmatprep.mubr.bf16.mxu0 0
  %253 = vmatmul.mubr.bf16.gmra.mrb[0].mxu0 %v149
  %v254 = vpop.f32.mrb[0].mxu0
  %v255 = vadd.f32 %v53, %v254
  %v256 = vpop.f32.mrb[0].mxu0
  %v257 = vpop.f32.mrb[0].mxu0
  %v258 = vadd.f32 %v53, %v257
  %v259 = vpop.f32.mrb[0].mxu0
  %260 = vmatprep.mubr.bf16.mxu0 0
  %261 = vmatmul.mubr.bf16.gmra.mrb[0].mxu0 %v152
  %v262 = vpop.f32.mrb[0].mxu0
  %v263 = vadd.f32 %v53, %v262
  %v264 = vpop.f32.mrb[0].mxu0
  %v265 = vpop.f32.mrb[0].mxu0
  %v266 = vadd.f32 %v53, %v265
  %v267 = vpop.f32.mrb[0].mxu0
  %268 = vmatprep.mubr.bf16.mxu0 0
  %269 = vmatmul.mubr.bf16.gmra.mrb[0].mxu0 %v155
  %v270 = vpop.f32.mrb[0].mxu0
  %v271 = vadd.f32 %v53, %v270
  %v272 = vpop.f32.mrb[0].mxu0
  %v273 = vpop.f32.mrb[0].mxu0
  %v274 = vadd.f32 %v53, %v273
  %v275 = vpop.f32.mrb[0].mxu0
  %276 = vmatprep.mubr.bf16.mxu0 0
  %277 = vmatmul.mubr.bf16.gmra.mrb[0].mxu0 %v158
  %v278 = vpop.f32.mrb[0].mxu0
  %v279 = vadd.f32 %v53, %v278
  %v280 = vpop.f32.mrb[0].mxu0
  %v281 = vpop.f32.mrb[0].mxu0
  %v282 = vadd.f32 %v53, %v281
  %v283 = vpop.f32.mrb[0].mxu0
  %284 = vmatprep.mubr.bf16.mxu0 0
  %285 = vmatmul.mubr.bf16.gmra.mrb[0].mxu0 %v161
  %v286 = vpop.f32.mrb[0].mxu0
  %v287 = vadd.f32 %v53, %v286
  %v288 = vpop.f32.mrb[0].mxu0
  %v289 = vpop.f32.mrb[0].mxu0
  %v290 = vadd.f32 %v53, %v289
  %v291 = vpop.f32.mrb[0].mxu0
  %292 = vmatprep.mubr.bf16.mxu0 0
  %293 = vmatmul.mubr.bf16.gmra.mrb[0].mxu0 %v164
  %v294 = vpop.f32.mrb[0].mxu0
  %v295 = vadd.f32 %v53, %v294
  %v296 = vpop.f32.mrb[0].mxu0
  %v297 = vpop.f32.mrb[0].mxu0
  %v298 = vadd.f32 %v53, %v297
  %v299 = vpop.f32.mrb[0].mxu0
  %300 = vmatprep.mubr.bf16.mxu0 0
  %301 = vmatmul.mubr.bf16.gmra.mrb[0].mxu0 %v167
  %v302 = vpop.f32.mrb[0].mxu0
  %v303 = vadd.f32 %v53, %v302
  %v304 = vpop.f32.mrb[0].mxu0
  %v305 = vpop.f32.mrb[0].mxu0
  %v306 = vadd.f32 %v53, %v305
  %v307 = vpop.f32.mrb[0].mxu0
  %308 = vmatprep.mubr.bf16.mxu0 0
  %309 = vmatmul.mubr.bf16.gmra.mrb[0].mxu0 %v170
  %v310 = vpop.f32.mrb[0].mxu0
  %v311 = vadd.f32 %v53, %v310
  %v312 = vpop.f32.mrb[0].mxu0
  %v313 = vpop.f32.mrb[0].mxu0
  %v314 = vadd.f32 %v53, %v313
  %v315 = vpop.f32.mrb[0].mxu0
  %316 = vmatprep.mubr.bf16.mxu0 0
  %317 = vmatmul.mubr.bf16.gmra.mrb[0].mxu0 %v173
  %v318 = vpop.f32.mrb[0].mxu0
  %v319 = vadd.f32 %v53, %v318
  %v320 = vpop.f32.mrb[0].mxu0
  %v321 = vpop.f32.mrb[0].mxu0
  %v322 = vadd.f32 %v53, %v321
  %v323 = vpop.f32.mrb[0].mxu0
  %324 = vmatprep.mubr.bf16.mxu0 0
  %325 = vmatmul.mubr.bf16.gmra.mrb[0].mxu0 %v176
  %v326 = vpop.f32.mrb[0].mxu0
  %v327 = vadd.f32 %v53, %v326
  %v328 = vpop.f32.mrb[0].mxu0
  %v329 = vpop.f32.mrb[0].mxu0
  %v330 = vadd.f32 %v53, %v329
  %v331 = vpop.f32.mrb[0].mxu0
  %332 = vmatprep.mubr.bf16.mxu0 0
  %333 = vmatmul.mubr.bf16.gmra.mrb[0].mxu0 %v179
  %v334 = vpop.f32.mrb[0].mxu0
  %v335 = vadd.f32 %v53, %v334
  %v336 = vpop.f32.mrb[0].mxu0
  %v337 = vpop.f32.mrb[0].mxu0
  %v338 = vadd.f32 %v53, %v337
  %v339 = vpop.f32.mrb[0].mxu0
  %340 = vmatprep.mubr.bf16.mxu0 0
  %341 = vmatmul.mubr.bf16.gmra.mrb[0].mxu0 %v182
  %v342 = vpop.f32.mrb[0].mxu0
  %v343 = vadd.f32 %v53, %v342
  %v344 = vpop.f32.mrb[0].mxu0
  %v345 = vpop.f32.mrb[0].mxu0
  %v346 = vadd.f32 %v53, %v345
  %v347 = vpop.f32.mrb[0].mxu0
  %348 = vdwg.mxu0
  %v349 = vmax.f32 %v223, 0.0
  %v350 = vmax.f32 %v226, 0.0
  %v351 = vmax.f32 %v231, 0.0
  %v352 = vmax.f32 %v234, 0.0
  %v353 = vmax.f32 %v239, 0.0
  %v354 = vmax.f32 %v242, 0.0
  %v355 = vmax.f32 %v247, 0.0
  %v356 = vmax.f32 %v250, 0.0
  %v357 = vmax.f32 %v255, 0.0
  %v358 = vmax.f32 %v258, 0.0
  %v359 = vmax.f32 %v263, 0.0
  %v360 = vmax.f32 %v266, 0.0
  %v361 = vmax.f32 %v271, 0.0
  %v362 = vmax.f32 %v274, 0.0
  %v363 = vmax.f32 %v279, 0.0
  %v364 = vmax.f32 %v282, 0.0
  %v365 = vmax.f32 %v287, 0.0
  %v366 = vmax.f32 %v290, 0.0
  %v367 = vmax.f32 %v295, 0.0
  %v368 = vmax.f32 %v298, 0.0
  %v369 = vmax.f32 %v303, 0.0
  %v370 = vmax.f32 %v306, 0.0
  %v371 = vmax.f32 %v311, 0.0
  %v372 = vmax.f32 %v314, 0.0
  %v373 = vmax.f32 %v319, 0.0
  %v374 = vmax.f32 %v322, 0.0
  %v375 = vmax.f32 %v327, 0.0
  %v376 = vmax.f32 %v330, 0.0
  %v377 = vmax.f32 %v335, 0.0
  %v378 = vmax.f32 %v338, 0.0
  %v379 = vmax.f32 %v343, 0.0
  %v380 = vmax.f32 %v346, 0.0
  %v381 = vmax.f32 %v349, %v353
  %v382 = vmax.f32 %v350, %v354
  %v383 = vmax.f32 %v351, %v355
  %v384 = vmax.f32 %v352, %v356
  %v385 = vmax.f32 %v381, %v357
  %v386 = vmax.f32 %v382, %v358
  %v387 = vmax.f32 %v383, %v359
  %v388 = vmax.f32 %v384, %v360
  %v389 = vmax.f32 %v385, %v361
  %v390 = vmax.f32 %v386, %v362
  %v391 = vmax.f32 %v387, %v363
  %v392 = vmax.f32 %v388, %v364
  %v393 = vmax.f32 %v389, %v365
  %v394 = vmax.f32 %v390, %v366
  %v395 = vmax.f32 %v391, %v367
  %v396 = vmax.f32 %v392, %v368
  %v397 = vmax.f32 %v393, %v369
  %v398 = vmax.f32 %v394, %v370
  %v399 = vmax.f32 %v395, %v371
  %v400 = vmax.f32 %v396, %v372
  %v401 = vmax.f32 %v397, %v373
  %v402 = vmax.f32 %v398, %v374
  %v403 = vmax.f32 %v399, %v375
  %v404 = vmax.f32 %v400, %v376
  %v405 = vmax.f32 %v401, %v377
  %v406 = vmax.f32 %v402, %v378
  %v407 = vmax.f32 %v403, %v379
  %v408 = vmax.f32 %v404, %v380
  %vm409 = vcmask 130048
  %410 = vst.msk [vmem:[%s3] sm:$0xff] %vm409, %v405
  %411 = vst.msk [vmem:[%s3 + $0x8] sm:$0xff] %vm409, %v406
  %412 = vst.msk [vmem:[%s3 + $0x10] sm:$0xff] %vm409, %v407
  %413 = vst.msk [vmem:[%s3 + $0x18] sm:$0xff] %vm409, %v408
  // Predicated region
  $region14: #{this_net_forward.4} parent=0 // pred_check
    _
  $region15: #{this_net_forward.4} parent=0 // pred_check_branch
    %415 = sbr.rel (0) target = $region17
  $region16: #{this_net_forward.4} parent=0 // pred_region
    _
  $region17: #{this_net_forward.4} parent=0 // pred_fallthru
    _
  // Predicated region
  $region18: #{this_net_forward.4} parent=0 // pred_check
    _
  $region19: #{this_net_forward.4} parent=0 // pred_check_branch
    %417 = sbr.rel (0) target = $region21
  $region20: #{this_net_forward.4} parent=0 // pred_region
    _
  $region21: #{this_net_forward.4} parent=0 // pred_fallthru
    _

// kernel: this_net_forward.5
$region0: #{this_net_forward.5}
  #allocation0 [shape = 'u32[]', space=smem, size = 0x4, offset = 0x4, fixed_abs, tag = 'smem constant byte address 0x4 - core index']
  #allocation1 [shape = 'u32[144,128]{1,0:T(1,128)}', space=vmem, size = 0x12000, scoped, tag = 'internal scratch']
  %s0 = inlined_call_operand.vmem [shape: bf16[16,1024], index: 0, kind: input, shape index: {}]
  %s1 = inlined_call_operand.vmem [shape: bf16[9,32,16], index: 1, kind: input, shape index: {}]
  %s2 = inlined_call_operand.vmem [shape: f32[32,1], index: 2, kind: input, shape index: {}]
  %s3 = inlined_call_operand.vmem [shape: f32[1,768], index: 3, kind: input, shape index: {}]
  %s4 = inlined_call_operand.vmem [shape: bf16[32,1024], index: 4, kind: output, shape index: {}]
  %s5 = sld [smem:[#allocation0]]
  $region26: #{this_net_forward.5} parent=0
    _
  %s7 = ssub.s32 1, %s5
  %s8 = scalar_select 0, %s7, %s5
  // Predicated region
  $region2: #{this_net_forward.5} parent=0 // pred_check
    _
  $region3: #{this_net_forward.5} parent=0 // pred_check_branch
    %10 = sbr.rel (0) target = $region5
  $region4: #{this_net_forward.5} parent=0 // pred_region
    _
  $region5: #{this_net_forward.5} parent=0 // pred_fallthru
    _
  // Predicated region
  $region6: #{this_net_forward.5} parent=0 // pred_check
    _
  $region7: #{this_net_forward.5} parent=0 // pred_check_branch
    %12 = sbr.rel (0) target = $region9
  $region8: #{this_net_forward.5} parent=0 // pred_region
    _
  $region9: #{this_net_forward.5} parent=0 // pred_fallthru
    _
  // Predicated region
  $region10: #{this_net_forward.5} parent=0 // pred_check
    _
  $region11: #{this_net_forward.5} parent=0 // pred_check_branch
    %14 = sbr.rel (0) target = $region13
  $region12: #{this_net_forward.5} parent=0 // pred_region
    _
  $region13: #{this_net_forward.5} parent=0 // pred_fallthru
    _
  // Predicated region
  $region14: #{this_net_forward.5} parent=0 // pred_check
    _
  $region15: #{this_net_forward.5} parent=0 // pred_check_branch
    %16 = sbr.rel (0) target = $region17
  $region16: #{this_net_forward.5} parent=0 // pred_region
    _
  $region17: #{this_net_forward.5} parent=0 // pred_fallthru
    _
  %v18 = vld [vmem:[%s0] sm:$0xff]
  %v19 = vld [vmem:[%s0 + $0x8] sm:$0xff]
  %v20 = vld [vmem:[%s0 + $0x10] sm:$0xff]
  %v21 = vld [vmem:[%s0 + $0x18] sm:$0xf]
  %v22 = vld [vmem:[%s0 + $0x20] sm:$0xff]
  %v23 = vld [vmem:[%s0 + $0x28] sm:$0xff]
  %v24 = vld [vmem:[%s0 + $0x30] sm:$0xff]
  %v25 = vld [vmem:[%s0 + $0x38] sm:$0xf]
  %v26 = vld [vmem:[%s1] sm:$0xf]
  %v27 = vld [vmem:[%s1 + $0x4] sm:$0xf]
  %v28 = vld [vmem:[%s1 + $0x8] sm:$0xf]
  %v29 = vld [vmem:[%s1 + $0xc] sm:$0xf]
  %s30 = scalar_lea.vmem %s1, 16
  %v31 = vld [vmem:[%s30] sm:$0xf]
  %v32 = vld [vmem:[%s30 + $0x4] sm:$0xf]
  %v33 = vld [vmem:[%s30 + $0x8] sm:$0xf]
  %v34 = vld [vmem:[%s30 + $0xc] sm:$0xf]
  %v39 = vunpack.c.l.b16 %v31
  %v40 = vunpack.c.l.b16 %v32
  %v41 = vunpack.c.l.b16 %v33
  %v42 = vunpack.c.l.b16 %v34
  %v43 = vpack.c.b16 %v40, %v39
  %v44 = vpack.c.b16 %v42, %v41
  %v53 = vunpack.c.l.b16 %v18
  %v54 = vunpack.c.h.b16 %v18
  %v55 = vunpack.c.l.b16 %v19
  %v56 = vunpack.c.h.b16 %v19
  %v57 = vunpack.c.l.b16 %v20
  %v58 = vunpack.c.h.b16 %v20
  %v59 = vunpack.c.l.b16 %v21
  %v60 = vunpack.c.l.b16 %v22
  %v61 = vunpack.c.h.b16 %v22
  %v62 = vunpack.c.l.b16 %v23
  %v63 = vunpack.c.h.b16 %v23
  %v64 = vunpack.c.l.b16 %v24
  %v65 = vunpack.c.h.b16 %v24
  %v66 = vunpack.c.l.b16 %v25
  %v67 = vpack.c.b16 %v60, %v53
  %v68 = vpack.c.b16 %v61, %v54
  %v69 = vpack.c.b16 %v62, %v55
  %v70 = vpack.c.b16 %v63, %v56
  %v71 = vpack.c.b16 %v64, %v57
  %v72 = vpack.c.b16 %v65, %v58
  %v73 = vpack.c.b16 %v66, %v59
  %74 = vrot.lane.b32.xlu0 %v67, 18
  %v75 = vpop.permute.xlu0 %74
  %76 = vrot.lane.b32.xlu0 %v68, 18
  %v77 = vpop.permute.xlu0 %76
  %78 = vrot.lane.b32.xlu0 %v69, 18
  %v79 = vpop.permute.xlu0 %78
  %80 = vrot.lane.b32.xlu0 %v70, 18
  %v81 = vpop.permute.xlu0 %80
  %82 = vrot.lane.b32.xlu0 %v71, 18
  %v83 = vpop.permute.xlu0 %82
  %84 = vrot.lane.b32.xlu0 %v72, 18
  %v85 = vpop.permute.xlu0 %84
  %86 = vrot.lane.b32.xlu0 %v73, 18
  %v87 = vpop.permute.xlu0 %86
  %vm88 = vcmask 146432
  %v89 = vsel %vm88, %v75, %v77
  %v90 = vsel %vm88, %v77, %v79
  %v91 = vsel %vm88, %v79, %v81
  %v92 = vsel %vm88, %v81, %v83
  %v93 = vsel %vm88, %v83, %v85
  %v94 = vsel %vm88, %v85, %v87
  %vm101 = vcmask 130048
  %v103 = vsel %vm101, %v43, 0
  %v106 = vsel %vm101, %v44, 0
  %108 = vmatprep.subr.bf16.mxu0 %v90
  %109 = vmatpush1.bf16.msra.mxu0 %v89
  %110 = vmatprep.subr.bf16.mxu0 0
  %111 = vmatpush1.bf16.msra.mxu0 0
  %112 = vmatprep.subr.bf16.mxu0 0
  %113 = vmatpush1.bf16.msra.mxu0 0
  %114 = vmatprep.subr.bf16.mxu0 0
  %115 = vmatpush1.bf16.msra.mxu0 0
  %116 = vmatprep.subr.bf16.mxu0 0
  %117 = vmatpush1.bf16.msra.mxu0 0
  %118 = vmatprep.subr.bf16.mxu0 0
  %119 = vmatpush1.bf16.msra.mxu0 0
  %120 = vmatprep.subr.bf16.mxu0 0
  %121 = vmatpush1.bf16.msra.mxu0 0
  %122 = vmatprep.subr.bf16.mxu0 0
  %123 = vmatpush1.bf16.msra.mxu0 0
  %124 = vmatprep.subr.bf16.mxu0 0
  %125 = vmatpush1.bf16.msra.mxu0 0
  %126 = vmatprep.subr.bf16.mxu0 0
  %127 = vmatpush1.bf16.msra.mxu0 0
  %128 = vmatprep.subr.bf16.mxu0 0
  %129 = vmatpush1.bf16.msra.mxu0 0
  %130 = vmatprep.subr.bf16.mxu0 0
  %131 = vmatpush1.bf16.msra.mxu0 0
  %132 = vmatprep.subr.bf16.mxu0 0
  %133 = vmatpush1.bf16.msra.mxu0 0
  %134 = vmatprep.subr.bf16.mxu0 0
  %135 = vmatpush1.bf16.msra.mxu0 0
  %136 = vmatprep.subr.bf16.mxu0 0
  %137 = vmatpush1.bf16.msra.mxu0 0
  %138 = vmatprep.subr.bf16.mxu0 0
  %139 = vmatpush1.bf16.msra.mxu0 0
  %140 = vmatprep.mubr.bf16.mxu0 0
  %141 = vmatmul.mubr.bf16.gmra.mrb[0].mxu0 %v103
  %v142 = vpop.f32.mrb[0].mxu0
  %v143 = vadd.f32 0.0, %v142
  %v144 = vpop.f32.mrb[0].mxu0
  %v145 = vadd.f32 0.0, %v144
  %v146 = vpop.f32.mrb[0].mxu0
  %v147 = vadd.f32 0.0, %v146
  %v148 = vpop.f32.mrb[0].mxu0
  %v149 = vadd.f32 0.0, %v148
  %150 = vmatprep.mubr.bf16.mxu0 0
  %151 = vmatmul.mubr.bf16.gmra.mrb[0].mxu0 %v106
  %v152 = vpop.f32.mrb[0].mxu0
  %v153 = vadd.f32 0.0, %v152
  %v154 = vpop.f32.mrb[0].mxu0
  %v155 = vadd.f32 0.0, %v154
  %v156 = vpop.f32.mrb[0].mxu0
  %v157 = vadd.f32 0.0, %v156
  %v158 = vpop.f32.mrb[0].mxu0
  %v159 = vadd.f32 0.0, %v158
  %160 = vdwg.mxu0
  %161 = vmatprep.subr.bf16.mxu0 %v92
  %162 = vmatpush1.bf16.msra.mxu0 %v91
  %163 = vmatprep.subr.bf16.mxu0 0
  %164 = vmatpush1.bf16.msra.mxu0 0
  %165 = vmatprep.subr.bf16.mxu0 0
  %166 = vmatpush1.bf16.msra.mxu0 0
  %167 = vmatprep.subr.bf16.mxu0 0
  %168 = vmatpush1.bf16.msra.mxu0 0
  %169 = vmatprep.subr.bf16.mxu0 0
  %170 = vmatpush1.bf16.msra.mxu0 0
  %171 = vmatprep.subr.bf16.mxu0 0
  %172 = vmatpush1.bf16.msra.mxu0 0
  %173 = vmatprep.subr.bf16.mxu0 0
  %174 = vmatpush1.bf16.msra.mxu0 0
  %175 = vmatprep.subr.bf16.mxu0 0
  %176 = vmatpush1.bf16.msra.mxu0 0
  %177 = vmatprep.subr.bf16.mxu0 0
  %178 = vmatpush1.bf16.msra.mxu0 0
  %179 = vmatprep.subr.bf16.mxu0 0
  %180 = vmatpush1.bf16.msra.mxu0 0
  %181 = vmatprep.subr.bf16.mxu0 0
  %182 = vmatpush1.bf16.msra.mxu0 0
  %183 = vmatprep.subr.bf16.mxu0 0
  %184 = vmatpush1.bf16.msra.mxu0 0
  %185 = vmatprep.subr.bf16.mxu0 0
  %186 = vmatpush1.bf16.msra.mxu0 0
  %187 = vmatprep.subr.bf16.mxu0 0
  %188 = vmatpush1.bf16.msra.mxu0 0
  %189 = vmatprep.subr.bf16.mxu0 0
  %190 = vmatpush1.bf16.msra.mxu0 0
  %191 = vmatprep.subr.bf16.mxu0 0
  %192 = vmatpush1.bf16.msra.mxu0 0
  %193 = vmatprep.mubr.bf16.mxu0 0
  %194 = vmatmul.mubr.bf16.gmra.mrb[0].mxu0 %v103
  %v195 = vpop.f32.mrb[0].mxu0
  %v196 = vadd.f32 0.0, %v195
  %v197 = vpop.f32.mrb[0].mxu0
  %v198 = vadd.f32 0.0, %v197
  %v199 = vpop.f32.mrb[0].mxu0
  %v200 = vadd.f32 0.0, %v199
  %v201 = vpop.f32.mrb[0].mxu0
  %v202 = vadd.f32 0.0, %v201
  %203 = vmatprep.mubr.bf16.mxu0 0
  %204 = vmatmul.mubr.bf16.gmra.mrb[0].mxu0 %v106
  %v205 = vpop.f32.mrb[0].mxu0
  %v206 = vadd.f32 0.0, %v205
  %v207 = vpop.f32.mrb[0].mxu0
  %v208 = vadd.f32 0.0, %v207
  %v209 = vpop.f32.mrb[0].mxu0
  %v210 = vadd.f32 0.0, %v209
  %v211 = vpop.f32.mrb[0].mxu0
  %v212 = vadd.f32 0.0, %v211
  %213 = vdwg.mxu0
  %214 = vmatprep.subr.bf16.mxu0 %v94
  %215 = vmatpush1.bf16.msra.mxu0 %v93
  %216 = vmatprep.subr.bf16.mxu0 0
  %217 = vmatpush1.bf16.msra.mxu0 0
  %218 = vmatprep.subr.bf16.mxu0 0
  %219 = vmatpush1.bf16.msra.mxu0 0
  %220 = vmatprep.subr.bf16.mxu0 0
  %221 = vmatpush1.bf16.msra.mxu0 0
  %222 = vmatprep.subr.bf16.mxu0 0
  %223 = vmatpush1.bf16.msra.mxu0 0
  %224 = vmatprep.subr.bf16.mxu0 0
  %225 = vmatpush1.bf16.msra.mxu0 0
  %226 = vmatprep.subr.bf16.mxu0 0
  %227 = vmatpush1.bf16.msra.mxu0 0
  %228 = vmatprep.subr.bf16.mxu0 0
  %229 = vmatpush1.bf16.msra.mxu0 0
  %230 = vmatprep.subr.bf16.mxu0 0
  %231 = vmatpush1.bf16.msra.mxu0 0
  %232 = vmatprep.subr.bf16.mxu0 0
  %233 = vmatpush1.bf16.msra.mxu0 0
  %234 = vmatprep.subr.bf16.mxu0 0
  %235 = vmatpush1.bf16.msra.mxu0 0
  %236 = vmatprep.subr.bf16.mxu0 0
  %237 = vmatpush1.bf16.msra.mxu0 0
  %238 = vmatprep.subr.bf16.mxu0 0
  %239 = vmatpush1.bf16.msra.mxu0 0
  %240 = vmatprep.subr.bf16.mxu0 0
  %241 = vmatpush1.bf16.msra.mxu0 0
  %242 = vmatprep.subr.bf16.mxu0 0
  %243 = vmatpush1.bf16.msra.mxu0 0
  %244 = vmatprep.subr.bf16.mxu0 0
  %245 = vmatpush1.bf16.msra.mxu0 0
  %246 = vmatprep.mubr.bf16.mxu0 0
  %247 = vmatmul.mubr.bf16.gmra.mrb[0].mxu0 %v103
  %v248 = vpop.f32.mrb[0].mxu0
  %v249 = vadd.f32 0.0, %v248
  %v250 = vpop.f32.mrb[0].mxu0
  %v251 = vadd.f32 0.0, %v250
  %v252 = vpop.f32.mrb[0].mxu0
  %v253 = vadd.f32 0.0, %v252
  %v254 = vpop.f32.mrb[0].mxu0
  %v255 = vadd.f32 0.0, %v254
  %256 = vmatprep.mubr.bf16.mxu0 0
  %257 = vmatmul.mubr.bf16.gmra.mrb[0].mxu0 %v106
  %v258 = vpop.f32.mrb[0].mxu0
  %v259 = vadd.f32 0.0, %v258
  %v260 = vpop.f32.mrb[0].mxu0
  %v261 = vadd.f32 0.0, %v260
  %v262 = vpop.f32.mrb[0].mxu0
  %v263 = vadd.f32 0.0, %v262
  %v264 = vpop.f32.mrb[0].mxu0
  %v265 = vadd.f32 0.0, %v264
  %266 = vdwg.mxu0
  %v271 = vunpack.c.l.b16 %v26
  %v272 = vunpack.c.l.b16 %v27
  %v273 = vunpack.c.l.b16 %v28
  %v274 = vunpack.c.l.b16 %v29
  %v275 = vpack.c.b16 %v272, %v271
  %v276 = vpack.c.b16 %v274, %v273
  %277 = vrot.lane.b32.xlu0 %v67, 19
  %v278 = vpop.permute.xlu0 %277
  %279 = vrot.lane.b32.xlu0 %v68, 19
  %v280 = vpop.permute.xlu0 %279
  %281 = vrot.lane.b32.xlu0 %v69, 19
  %v282 = vpop.permute.xlu0 %281
  %283 = vrot.lane.b32.xlu0 %v70, 19
  %v284 = vpop.permute.xlu0 %283
  %285 = vrot.lane.b32.xlu0 %v71, 19
  %v286 = vpop.permute.xlu0 %285
  %287 = vrot.lane.b32.xlu0 %v72, 19
  %v288 = vpop.permute.xlu0 %287
  %289 = vrot.lane.b32.xlu0 %v73, 19
  %v290 = vpop.permute.xlu0 %289
  %vm291 = vcmask 154624
  %v292 = vsel %vm291, %v278, %v280
  %v293 = vsel %vm291, %v280, %v282
  %v294 = vsel %vm291, %v282, %v284
  %v295 = vsel %vm291, %v284, %v286
  %v296 = vsel %vm291, %v286, %v288
  %v297 = vsel %vm291, %v288, %v290
  %v305 = vsel %vm101, %v275, 0
  %v308 = vsel %vm101, %v276, 0
  %310 = vmatprep.subr.bf16.mxu0 %v293
  %311 = vmatpush1.bf16.msra.mxu0 %v292
  %312 = vmatprep.subr.bf16.mxu0 0
  %313 = vmatpush1.bf16.msra.mxu0 0
  %314 = vmatprep.subr.bf16.mxu0 0
  %315 = vmatpush1.bf16.msra.mxu0 0
  %316 = vmatprep.subr.bf16.mxu0 0
  %317 = vmatpush1.bf16.msra.mxu0 0
  %318 = vmatprep.subr.bf16.mxu0 0
  %319 = vmatpush1.bf16.msra.mxu0 0
  %320 = vmatprep.subr.bf16.mxu0 0
  %321 = vmatpush1.bf16.msra.mxu0 0
  %322 = vmatprep.subr.bf16.mxu0 0
  %323 = vmatpush1.bf16.msra.mxu0 0
  %324 = vmatprep.subr.bf16.mxu0 0
  %325 = vmatpush1.bf16.msra.mxu0 0
  %326 = vmatprep.subr.bf16.mxu0 0
  %327 = vmatpush1.bf16.msra.mxu0 0
  %328 = vmatprep.subr.bf16.mxu0 0
  %329 = vmatpush1.bf16.msra.mxu0 0
  %330 = vmatprep.subr.bf16.mxu0 0
  %331 = vmatpush1.bf16.msra.mxu0 0
  %332 = vmatprep.subr.bf16.mxu0 0
  %333 = vmatpush1.bf16.msra.mxu0 0
  %334 = vmatprep.subr.bf16.mxu0 0
  %335 = vmatpush1.bf16.msra.mxu0 0
  %336 = vmatprep.subr.bf16.mxu0 0
  %337 = vmatpush1.bf16.msra.mxu0 0
  %338 = vmatprep.subr.bf16.mxu0 0
  %339 = vmatpush1.bf16.msra.mxu0 0
  %340 = vmatprep.subr.bf16.mxu0 0
  %341 = vmatpush1.bf16.msra.mxu0 0
  %342 = vmatprep.mubr.bf16.mxu0 0
  %343 = vmatmul.mubr.bf16.gmra.mrb[0].mxu0 %v305
  %v344 = vpop.f32.mrb[0].mxu0
  %v345 = vadd.f32 %v143, %v344
  %v346 = vpop.f32.mrb[0].mxu0
  %v347 = vadd.f32 %v145, %v346
  %v348 = vpop.f32.mrb[0].mxu0
  %v349 = vadd.f32 %v147, %v348
  %v350 = vpop.f32.mrb[0].mxu0
  %v351 = vadd.f32 %v149, %v350
  %352 = vmatprep.mubr.bf16.mxu0 0
  %353 = vmatmul.mubr.bf16.gmra.mrb[0].mxu0 %v308
  %v354 = vpop.f32.mrb[0].mxu0
  %v355 = vadd.f32 %v153, %v354
  %v356 = vpop.f32.mrb[0].mxu0
  %v357 = vadd.f32 %v155, %v356
  %v358 = vpop.f32.mrb[0].mxu0
  %v359 = vadd.f32 %v157, %v358
  %v360 = vpop.f32.mrb[0].mxu0
  %v361 = vadd.f32 %v159, %v360
  %362 = vdwg.mxu0
  %363 = vmatprep.subr.bf16.mxu0 %v295
  %364 = vmatpush1.bf16.msra.mxu0 %v294
  %365 = vmatprep.subr.bf16.mxu0 0
  %366 = vmatpush1.bf16.msra.mxu0 0
  %367 = vmatprep.subr.bf16.mxu0 0
  %368 = vmatpush1.bf16.msra.mxu0 0
  %369 = vmatprep.subr.bf16.mxu0 0
  %370 = vmatpush1.bf16.msra.mxu0 0
  %371 = vmatprep.subr.bf16.mxu0 0
  %372 = vmatpush1.bf16.msra.mxu0 0
  %373 = vmatprep.subr.bf16.mxu0 0
  %374 = vmatpush1.bf16.msra.mxu0 0
  %375 = vmatprep.subr.bf16.mxu0 0
  %376 = vmatpush1.bf16.msra.mxu0 0
  %377 = vmatprep.subr.bf16.mxu0 0
  %378 = vmatpush1.bf16.msra.mxu0 0
  %379 = vmatprep.subr.bf16.mxu0 0
  %380 = vmatpush1.bf16.msra.mxu0 0
  %381 = vmatprep.subr.bf16.mxu0 0
  %382 = vmatpush1.bf16.msra.mxu0 0
  %383 = vmatprep.subr.bf16.mxu0 0
  %384 = vmatpush1.bf16.msra.mxu0 0
  %385 = vmatprep.subr.bf16.mxu0 0
  %386 = vmatpush1.bf16.msra.mxu0 0
  %387 = vmatprep.subr.bf16.mxu0 0
  %388 = vmatpush1.bf16.msra.mxu0 0
  %389 = vmatprep.subr.bf16.mxu0 0
  %390 = vmatpush1.bf16.msra.mxu0 0
  %391 = vmatprep.subr.bf16.mxu0 0
  %392 = vmatpush1.bf16.msra.mxu0 0
  %393 = vmatprep.subr.bf16.mxu0 0
  %394 = vmatpush1.bf16.msra.mxu0 0
  %395 = vmatprep.mubr.bf16.mxu0 0
  %396 = vmatmul.mubr.bf16.gmra.mrb[0].mxu0 %v305
  %v397 = vpop.f32.mrb[0].mxu0
  %v398 = vadd.f32 %v196, %v397
  %v399 = vpop.f32.mrb[0].mxu0
  %v400 = vadd.f32 %v198, %v399
  %v401 = vpop.f32.mrb[0].mxu0
  %v402 = vadd.f32 %v200, %v401
  %v403 = vpop.f32.mrb[0].mxu0
  %v404 = vadd.f32 %v202, %v403
  %405 = vmatprep.mubr.bf16.mxu0 0
  %406 = vmatmul.mubr.bf16.gmra.mrb[0].mxu0 %v308
  %v407 = vpop.f32.mrb[0].mxu0
  %v408 = vadd.f32 %v206, %v407
  %v409 = vpop.f32.mrb[0].mxu0
  %v410 = vadd.f32 %v208, %v409
  %v411 = vpop.f32.mrb[0].mxu0
  %v412 = vadd.f32 %v210, %v411
  %v413 = vpop.f32.mrb[0].mxu0
  %v414 = vadd.f32 %v212, %v413
  %415 = vdwg.mxu0
  %416 = vmatprep.subr.bf16.mxu0 %v297
  %417 = vmatpush1.bf16.msra.mxu0 %v296
  %418 = vmatprep.subr.bf16.mxu0 0
  %419 = vmatpush1.bf16.msra.mxu0 0
  %420 = vmatprep.subr.bf16.mxu0 0
  %421 = vmatpush1.bf16.msra.mxu0 0
  %422 = vmatprep.subr.bf16.mxu0 0
  %423 = vmatpush1.bf16.msra.mxu0 0
  %424 = vmatprep.subr.bf16.mxu0 0
  %425 = vmatpush1.bf16.msra.mxu0 0
  %426 = vmatprep.subr.bf16.mxu0 0
  %427 = vmatpush1.bf16.msra.mxu0 0
  %428 = vmatprep.subr.bf16.mxu0 0
  %429 = vmatpush1.bf16.msra.mxu0 0
  %430 = vmatprep.subr.bf16.mxu0 0
  %431 = vmatpush1.bf16.msra.mxu0 0
  %432 = vmatprep.subr.bf16.mxu0 0
  %433 = vmatpush1.bf16.msra.mxu0 0
  %434 = vmatprep.subr.bf16.mxu0 0
  %435 = vmatpush1.bf16.msra.mxu0 0
  %436 = vmatprep.subr.bf16.mxu0 0
  %437 = vmatpush1.bf16.msra.mxu0 0
  %438 = vmatprep.subr.bf16.mxu0 0
  %439 = vmatpush1.bf16.msra.mxu0 0
  %440 = vmatprep.subr.bf16.mxu0 0
  %441 = vmatpush1.bf16.msra.mxu0 0
  %442 = vmatprep.subr.bf16.mxu0 0
  %443 = vmatpush1.bf16.msra.mxu0 0
  %444 = vmatprep.subr.bf16.mxu0 0
  %445 = vmatpush1.bf16.msra.mxu0 0
  %446 = vmatprep.subr.bf16.mxu0 0
  %447 = vmatpush1.bf16.msra.mxu0 0
  %448 = vmatprep.mubr.bf16.mxu0 0
  %449 = vmatmul.mubr.bf16.gmra.mrb[0].mxu0 %v305
  %v450 = vpop.f32.mrb[0].mxu0
  %v451 = vadd.f32 %v249, %v450
  %v452 = vpop.f32.mrb[0].mxu0
  %v453 = vadd.f32 %v251, %v452
  %v454 = vpop.f32.mrb[0].mxu0
  %v455 = vadd.f32 %v253, %v454
  %v456 = vpop.f32.mrb[0].mxu0
  %v457 = vadd.f32 %v255, %v456
  %458 = vmatprep.mubr.bf16.mxu0 0
  %459 = vmatmul.mubr.bf16.gmra.mrb[0].mxu0 %v308
  %v460 = vpop.f32.mrb[0].mxu0
  %v461 = vadd.f32 %v259, %v460
  %v462 = vpop.f32.mrb[0].mxu0
  %v463 = vadd.f32 %v261, %v462
  %v464 = vpop.f32.mrb[0].mxu0
  %v465 = vadd.f32 %v263, %v464
  %v466 = vpop.f32.mrb[0].mxu0
  %v467 = vadd.f32 %v265, %v466
  %468 = vdwg.mxu0
  %s469 = scalar_lea.vmem %s1, 32
  %v470 = vld [vmem:[%s469] sm:$0xf]
  %v471 = vld [vmem:[%s469 + $0x4] sm:$0xf]
  %v472 = vld [vmem:[%s469 + $0x8] sm:$0xf]
  %v473 = vld [vmem:[%s469 + $0xc] sm:$0xf]
  %v478 = vunpack.c.l.b16 %v470
  %v479 = vunpack.c.l.b16 %v471
  %v480 = vunpack.c.l.b16 %v472
  %v481 = vunpack.c.l.b16 %v473
  %v482 = vpack.c.b16 %v479, %v478
  %v483 = vpack.c.b16 %v481, %v480
  %484 = vrot.lane.b32.xlu0 %v67, 17
  %v485 = vpop.permute.xlu0 %484
  %486 = vrot.lane.b32.xlu0 %v68, 17
  %v487 = vpop.permute.xlu0 %486
  %488 = vrot.lane.b32.xlu0 %v69, 17
  %v489 = vpop.permute.xlu0 %488
  %490 = vrot.lane.b32.xlu0 %v70, 17
  %v491 = vpop.permute.xlu0 %490
  %492 = vrot.lane.b32.xlu0 %v71, 17
  %v493 = vpop.permute.xlu0 %492
  %494 = vrot.lane.b32.xlu0 %v72, 17
  %v495 = vpop.permute.xlu0 %494
  %496 = vrot.lane.b32.xlu0 %v73, 17
  %v497 = vpop.permute.xlu0 %496
  %vm498 = vcmask 138240
  %v499 = vsel %vm498, %v485, %v487
  %v500 = vsel %vm498, %v487, %v489
  %v501 = vsel %vm498, %v489, %v491
  %v502 = vsel %vm498, %v491, %v493
  %v503 = vsel %vm498, %v493, %v495
  %v504 = vsel %vm498, %v495, %v497
  %v512 = vsel %vm101, %v482, 0
  %v515 = vsel %vm101, %v483, 0
  %517 = vmatprep.subr.bf16.mxu0 %v500
  %518 = vmatpush1.bf16.msra.mxu0 %v499
  %519 = vmatprep.subr.bf16.mxu0 0
  %520 = vmatpush1.bf16.msra.mxu0 0
  %521 = vmatprep.subr.bf16.mxu0 0
  %522 = vmatpush1.bf16.msra.mxu0 0
  %523 = vmatprep.subr.bf16.mxu0 0
  %524 = vmatpush1.bf16.msra.mxu0 0
  %525 = vmatprep.subr.bf16.mxu0 0
  %526 = vmatpush1.bf16.msra.mxu0 0
  %527 = vmatprep.subr.bf16.mxu0 0
  %528 = vmatpush1.bf16.msra.mxu0 0
  %529 = vmatprep.subr.bf16.mxu0 0
  %530 = vmatpush1.bf16.msra.mxu0 0
  %531 = vmatprep.subr.bf16.mxu0 0
  %532 = vmatpush1.bf16.msra.mxu0 0
  %533 = vmatprep.subr.bf16.mxu0 0
  %534 = vmatpush1.bf16.msra.mxu0 0
  %535 = vmatprep.subr.bf16.mxu0 0
  %536 = vmatpush1.bf16.msra.mxu0 0
  %537 = vmatprep.subr.bf16.mxu0 0
  %538 = vmatpush1.bf16.msra.mxu0 0
  %539 = vmatprep.subr.bf16.mxu0 0
  %540 = vmatpush1.bf16.msra.mxu0 0
  %541 = vmatprep.subr.bf16.mxu0 0
  %542 = vmatpush1.bf16.msra.mxu0 0
  %543 = vmatprep.subr.bf16.mxu0 0
  %544 = vmatpush1.bf16.msra.mxu0 0
  %545 = vmatprep.subr.bf16.mxu0 0
  %546 = vmatpush1.bf16.msra.mxu0 0
  %547 = vmatprep.subr.bf16.mxu0 0
  %548 = vmatpush1.bf16.msra.mxu0 0
  %549 = vmatprep.mubr.bf16.mxu0 0
  %550 = vmatmul.mubr.bf16.gmra.mrb[0].mxu0 %v512
  %v551 = vpop.f32.mrb[0].mxu0
  %v552 = vadd.f32 0.0, %v551
  %v553 = vpop.f32.mrb[0].mxu0
  %v554 = vadd.f32 0.0, %v553
  %v555 = vpop.f32.mrb[0].mxu0
  %v556 = vadd.f32 0.0, %v555
  %v557 = vpop.f32.mrb[0].mxu0
  %v558 = vadd.f32 0.0, %v557
  %559 = vmatprep.mubr.bf16.mxu0 0
  %560 = vmatmul.mubr.bf16.gmra.mrb[0].mxu0 %v515
  %v561 = vpop.f32.mrb[0].mxu0
  %v562 = vadd.f32 0.0, %v561
  %v563 = vpop.f32.mrb[0].mxu0
  %v564 = vadd.f32 0.0, %v563
  %v565 = vpop.f32.mrb[0].mxu0
  %v566 = vadd.f32 0.0, %v565
  %v567 = vpop.f32.mrb[0].mxu0
  %v568 = vadd.f32 0.0, %v567
  %569 = vdwg.mxu0
  %570 = vmatprep.subr.bf16.mxu0 %v502
  %571 = vmatpush1.bf16.msra.mxu0 %v501
  %572 = vmatprep.subr.bf16.mxu0 0
  %573 = vmatpush1.bf16.msra.mxu0 0
  %574 = vmatprep.subr.bf16.mxu0 0
  %575 = vmatpush1.bf16.msra.mxu0 0
  %576 = vmatprep.subr.bf16.mxu0 0
  %577 = vmatpush1.bf16.msra.mxu0 0
  %578 = vmatprep.subr.bf16.mxu0 0
  %579 = vmatpush1.bf16.msra.mxu0 0
  %580 = vmatprep.subr.bf16.mxu0 0
  %581 = vmatpush1.bf16.msra.mxu0 0
  %582 = vmatprep.subr.bf16.mxu0 0
  %583 = vmatpush1.bf16.msra.mxu0 0
  %584 = vmatprep.subr.bf16.mxu0 0
  %585 = vmatpush1.bf16.msra.mxu0 0
  %586 = vmatprep.subr.bf16.mxu0 0
  %587 = vmatpush1.bf16.msra.mxu0 0
  %588 = vmatprep.subr.bf16.mxu0 0
  %589 = vmatpush1.bf16.msra.mxu0 0
  %590 = vmatprep.subr.bf16.mxu0 0
  %591 = vmatpush1.bf16.msra.mxu0 0
  %592 = vmatprep.subr.bf16.mxu0 0
  %593 = vmatpush1.bf16.msra.mxu0 0
  %594 = vmatprep.subr.bf16.mxu0 0
  %595 = vmatpush1.bf16.msra.mxu0 0
  %596 = vmatprep.subr.bf16.mxu0 0
  %597 = vmatpush1.bf16.msra.mxu0 0
  %598 = vmatprep.subr.bf16.mxu0 0
  %599 = vmatpush1.bf16.msra.mxu0 0
  %600 = vmatprep.subr.bf16.mxu0 0
  %601 = vmatpush1.bf16.msra.mxu0 0
  %602 = vmatprep.mubr.bf16.mxu0 0
  %603 = vmatmul.mubr.bf16.gmra.mrb[0].mxu0 %v512
  %v604 = vpop.f32.mrb[0].mxu0
  %v605 = vadd.f32 0.0, %v604
  %v606 = vpop.f32.mrb[0].mxu0
  %v607 = vadd.f32 0.0, %v606
  %v608 = vpop.f32.mrb[0].mxu0
  %v609 = vadd.f32 0.0, %v608
  %v610 = vpop.f32.mrb[0].mxu0
  %v611 = vadd.f32 0.0, %v610
  %612 = vmatprep.mubr.bf16.mxu0 0
  %613 = vmatmul.mubr.bf16.gmra.mrb[0].mxu0 %v515
  %v614 = vpop.f32.mrb[0].mxu0
  %v615 = vadd.f32 0.0, %v614
  %v616 = vpop.f32.mrb[0].mxu0
  %v617 = vadd.f32 0.0, %v616
  %v618 = vpop.f32.mrb[0].mxu0
  %v619 = vadd.f32 0.0, %v618
  %v620 = vpop.f32.mrb[0].mxu0
  %v621 = vadd.f32 0.0, %v620
  %622 = vdwg.mxu0
  %623 = vmatprep.subr.bf16.mxu0 %v504
  %624 = vmatpush1.bf16.msra.mxu0 %v503
  %625 = vmatprep.subr.bf16.mxu0 0
  %626 = vmatpush1.bf16.msra.mxu0 0
  %627 = vmatprep.subr.bf16.mxu0 0
  %628 = vmatpush1.bf16.msra.mxu0 0
  %629 = vmatprep.subr.bf16.mxu0 0
  %630 = vmatpush1.bf16.msra.mxu0 0
  %631 = vmatprep.subr.bf16.mxu0 0
  %632 = vmatpush1.bf16.msra.mxu0 0
  %633 = vmatprep.subr.bf16.mxu0 0
  %634 = vmatpush1.bf16.msra.mxu0 0
  %635 = vmatprep.subr.bf16.mxu0 0
  %636 = vmatpush1.bf16.msra.mxu0 0
  %637 = vmatprep.subr.bf16.mxu0 0
  %638 = vmatpush1.bf16.msra.mxu0 0
  %639 = vmatprep.subr.bf16.mxu0 0
  %640 = vmatpush1.bf16.msra.mxu0 0
  %641 = vmatprep.subr.bf16.mxu0 0
  %642 = vmatpush1.bf16.msra.mxu0 0
  %643 = vmatprep.subr.bf16.mxu0 0
  %644 = vmatpush1.bf16.msra.mxu0 0
  %645 = vmatprep.subr.bf16.mxu0 0
  %646 = vmatpush1.bf16.msra.mxu0 0
  %647 = vmatprep.subr.bf16.mxu0 0
  %648 = vmatpush1.bf16.msra.mxu0 0
  %649 = vmatprep.subr.bf16.mxu0 0
  %650 = vmatpush1.bf16.msra.mxu0 0
  %651 = vmatprep.subr.bf16.mxu0 0
  %652 = vmatpush1.bf16.msra.mxu0 0
  %653 = vmatprep.subr.bf16.mxu0 0
  %654 = vmatpush1.bf16.msra.mxu0 0
  %655 = vmatprep.mubr.bf16.mxu0 0
  %656 = vmatmul.mubr.bf16.gmra.mrb[0].mxu0 %v512
  %v657 = vpop.f32.mrb[0].mxu0
  %v658 = vadd.f32 0.0, %v657
  %v659 = vpop.f32.mrb[0].mxu0
  %v660 = vadd.f32 0.0, %v659
  %v661 = vpop.f32.mrb[0].mxu0
  %v662 = vadd.f32 0.0, %v661
  %v663 = vpop.f32.mrb[0].mxu0
  %v664 = vadd.f32 0.0, %v663
  %665 = vmatprep.mubr.bf16.mxu0 0
  %666 = vmatmul.mubr.bf16.gmra.mrb[0].mxu0 %v515
  %v667 = vpop.f32.mrb[0].mxu0
  %v668 = vadd.f32 0.0, %v667
  %v669 = vpop.f32.mrb[0].mxu0
  %v670 = vadd.f32 0.0, %v669
  %v671 = vpop.f32.mrb[0].mxu0
  %v672 = vadd.f32 0.0, %v671
  %v673 = vpop.f32.mrb[0].mxu0
  %v674 = vadd.f32 0.0, %v673
  %675 = vdwg.mxu0
  %v676 = vadd.f32 %v345, %v552
  %v677 = vadd.f32 %v347, %v554
  %v678 = vadd.f32 %v398, %v605
  %v679 = vadd.f32 %v400, %v607
  %v680 = vadd.f32 %v451, %v658
  %v681 = vadd.f32 %v453, %v660
  %v682 = vadd.f32 %v349, %v556
  %v683 = vadd.f32 %v351, %v558
  %v684 = vadd.f32 %v402, %v609
  %v685 = vadd.f32 %v404, %v611
  %v686 = vadd.f32 %v455, %v662
  %v687 = vadd.f32 %v457, %v664
  %v688 = vadd.f32 %v355, %v562
  %v689 = vadd.f32 %v357, %v564
  %v690 = vadd.f32 %v408, %v615
  %v691 = vadd.f32 %v410, %v617
  %v692 = vadd.f32 %v461, %v668
  %v693 = vadd.f32 %v463, %v670
  %v694 = vadd.f32 %v359, %v566
  %v695 = vadd.f32 %v361, %v568
  %v696 = vadd.f32 %v412, %v619
  %v697 = vadd.f32 %v414, %v621
  %v698 = vadd.f32 %v465, %v672
  %v699 = vadd.f32 %v467, %v674
  %s700 = scalar_lea.vmem %s1, 48
  %v701 = vld [vmem:[%s700] sm:$0xf]
  %v702 = vld [vmem:[%s700 + $0x4] sm:$0xf]
  %v703 = vld [vmem:[%s700 + $0x8] sm:$0xf]
  %v704 = vld [vmem:[%s700 + $0xc] sm:$0xf]
  %v709 = vunpack.c.l.b16 %v701
  %v710 = vunpack.c.l.b16 %v702
  %v711 = vunpack.c.l.b16 %v703
  %v712 = vunpack.c.l.b16 %v704
  %v713 = vpack.c.b16 %v710, %v709
  %v714 = vpack.c.b16 %v712, %v711
  %715 = vrot.lane.b32.xlu0 %v67, 1
  %v716 = vpop.permute.xlu0 %715
  %717 = vrot.lane.b32.xlu0 %v68, 1
  %v718 = vpop.permute.xlu0 %717
  %719 = vrot.lane.b32.xlu0 %v69, 1
  %v720 = vpop.permute.xlu0 %719
  %721 = vrot.lane.b32.xlu0 %v70, 1
  %v722 = vpop.permute.xlu0 %721
  %723 = vrot.lane.b32.xlu0 %v71, 1
  %v724 = vpop.permute.xlu0 %723
  %725 = vrot.lane.b32.xlu0 %v72, 1
  %v726 = vpop.permute.xlu0 %725
  %727 = vrot.lane.b32.xlu0 %v73, 1
  %v728 = vpop.permute.xlu0 %727
  %vm729 = vcmask 7168
  %v730 = vsel %vm729, %v716, %v718
  %v731 = vsel %vm729, %v718, %v720
  %v732 = vsel %vm729, %v720, %v722
  %v733 = vsel %vm729, %v722, %v724
  %v734 = vsel %vm729, %v724, %v726
  %v735 = vsel %vm729, %v726, %v728
  %v743 = vsel %vm101, %v713, 0
  %v746 = vsel %vm101, %v714, 0
  %748 = vmatprep.subr.bf16.mxu0 %v731
  %749 = vmatpush1.bf16.msra.mxu0 %v730
  %750 = vmatprep.subr.bf16.mxu0 0
  %751 = vmatpush1.bf16.msra.mxu0 0
  %752 = vmatprep.subr.bf16.mxu0 0
  %753 = vmatpush1.bf16.msra.mxu0 0
  %754 = vmatprep.subr.bf16.mxu0 0
  %755 = vmatpush1.bf16.msra.mxu0 0
  %756 = vmatprep.subr.bf16.mxu0 0
  %757 = vmatpush1.bf16.msra.mxu0 0
  %758 = vmatprep.subr.bf16.mxu0 0
  %759 = vmatpush1.bf16.msra.mxu0 0
  %760 = vmatprep.subr.bf16.mxu0 0
  %761 = vmatpush1.bf16.msra.mxu0 0
  %762 = vmatprep.subr.bf16.mxu0 0
  %763 = vmatpush1.bf16.msra.mxu0 0
  %764 = vmatprep.subr.bf16.mxu0 0
  %765 = vmatpush1.bf16.msra.mxu0 0
  %766 = vmatprep.subr.bf16.mxu0 0
  %767 = vmatpush1.bf16.msra.mxu0 0
  %768 = vmatprep.subr.bf16.mxu0 0
  %769 = vmatpush1.bf16.msra.mxu0 0
  %770 = vmatprep.subr.bf16.mxu0 0
  %771 = vmatpush1.bf16.msra.mxu0 0
  %772 = vmatprep.subr.bf16.mxu0 0
  %773 = vmatpush1.bf16.msra.mxu0 0
  %774 = vmatprep.subr.bf16.mxu0 0
  %775 = vmatpush1.bf16.msra.mxu0 0
  %776 = vmatprep.subr.bf16.mxu0 0
  %777 = vmatpush1.bf16.msra.mxu0 0
  %778 = vmatprep.subr.bf16.mxu0 0
  %779 = vmatpush1.bf16.msra.mxu0 0
  %780 = vmatprep.mubr.bf16.mxu0 0
  %781 = vmatmul.mubr.bf16.gmra.mrb[0].mxu0 %v743
  %v782 = vpop.f32.mrb[0].mxu0
  %v783 = vadd.f32 0.0, %v782
  %v784 = vpop.f32.mrb[0].mxu0
  %v785 = vadd.f32 0.0, %v784
  %v786 = vpop.f32.mrb[0].mxu0
  %v787 = vadd.f32 0.0, %v786
  %v788 = vpop.f32.mrb[0].mxu0
  %v789 = vadd.f32 0.0, %v788
  %790 = vmatprep.mubr.bf16.mxu0 0
  %791 = vmatmul.mubr.bf16.gmra.mrb[0].mxu0 %v746
  %v792 = vpop.f32.mrb[0].mxu0
  %v793 = vadd.f32 0.0, %v792
  %v794 = vpop.f32.mrb[0].mxu0
  %v795 = vadd.f32 0.0, %v794
  %v796 = vpop.f32.mrb[0].mxu0
  %v797 = vadd.f32 0.0, %v796
  %v798 = vpop.f32.mrb[0].mxu0
  %v799 = vadd.f32 0.0, %v798
  %800 = vdwg.mxu0
  %801 = vmatprep.subr.bf16.mxu0 %v733
  %802 = vmatpush1.bf16.msra.mxu0 %v732
  %803 = vmatprep.subr.bf16.mxu0 0
  %804 = vmatpush1.bf16.msra.mxu0 0
  %805 = vmatprep.subr.bf16.mxu0 0
  %806 = vmatpush1.bf16.msra.mxu0 0
  %807 = vmatprep.subr.bf16.mxu0 0
  %808 = vmatpush1.bf16.msra.mxu0 0
  %809 = vmatprep.subr.bf16.mxu0 0
  %810 = vmatpush1.bf16.msra.mxu0 0
  %811 = vmatprep.subr.bf16.mxu0 0
  %812 = vmatpush1.bf16.msra.mxu0 0
  %813 = vmatprep.subr.bf16.mxu0 0
  %814 = vmatpush1.bf16.msra.mxu0 0
  %815 = vmatprep.subr.bf16.mxu0 0
  %816 = vmatpush1.bf16.msra.mxu0 0
  %817 = vmatprep.subr.bf16.mxu0 0
  %818 = vmatpush1.bf16.msra.mxu0 0
  %819 = vmatprep.subr.bf16.mxu0 0
  %820 = vmatpush1.bf16.msra.mxu0 0
  %821 = vmatprep.subr.bf16.mxu0 0
  %822 = vmatpush1.bf16.msra.mxu0 0
  %823 = vmatprep.subr.bf16.mxu0 0
  %824 = vmatpush1.bf16.msra.mxu0 0
  %825 = vmatprep.subr.bf16.mxu0 0
  %826 = vmatpush1.bf16.msra.mxu0 0
  %827 = vmatprep.subr.bf16.mxu0 0
  %828 = vmatpush1.bf16.msra.mxu0 0
  %829 = vmatprep.subr.bf16.mxu0 0
  %830 = vmatpush1.bf16.msra.mxu0 0
  %831 = vmatprep.subr.bf16.mxu0 0
  %832 = vmatpush1.bf16.msra.mxu0 0
  %833 = vmatprep.mubr.bf16.mxu0 0
  %834 = vmatmul.mubr.bf16.gmra.mrb[0].mxu0 %v743
  %v835 = vpop.f32.mrb[0].mxu0
  %v836 = vadd.f32 0.0, %v835
  %v837 = vpop.f32.mrb[0].mxu0
  %v838 = vadd.f32 0.0, %v837
  %v839 = vpop.f32.mrb[0].mxu0
  %v840 = vadd.f32 0.0, %v839
  %v841 = vpop.f32.mrb[0].mxu0
  %v842 = vadd.f32 0.0, %v841
  %843 = vmatprep.mubr.bf16.mxu0 0
  %844 = vmatmul.mubr.bf16.gmra.mrb[0].mxu0 %v746
  %v845 = vpop.f32.mrb[0].mxu0
  %v846 = vadd.f32 0.0, %v845
  %v847 = vpop.f32.mrb[0].mxu0
  %v848 = vadd.f32 0.0, %v847
  %v849 = vpop.f32.mrb[0].mxu0
  %v850 = vadd.f32 0.0, %v849
  %v851 = vpop.f32.mrb[0].mxu0
  %v852 = vadd.f32 0.0, %v851
  %853 = vdwg.mxu0
  %854 = vmatprep.subr.bf16.mxu0 %v735
  %855 = vmatpush1.bf16.msra.mxu0 %v734
  %856 = vmatprep.subr.bf16.mxu0 0
  %857 = vmatpush1.bf16.msra.mxu0 0
  %858 = vmatprep.subr.bf16.mxu0 0
  %859 = vmatpush1.bf16.msra.mxu0 0
  %860 = vmatprep.subr.bf16.mxu0 0
  %861 = vmatpush1.bf16.msra.mxu0 0
  %862 = vmatprep.subr.bf16.mxu0 0
  %863 = vmatpush1.bf16.msra.mxu0 0
  %864 = vmatprep.subr.bf16.mxu0 0
  %865 = vmatpush1.bf16.msra.mxu0 0
  %866 = vmatprep.subr.bf16.mxu0 0
  %867 = vmatpush1.bf16.msra.mxu0 0
  %868 = vmatprep.subr.bf16.mxu0 0
  %869 = vmatpush1.bf16.msra.mxu0 0
  %870 = vmatprep.subr.bf16.mxu0 0
  %871 = vmatpush1.bf16.msra.mxu0 0
  %872 = vmatprep.subr.bf16.mxu0 0
  %873 = vmatpush1.bf16.msra.mxu0 0
  %874 = vmatprep.subr.bf16.mxu0 0
  %875 = vmatpush1.bf16.msra.mxu0 0
  %876 = vmatprep.subr.bf16.mxu0 0
  %877 = vmatpush1.bf16.msra.mxu0 0
  %878 = vmatprep.subr.bf16.mxu0 0
  %879 = vmatpush1.bf16.msra.mxu0 0
  %880 = vmatprep.subr.bf16.mxu0 0
  %881 = vmatpush1.bf16.msra.mxu0 0
  %882 = vmatprep.subr.bf16.mxu0 0
  %883 = vmatpush1.bf16.msra.mxu0 0
  %884 = vmatprep.subr.bf16.mxu0 0
  %885 = vmatpush1.bf16.msra.mxu0 0
  %886 = vmatprep.mubr.bf16.mxu0 0
  %887 = vmatmul.mubr.bf16.gmra.mrb[0].mxu0 %v743
  %v888 = vpop.f32.mrb[0].mxu0
  %v889 = vadd.f32 0.0, %v888
  %v890 = vpop.f32.mrb[0].mxu0
  %v891 = vadd.f32 0.0, %v890
  %v892 = vpop.f32.mrb[0].mxu0
  %v893 = vadd.f32 0.0, %v892
  %v894 = vpop.f32.mrb[0].mxu0
  %v895 = vadd.f32 0.0, %v894
  %896 = vmatprep.mubr.bf16.mxu0 0
  %897 = vmatmul.mubr.bf16.gmra.mrb[0].mxu0 %v746
  %v898 = vpop.f32.mrb[0].mxu0
  %v899 = vadd.f32 0.0, %v898
  %v900 = vpop.f32.mrb[0].mxu0
  %v901 = vadd.f32 0.0, %v900
  %v902 = vpop.f32.mrb[0].mxu0
  %v903 = vadd.f32 0.0, %v902
  %v904 = vpop.f32.mrb[0].mxu0
  %v905 = vadd.f32 0.0, %v904
  %906 = vdwg.mxu0
  %v907 = vadd.f32 %v676, %v783
  %v908 = vadd.f32 %v677, %v785
  %v909 = vadd.f32 %v678, %v836
  %v910 = vadd.f32 %v679, %v838
  %v911 = vadd.f32 %v680, %v889
  %v912 = vadd.f32 %v681, %v891
  %v913 = vadd.f32 %v682, %v787
  %v914 = vadd.f32 %v683, %v789
  %v915 = vadd.f32 %v684, %v840
  %v916 = vadd.f32 %v685, %v842
  %v917 = vadd.f32 %v686, %v893
  %v918 = vadd.f32 %v687, %v895
  %v919 = vadd.f32 %v688, %v793
  %v920 = vadd.f32 %v689, %v795
  %v921 = vadd.f32 %v690, %v846
  %v922 = vadd.f32 %v691, %v848
  %v923 = vadd.f32 %v692, %v899
  %v924 = vadd.f32 %v693, %v901
  %v925 = vadd.f32 %v694, %v797
  %v926 = vadd.f32 %v695, %v799
  %v927 = vadd.f32 %v696, %v850
  %v928 = vadd.f32 %v697, %v852
  %v929 = vadd.f32 %v698, %v903
  %v930 = vadd.f32 %v699, %v905
  %v931 = vld [vmem:[%s0 + $0x4] sm:$0xff]
  %v932 = vld [vmem:[%s0 + $0xc] sm:$0xff]
  %v933 = vld [vmem:[%s0 + $0x14] sm:$0xff]
  %v934 = vld [vmem:[%s0 + $0x24] sm:$0xff]
  %v935 = vld [vmem:[%s0 + $0x2c] sm:$0xff]
  %v936 = vld [vmem:[%s0 + $0x34] sm:$0xff]
  %s937 = scalar_lea.vmem %s1, 64
  %v938 = vld [vmem:[%s937] sm:$0xf]
  %v939 = vld [vmem:[%s937 + $0x4] sm:$0xf]
  %v940 = vld [vmem:[%s937 + $0x8] sm:$0xf]
  %v941 = vld [vmem:[%s937 + $0xc] sm:$0xf]
  %v946 = vunpack.c.l.b16 %v938
  %v947 = vunpack.c.l.b16 %v939
  %v948 = vunpack.c.l.b16 %v940
  %v949 = vunpack.c.l.b16 %v941
  %v950 = vpack.c.b16 %v947, %v946
  %v951 = vpack.c.b16 %v949, %v948
  %v958 = vunpack.c.l.b16 %v931
  %v959 = vunpack.c.h.b16 %v931
  %v960 = vunpack.c.l.b16 %v932
  %v961 = vunpack.c.h.b16 %v932
  %v962 = vunpack.c.l.b16 %v933
  %v963 = vunpack.c.h.b16 %v933
  %v964 = vunpack.c.l.b16 %v934
  %v965 = vunpack.c.h.b16 %v934
  %v966 = vunpack.c.l.b16 %v935
  %v967 = vunpack.c.h.b16 %v935
  %v968 = vunpack.c.l.b16 %v936
  %v969 = vunpack.c.h.b16 %v936
  %v970 = vpack.c.b16 %v964, %v958
  %v971 = vpack.c.b16 %v965, %v959
  %v972 = vpack.c.b16 %v966, %v960
  %v973 = vpack.c.b16 %v967, %v961
  %v974 = vpack.c.b16 %v968, %v962
  %v975 = vpack.c.b16 %v969, %v963
  %v983 = vsel %vm101, %v950, 0
  %v986 = vsel %vm101, %v951, 0
  %988 = vmatprep.subr.bf16.mxu0 %v971
  %989 = vmatpush1.bf16.msra.mxu0 %v970
  %990 = vmatprep.subr.bf16.mxu0 0
  %991 = vmatpush1.bf16.msra.mxu0 0
  %992 = vmatprep.subr.bf16.mxu0 0
  %993 = vmatpush1.bf16.msra.mxu0 0
  %994 = vmatprep.subr.bf16.mxu0 0
  %995 = vmatpush1.bf16.msra.mxu0 0
  %996 = vmatprep.subr.bf16.mxu0 0
  %997 = vmatpush1.bf16.msra.mxu0 0
  %998 = vmatprep.subr.bf16.mxu0 0
  %999 = vmatpush1.bf16.msra.mxu0 0
  %1000 = vmatprep.subr.bf16.mxu0 0
  %1001 = vmatpush1.bf16.msra.mxu0 0
  %1002 = vmatprep.subr.bf16.mxu0 0
  %1003 = vmatpush1.bf16.msra.mxu0 0
  %1004 = vmatprep.subr.bf16.mxu0 0
  %1005 = vmatpush1.bf16.msra.mxu0 0
  %1006 = vmatprep.subr.bf16.mxu0 0
  %1007 = vmatpush1.bf16.msra.mxu0 0
  %1008 = vmatprep.subr.bf16.mxu0 0
  %1009 = vmatpush1.bf16.msra.mxu0 0
  %1010 = vmatprep.subr.bf16.mxu0 0
  %1011 = vmatpush1.bf16.msra.mxu0 0
  %1012 = vmatprep.subr.bf16.mxu0 0
  %1013 = vmatpush1.bf16.msra.mxu0 0
  %1014 = vmatprep.subr.bf16.mxu0 0
  %1015 = vmatpush1.bf16.msra.mxu0 0
  %1016 = vmatprep.subr.bf16.mxu0 0
  %1017 = vmatpush1.bf16.msra.mxu0 0
  %1018 = vmatprep.subr.bf16.mxu0 0
  %1019 = vmatpush1.bf16.msra.mxu0 0
  %1020 = vmatprep.mubr.bf16.mxu0 0
  %1021 = vmatmul.mubr.bf16.gmra.mrb[0].mxu0 %v983
  %v1022 = vpop.f32.mrb[0].mxu0
  %v1023 = vadd.f32 0.0, %v1022
  %v1024 = vpop.f32.mrb[0].mxu0
  %v1025 = vadd.f32 0.0, %v1024
  %v1026 = vpop.f32.mrb[0].mxu0
  %v1027 = vadd.f32 0.0, %v1026
  %v1028 = vpop.f32.mrb[0].mxu0
  %v1029 = vadd.f32 0.0, %v1028
  %1030 = vmatprep.mubr.bf16.mxu0 0
  %1031 = vmatmul.mubr.bf16.gmra.mrb[0].mxu0 %v986
  %v1032 = vpop.f32.mrb[0].mxu0
  %v1033 = vadd.f32 0.0, %v1032
  %v1034 = vpop.f32.mrb[0].mxu0
  %v1035 = vadd.f32 0.0, %v1034
  %v1036 = vpop.f32.mrb[0].mxu0
  %v1037 = vadd.f32 0.0, %v1036
  %v1038 = vpop.f32.mrb[0].mxu0
  %v1039 = vadd.f32 0.0, %v1038
  %1040 = vdwg.mxu0
  %1041 = vmatprep.subr.bf16.mxu0 %v973
  %1042 = vmatpush1.bf16.msra.mxu0 %v972
  %1043 = vmatprep.subr.bf16.mxu0 0
  %1044 = vmatpush1.bf16.msra.mxu0 0
  %1045 = vmatprep.subr.bf16.mxu0 0
  %1046 = vmatpush1.bf16.msra.mxu0 0
  %1047 = vmatprep.subr.bf16.mxu0 0
  %1048 = vmatpush1.bf16.msra.mxu0 0
  %1049 = vmatprep.subr.bf16.mxu0 0
  %1050 = vmatpush1.bf16.msra.mxu0 0
  %1051 = vmatprep.subr.bf16.mxu0 0
  %1052 = vmatpush1.bf16.msra.mxu0 0
  %1053 = vmatprep.subr.bf16.mxu0 0
  %1054 = vmatpush1.bf16.msra.mxu0 0
  %1055 = vmatprep.subr.bf16.mxu0 0
  %1056 = vmatpush1.bf16.msra.mxu0 0
  %1057 = vmatprep.subr.bf16.mxu0 0
  %1058 = vmatpush1.bf16.msra.mxu0 0
  %1059 = vmatprep.subr.bf16.mxu0 0
  %1060 = vmatpush1.bf16.msra.mxu0 0
  %1061 = vmatprep.subr.bf16.mxu0 0
  %1062 = vmatpush1.bf16.msra.mxu0 0
  %1063 = vmatprep.subr.bf16.mxu0 0
  %1064 = vmatpush1.bf16.msra.mxu0 0
  %1065 = vmatprep.subr.bf16.mxu0 0
  %1066 = vmatpush1.bf16.msra.mxu0 0
  %1067 = vmatprep.subr.bf16.mxu0 0
  %1068 = vmatpush1.bf16.msra.mxu0 0
  %1069 = vmatprep.subr.bf16.mxu0 0
  %1070 = vmatpush1.bf16.msra.mxu0 0
  %1071 = vmatprep.subr.bf16.mxu0 0
  %1072 = vmatpush1.bf16.msra.mxu0 0
  %1073 = vmatprep.mubr.bf16.mxu0 0
  %1074 = vmatmul.mubr.bf16.gmra.mrb[0].mxu0 %v983
  %v1075 = vpop.f32.mrb[0].mxu0
  %v1076 = vadd.f32 0.0, %v1075
  %v1077 = vpop.f32.mrb[0].mxu0
  %v1078 = vadd.f32 0.0, %v1077
  %v1079 = vpop.f32.mrb[0].mxu0
  %v1080 = vadd.f32 0.0, %v1079
  %v1081 = vpop.f32.mrb[0].mxu0
  %v1082 = vadd.f32 0.0, %v1081
  %1083 = vmatprep.mubr.bf16.mxu0 0
  %1084 = vmatmul.mubr.bf16.gmra.mrb[0].mxu0 %v986
  %v1085 = vpop.f32.mrb[0].mxu0
  %v1086 = vadd.f32 0.0, %v1085
  %v1087 = vpop.f32.mrb[0].mxu0
  %v1088 = vadd.f32 0.0, %v1087
  %v1089 = vpop.f32.mrb[0].mxu0
  %v1090 = vadd.f32 0.0, %v1089
  %v1091 = vpop.f32.mrb[0].mxu0
  %v1092 = vadd.f32 0.0, %v1091
  %1093 = vdwg.mxu0
  %1094 = vmatprep.subr.bf16.mxu0 %v975
  %1095 = vmatpush1.bf16.msra.mxu0 %v974
  %1096 = vmatprep.subr.bf16.mxu0 0
  %1097 = vmatpush1.bf16.msra.mxu0 0
  %1098 = vmatprep.subr.bf16.mxu0 0
  %1099 = vmatpush1.bf16.msra.mxu0 0
  %1100 = vmatprep.subr.bf16.mxu0 0
  %1101 = vmatpush1.bf16.msra.mxu0 0
  %1102 = vmatprep.subr.bf16.mxu0 0
  %1103 = vmatpush1.bf16.msra.mxu0 0
  %1104 = vmatprep.subr.bf16.mxu0 0
  %1105 = vmatpush1.bf16.msra.mxu0 0
  %1106 = vmatprep.subr.bf16.mxu0 0
  %1107 = vmatpush1.bf16.msra.mxu0 0
  %1108 = vmatprep.subr.bf16.mxu0 0
  %1109 = vmatpush1.bf16.msra.mxu0 0
  %1110 = vmatprep.subr.bf16.mxu0 0
  %1111 = vmatpush1.bf16.msra.mxu0 0
  %1112 = vmatprep.subr.bf16.mxu0 0
  %1113 = vmatpush1.bf16.msra.mxu0 0
  %1114 = vmatprep.subr.bf16.mxu0 0
  %1115 = vmatpush1.bf16.msra.mxu0 0
  %1116 = vmatprep.subr.bf16.mxu0 0
  %1117 = vmatpush1.bf16.msra.mxu0 0
  %1118 = vmatprep.subr.bf16.mxu0 0
  %1119 = vmatpush1.bf16.msra.mxu0 0
  %1120 = vmatprep.subr.bf16.mxu0 0
  %1121 = vmatpush1.bf16.msra.mxu0 0
  %1122 = vmatprep.subr.bf16.mxu0 0
  %1123 = vmatpush1.bf16.msra.mxu0 0
  %1124 = vmatprep.subr.bf16.mxu0 0
  %1125 = vmatpush1.bf16.msra.mxu0 0
  %1126 = vmatprep.mubr.bf16.mxu0 0
  %1127 = vmatmul.mubr.bf16.gmra.mrb[0].mxu0 %v983
  %v1128 = vpop.f32.mrb[0].mxu0
  %v1129 = vadd.f32 0.0, %v1128
  %v1130 = vpop.f32.mrb[0].mxu0
  %v1131 = vadd.f32 0.0, %v1130
  %v1132 = vpop.f32.mrb[0].mxu0
  %v1133 = vadd.f32 0.0, %v1132
  %v1134 = vpop.f32.mrb[0].mxu0
  %v1135 = vadd.f32 0.0, %v1134
  %1136 = vmatprep.mubr.bf16.mxu0 0
  %1137 = vmatmul.mubr.bf16.gmra.mrb[0].mxu0 %v986
  %v1138 = vpop.f32.mrb[0].mxu0
  %v1139 = vadd.f32 0.0, %v1138
  %v1140 = vpop.f32.mrb[0].mxu0
  %v1141 = vadd.f32 0.0, %v1140
  %v1142 = vpop.f32.mrb[0].mxu0
  %v1143 = vadd.f32 0.0, %v1142
  %v1144 = vpop.f32.mrb[0].mxu0
  %v1145 = vadd.f32 0.0, %v1144
  %1146 = vdwg.mxu0
  %v1147 = vadd.f32 %v907, %v1023
  %v1148 = vadd.f32 %v908, %v1025
  %v1149 = vadd.f32 %v909, %v1076
  %v1150 = vadd.f32 %v910, %v1078
  %v1151 = vadd.f32 %v911, %v1129
  %v1152 = vadd.f32 %v912, %v1131
  %v1153 = vadd.f32 %v913, %v1027
  %v1154 = vadd.f32 %v914, %v1029
  %v1155 = vadd.f32 %v915, %v1080
  %v1156 = vadd.f32 %v916, %v1082
  %v1157 = vadd.f32 %v917, %v1133
  %v1158 = vadd.f32 %v918, %v1135
  %v1159 = vadd.f32 %v919, %v1033
  %v1160 = vadd.f32 %v920, %v1035
  %v1161 = vadd.f32 %v921, %v1086
  %v1162 = vadd.f32 %v922, %v1088
  %v1163 = vadd.f32 %v923, %v1139
  %v1164 = vadd.f32 %v924, %v1141
  %v1165 = vadd.f32 %v925, %v1037
  %v1166 = vadd.f32 %v926, %v1039
  %v1167 = vadd.f32 %v927, %v1090
  %v1168 = vadd.f32 %v928, %v1092
  %v1169 = vadd.f32 %v929, %v1143
  %v1170 = vadd.f32 %v930, %v1145
  %v1171 = vld [vmem:[%s0 + $0x4] sm:$0xff]
  %v1172 = vld [vmem:[%s0 + $0xc] sm:$0xff]
  %v1173 = vld [vmem:[%s0 + $0x14] sm:$0xff]
  %v1174 = vld [vmem:[%s0 + $0x1c] sm:$0xf]
  %v1175 = vld [vmem:[%s0 + $0x24] sm:$0xff]
  %v1176 = vld [vmem:[%s0 + $0x2c] sm:$0xff]
  %v1177 = vld [vmem:[%s0 + $0x34] sm:$0xff]
  %v1178 = vld [vmem:[%s0 + $0x3c] sm:$0xf]
  %s1179 = scalar_lea.vmem %s1, 80
  %v1180 = vld [vmem:[%s1179] sm:$0xf]
  %v1181 = vld [vmem:[%s1179 + $0x4] sm:$0xf]
  %v1182 = vld [vmem:[%s1179 + $0x8] sm:$0xf]
  %v1183 = vld [vmem:[%s1179 + $0xc] sm:$0xf]
  %v1188 = vunpack.c.l.b16 %v1180
  %v1189 = vunpack.c.l.b16 %v1181
  %v1190 = vunpack.c.l.b16 %v1182
  %v1191 = vunpack.c.l.b16 %v1183
  %v1192 = vpack.c.b16 %v1189, %v1188
  %v1193 = vpack.c.b16 %v1191, %v1190
  %v1202 = vunpack.c.l.b16 %v1171
  %v1203 = vunpack.c.h.b16 %v1171
  %v1204 = vunpack.c.l.b16 %v1172
  %v1205 = vunpack.c.h.b16 %v1172
  %v1206 = vunpack.c.l.b16 %v1173
  %v1207 = vunpack.c.h.b16 %v1173
  %v1208 = vunpack.c.l.b16 %v1174
  %v1209 = vunpack.c.l.b16 %v1175
  %v1210 = vunpack.c.h.b16 %v1175
  %v1211 = vunpack.c.l.b16 %v1176
  %v1212 = vunpack.c.h.b16 %v1176
  %v1213 = vunpack.c.l.b16 %v1177
  %v1214 = vunpack.c.h.b16 %v1177
  %v1215 = vunpack.c.l.b16 %v1178
  %v1216 = vpack.c.b16 %v1209, %v1202
  %v1217 = vpack.c.b16 %v1210, %v1203
  %v1218 = vpack.c.b16 %v1211, %v1204
  %v1219 = vpack.c.b16 %v1212, %v1205
  %v1220 = vpack.c.b16 %v1213, %v1206
  %v1221 = vpack.c.b16 %v1214, %v1207
  %v1222 = vpack.c.b16 %v1215, %v1208
  %1223 = vrot.lane.b32.xlu0 %v1216, 127
  %v1224 = vpop.permute.xlu0 %1223
  %1225 = vrot.lane.b32.xlu0 %v1217, 127
  %v1226 = vpop.permute.xlu0 %1225
  %1227 = vrot.lane.b32.xlu0 %v1218, 127
  %v1228 = vpop.permute.xlu0 %1227
  %1229 = vrot.lane.b32.xlu0 %v1219, 127
  %v1230 = vpop.permute.xlu0 %1229
  %1231 = vrot.lane.b32.xlu0 %v1220, 127
  %v1232 = vpop.permute.xlu0 %1231
  %1233 = vrot.lane.b32.xlu0 %v1221, 127
  %v1234 = vpop.permute.xlu0 %1233
  %1235 = vrot.lane.b32.xlu0 %v1222, 127
  %v1236 = vpop.permute.xlu0 %1235
  %vm1237 = vcmask 1039360
  %v1238 = vsel %vm1237, %v1224, %v1226
  %v1239 = vsel %vm1237, %v1226, %v1228
  %v1240 = vsel %vm1237, %v1228, %v1230
  %v1241 = vsel %vm1237, %v1230, %v1232
  %v1242 = vsel %vm1237, %v1232, %v1234
  %v1243 = vsel %vm1237, %v1234, %v1236
  %v1251 = vsel %vm101, %v1192, 0
  %v1254 = vsel %vm101, %v1193, 0
  %1256 = vmatprep.subr.bf16.mxu0 %v1239
  %1257 = vmatpush1.bf16.msra.mxu0 %v1238
  %1258 = vmatprep.subr.bf16.mxu0 0
  %1259 = vmatpush1.bf16.msra.mxu0 0
  %1260 = vmatprep.subr.bf16.mxu0 0
  %1261 = vmatpush1.bf16.msra.mxu0 0
  %1262 = vmatprep.subr.bf16.mxu0 0
  %1263 = vmatpush1.bf16.msra.mxu0 0
  %1264 = vmatprep.subr.bf16.mxu0 0
  %1265 = vmatpush1.bf16.msra.mxu0 0
  %1266 = vmatprep.subr.bf16.mxu0 0
  %1267 = vmatpush1.bf16.msra.mxu0 0
  %1268 = vmatprep.subr.bf16.mxu0 0
  %1269 = vmatpush1.bf16.msra.mxu0 0
  %1270 = vmatprep.subr.bf16.mxu0 0
  %1271 = vmatpush1.bf16.msra.mxu0 0
  %1272 = vmatprep.subr.bf16.mxu0 0
  %1273 = vmatpush1.bf16.msra.mxu0 0
  %1274 = vmatprep.subr.bf16.mxu0 0
  %1275 = vmatpush1.bf16.msra.mxu0 0
  %1276 = vmatprep.subr.bf16.mxu0 0
  %1277 = vmatpush1.bf16.msra.mxu0 0
  %1278 = vmatprep.subr.bf16.mxu0 0
  %1279 = vmatpush1.bf16.msra.mxu0 0
  %1280 = vmatprep.subr.bf16.mxu0 0
  %1281 = vmatpush1.bf16.msra.mxu0 0
  %1282 = vmatprep.subr.bf16.mxu0 0
  %1283 = vmatpush1.bf16.msra.mxu0 0
  %1284 = vmatprep.subr.bf16.mxu0 0
  %1285 = vmatpush1.bf16.msra.mxu0 0
  %1286 = vmatprep.subr.bf16.mxu0 0
  %1287 = vmatpush1.bf16.msra.mxu0 0
  %1288 = vmatprep.mubr.bf16.mxu0 0
  %1289 = vmatmul.mubr.bf16.gmra.mrb[0].mxu0 %v1251
  %v1290 = vpop.f32.mrb[0].mxu0
  %v1291 = vadd.f32 0.0, %v1290
  %v1292 = vpop.f32.mrb[0].mxu0
  %v1293 = vadd.f32 0.0, %v1292
  %v1294 = vpop.f32.mrb[0].mxu0
  %v1295 = vadd.f32 0.0, %v1294
  %v1296 = vpop.f32.mrb[0].mxu0
  %v1297 = vadd.f32 0.0, %v1296
  %1298 = vmatprep.mubr.bf16.mxu0 0
  %1299 = vmatmul.mubr.bf16.gmra.mrb[0].mxu0 %v1254
  %v1300 = vpop.f32.mrb[0].mxu0
  %v1301 = vadd.f32 0.0, %v1300
  %v1302 = vpop.f32.mrb[0].mxu0
  %v1303 = vadd.f32 0.0, %v1302
  %v1304 = vpop.f32.mrb[0].mxu0
  %v1305 = vadd.f32 0.0, %v1304
  %v1306 = vpop.f32.mrb[0].mxu0
  %v1307 = vadd.f32 0.0, %v1306
  %1308 = vdwg.mxu0
  %1309 = vmatprep.subr.bf16.mxu0 %v1241
  %1310 = vmatpush1.bf16.msra.mxu0 %v1240
  %1311 = vmatprep.subr.bf16.mxu0 0
  %1312 = vmatpush1.bf16.msra.mxu0 0
  %1313 = vmatprep.subr.bf16.mxu0 0
  %1314 = vmatpush1.bf16.msra.mxu0 0
  %1315 = vmatprep.subr.bf16.mxu0 0
  %1316 = vmatpush1.bf16.msra.mxu0 0
  %1317 = vmatprep.subr.bf16.mxu0 0
  %1318 = vmatpush1.bf16.msra.mxu0 0
  %1319 = vmatprep.subr.bf16.mxu0 0
  %1320 = vmatpush1.bf16.msra.mxu0 0
  %1321 = vmatprep.subr.bf16.mxu0 0
  %1322 = vmatpush1.bf16.msra.mxu0 0
  %1323 = vmatprep.subr.bf16.mxu0 0
  %1324 = vmatpush1.bf16.msra.mxu0 0
  %1325 = vmatprep.subr.bf16.mxu0 0
  %1326 = vmatpush1.bf16.msra.mxu0 0
  %1327 = vmatprep.subr.bf16.mxu0 0
  %1328 = vmatpush1.bf16.msra.mxu0 0
  %1329 = vmatprep.subr.bf16.mxu0 0
  %1330 = vmatpush1.bf16.msra.mxu0 0
  %1331 = vmatprep.subr.bf16.mxu0 0
  %1332 = vmatpush1.bf16.msra.mxu0 0
  %1333 = vmatprep.subr.bf16.mxu0 0
  %1334 = vmatpush1.bf16.msra.mxu0 0
  %1335 = vmatprep.subr.bf16.mxu0 0
  %1336 = vmatpush1.bf16.msra.mxu0 0
  %1337 = vmatprep.subr.bf16.mxu0 0
  %1338 = vmatpush1.bf16.msra.mxu0 0
  %1339 = vmatprep.subr.bf16.mxu0 0
  %1340 = vmatpush1.bf16.msra.mxu0 0
  %1341 = vmatprep.mubr.bf16.mxu0 0
  %1342 = vmatmul.mubr.bf16.gmra.mrb[0].mxu0 %v1251
  %v1343 = vpop.f32.mrb[0].mxu0
  %v1344 = vadd.f32 0.0, %v1343
  %v1345 = vpop.f32.mrb[0].mxu0
  %v1346 = vadd.f32 0.0, %v1345
  %v1347 = vpop.f32.mrb[0].mxu0
  %v1348 = vadd.f32 0.0, %v1347
  %v1349 = vpop.f32.mrb[0].mxu0
  %v1350 = vadd.f32 0.0, %v1349
  %1351 = vmatprep.mubr.bf16.mxu0 0
  %1352 = vmatmul.mubr.bf16.gmra.mrb[0].mxu0 %v1254
  %v1353 = vpop.f32.mrb[0].mxu0
  %v1354 = vadd.f32 0.0, %v1353
  %v1355 = vpop.f32.mrb[0].mxu0
  %v1356 = vadd.f32 0.0, %v1355
  %v1357 = vpop.f32.mrb[0].mxu0
  %v1358 = vadd.f32 0.0, %v1357
  %v1359 = vpop.f32.mrb[0].mxu0
  %v1360 = vadd.f32 0.0, %v1359
  %1361 = vdwg.mxu0
  %1362 = vmatprep.subr.bf16.mxu0 %v1243
  %1363 = vmatpush1.bf16.msra.mxu0 %v1242
  %1364 = vmatprep.subr.bf16.mxu0 0
  %1365 = vmatpush1.bf16.msra.mxu0 0
  %1366 = vmatprep.subr.bf16.mxu0 0
  %1367 = vmatpush1.bf16.msra.mxu0 0
  %1368 = vmatprep.subr.bf16.mxu0 0
  %1369 = vmatpush1.bf16.msra.mxu0 0
  %1370 = vmatprep.subr.bf16.mxu0 0
  %1371 = vmatpush1.bf16.msra.mxu0 0
  %1372 = vmatprep.subr.bf16.mxu0 0
  %1373 = vmatpush1.bf16.msra.mxu0 0
  %1374 = vmatprep.subr.bf16.mxu0 0
  %1375 = vmatpush1.bf16.msra.mxu0 0
  %1376 = vmatprep.subr.bf16.mxu0 0
  %1377 = vmatpush1.bf16.msra.mxu0 0
  %1378 = vmatprep.subr.bf16.mxu0 0
  %1379 = vmatpush1.bf16.msra.mxu0 0
  %1380 = vmatprep.subr.bf16.mxu0 0
  %1381 = vmatpush1.bf16.msra.mxu0 0
  %1382 = vmatprep.subr.bf16.mxu0 0
  %1383 = vmatpush1.bf16.msra.mxu0 0
  %1384 = vmatprep.subr.bf16.mxu0 0
  %1385 = vmatpush1.bf16.msra.mxu0 0
  %1386 = vmatprep.subr.bf16.mxu0 0
  %1387 = vmatpush1.bf16.msra.mxu0 0
  %1388 = vmatprep.subr.bf16.mxu0 0
  %1389 = vmatpush1.bf16.msra.mxu0 0
  %1390 = vmatprep.subr.bf16.mxu0 0
  %1391 = vmatpush1.bf16.msra.mxu0 0
  %1392 = vmatprep.subr.bf16.mxu0 0
  %1393 = vmatpush1.bf16.msra.mxu0 0
  %1394 = vmatprep.mubr.bf16.mxu0 0
  %1395 = vmatmul.mubr.bf16.gmra.mrb[0].mxu0 %v1251
  %v1396 = vpop.f32.mrb[0].mxu0
  %v1397 = vadd.f32 0.0, %v1396
  %v1398 = vpop.f32.mrb[0].mxu0
  %v1399 = vadd.f32 0.0, %v1398
  %v1400 = vpop.f32.mrb[0].mxu0
  %v1401 = vadd.f32 0.0, %v1400
  %v1402 = vpop.f32.mrb[0].mxu0
  %v1403 = vadd.f32 0.0, %v1402
  %1404 = vmatprep.mubr.bf16.mxu0 0
  %1405 = vmatmul.mubr.bf16.gmra.mrb[0].mxu0 %v1254
  %v1406 = vpop.f32.mrb[0].mxu0
  %v1407 = vadd.f32 0.0, %v1406
  %v1408 = vpop.f32.mrb[0].mxu0
  %v1409 = vadd.f32 0.0, %v1408
  %v1410 = vpop.f32.mrb[0].mxu0
  %v1411 = vadd.f32 0.0, %v1410
  %v1412 = vpop.f32.mrb[0].mxu0
  %v1413 = vadd.f32 0.0, %v1412
  %1414 = vdwg.mxu0
  %v1415 = vadd.f32 %v1147, %v1291
  %v1416 = vadd.f32 %v1148, %v1293
  %v1417 = vadd.f32 %v1149, %v1344
  %v1418 = vadd.f32 %v1150, %v1346
  %v1419 = vadd.f32 %v1151, %v1397
  %v1420 = vadd.f32 %v1152, %v1399
  %v1421 = vadd.f32 %v1153, %v1295
  %v1422 = vadd.f32 %v1154, %v1297
  %v1423 = vadd.f32 %v1155, %v1348
  %v1424 = vadd.f32 %v1156, %v1350
  %v1425 = vadd.f32 %v1157, %v1401
  %v1426 = vadd.f32 %v1158, %v1403
  %v1427 = vadd.f32 %v1159, %v1301
  %v1428 = vadd.f32 %v1160, %v1303
  %v1429 = vadd.f32 %v1161, %v1354
  %v1430 = vadd.f32 %v1162, %v1356
  %v1431 = vadd.f32 %v1163, %v1407
  %v1432 = vadd.f32 %v1164, %v1409
  %v1433 = vadd.f32 %v1165, %v1305
  %v1434 = vadd.f32 %v1166, %v1307
  %v1435 = vadd.f32 %v1167, %v1358
  %v1436 = vadd.f32 %v1168, %v1360
  %v1437 = vadd.f32 %v1169, %v1411
  %v1438 = vadd.f32 %v1170, %v1413
  %s1439 = scalar_lea.vmem %s1, 96
  %v1440 = vld [vmem:[%s1439] sm:$0xf]
  %v1441 = vld [vmem:[%s1439 + $0x4] sm:$0xf]
  %v1442 = vld [vmem:[%s1439 + $0x8] sm:$0xf]
  %v1443 = vld [vmem:[%s1439 + $0xc] sm:$0xf]
  %v1448 = vunpack.c.l.b16 %v1440
  %v1449 = vunpack.c.l.b16 %v1441
  %v1450 = vunpack.c.l.b16 %v1442
  %v1451 = vunpack.c.l.b16 %v1443
  %v1452 = vpack.c.b16 %v1449, %v1448
  %v1453 = vpack.c.b16 %v1451, %v1450
  %1454 = vrot.lane.b32.xlu0 %v1216, 111
  %v1455 = vpop.permute.xlu0 %1454
  %1456 = vrot.lane.b32.xlu0 %v1217, 111
  %v1457 = vpop.permute.xlu0 %1456
  %1458 = vrot.lane.b32.xlu0 %v1218, 111
  %v1459 = vpop.permute.xlu0 %1458
  %1460 = vrot.lane.b32.xlu0 %v1219, 111
  %v1461 = vpop.permute.xlu0 %1460
  %1462 = vrot.lane.b32.xlu0 %v1220, 111
  %v1463 = vpop.permute.xlu0 %1462
  %1464 = vrot.lane.b32.xlu0 %v1221, 111
  %v1465 = vpop.permute.xlu0 %1464
  %1466 = vrot.lane.b32.xlu0 %v1222, 111
  %v1467 = vpop.permute.xlu0 %1466
  %vm1468 = vcmask 908288
  %v1469 = vsel %vm1468, %v1455, %v1457
  %v1470 = vsel %vm1468, %v1457, %v1459
  %v1471 = vsel %vm1468, %v1459, %v1461
  %v1472 = vsel %vm1468, %v1461, %v1463
  %v1473 = vsel %vm1468, %v1463, %v1465
  %v1474 = vsel %vm1468, %v1465, %v1467
  %v1482 = vsel %vm101, %v1452, 0
  %v1485 = vsel %vm101, %v1453, 0
  %1487 = vmatprep.subr.bf16.mxu0 %v1470
  %1488 = vmatpush1.bf16.msra.mxu0 %v1469
  %1489 = vmatprep.subr.bf16.mxu0 0
  %1490 = vmatpush1.bf16.msra.mxu0 0
  %1491 = vmatprep.subr.bf16.mxu0 0
  %1492 = vmatpush1.bf16.msra.mxu0 0
  %1493 = vmatprep.subr.bf16.mxu0 0
  %1494 = vmatpush1.bf16.msra.mxu0 0
  %1495 = vmatprep.subr.bf16.mxu0 0
  %1496 = vmatpush1.bf16.msra.mxu0 0
  %1497 = vmatprep.subr.bf16.mxu0 0
  %1498 = vmatpush1.bf16.msra.mxu0 0
  %1499 = vmatprep.subr.bf16.mxu0 0
  %1500 = vmatpush1.bf16.msra.mxu0 0
  %1501 = vmatprep.subr.bf16.mxu0 0
  %1502 = vmatpush1.bf16.msra.mxu0 0
  %1503 = vmatprep.subr.bf16.mxu0 0
  %1504 = vmatpush1.bf16.msra.mxu0 0
  %1505 = vmatprep.subr.bf16.mxu0 0
  %1506 = vmatpush1.bf16.msra.mxu0 0
  %1507 = vmatprep.subr.bf16.mxu0 0
  %1508 = vmatpush1.bf16.msra.mxu0 0
  %1509 = vmatprep.subr.bf16.mxu0 0
  %1510 = vmatpush1.bf16.msra.mxu0 0
  %1511 = vmatprep.subr.bf16.mxu0 0
  %1512 = vmatpush1.bf16.msra.mxu0 0
  %1513 = vmatprep.subr.bf16.mxu0 0
  %1514 = vmatpush1.bf16.msra.mxu0 0
  %1515 = vmatprep.subr.bf16.mxu0 0
  %1516 = vmatpush1.bf16.msra.mxu0 0
  %1517 = vmatprep.subr.bf16.mxu0 0
  %1518 = vmatpush1.bf16.msra.mxu0 0
  %1519 = vmatprep.mubr.bf16.mxu0 0
  %1520 = vmatmul.mubr.bf16.gmra.mrb[0].mxu0 %v1482
  %v1521 = vpop.f32.mrb[0].mxu0
  %v1522 = vadd.f32 0.0, %v1521
  %v1523 = vpop.f32.mrb[0].mxu0
  %v1524 = vadd.f32 0.0, %v1523
  %v1525 = vpop.f32.mrb[0].mxu0
  %v1526 = vadd.f32 0.0, %v1525
  %v1527 = vpop.f32.mrb[0].mxu0
  %v1528 = vadd.f32 0.0, %v1527
  %1529 = vmatprep.mubr.bf16.mxu0 0
  %1530 = vmatmul.mubr.bf16.gmra.mrb[0].mxu0 %v1485
  %v1531 = vpop.f32.mrb[0].mxu0
  %v1532 = vadd.f32 0.0, %v1531
  %v1533 = vpop.f32.mrb[0].mxu0
  %v1534 = vadd.f32 0.0, %v1533
  %v1535 = vpop.f32.mrb[0].mxu0
  %v1536 = vadd.f32 0.0, %v1535
  %v1537 = vpop.f32.mrb[0].mxu0
  %v1538 = vadd.f32 0.0, %v1537
  %1539 = vdwg.mxu0
  %1540 = vmatprep.subr.bf16.mxu0 %v1472
  %1541 = vmatpush1.bf16.msra.mxu0 %v1471
  %1542 = vmatprep.subr.bf16.mxu0 0
  %1543 = vmatpush1.bf16.msra.mxu0 0
  %1544 = vmatprep.subr.bf16.mxu0 0
  %1545 = vmatpush1.bf16.msra.mxu0 0
  %1546 = vmatprep.subr.bf16.mxu0 0
  %1547 = vmatpush1.bf16.msra.mxu0 0
  %1548 = vmatprep.subr.bf16.mxu0 0
  %1549 = vmatpush1.bf16.msra.mxu0 0
  %1550 = vmatprep.subr.bf16.mxu0 0
  %1551 = vmatpush1.bf16.msra.mxu0 0
  %1552 = vmatprep.subr.bf16.mxu0 0
  %1553 = vmatpush1.bf16.msra.mxu0 0
  %1554 = vmatprep.subr.bf16.mxu0 0
  %1555 = vmatpush1.bf16.msra.mxu0 0
  %1556 = vmatprep.subr.bf16.mxu0 0
  %1557 = vmatpush1.bf16.msra.mxu0 0
  %1558 = vmatprep.subr.bf16.mxu0 0
  %1559 = vmatpush1.bf16.msra.mxu0 0
  %1560 = vmatprep.subr.bf16.mxu0 0
  %1561 = vmatpush1.bf16.msra.mxu0 0
  %1562 = vmatprep.subr.bf16.mxu0 0
  %1563 = vmatpush1.bf16.msra.mxu0 0
  %1564 = vmatprep.subr.bf16.mxu0 0
  %1565 = vmatpush1.bf16.msra.mxu0 0
  %1566 = vmatprep.subr.bf16.mxu0 0
  %1567 = vmatpush1.bf16.msra.mxu0 0
  %1568 = vmatprep.subr.bf16.mxu0 0
  %1569 = vmatpush1.bf16.msra.mxu0 0
  %1570 = vmatprep.subr.bf16.mxu0 0
  %1571 = vmatpush1.bf16.msra.mxu0 0
  %1572 = vmatprep.mubr.bf16.mxu0 0
  %1573 = vmatmul.mubr.bf16.gmra.mrb[0].mxu0 %v1482
  %v1574 = vpop.f32.mrb[0].mxu0
  %v1575 = vadd.f32 0.0, %v1574
  %v1576 = vpop.f32.mrb[0].mxu0
  %v1577 = vadd.f32 0.0, %v1576
  %v1578 = vpop.f32.mrb[0].mxu0
  %v1579 = vadd.f32 0.0, %v1578
  %v1580 = vpop.f32.mrb[0].mxu0
  %v1581 = vadd.f32 0.0, %v1580
  %1582 = vmatprep.mubr.bf16.mxu0 0
  %1583 = vmatmul.mubr.bf16.gmra.mrb[0].mxu0 %v1485
  %v1584 = vpop.f32.mrb[0].mxu0
  %v1585 = vadd.f32 0.0, %v1584
  %v1586 = vpop.f32.mrb[0].mxu0
  %v1587 = vadd.f32 0.0, %v1586
  %v1588 = vpop.f32.mrb[0].mxu0
  %v1589 = vadd.f32 0.0, %v1588
  %v1590 = vpop.f32.mrb[0].mxu0
  %v1591 = vadd.f32 0.0, %v1590
  %1592 = vdwg.mxu0
  %1593 = vmatprep.subr.bf16.mxu0 %v1474
  %1594 = vmatpush1.bf16.msra.mxu0 %v1473
  %1595 = vmatprep.subr.bf16.mxu0 0
  %1596 = vmatpush1.bf16.msra.mxu0 0
  %1597 = vmatprep.subr.bf16.mxu0 0
  %1598 = vmatpush1.bf16.msra.mxu0 0
  %1599 = vmatprep.subr.bf16.mxu0 0
  %1600 = vmatpush1.bf16.msra.mxu0 0
  %1601 = vmatprep.subr.bf16.mxu0 0
  %1602 = vmatpush1.bf16.msra.mxu0 0
  %1603 = vmatprep.subr.bf16.mxu0 0
  %1604 = vmatpush1.bf16.msra.mxu0 0
  %1605 = vmatprep.subr.bf16.mxu0 0
  %1606 = vmatpush1.bf16.msra.mxu0 0
  %1607 = vmatprep.subr.bf16.mxu0 0
  %1608 = vmatpush1.bf16.msra.mxu0 0
  %1609 = vmatprep.subr.bf16.mxu0 0
  %1610 = vmatpush1.bf16.msra.mxu0 0
  %1611 = vmatprep.subr.bf16.mxu0 0
  %1612 = vmatpush1.bf16.msra.mxu0 0
  %1613 = vmatprep.subr.bf16.mxu0 0
  %1614 = vmatpush1.bf16.msra.mxu0 0
  %1615 = vmatprep.subr.bf16.mxu0 0
  %1616 = vmatpush1.bf16.msra.mxu0 0
  %1617 = vmatprep.subr.bf16.mxu0 0
  %1618 = vmatpush1.bf16.msra.mxu0 0
  %1619 = vmatprep.subr.bf16.mxu0 0
  %1620 = vmatpush1.bf16.msra.mxu0 0
  %1621 = vmatprep.subr.bf16.mxu0 0
  %1622 = vmatpush1.bf16.msra.mxu0 0
  %1623 = vmatprep.subr.bf16.mxu0 0
  %1624 = vmatpush1.bf16.msra.mxu0 0
  %1625 = vmatprep.mubr.bf16.mxu0 0
  %1626 = vmatmul.mubr.bf16.gmra.mrb[0].mxu0 %v1482
  %v1627 = vpop.f32.mrb[0].mxu0
  %v1628 = vadd.f32 0.0, %v1627
  %v1629 = vpop.f32.mrb[0].mxu0
  %v1630 = vadd.f32 0.0, %v1629
  %v1631 = vpop.f32.mrb[0].mxu0
  %v1632 = vadd.f32 0.0, %v1631
  %v1633 = vpop.f32.mrb[0].mxu0
  %v1634 = vadd.f32 0.0, %v1633
  %1635 = vmatprep.mubr.bf16.mxu0 0
  %1636 = vmatmul.mubr.bf16.gmra.mrb[0].mxu0 %v1485
  %v1637 = vpop.f32.mrb[0].mxu0
  %v1638 = vadd.f32 0.0, %v1637
  %v1639 = vpop.f32.mrb[0].mxu0
  %v1640 = vadd.f32 0.0, %v1639
  %v1641 = vpop.f32.mrb[0].mxu0
  %v1642 = vadd.f32 0.0, %v1641
  %v1643 = vpop.f32.mrb[0].mxu0
  %v1644 = vadd.f32 0.0, %v1643
  %1645 = vdwg.mxu0
  %v1646 = vadd.f32 %v1415, %v1522
  %v1647 = vadd.f32 %v1416, %v1524
  %v1648 = vadd.f32 %v1417, %v1575
  %v1649 = vadd.f32 %v1418, %v1577
  %v1650 = vadd.f32 %v1419, %v1628
  %v1651 = vadd.f32 %v1420, %v1630
  %v1652 = vadd.f32 %v1421, %v1526
  %v1653 = vadd.f32 %v1422, %v1528
  %v1654 = vadd.f32 %v1423, %v1579
  %v1655 = vadd.f32 %v1424, %v1581
  %v1656 = vadd.f32 %v1425, %v1632
  %v1657 = vadd.f32 %v1426, %v1634
  %v1658 = vadd.f32 %v1427, %v1532
  %v1659 = vadd.f32 %v1428, %v1534
  %v1660 = vadd.f32 %v1429, %v1585
  %v1661 = vadd.f32 %v1430, %v1587
  %v1662 = vadd.f32 %v1431, %v1638
  %v1663 = vadd.f32 %v1432, %v1640
  %v1664 = vadd.f32 %v1433, %v1536
  %v1665 = vadd.f32 %v1434, %v1538
  %v1666 = vadd.f32 %v1435, %v1589
  %v1667 = vadd.f32 %v1436, %v1591
  %v1668 = vadd.f32 %v1437, %v1642
  %v1669 = vadd.f32 %v1438, %v1644
  %s1670 = scalar_lea.vmem %s1, 112
  %v1671 = vld [vmem:[%s1670] sm:$0xf]
  %v1672 = vld [vmem:[%s1670 + $0x4] sm:$0xf]
  %v1673 = vld [vmem:[%s1670 + $0x8] sm:$0xf]
  %v1674 = vld [vmem:[%s1670 + $0xc] sm:$0xf]
  %v1679 = vunpack.c.l.b16 %v1671
  %v1680 = vunpack.c.l.b16 %v1672
  %v1681 = vunpack.c.l.b16 %v1673
  %v1682 = vunpack.c.l.b16 %v1674
  %v1683 = vpack.c.b16 %v1680, %v1679
  %v1684 = vpack.c.b16 %v1682, %v1681
  %1685 = vrot.lane.b32.xlu0 %v1216, 110
  %v1686 = vpop.permute.xlu0 %1685
  %1687 = vrot.lane.b32.xlu0 %v1217, 110
  %v1688 = vpop.permute.xlu0 %1687
  %1689 = vrot.lane.b32.xlu0 %v1218, 110
  %v1690 = vpop.permute.xlu0 %1689
  %1691 = vrot.lane.b32.xlu0 %v1219, 110
  %v1692 = vpop.permute.xlu0 %1691
  %1693 = vrot.lane.b32.xlu0 %v1220, 110
  %v1694 = vpop.permute.xlu0 %1693
  %1695 = vrot.lane.b32.xlu0 %v1221, 110
  %v1696 = vpop.permute.xlu0 %1695
  %1697 = vrot.lane.b32.xlu0 %v1222, 110
  %v1698 = vpop.permute.xlu0 %1697
  %vm1699 = vcmask 900096
  %v1700 = vsel %vm1699, %v1686, %v1688
  %v1701 = vsel %vm1699, %v1688, %v1690
  %v1702 = vsel %vm1699, %v1690, %v1692
  %v1703 = vsel %vm1699, %v1692, %v1694
  %v1704 = vsel %vm1699, %v1694, %v1696
  %v1705 = vsel %vm1699, %v1696, %v1698
  %v1713 = vsel %vm101, %v1683, 0
  %v1716 = vsel %vm101, %v1684, 0
  %1718 = vmatprep.subr.bf16.mxu0 %v1701
  %1719 = vmatpush1.bf16.msra.mxu0 %v1700
  %1720 = vmatprep.subr.bf16.mxu0 0
  %1721 = vmatpush1.bf16.msra.mxu0 0
  %1722 = vmatprep.subr.bf16.mxu0 0
  %1723 = vmatpush1.bf16.msra.mxu0 0
  %1724 = vmatprep.subr.bf16.mxu0 0
  %1725 = vmatpush1.bf16.msra.mxu0 0
  %1726 = vmatprep.subr.bf16.mxu0 0
  %1727 = vmatpush1.bf16.msra.mxu0 0
  %1728 = vmatprep.subr.bf16.mxu0 0
  %1729 = vmatpush1.bf16.msra.mxu0 0
  %1730 = vmatprep.subr.bf16.mxu0 0
  %1731 = vmatpush1.bf16.msra.mxu0 0
  %1732 = vmatprep.subr.bf16.mxu0 0
  %1733 = vmatpush1.bf16.msra.mxu0 0
  %1734 = vmatprep.subr.bf16.mxu0 0
  %1735 = vmatpush1.bf16.msra.mxu0 0
  %1736 = vmatprep.subr.bf16.mxu0 0
  %1737 = vmatpush1.bf16.msra.mxu0 0
  %1738 = vmatprep.subr.bf16.mxu0 0
  %1739 = vmatpush1.bf16.msra.mxu0 0
  %1740 = vmatprep.subr.bf16.mxu0 0
  %1741 = vmatpush1.bf16.msra.mxu0 0
  %1742 = vmatprep.subr.bf16.mxu0 0
  %1743 = vmatpush1.bf16.msra.mxu0 0
  %1744 = vmatprep.subr.bf16.mxu0 0
  %1745 = vmatpush1.bf16.msra.mxu0 0
  %1746 = vmatprep.subr.bf16.mxu0 0
  %1747 = vmatpush1.bf16.msra.mxu0 0
  %1748 = vmatprep.subr.bf16.mxu0 0
  %1749 = vmatpush1.bf16.msra.mxu0 0
  %1750 = vmatprep.mubr.bf16.mxu0 0
  %1751 = vmatmul.mubr.bf16.gmra.mrb[0].mxu0 %v1713
  %v1752 = vpop.f32.mrb[0].mxu0
  %v1753 = vadd.f32 0.0, %v1752
  %v1754 = vpop.f32.mrb[0].mxu0
  %v1755 = vadd.f32 0.0, %v1754
  %v1756 = vpop.f32.mrb[0].mxu0
  %v1757 = vadd.f32 0.0, %v1756
  %v1758 = vpop.f32.mrb[0].mxu0
  %v1759 = vadd.f32 0.0, %v1758
  %1760 = vmatprep.mubr.bf16.mxu0 0
  %1761 = vmatmul.mubr.bf16.gmra.mrb[0].mxu0 %v1716
  %v1762 = vpop.f32.mrb[0].mxu0
  %v1763 = vadd.f32 0.0, %v1762
  %v1764 = vpop.f32.mrb[0].mxu0
  %v1765 = vadd.f32 0.0, %v1764
  %v1766 = vpop.f32.mrb[0].mxu0
  %v1767 = vadd.f32 0.0, %v1766
  %v1768 = vpop.f32.mrb[0].mxu0
  %v1769 = vadd.f32 0.0, %v1768
  %1770 = vdwg.mxu0
  %1771 = vmatprep.subr.bf16.mxu0 %v1703
  %1772 = vmatpush1.bf16.msra.mxu0 %v1702
  %1773 = vmatprep.subr.bf16.mxu0 0
  %1774 = vmatpush1.bf16.msra.mxu0 0
  %1775 = vmatprep.subr.bf16.mxu0 0
  %1776 = vmatpush1.bf16.msra.mxu0 0
  %1777 = vmatprep.subr.bf16.mxu0 0
  %1778 = vmatpush1.bf16.msra.mxu0 0
  %1779 = vmatprep.subr.bf16.mxu0 0
  %1780 = vmatpush1.bf16.msra.mxu0 0
  %1781 = vmatprep.subr.bf16.mxu0 0
  %1782 = vmatpush1.bf16.msra.mxu0 0
  %1783 = vmatprep.subr.bf16.mxu0 0
  %1784 = vmatpush1.bf16.msra.mxu0 0
  %1785 = vmatprep.subr.bf16.mxu0 0
  %1786 = vmatpush1.bf16.msra.mxu0 0
  %1787 = vmatprep.subr.bf16.mxu0 0
  %1788 = vmatpush1.bf16.msra.mxu0 0
  %1789 = vmatprep.subr.bf16.mxu0 0
  %1790 = vmatpush1.bf16.msra.mxu0 0
  %1791 = vmatprep.subr.bf16.mxu0 0
  %1792 = vmatpush1.bf16.msra.mxu0 0
  %1793 = vmatprep.subr.bf16.mxu0 0
  %1794 = vmatpush1.bf16.msra.mxu0 0
  %1795 = vmatprep.subr.bf16.mxu0 0
  %1796 = vmatpush1.bf16.msra.mxu0 0
  %1797 = vmatprep.subr.bf16.mxu0 0
  %1798 = vmatpush1.bf16.msra.mxu0 0
  %1799 = vmatprep.subr.bf16.mxu0 0
  %1800 = vmatpush1.bf16.msra.mxu0 0
  %1801 = vmatprep.subr.bf16.mxu0 0
  %1802 = vmatpush1.bf16.msra.mxu0 0
  %1803 = vmatprep.mubr.bf16.mxu0 0
  %1804 = vmatmul.mubr.bf16.gmra.mrb[0].mxu0 %v1713
  %v1805 = vpop.f32.mrb[0].mxu0
  %v1806 = vadd.f32 0.0, %v1805
  %v1807 = vpop.f32.mrb[0].mxu0
  %v1808 = vadd.f32 0.0, %v1807
  %v1809 = vpop.f32.mrb[0].mxu0
  %v1810 = vadd.f32 0.0, %v1809
  %v1811 = vpop.f32.mrb[0].mxu0
  %v1812 = vadd.f32 0.0, %v1811
  %1813 = vmatprep.mubr.bf16.mxu0 0
  %1814 = vmatmul.mubr.bf16.gmra.mrb[0].mxu0 %v1716
  %v1815 = vpop.f32.mrb[0].mxu0
  %v1816 = vadd.f32 0.0, %v1815
  %v1817 = vpop.f32.mrb[0].mxu0
  %v1818 = vadd.f32 0.0, %v1817
  %v1819 = vpop.f32.mrb[0].mxu0
  %v1820 = vadd.f32 0.0, %v1819
  %v1821 = vpop.f32.mrb[0].mxu0
  %v1822 = vadd.f32 0.0, %v1821
  %1823 = vdwg.mxu0
  %1824 = vmatprep.subr.bf16.mxu0 %v1705
  %1825 = vmatpush1.bf16.msra.mxu0 %v1704
  %1826 = vmatprep.subr.bf16.mxu0 0
  %1827 = vmatpush1.bf16.msra.mxu0 0
  %1828 = vmatprep.subr.bf16.mxu0 0
  %1829 = vmatpush1.bf16.msra.mxu0 0
  %1830 = vmatprep.subr.bf16.mxu0 0
  %1831 = vmatpush1.bf16.msra.mxu0 0
  %1832 = vmatprep.subr.bf16.mxu0 0
  %1833 = vmatpush1.bf16.msra.mxu0 0
  %1834 = vmatprep.subr.bf16.mxu0 0
  %1835 = vmatpush1.bf16.msra.mxu0 0
  %1836 = vmatprep.subr.bf16.mxu0 0
  %1837 = vmatpush1.bf16.msra.mxu0 0
  %1838 = vmatprep.subr.bf16.mxu0 0
  %1839 = vmatpush1.bf16.msra.mxu0 0
  %1840 = vmatprep.subr.bf16.mxu0 0
  %1841 = vmatpush1.bf16.msra.mxu0 0
  %1842 = vmatprep.subr.bf16.mxu0 0
  %1843 = vmatpush1.bf16.msra.mxu0 0
  %1844 = vmatprep.subr.bf16.mxu0 0
  %1845 = vmatpush1.bf16.msra.mxu0 0
  %1846 = vmatprep.subr.bf16.mxu0 0
  %1847 = vmatpush1.bf16.msra.mxu0 0
  %1848 = vmatprep.subr.bf16.mxu0 0
  %1849 = vmatpush1.bf16.msra.mxu0 0
  %1850 = vmatprep.subr.bf16.mxu0 0
  %1851 = vmatpush1.bf16.msra.mxu0 0
  %1852 = vmatprep.subr.bf16.mxu0 0
  %1853 = vmatpush1.bf16.msra.mxu0 0
  %1854 = vmatprep.subr.bf16.mxu0 0
  %1855 = vmatpush1.bf16.msra.mxu0 0
  %1856 = vmatprep.mubr.bf16.mxu0 0
  %1857 = vmatmul.mubr.bf16.gmra.mrb[0].mxu0 %v1713
  %v1858 = vpop.f32.mrb[0].mxu0
  %v1859 = vadd.f32 0.0, %v1858
  %v1860 = vpop.f32.mrb[0].mxu0
  %v1861 = vadd.f32 0.0, %v1860
  %v1862 = vpop.f32.mrb[0].mxu0
  %v1863 = vadd.f32 0.0, %v1862
  %v1864 = vpop.f32.mrb[0].mxu0
  %v1865 = vadd.f32 0.0, %v1864
  %1866 = vmatprep.mubr.bf16.mxu0 0
  %1867 = vmatmul.mubr.bf16.gmra.mrb[0].mxu0 %v1716
  %v1868 = vpop.f32.mrb[0].mxu0
  %v1869 = vadd.f32 0.0, %v1868
  %v1870 = vpop.f32.mrb[0].mxu0
  %v1871 = vadd.f32 0.0, %v1870
  %v1872 = vpop.f32.mrb[0].mxu0
  %v1873 = vadd.f32 0.0, %v1872
  %v1874 = vpop.f32.mrb[0].mxu0
  %v1875 = vadd.f32 0.0, %v1874
  %1876 = vdwg.mxu0
  %v1877 = vadd.f32 %v1646, %v1753
  %v1878 = vadd.f32 %v1647, %v1755
  %v1879 = vadd.f32 %v1648, %v1806
  %v1880 = vadd.f32 %v1649, %v1808
  %v1881 = vadd.f32 %v1650, %v1859
  %v1882 = vadd.f32 %v1651, %v1861
  %v1883 = vadd.f32 %v1652, %v1757
  %v1884 = vadd.f32 %v1653, %v1759
  %v1885 = vadd.f32 %v1654, %v1810
  %v1886 = vadd.f32 %v1655, %v1812
  %v1887 = vadd.f32 %v1656, %v1863
  %v1888 = vadd.f32 %v1657, %v1865
  %v1889 = vadd.f32 %v1658, %v1763
  %v1890 = vadd.f32 %v1659, %v1765
  %v1891 = vadd.f32 %v1660, %v1816
  %v1892 = vadd.f32 %v1661, %v1818
  %v1893 = vadd.f32 %v1662, %v1869
  %v1894 = vadd.f32 %v1663, %v1871
  %v1895 = vadd.f32 %v1664, %v1767
  %v1896 = vadd.f32 %v1665, %v1769
  %v1897 = vadd.f32 %v1666, %v1820
  %v1898 = vadd.f32 %v1667, %v1822
  %v1899 = vadd.f32 %v1668, %v1873
  %v1900 = vadd.f32 %v1669, %v1875
  %s1901 = scalar_lea.vmem %s1, 128
  %v1902 = vld [vmem:[%s1901] sm:$0xf]
  %v1903 = vld [vmem:[%s1901 + $0x4] sm:$0xf]
  %v1904 = vld [vmem:[%s1901 + $0x8] sm:$0xf]
  %v1905 = vld [vmem:[%s1901 + $0xc] sm:$0xf]
  %v1910 = vunpack.c.l.b16 %v1902
  %v1911 = vunpack.c.l.b16 %v1903
  %v1912 = vunpack.c.l.b16 %v1904
  %v1913 = vunpack.c.l.b16 %v1905
  %v1914 = vpack.c.b16 %v1911, %v1910
  %v1915 = vpack.c.b16 %v1913, %v1912
  %1916 = vrot.lane.b32.xlu0 %v1216, 109
  %v1917 = vpop.permute.xlu0 %1916
  %1918 = vrot.lane.b32.xlu0 %v1217, 109
  %v1919 = vpop.permute.xlu0 %1918
  %1920 = vrot.lane.b32.xlu0 %v1218, 109
  %v1921 = vpop.permute.xlu0 %1920
  %1922 = vrot.lane.b32.xlu0 %v1219, 109
  %v1923 = vpop.permute.xlu0 %1922
  %1924 = vrot.lane.b32.xlu0 %v1220, 109
  %v1925 = vpop.permute.xlu0 %1924
  %1926 = vrot.lane.b32.xlu0 %v1221, 109
  %v1927 = vpop.permute.xlu0 %1926
  %1928 = vrot.lane.b32.xlu0 %v1222, 109
  %v1929 = vpop.permute.xlu0 %1928
  %vm1930 = vcmask 891904
  %v1931 = vsel %vm1930, %v1917, %v1919
  %v1932 = vsel %vm1930, %v1919, %v1921
  %v1933 = vsel %vm1930, %v1921, %v1923
  %v1934 = vsel %vm1930, %v1923, %v1925
  %v1935 = vsel %vm1930, %v1925, %v1927
  %v1936 = vsel %vm1930, %v1927, %v1929
  %v1944 = vsel %vm101, %v1914, 0
  %v1947 = vsel %vm101, %v1915, 0
  %1949 = vmatprep.subr.bf16.mxu0 %v1932
  %1950 = vmatpush1.bf16.msra.mxu0 %v1931
  %1951 = vmatprep.subr.bf16.mxu0 0
  %1952 = vmatpush1.bf16.msra.mxu0 0
  %1953 = vmatprep.subr.bf16.mxu0 0
  %1954 = vmatpush1.bf16.msra.mxu0 0
  %1955 = vmatprep.subr.bf16.mxu0 0
  %1956 = vmatpush1.bf16.msra.mxu0 0
  %1957 = vmatprep.subr.bf16.mxu0 0
  %1958 = vmatpush1.bf16.msra.mxu0 0
  %1959 = vmatprep.subr.bf16.mxu0 0
  %1960 = vmatpush1.bf16.msra.mxu0 0
  %1961 = vmatprep.subr.bf16.mxu0 0
  %1962 = vmatpush1.bf16.msra.mxu0 0
  %1963 = vmatprep.subr.bf16.mxu0 0
  %1964 = vmatpush1.bf16.msra.mxu0 0
  %1965 = vmatprep.subr.bf16.mxu0 0
  %1966 = vmatpush1.bf16.msra.mxu0 0
  %1967 = vmatprep.subr.bf16.mxu0 0
  %1968 = vmatpush1.bf16.msra.mxu0 0
  %1969 = vmatprep.subr.bf16.mxu0 0
  %1970 = vmatpush1.bf16.msra.mxu0 0
  %1971 = vmatprep.subr.bf16.mxu0 0
  %1972 = vmatpush1.bf16.msra.mxu0 0
  %1973 = vmatprep.subr.bf16.mxu0 0
  %1974 = vmatpush1.bf16.msra.mxu0 0
  %1975 = vmatprep.subr.bf16.mxu0 0
  %1976 = vmatpush1.bf16.msra.mxu0 0
  %1977 = vmatprep.subr.bf16.mxu0 0
  %1978 = vmatpush1.bf16.msra.mxu0 0
  %1979 = vmatprep.subr.bf16.mxu0 0
  %1980 = vmatpush1.bf16.msra.mxu0 0
  %1981 = vmatprep.mubr.bf16.mxu0 0
  %1982 = vmatmul.mubr.bf16.gmra.mrb[0].mxu0 %v1944
  %v1983 = vpop.f32.mrb[0].mxu0
  %v1984 = vadd.f32 0.0, %v1983
  %v1985 = vpop.f32.mrb[0].mxu0
  %v1986 = vadd.f32 0.0, %v1985
  %v1987 = vpop.f32.mrb[0].mxu0
  %v1988 = vadd.f32 0.0, %v1987
  %v1989 = vpop.f32.mrb[0].mxu0
  %v1990 = vadd.f32 0.0, %v1989
  %1991 = vmatprep.mubr.bf16.mxu0 0
  %1992 = vmatmul.mubr.bf16.gmra.mrb[0].mxu0 %v1947
  %v1993 = vpop.f32.mrb[0].mxu0
  %v1994 = vadd.f32 0.0, %v1993
  %v1995 = vpop.f32.mrb[0].mxu0
  %v1996 = vadd.f32 0.0, %v1995
  %v1997 = vpop.f32.mrb[0].mxu0
  %v1998 = vadd.f32 0.0, %v1997
  %v1999 = vpop.f32.mrb[0].mxu0
  %v2000 = vadd.f32 0.0, %v1999
  %2001 = vdwg.mxu0
  %2002 = vmatprep.subr.bf16.mxu0 %v1934
  %2003 = vmatpush1.bf16.msra.mxu0 %v1933
  %2004 = vmatprep.subr.bf16.mxu0 0
  %2005 = vmatpush1.bf16.msra.mxu0 0
  %2006 = vmatprep.subr.bf16.mxu0 0
  %2007 = vmatpush1.bf16.msra.mxu0 0
  %2008 = vmatprep.subr.bf16.mxu0 0
  %2009 = vmatpush1.bf16.msra.mxu0 0
  %2010 = vmatprep.subr.bf16.mxu0 0
  %2011 = vmatpush1.bf16.msra.mxu0 0
  %2012 = vmatprep.subr.bf16.mxu0 0
  %2013 = vmatpush1.bf16.msra.mxu0 0
  %2014 = vmatprep.subr.bf16.mxu0 0
  %2015 = vmatpush1.bf16.msra.mxu0 0
  %2016 = vmatprep.subr.bf16.mxu0 0
  %2017 = vmatpush1.bf16.msra.mxu0 0
  %2018 = vmatprep.subr.bf16.mxu0 0
  %2019 = vmatpush1.bf16.msra.mxu0 0
  %2020 = vmatprep.subr.bf16.mxu0 0
  %2021 = vmatpush1.bf16.msra.mxu0 0
  %2022 = vmatprep.subr.bf16.mxu0 0
  %2023 = vmatpush1.bf16.msra.mxu0 0
  %2024 = vmatprep.subr.bf16.mxu0 0
  %2025 = vmatpush1.bf16.msra.mxu0 0
  %2026 = vmatprep.subr.bf16.mxu0 0
  %2027 = vmatpush1.bf16.msra.mxu0 0
  %2028 = vmatprep.subr.bf16.mxu0 0
  %2029 = vmatpush1.bf16.msra.mxu0 0
  %2030 = vmatprep.subr.bf16.mxu0 0
  %2031 = vmatpush1.bf16.msra.mxu0 0
  %2032 = vmatprep.subr.bf16.mxu0 0
  %2033 = vmatpush1.bf16.msra.mxu0 0
  %2034 = vmatprep.mubr.bf16.mxu0 0
  %2035 = vmatmul.mubr.bf16.gmra.mrb[0].mxu0 %v1944
  %v2036 = vpop.f32.mrb[0].mxu0
  %v2037 = vadd.f32 0.0, %v2036
  %v2038 = vpop.f32.mrb[0].mxu0
  %v2039 = vadd.f32 0.0, %v2038
  %v2040 = vpop.f32.mrb[0].mxu0
  %v2041 = vadd.f32 0.0, %v2040
  %v2042 = vpop.f32.mrb[0].mxu0
  %v2043 = vadd.f32 0.0, %v2042
  %2044 = vmatprep.mubr.bf16.mxu0 0
  %2045 = vmatmul.mubr.bf16.gmra.mrb[0].mxu0 %v1947
  %v2046 = vpop.f32.mrb[0].mxu0
  %v2047 = vadd.f32 0.0, %v2046
  %v2048 = vpop.f32.mrb[0].mxu0
  %v2049 = vadd.f32 0.0, %v2048
  %v2050 = vpop.f32.mrb[0].mxu0
  %v2051 = vadd.f32 0.0, %v2050
  %v2052 = vpop.f32.mrb[0].mxu0
  %v2053 = vadd.f32 0.0, %v2052
  %2054 = vdwg.mxu0
  %2055 = vmatprep.subr.bf16.mxu0 %v1936
  %2056 = vmatpush1.bf16.msra.mxu0 %v1935
  %2057 = vmatprep.subr.bf16.mxu0 0
  %2058 = vmatpush1.bf16.msra.mxu0 0
  %2059 = vmatprep.subr.bf16.mxu0 0
  %2060 = vmatpush1.bf16.msra.mxu0 0
  %2061 = vmatprep.subr.bf16.mxu0 0
  %2062 = vmatpush1.bf16.msra.mxu0 0
  %2063 = vmatprep.subr.bf16.mxu0 0
  %2064 = vmatpush1.bf16.msra.mxu0 0
  %2065 = vmatprep.subr.bf16.mxu0 0
  %2066 = vmatpush1.bf16.msra.mxu0 0
  %2067 = vmatprep.subr.bf16.mxu0 0
  %2068 = vmatpush1.bf16.msra.mxu0 0
  %2069 = vmatprep.subr.bf16.mxu0 0
  %2070 = vmatpush1.bf16.msra.mxu0 0
  %2071 = vmatprep.subr.bf16.mxu0 0
  %2072 = vmatpush1.bf16.msra.mxu0 0
  %2073 = vmatprep.subr.bf16.mxu0 0
  %2074 = vmatpush1.bf16.msra.mxu0 0
  %2075 = vmatprep.subr.bf16.mxu0 0
  %2076 = vmatpush1.bf16.msra.mxu0 0
  %2077 = vmatprep.subr.bf16.mxu0 0
  %2078 = vmatpush1.bf16.msra.mxu0 0
  %2079 = vmatprep.subr.bf16.mxu0 0
  %2080 = vmatpush1.bf16.msra.mxu0 0
  %2081 = vmatprep.subr.bf16.mxu0 0
  %2082 = vmatpush1.bf16.msra.mxu0 0
  %2083 = vmatprep.subr.bf16.mxu0 0
  %2084 = vmatpush1.bf16.msra.mxu0 0
  %2085 = vmatprep.subr.bf16.mxu0 0
  %2086 = vmatpush1.bf16.msra.mxu0 0
  %2087 = vmatprep.mubr.bf16.mxu0 0
  %2088 = vmatmul.mubr.bf16.gmra.mrb[0].mxu0 %v1944
  %v2089 = vpop.f32.mrb[0].mxu0
  %v2090 = vadd.f32 0.0, %v2089
  %v2091 = vpop.f32.mrb[0].mxu0
  %v2092 = vadd.f32 0.0, %v2091
  %v2093 = vpop.f32.mrb[0].mxu0
  %v2094 = vadd.f32 0.0, %v2093
  %v2095 = vpop.f32.mrb[0].mxu0
  %v2096 = vadd.f32 0.0, %v2095
  %2097 = vmatprep.mubr.bf16.mxu0 0
  %2098 = vmatmul.mubr.bf16.gmra.mrb[0].mxu0 %v1947
  %v2099 = vpop.f32.mrb[0].mxu0
  %v2100 = vadd.f32 0.0, %v2099
  %v2101 = vpop.f32.mrb[0].mxu0
  %v2102 = vadd.f32 0.0, %v2101
  %v2103 = vpop.f32.mrb[0].mxu0
  %v2104 = vadd.f32 0.0, %v2103
  %v2105 = vpop.f32.mrb[0].mxu0
  %v2106 = vadd.f32 0.0, %v2105
  %2107 = vdwg.mxu0
  %v2108 = vadd.f32 %v1877, %v1984
  %v2109 = vadd.f32 %v1878, %v1986
  %v2110 = vadd.f32 %v1879, %v2037
  %v2111 = vadd.f32 %v1880, %v2039
  %v2112 = vadd.f32 %v1881, %v2090
  %v2113 = vadd.f32 %v1882, %v2092
  %v2114 = vadd.f32 %v1883, %v1988
  %v2115 = vadd.f32 %v1884, %v1990
  %v2116 = vadd.f32 %v1885, %v2041
  %v2117 = vadd.f32 %v1886, %v2043
  %v2118 = vadd.f32 %v1887, %v2094
  %v2119 = vadd.f32 %v1888, %v2096
  %v2120 = vadd.f32 %v1889, %v1994
  %v2121 = vadd.f32 %v1890, %v1996
  %v2122 = vadd.f32 %v1891, %v2047
  %v2123 = vadd.f32 %v1892, %v2049
  %v2124 = vadd.f32 %v1893, %v2100
  %v2125 = vadd.f32 %v1894, %v2102
  %v2126 = vadd.f32 %v1895, %v1998
  %v2127 = vadd.f32 %v1896, %v2000
  %v2128 = vadd.f32 %v1897, %v2051
  %v2129 = vadd.f32 %v1898, %v2053
  %v2130 = vadd.f32 %v1899, %v2104
  %v2131 = vadd.f32 %v1900, %v2106
  %v2132 = vld [vmem:[%s2] sm:$0xff]
  %v2133 = vld [vmem:[%s2 + $0x8] sm:$0xff]
  %v2134 = vld [vmem:[%s2 + $0x10] sm:$0xff]
  %v2135 = vld [vmem:[%s2 + $0x18] sm:$0xff]
  %2137 = vset.pattern.permute.xlu0 0
  %2138 = vperm.xlu0 %2137, %v2132
  %v2139 = vpop.permute.xlu0 %2138
  %2142 = vset.pattern.permute.xlu0 0
  %2143 = vperm.xlu0 %2142, %v2133
  %v2144 = vpop.permute.xlu0 %2143
  %2147 = vset.pattern.permute.xlu0 0
  %2148 = vperm.xlu0 %2147, %v2134
  %v2149 = vpop.permute.xlu0 %2148
  %2152 = vset.pattern.permute.xlu0 0
  %2153 = vperm.xlu0 %2152, %v2135
  %v2154 = vpop.permute.xlu0 %2153
  %v2156 = vadd.f32 %v2108, %v2139
  %v2157 = vadd.f32 %v2109, %v2139
  %v2158 = vadd.f32 %v2110, %v2139
  %v2159 = vadd.f32 %v2111, %v2139
  %v2160 = vadd.f32 %v2112, %v2139
  %v2161 = vadd.f32 %v2113, %v2139
  %v2162 = vadd.f32 %v2114, %v2144
  %v2163 = vadd.f32 %v2115, %v2144
  %v2164 = vadd.f32 %v2116, %v2144
  %v2165 = vadd.f32 %v2117, %v2144
  %v2166 = vadd.f32 %v2118, %v2144
  %v2167 = vadd.f32 %v2119, %v2144
  %v2168 = vadd.f32 %v2120, %v2149
  %v2169 = vadd.f32 %v2121, %v2149
  %v2170 = vadd.f32 %v2122, %v2149
  %v2171 = vadd.f32 %v2123, %v2149
  %v2172 = vadd.f32 %v2124, %v2149
  %v2173 = vadd.f32 %v2125, %v2149
  %v2174 = vadd.f32 %v2126, %v2154
  %v2175 = vadd.f32 %v2127, %v2154
  %v2176 = vadd.f32 %v2128, %v2154
  %v2177 = vadd.f32 %v2129, %v2154
  %v2178 = vadd.f32 %v2130, %v2154
  %v2179 = vadd.f32 %v2131, %v2154
  %v2180 = vmax.f32 %v2156, 0.0
  %v2181 = vmax.f32 %v2157, 0.0
  %v2182 = vmax.f32 %v2158, 0.0
  %v2183 = vmax.f32 %v2159, 0.0
  %v2184 = vmax.f32 %v2160, 0.0
  %v2185 = vmax.f32 %v2161, 0.0
  %v2186 = vmax.f32 %v2162, 0.0
  %v2187 = vmax.f32 %v2163, 0.0
  %v2188 = vmax.f32 %v2164, 0.0
  %v2189 = vmax.f32 %v2165, 0.0
  %v2190 = vmax.f32 %v2166, 0.0
  %v2191 = vmax.f32 %v2167, 0.0
  %v2192 = vmax.f32 %v2168, 0.0
  %v2193 = vmax.f32 %v2169, 0.0
  %v2194 = vmax.f32 %v2170, 0.0
  %v2195 = vmax.f32 %v2171, 0.0
  %v2196 = vmax.f32 %v2172, 0.0
  %v2197 = vmax.f32 %v2173, 0.0
  %v2198 = vmax.f32 %v2174, 0.0
  %v2199 = vmax.f32 %v2175, 0.0
  %v2200 = vmax.f32 %v2176, 0.0
  %v2201 = vmax.f32 %v2177, 0.0
  %v2202 = vmax.f32 %v2178, 0.0
  %v2203 = vmax.f32 %v2179, 0.0
  %v2204 = vld [vmem:[%s3] sm:$0x3f]
  %v2206 = vlaneseq
  %v2207 = vshrl.u32 %v2206, 7
  %v2208 = vsub.s32 0, %v2207
  %v2209 = vrot.slane %v2204, %v2208
  %v2210 = vlaneseq
  %v2211 = vshrl.u32 %v2210, 7
  %v2212 = vsub.s32 1, %v2211
  %v2213 = vrot.slane %v2204, %v2212
  %v2214 = vlaneseq
  %v2215 = vshrl.u32 %v2214, 7
  %v2216 = vsub.s32 2, %v2215
  %v2217 = vrot.slane %v2204, %v2216
  %v2218 = vlaneseq
  %v2219 = vshrl.u32 %v2218, 7
  %v2220 = vsub.s32 3, %v2219
  %v2221 = vrot.slane %v2204, %v2220
  %v2222 = vlaneseq
  %v2223 = vshrl.u32 %v2222, 7
  %v2224 = vsub.s32 4, %v2223
  %v2225 = vrot.slane %v2204, %v2224
  %v2226 = vlaneseq
  %v2227 = vshrl.u32 %v2226, 7
  %v2228 = vsub.s32 5, %v2227
  %v2229 = vrot.slane %v2204, %v2228
  %v2236 = vmul.f32 %v2180, %v2209
  %v2237 = vmul.f32 %v2181, %v2213
  %v2238 = vmul.f32 %v2182, %v2217
  %v2239 = vmul.f32 %v2183, %v2221
  %v2240 = vmul.f32 %v2184, %v2225
  %v2241 = vmul.f32 %v2185, %v2229
  %v2242 = vmul.f32 %v2186, %v2209
  %v2243 = vmul.f32 %v2187, %v2213
  %v2244 = vmul.f32 %v2188, %v2217
  %v2245 = vmul.f32 %v2189, %v2221
  %v2246 = vmul.f32 %v2190, %v2225
  %v2247 = vmul.f32 %v2191, %v2229
  %v2248 = vmul.f32 %v2192, %v2209
  %v2249 = vmul.f32 %v2193, %v2213
  %v2250 = vmul.f32 %v2194, %v2217
  %v2251 = vmul.f32 %v2195, %v2221
  %v2252 = vmul.f32 %v2196, %v2225
  %v2253 = vmul.f32 %v2197, %v2229
  %v2254 = vmul.f32 %v2198, %v2209
  %v2255 = vmul.f32 %v2199, %v2213
  %v2256 = vmul.f32 %v2200, %v2217
  %v2257 = vmul.f32 %v2201, %v2221
  %v2258 = vmul.f32 %v2202, %v2225
  %v2259 = vmul.f32 %v2203, %v2229
  %2260 = vst [vmem:[%s4] sm:$0xff] 0
  %2261 = vst [vmem:[%s4 + $0x8] sm:$0xff] 0
  %2262 = vst [vmem:[%s4 + $0x10] sm:$0xff] 0
  %2263 = vst [vmem:[%s4 + $0x18] sm:$0xff] 0
  %2264 = vst [vmem:[%s4 + $0x20] sm:$0xff] 0
  %2265 = vst [vmem:[%s4 + $0x28] sm:$0xff] 0
  %2266 = vst [vmem:[%s4 + $0x30] sm:$0xff] 0
  %2267 = vst [vmem:[%s4 + $0x38] sm:$0xff] 0
  %2268 = vst [vmem:[%s4 + $0x40] sm:$0xff] 0
  %2269 = vst [vmem:[%s4 + $0x48] sm:$0xff] 0
  %2270 = vst [vmem:[%s4 + $0x50] sm:$0xff] 0
  %2271 = vst [vmem:[%s4 + $0x58] sm:$0xff] 0
  %2272 = vst [vmem:[%s4 + $0x60] sm:$0xff] 0
  %2273 = vst [vmem:[%s4 + $0x68] sm:$0xff] 0
  %2274 = vst [vmem:[%s4 + $0x70] sm:$0xff] 0
  %2275 = vst [vmem:[%s4 + $0x78] sm:$0xff] 0
  %v2276 = vpack.c.bf16 %v2242, %v2236
  %v2277 = vpack.c.bf16 %v2243, %v2237
  %v2278 = vpack.c.bf16 %v2244, %v2238
  %v2279 = vpack.c.bf16 %v2245, %v2239
  %v2280 = vpack.c.bf16 %v2246, %v2240
  %v2281 = vpack.c.bf16 %v2247, %v2241
  %v2282 = vpack.c.bf16 %v2254, %v2248
  %v2283 = vpack.c.bf16 %v2255, %v2249
  %v2284 = vpack.c.bf16 %v2256, %v2250
  %v2285 = vpack.c.bf16 %v2257, %v2251
  %v2286 = vpack.c.bf16 %v2258, %v2252
  %v2287 = vpack.c.bf16 %v2259, %v2253
  %v2300 = vunpack.c.l.b16 %v2276
  %v2301 = vunpack.c.l.b16 %v2277
  %v2302 = vunpack.c.l.b16 %v2278
  %v2303 = vunpack.c.l.b16 %v2279
  %v2304 = vunpack.c.l.b16 %v2280
  %v2305 = vunpack.c.l.b16 %v2281
  %v2306 = vunpack.c.h.b16 %v2276
  %v2307 = vunpack.c.h.b16 %v2277
  %v2308 = vunpack.c.h.b16 %v2278
  %v2309 = vunpack.c.h.b16 %v2279
  %v2310 = vunpack.c.h.b16 %v2280
  %v2311 = vunpack.c.h.b16 %v2281
  %v2312 = vunpack.c.l.b16 %v2282
  %v2313 = vunpack.c.l.b16 %v2283
  %v2314 = vunpack.c.l.b16 %v2284
  %v2315 = vunpack.c.l.b16 %v2285
  %v2316 = vunpack.c.l.b16 %v2286
  %v2317 = vunpack.c.l.b16 %v2287
  %v2318 = vunpack.c.h.b16 %v2282
  %v2319 = vunpack.c.h.b16 %v2283
  %v2320 = vunpack.c.h.b16 %v2284
  %v2321 = vunpack.c.h.b16 %v2285
  %v2322 = vunpack.c.h.b16 %v2286
  %v2323 = vunpack.c.h.b16 %v2287
  %v2324 = vpack.c.b16 %v2301, %v2300
  %v2325 = vpack.c.b16 %v2303, %v2302
  %v2326 = vpack.c.b16 %v2305, %v2304
  %v2327 = vpack.c.b16 %v2307, %v2306
  %v2328 = vpack.c.b16 %v2309, %v2308
  %v2329 = vpack.c.b16 %v2311, %v2310
  %v2330 = vpack.c.b16 %v2313, %v2312
  %v2331 = vpack.c.b16 %v2315, %v2314
  %v2332 = vpack.c.b16 %v2317, %v2316
  %v2333 = vpack.c.b16 %v2319, %v2318
  %v2334 = vpack.c.b16 %v2321, %v2320
  %v2335 = vpack.c.b16 %v2323, %v2322
  %2348 = vst [vmem:[%s4 + $0x4] sm:$0xff] %v2324
  %2349 = vst [vmem:[%s4 + $0xc] sm:$0xff] %v2325
  %2350 = vst [vmem:[%s4 + $0x14] sm:$0xff] %v2326
  %2351 = vst [vmem:[%s4 + $0x24] sm:$0xff] %v2327
  %2352 = vst [vmem:[%s4 + $0x2c] sm:$0xff] %v2328
  %2353 = vst [vmem:[%s4 + $0x34] sm:$0xff] %v2329
  %2354 = vst [vmem:[%s4 + $0x44] sm:$0xff] %v2330
  %2355 = vst [vmem:[%s4 + $0x4c] sm:$0xff] %v2331
  %2356 = vst [vmem:[%s4 + $0x54] sm:$0xff] %v2332
  %2357 = vst [vmem:[%s4 + $0x64] sm:$0xff] %v2333
  %2358 = vst [vmem:[%s4 + $0x6c] sm:$0xff] %v2334
  %2359 = vst [vmem:[%s4 + $0x74] sm:$0xff] %v2335
  // Predicated region
  $region18: #{this_net_forward.5} parent=0 // pred_check
    _
  $region19: #{this_net_forward.5} parent=0 // pred_check_branch
    %2361 = sbr.rel (0) target = $region21
  $region20: #{this_net_forward.5} parent=0 // pred_region
    _
  $region21: #{this_net_forward.5} parent=0 // pred_fallthru
    _
  // Predicated region
  $region22: #{this_net_forward.5} parent=0 // pred_check
    _
  $region23: #{this_net_forward.5} parent=0 // pred_check_branch
    %2363 = sbr.rel (0) target = $region25
  $region24: #{this_net_forward.5} parent=0 // pred_region
    _
  $region25: #{this_net_forward.5} parent=0 // pred_fallthru
    _

// kernel: this_net_forward.6
$region0: #{this_net_forward.6}
  #allocation0 [shape = 'u32[]', space=smem, size = 0x4, offset = 0x4, fixed_abs, tag = 'smem constant byte address 0x4 - core index']
  #allocation1 [shape = 'u32[144,128]{1,0:T(1,128)}', space=vmem, size = 0x12000, scoped, tag = 'internal scratch']
  %s0 = inlined_call_operand.vmem [shape: bf16[32,512], index: 0, kind: input, shape index: {}]
  %s1 = inlined_call_operand.vmem [shape: bf16[9,64,32], index: 1, kind: input, shape index: {}]
  %s2 = inlined_call_operand.vmem [shape: f32[64,1], index: 2, kind: input, shape index: {}]
  %s3 = inlined_call_operand.vmem [shape: f32[1,256], index: 3, kind: input, shape index: {}]
  %s4 = inlined_call_operand.vmem [shape: bf16[64,512], index: 4, kind: output, shape index: {}]
  %s5 = sld [smem:[#allocation0]]
  $region26: #{this_net_forward.6} parent=0
    _
  %s7 = ssub.s32 1, %s5
  %s8 = scalar_select 0, %s7, %s5
  // Predicated region
  $region2: #{this_net_forward.6} parent=0 // pred_check
    _
  $region3: #{this_net_forward.6} parent=0 // pred_check_branch
    %10 = sbr.rel (0) target = $region5
  $region4: #{this_net_forward.6} parent=0 // pred_region
    _
  $region5: #{this_net_forward.6} parent=0 // pred_fallthru
    _
  // Predicated region
  $region6: #{this_net_forward.6} parent=0 // pred_check
    _
  $region7: #{this_net_forward.6} parent=0 // pred_check_branch
    %12 = sbr.rel (0) target = $region9
  $region8: #{this_net_forward.6} parent=0 // pred_region
    _
  $region9: #{this_net_forward.6} parent=0 // pred_fallthru
    _
  // Predicated region
  $region10: #{this_net_forward.6} parent=0 // pred_check
    _
  $region11: #{this_net_forward.6} parent=0 // pred_check_branch
    %14 = sbr.rel (0) target = $region13
  $region12: #{this_net_forward.6} parent=0 // pred_region
    _
  $region13: #{this_net_forward.6} parent=0 // pred_fallthru
    _
  // Predicated region
  $region14: #{this_net_forward.6} parent=0 // pred_check
    _
  $region15: #{this_net_forward.6} parent=0 // pred_check_branch
    %16 = sbr.rel (0) target = $region17
  $region16: #{this_net_forward.6} parent=0 // pred_region
    _
  $region17: #{this_net_forward.6} parent=0 // pred_fallthru
    _
  %v18 = vld [vmem:[%s0] sm:$0xff]
  %v19 = vld [vmem:[%s0 + $0x8] sm:$0xf]
  %v20 = vld [vmem:[%s0 + $0x10] sm:$0xff]
  %v21 = vld [vmem:[%s0 + $0x18] sm:$0xf]
  %v22 = vld [vmem:[%s0 + $0x20] sm:$0xff]
  %v23 = vld [vmem:[%s0 + $0x28] sm:$0xf]
  %v24 = vld [vmem:[%s0 + $0x30] sm:$0xff]
  %v25 = vld [vmem:[%s0 + $0x38] sm:$0xf]
  %v26 = vld [vmem:[%s1] sm:$0xf]
  %v27 = vld [vmem:[%s1 + $0x4] sm:$0xf]
  %v28 = vld [vmem:[%s1 + $0x8] sm:$0xf]
  %v29 = vld [vmem:[%s1 + $0xc] sm:$0xf]
  %v30 = vld [vmem:[%s1 + $0x10] sm:$0xf]
  %v31 = vld [vmem:[%s1 + $0x14] sm:$0xf]
  %v32 = vld [vmem:[%s1 + $0x18] sm:$0xf]
  %v33 = vld [vmem:[%s1 + $0x1c] sm:$0xf]
  %s34 = scalar_lea.vmem %s1, 32
  %v35 = vld [vmem:[%s34] sm:$0xf]
  %v36 = vld [vmem:[%s34 + $0x4] sm:$0xf]
  %v37 = vld [vmem:[%s34 + $0x8] sm:$0xf]
  %v38 = vld [vmem:[%s34 + $0xc] sm:$0xf]
  %v39 = vld [vmem:[%s34 + $0x10] sm:$0xf]
  %v40 = vld [vmem:[%s34 + $0x14] sm:$0xf]
  %v41 = vld [vmem:[%s34 + $0x18] sm:$0xf]
  %v42 = vld [vmem:[%s34 + $0x1c] sm:$0xf]
  %v51 = vunpack.c.l.b16 %v35
  %v52 = vunpack.c.l.b16 %v36
  %v53 = vunpack.c.l.b16 %v37
  %v54 = vunpack.c.l.b16 %v38
  %v55 = vunpack.c.l.b16 %v39
  %v56 = vunpack.c.l.b16 %v40
  %v57 = vunpack.c.l.b16 %v41
  %v58 = vunpack.c.l.b16 %v42
  %v59 = vpack.c.b16 %v52, %v51
  %v60 = vpack.c.b16 %v54, %v53
  %v61 = vpack.c.b16 %v56, %v55
  %v62 = vpack.c.b16 %v58, %v57
  %v71 = vunpack.c.l.b16 %v18
  %v72 = vunpack.c.h.b16 %v18
  %v73 = vunpack.c.l.b16 %v19
  %v74 = vunpack.c.l.b16 %v20
  %v75 = vunpack.c.h.b16 %v20
  %v76 = vunpack.c.l.b16 %v21
  %v77 = vunpack.c.l.b16 %v22
  %v78 = vunpack.c.h.b16 %v22
  %v79 = vunpack.c.l.b16 %v23
  %v80 = vunpack.c.l.b16 %v24
  %v81 = vunpack.c.h.b16 %v24
  %v82 = vunpack.c.l.b16 %v25
  %v83 = vpack.c.b16 %v74, %v71
  %v84 = vpack.c.b16 %v75, %v72
  %v85 = vpack.c.b16 %v76, %v73
  %v86 = vpack.c.b16 %v80, %v77
  %v87 = vpack.c.b16 %v81, %v78
  %v88 = vpack.c.b16 %v82, %v79
  %89 = vrot.lane.b32.xlu0 %v83, 10
  %v90 = vpop.permute.xlu0 %89
  %91 = vrot.lane.b32.xlu0 %v84, 10
  %v92 = vpop.permute.xlu0 %91
  %93 = vrot.lane.b32.xlu0 %v85, 10
  %v94 = vpop.permute.xlu0 %93
  %95 = vrot.lane.b32.xlu0 %v86, 10
  %v96 = vpop.permute.xlu0 %95
  %97 = vrot.lane.b32.xlu0 %v87, 10
  %v98 = vpop.permute.xlu0 %97
  %99 = vrot.lane.b32.xlu0 %v88, 10
  %v100 = vpop.permute.xlu0 %99
  %vm101 = vcmask 80896
  %v102 = vsel %vm101, %v90, %v92
  %v103 = vsel %vm101, %v92, %v94
  %v104 = vsel %vm101, %v96, %v98
  %v105 = vsel %vm101, %v98, %v100
  %vm110 = vcmask 261120
  %v112 = vsel %vm110, %v59, 0
  %v115 = vsel %vm110, %v60, 0
  %v118 = vsel %vm110, %v61, 0
  %v121 = vsel %vm110, %v62, 0
  %123 = vmatprep.subr.bf16.mxu0 %v103
  %124 = vmatpush1.bf16.msra.mxu0 %v102
  %125 = vmatprep.subr.bf16.mxu0 %v105
  %126 = vmatpush1.bf16.msra.mxu0 %v104
  %127 = vmatprep.subr.bf16.mxu0 0
  %128 = vmatpush1.bf16.msra.mxu0 0
  %129 = vmatprep.subr.bf16.mxu0 0
  %130 = vmatpush1.bf16.msra.mxu0 0
  %131 = vmatprep.subr.bf16.mxu0 0
  %132 = vmatpush1.bf16.msra.mxu0 0
  %133 = vmatprep.subr.bf16.mxu0 0
  %134 = vmatpush1.bf16.msra.mxu0 0
  %135 = vmatprep.subr.bf16.mxu0 0
  %136 = vmatpush1.bf16.msra.mxu0 0
  %137 = vmatprep.subr.bf16.mxu0 0
  %138 = vmatpush1.bf16.msra.mxu0 0
  %139 = vmatprep.subr.bf16.mxu0 0
  %140 = vmatpush1.bf16.msra.mxu0 0
  %141 = vmatprep.subr.bf16.mxu0 0
  %142 = vmatpush1.bf16.msra.mxu0 0
  %143 = vmatprep.subr.bf16.mxu0 0
  %144 = vmatpush1.bf16.msra.mxu0 0
  %145 = vmatprep.subr.bf16.mxu0 0
  %146 = vmatpush1.bf16.msra.mxu0 0
  %147 = vmatprep.subr.bf16.mxu0 0
  %148 = vmatpush1.bf16.msra.mxu0 0
  %149 = vmatprep.subr.bf16.mxu0 0
  %150 = vmatpush1.bf16.msra.mxu0 0
  %151 = vmatprep.subr.bf16.mxu0 0
  %152 = vmatpush1.bf16.msra.mxu0 0
  %153 = vmatprep.subr.bf16.mxu0 0
  %154 = vmatpush1.bf16.msra.mxu0 0
  %155 = vmatprep.mubr.bf16.mxu0 0
  %156 = vmatmul.mubr.bf16.gmra.mrb[0].mxu0 %v112
  %v157 = vpop.f32.mrb[0].mxu0
  %v158 = vadd.f32 0.0, %v157
  %v159 = vpop.f32.mrb[0].mxu0
  %v160 = vadd.f32 0.0, %v159
  %v161 = vpop.f32.mrb[0].mxu0
  %v162 = vadd.f32 0.0, %v161
  %v163 = vpop.f32.mrb[0].mxu0
  %v164 = vadd.f32 0.0, %v163
  %165 = vmatprep.mubr.bf16.mxu0 0
  %166 = vmatmul.mubr.bf16.gmra.mrb[0].mxu0 %v115
  %v167 = vpop.f32.mrb[0].mxu0
  %v168 = vadd.f32 0.0, %v167
  %v169 = vpop.f32.mrb[0].mxu0
  %v170 = vadd.f32 0.0, %v169
  %v171 = vpop.f32.mrb[0].mxu0
  %v172 = vadd.f32 0.0, %v171
  %v173 = vpop.f32.mrb[0].mxu0
  %v174 = vadd.f32 0.0, %v173
  %175 = vmatprep.mubr.bf16.mxu0 0
  %176 = vmatmul.mubr.bf16.gmra.mrb[0].mxu0 %v118
  %v177 = vpop.f32.mrb[0].mxu0
  %v178 = vadd.f32 0.0, %v177
  %v179 = vpop.f32.mrb[0].mxu0
  %v180 = vadd.f32 0.0, %v179
  %v181 = vpop.f32.mrb[0].mxu0
  %v182 = vadd.f32 0.0, %v181
  %v183 = vpop.f32.mrb[0].mxu0
  %v184 = vadd.f32 0.0, %v183
  %185 = vmatprep.mubr.bf16.mxu0 0
  %186 = vmatmul.mubr.bf16.gmra.mrb[0].mxu0 %v121
  %v187 = vpop.f32.mrb[0].mxu0
  %v188 = vadd.f32 0.0, %v187
  %v189 = vpop.f32.mrb[0].mxu0
  %v190 = vadd.f32 0.0, %v189
  %v191 = vpop.f32.mrb[0].mxu0
  %v192 = vadd.f32 0.0, %v191
  %v193 = vpop.f32.mrb[0].mxu0
  %v194 = vadd.f32 0.0, %v193
  %195 = vdwg.mxu0
  %v204 = vunpack.c.l.b16 %v26
  %v205 = vunpack.c.l.b16 %v27
  %v206 = vunpack.c.l.b16 %v28
  %v207 = vunpack.c.l.b16 %v29
  %v208 = vunpack.c.l.b16 %v30
  %v209 = vunpack.c.l.b16 %v31
  %v210 = vunpack.c.l.b16 %v32
  %v211 = vunpack.c.l.b16 %v33
  %v212 = vpack.c.b16 %v205, %v204
  %v213 = vpack.c.b16 %v207, %v206
  %v214 = vpack.c.b16 %v209, %v208
  %v215 = vpack.c.b16 %v211, %v210
  %216 = vrot.lane.b32.xlu0 %v83, 11
  %v217 = vpop.permute.xlu0 %216
  %218 = vrot.lane.b32.xlu0 %v84, 11
  %v219 = vpop.permute.xlu0 %218
  %220 = vrot.lane.b32.xlu0 %v85, 11
  %v221 = vpop.permute.xlu0 %220
  %222 = vrot.lane.b32.xlu0 %v86, 11
  %v223 = vpop.permute.xlu0 %222
  %224 = vrot.lane.b32.xlu0 %v87, 11
  %v225 = vpop.permute.xlu0 %224
  %226 = vrot.lane.b32.xlu0 %v88, 11
  %v227 = vpop.permute.xlu0 %226
  %vm228 = vcmask 89088
  %v229 = vsel %vm228, %v217, %v219
  %v230 = vsel %vm228, %v219, %v221
  %v231 = vsel %vm228, %v223, %v225
  %v232 = vsel %vm228, %v225, %v227
  %v238 = vsel %vm110, %v212, 0
  %v241 = vsel %vm110, %v213, 0
  %v244 = vsel %vm110, %v214, 0
  %v247 = vsel %vm110, %v215, 0
  %249 = vmatprep.subr.bf16.mxu0 %v230
  %250 = vmatpush1.bf16.msra.mxu0 %v229
  %251 = vmatprep.subr.bf16.mxu0 %v232
  %252 = vmatpush1.bf16.msra.mxu0 %v231
  %253 = vmatprep.subr.bf16.mxu0 0
  %254 = vmatpush1.bf16.msra.mxu0 0
  %255 = vmatprep.subr.bf16.mxu0 0
  %256 = vmatpush1.bf16.msra.mxu0 0
  %257 = vmatprep.subr.bf16.mxu0 0
  %258 = vmatpush1.bf16.msra.mxu0 0
  %259 = vmatprep.subr.bf16.mxu0 0
  %260 = vmatpush1.bf16.msra.mxu0 0
  %261 = vmatprep.subr.bf16.mxu0 0
  %262 = vmatpush1.bf16.msra.mxu0 0
  %263 = vmatprep.subr.bf16.mxu0 0
  %264 = vmatpush1.bf16.msra.mxu0 0
  %265 = vmatprep.subr.bf16.mxu0 0
  %266 = vmatpush1.bf16.msra.mxu0 0
  %267 = vmatprep.subr.bf16.mxu0 0
  %268 = vmatpush1.bf16.msra.mxu0 0
  %269 = vmatprep.subr.bf16.mxu0 0
  %270 = vmatpush1.bf16.msra.mxu0 0
  %271 = vmatprep.subr.bf16.mxu0 0
  %272 = vmatpush1.bf16.msra.mxu0 0
  %273 = vmatprep.subr.bf16.mxu0 0
  %274 = vmatpush1.bf16.msra.mxu0 0
  %275 = vmatprep.subr.bf16.mxu0 0
  %276 = vmatpush1.bf16.msra.mxu0 0
  %277 = vmatprep.subr.bf16.mxu0 0
  %278 = vmatpush1.bf16.msra.mxu0 0
  %279 = vmatprep.subr.bf16.mxu0 0
  %280 = vmatpush1.bf16.msra.mxu0 0
  %281 = vmatprep.mubr.bf16.mxu0 0
  %282 = vmatmul.mubr.bf16.gmra.mrb[0].mxu0 %v238
  %v283 = vpop.f32.mrb[0].mxu0
  %v284 = vadd.f32 %v158, %v283
  %v285 = vpop.f32.mrb[0].mxu0
  %v286 = vadd.f32 %v160, %v285
  %v287 = vpop.f32.mrb[0].mxu0
  %v288 = vadd.f32 %v162, %v287
  %v289 = vpop.f32.mrb[0].mxu0
  %v290 = vadd.f32 %v164, %v289
  %291 = vmatprep.mubr.bf16.mxu0 0
  %292 = vmatmul.mubr.bf16.gmra.mrb[0].mxu0 %v241
  %v293 = vpop.f32.mrb[0].mxu0
  %v294 = vadd.f32 %v168, %v293
  %v295 = vpop.f32.mrb[0].mxu0
  %v296 = vadd.f32 %v170, %v295
  %v297 = vpop.f32.mrb[0].mxu0
  %v298 = vadd.f32 %v172, %v297
  %v299 = vpop.f32.mrb[0].mxu0
  %v300 = vadd.f32 %v174, %v299
  %301 = vmatprep.mubr.bf16.mxu0 0
  %302 = vmatmul.mubr.bf16.gmra.mrb[0].mxu0 %v244
  %v303 = vpop.f32.mrb[0].mxu0
  %v304 = vadd.f32 %v178, %v303
  %v305 = vpop.f32.mrb[0].mxu0
  %v306 = vadd.f32 %v180, %v305
  %v307 = vpop.f32.mrb[0].mxu0
  %v308 = vadd.f32 %v182, %v307
  %v309 = vpop.f32.mrb[0].mxu0
  %v310 = vadd.f32 %v184, %v309
  %311 = vmatprep.mubr.bf16.mxu0 0
  %312 = vmatmul.mubr.bf16.gmra.mrb[0].mxu0 %v247
  %v313 = vpop.f32.mrb[0].mxu0
  %v314 = vadd.f32 %v188, %v313
  %v315 = vpop.f32.mrb[0].mxu0
  %v316 = vadd.f32 %v190, %v315
  %v317 = vpop.f32.mrb[0].mxu0
  %v318 = vadd.f32 %v192, %v317
  %v319 = vpop.f32.mrb[0].mxu0
  %v320 = vadd.f32 %v194, %v319
  %321 = vdwg.mxu0
  %s322 = scalar_lea.vmem %s1, 64
  %v323 = vld [vmem:[%s322] sm:$0xf]
  %v324 = vld [vmem:[%s322 + $0x4] sm:$0xf]
  %v325 = vld [vmem:[%s322 + $0x8] sm:$0xf]
  %v326 = vld [vmem:[%s322 + $0xc] sm:$0xf]
  %v327 = vld [vmem:[%s322 + $0x10] sm:$0xf]
  %v328 = vld [vmem:[%s322 + $0x14] sm:$0xf]
  %v329 = vld [vmem:[%s322 + $0x18] sm:$0xf]
  %v330 = vld [vmem:[%s322 + $0x1c] sm:$0xf]
  %v339 = vunpack.c.l.b16 %v323
  %v340 = vunpack.c.l.b16 %v324
  %v341 = vunpack.c.l.b16 %v325
  %v342 = vunpack.c.l.b16 %v326
  %v343 = vunpack.c.l.b16 %v327
  %v344 = vunpack.c.l.b16 %v328
  %v345 = vunpack.c.l.b16 %v329
  %v346 = vunpack.c.l.b16 %v330
  %v347 = vpack.c.b16 %v340, %v339
  %v348 = vpack.c.b16 %v342, %v341
  %v349 = vpack.c.b16 %v344, %v343
  %v350 = vpack.c.b16 %v346, %v345
  %351 = vrot.lane.b32.xlu0 %v83, 9
  %v352 = vpop.permute.xlu0 %351
  %353 = vrot.lane.b32.xlu0 %v84, 9
  %v354 = vpop.permute.xlu0 %353
  %355 = vrot.lane.b32.xlu0 %v85, 9
  %v356 = vpop.permute.xlu0 %355
  %357 = vrot.lane.b32.xlu0 %v86, 9
  %v358 = vpop.permute.xlu0 %357
  %359 = vrot.lane.b32.xlu0 %v87, 9
  %v360 = vpop.permute.xlu0 %359
  %361 = vrot.lane.b32.xlu0 %v88, 9
  %v362 = vpop.permute.xlu0 %361
  %vm363 = vcmask 72704
  %v364 = vsel %vm363, %v352, %v354
  %v365 = vsel %vm363, %v354, %v356
  %v366 = vsel %vm363, %v358, %v360
  %v367 = vsel %vm363, %v360, %v362
  %v373 = vsel %vm110, %v347, 0
  %v376 = vsel %vm110, %v348, 0
  %v379 = vsel %vm110, %v349, 0
  %v382 = vsel %vm110, %v350, 0
  %384 = vmatprep.subr.bf16.mxu0 %v365
  %385 = vmatpush1.bf16.msra.mxu0 %v364
  %386 = vmatprep.subr.bf16.mxu0 %v367
  %387 = vmatpush1.bf16.msra.mxu0 %v366
  %388 = vmatprep.subr.bf16.mxu0 0
  %389 = vmatpush1.bf16.msra.mxu0 0
  %390 = vmatprep.subr.bf16.mxu0 0
  %391 = vmatpush1.bf16.msra.mxu0 0
  %392 = vmatprep.subr.bf16.mxu0 0
  %393 = vmatpush1.bf16.msra.mxu0 0
  %394 = vmatprep.subr.bf16.mxu0 0
  %395 = vmatpush1.bf16.msra.mxu0 0
  %396 = vmatprep.subr.bf16.mxu0 0
  %397 = vmatpush1.bf16.msra.mxu0 0
  %398 = vmatprep.subr.bf16.mxu0 0
  %399 = vmatpush1.bf16.msra.mxu0 0
  %400 = vmatprep.subr.bf16.mxu0 0
  %401 = vmatpush1.bf16.msra.mxu0 0
  %402 = vmatprep.subr.bf16.mxu0 0
  %403 = vmatpush1.bf16.msra.mxu0 0
  %404 = vmatprep.subr.bf16.mxu0 0
  %405 = vmatpush1.bf16.msra.mxu0 0
  %406 = vmatprep.subr.bf16.mxu0 0
  %407 = vmatpush1.bf16.msra.mxu0 0
  %408 = vmatprep.subr.bf16.mxu0 0
  %409 = vmatpush1.bf16.msra.mxu0 0
  %410 = vmatprep.subr.bf16.mxu0 0
  %411 = vmatpush1.bf16.msra.mxu0 0
  %412 = vmatprep.subr.bf16.mxu0 0
  %413 = vmatpush1.bf16.msra.mxu0 0
  %414 = vmatprep.subr.bf16.mxu0 0
  %415 = vmatpush1.bf16.msra.mxu0 0
  %416 = vmatprep.mubr.bf16.mxu0 0
  %417 = vmatmul.mubr.bf16.gmra.mrb[0].mxu0 %v373
  %v418 = vpop.f32.mrb[0].mxu0
  %v419 = vadd.f32 0.0, %v418
  %v420 = vpop.f32.mrb[0].mxu0
  %v421 = vadd.f32 0.0, %v420
  %v422 = vpop.f32.mrb[0].mxu0
  %v423 = vadd.f32 0.0, %v422
  %v424 = vpop.f32.mrb[0].mxu0
  %v425 = vadd.f32 0.0, %v424
  %426 = vmatprep.mubr.bf16.mxu0 0
  %427 = vmatmul.mubr.bf16.gmra.mrb[0].mxu0 %v376
  %v428 = vpop.f32.mrb[0].mxu0
  %v429 = vadd.f32 0.0, %v428
  %v430 = vpop.f32.mrb[0].mxu0
  %v431 = vadd.f32 0.0, %v430
  %v432 = vpop.f32.mrb[0].mxu0
  %v433 = vadd.f32 0.0, %v432
  %v434 = vpop.f32.mrb[0].mxu0
  %v435 = vadd.f32 0.0, %v434
  %436 = vmatprep.mubr.bf16.mxu0 0
  %437 = vmatmul.mubr.bf16.gmra.mrb[0].mxu0 %v379
  %v438 = vpop.f32.mrb[0].mxu0
  %v439 = vadd.f32 0.0, %v438
  %v440 = vpop.f32.mrb[0].mxu0
  %v441 = vadd.f32 0.0, %v440
  %v442 = vpop.f32.mrb[0].mxu0
  %v443 = vadd.f32 0.0, %v442
  %v444 = vpop.f32.mrb[0].mxu0
  %v445 = vadd.f32 0.0, %v444
  %446 = vmatprep.mubr.bf16.mxu0 0
  %447 = vmatmul.mubr.bf16.gmra.mrb[0].mxu0 %v382
  %v448 = vpop.f32.mrb[0].mxu0
  %v449 = vadd.f32 0.0, %v448
  %v450 = vpop.f32.mrb[0].mxu0
  %v451 = vadd.f32 0.0, %v450
  %v452 = vpop.f32.mrb[0].mxu0
  %v453 = vadd.f32 0.0, %v452
  %v454 = vpop.f32.mrb[0].mxu0
  %v455 = vadd.f32 0.0, %v454
  %456 = vdwg.mxu0
  %v457 = vadd.f32 %v284, %v419
  %v458 = vadd.f32 %v286, %v421
  %v459 = vadd.f32 %v288, %v423
  %v460 = vadd.f32 %v290, %v425
  %v461 = vadd.f32 %v294, %v429
  %v462 = vadd.f32 %v296, %v431
  %v463 = vadd.f32 %v298, %v433
  %v464 = vadd.f32 %v300, %v435
  %v465 = vadd.f32 %v304, %v439
  %v466 = vadd.f32 %v306, %v441
  %v467 = vadd.f32 %v308, %v443
  %v468 = vadd.f32 %v310, %v445
  %v469 = vadd.f32 %v314, %v449
  %v470 = vadd.f32 %v316, %v451
  %v471 = vadd.f32 %v318, %v453
  %v472 = vadd.f32 %v320, %v455
  %s473 = scalar_lea.vmem %s1, 96
  %v474 = vld [vmem:[%s473] sm:$0xf]
  %v475 = vld [vmem:[%s473 + $0x4] sm:$0xf]
  %v476 = vld [vmem:[%s473 + $0x8] sm:$0xf]
  %v477 = vld [vmem:[%s473 + $0xc] sm:$0xf]
  %v478 = vld [vmem:[%s473 + $0x10] sm:$0xf]
  %v479 = vld [vmem:[%s473 + $0x14] sm:$0xf]
  %v480 = vld [vmem:[%s473 + $0x18] sm:$0xf]
  %v481 = vld [vmem:[%s473 + $0x1c] sm:$0xf]
  %v490 = vunpack.c.l.b16 %v474
  %v491 = vunpack.c.l.b16 %v475
  %v492 = vunpack.c.l.b16 %v476
  %v493 = vunpack.c.l.b16 %v477
  %v494 = vunpack.c.l.b16 %v478
  %v495 = vunpack.c.l.b16 %v479
  %v496 = vunpack.c.l.b16 %v480
  %v497 = vunpack.c.l.b16 %v481
  %v498 = vpack.c.b16 %v491, %v490
  %v499 = vpack.c.b16 %v493, %v492
  %v500 = vpack.c.b16 %v495, %v494
  %v501 = vpack.c.b16 %v497, %v496
  %502 = vrot.lane.b32.xlu0 %v83, 1
  %v503 = vpop.permute.xlu0 %502
  %504 = vrot.lane.b32.xlu0 %v84, 1
  %v505 = vpop.permute.xlu0 %504
  %506 = vrot.lane.b32.xlu0 %v85, 1
  %v507 = vpop.permute.xlu0 %506
  %508 = vrot.lane.b32.xlu0 %v86, 1
  %v509 = vpop.permute.xlu0 %508
  %510 = vrot.lane.b32.xlu0 %v87, 1
  %v511 = vpop.permute.xlu0 %510
  %512 = vrot.lane.b32.xlu0 %v88, 1
  %v513 = vpop.permute.xlu0 %512
  %vm514 = vcmask 7168
  %v515 = vsel %vm514, %v503, %v505
  %v516 = vsel %vm514, %v505, %v507
  %v517 = vsel %vm514, %v509, %v511
  %v518 = vsel %vm514, %v511, %v513
  %v524 = vsel %vm110, %v498, 0
  %v527 = vsel %vm110, %v499, 0
  %v530 = vsel %vm110, %v500, 0
  %v533 = vsel %vm110, %v501, 0
  %535 = vmatprep.subr.bf16.mxu0 %v516
  %536 = vmatpush1.bf16.msra.mxu0 %v515
  %537 = vmatprep.subr.bf16.mxu0 %v518
  %538 = vmatpush1.bf16.msra.mxu0 %v517
  %539 = vmatprep.subr.bf16.mxu0 0
  %540 = vmatpush1.bf16.msra.mxu0 0
  %541 = vmatprep.subr.bf16.mxu0 0
  %542 = vmatpush1.bf16.msra.mxu0 0
  %543 = vmatprep.subr.bf16.mxu0 0
  %544 = vmatpush1.bf16.msra.mxu0 0
  %545 = vmatprep.subr.bf16.mxu0 0
  %546 = vmatpush1.bf16.msra.mxu0 0
  %547 = vmatprep.subr.bf16.mxu0 0
  %548 = vmatpush1.bf16.msra.mxu0 0
  %549 = vmatprep.subr.bf16.mxu0 0
  %550 = vmatpush1.bf16.msra.mxu0 0
  %551 = vmatprep.subr.bf16.mxu0 0
  %552 = vmatpush1.bf16.msra.mxu0 0
  %553 = vmatprep.subr.bf16.mxu0 0
  %554 = vmatpush1.bf16.msra.mxu0 0
  %555 = vmatprep.subr.bf16.mxu0 0
  %556 = vmatpush1.bf16.msra.mxu0 0
  %557 = vmatprep.subr.bf16.mxu0 0
  %558 = vmatpush1.bf16.msra.mxu0 0
  %559 = vmatprep.subr.bf16.mxu0 0
  %560 = vmatpush1.bf16.msra.mxu0 0
  %561 = vmatprep.subr.bf16.mxu0 0
  %562 = vmatpush1.bf16.msra.mxu0 0
  %563 = vmatprep.subr.bf16.mxu0 0
  %564 = vmatpush1.bf16.msra.mxu0 0
  %565 = vmatprep.subr.bf16.mxu0 0
  %566 = vmatpush1.bf16.msra.mxu0 0
  %567 = vmatprep.mubr.bf16.mxu0 0
  %568 = vmatmul.mubr.bf16.gmra.mrb[0].mxu0 %v524
  %v569 = vpop.f32.mrb[0].mxu0
  %v570 = vadd.f32 0.0, %v569
  %v571 = vpop.f32.mrb[0].mxu0
  %v572 = vadd.f32 0.0, %v571
  %v573 = vpop.f32.mrb[0].mxu0
  %v574 = vadd.f32 0.0, %v573
  %v575 = vpop.f32.mrb[0].mxu0
  %v576 = vadd.f32 0.0, %v575
  %577 = vmatprep.mubr.bf16.mxu0 0
  %578 = vmatmul.mubr.bf16.gmra.mrb[0].mxu0 %v527
  %v579 = vpop.f32.mrb[0].mxu0
  %v580 = vadd.f32 0.0, %v579
  %v581 = vpop.f32.mrb[0].mxu0
  %v582 = vadd.f32 0.0, %v581
  %v583 = vpop.f32.mrb[0].mxu0
  %v584 = vadd.f32 0.0, %v583
  %v585 = vpop.f32.mrb[0].mxu0
  %v586 = vadd.f32 0.0, %v585
  %587 = vmatprep.mubr.bf16.mxu0 0
  %588 = vmatmul.mubr.bf16.gmra.mrb[0].mxu0 %v530
  %v589 = vpop.f32.mrb[0].mxu0
  %v590 = vadd.f32 0.0, %v589
  %v591 = vpop.f32.mrb[0].mxu0
  %v592 = vadd.f32 0.0, %v591
  %v593 = vpop.f32.mrb[0].mxu0
  %v594 = vadd.f32 0.0, %v593
  %v595 = vpop.f32.mrb[0].mxu0
  %v596 = vadd.f32 0.0, %v595
  %597 = vmatprep.mubr.bf16.mxu0 0
  %598 = vmatmul.mubr.bf16.gmra.mrb[0].mxu0 %v533
  %v599 = vpop.f32.mrb[0].mxu0
  %v600 = vadd.f32 0.0, %v599
  %v601 = vpop.f32.mrb[0].mxu0
  %v602 = vadd.f32 0.0, %v601
  %v603 = vpop.f32.mrb[0].mxu0
  %v604 = vadd.f32 0.0, %v603
  %v605 = vpop.f32.mrb[0].mxu0
  %v606 = vadd.f32 0.0, %v605
  %607 = vdwg.mxu0
  %v608 = vadd.f32 %v457, %v570
  %v609 = vadd.f32 %v458, %v572
  %v610 = vadd.f32 %v459, %v574
  %v611 = vadd.f32 %v460, %v576
  %v612 = vadd.f32 %v461, %v580
  %v613 = vadd.f32 %v462, %v582
  %v614 = vadd.f32 %v463, %v584
  %v615 = vadd.f32 %v464, %v586
  %v616 = vadd.f32 %v465, %v590
  %v617 = vadd.f32 %v466, %v592
  %v618 = vadd.f32 %v467, %v594
  %v619 = vadd.f32 %v468, %v596
  %v620 = vadd.f32 %v469, %v600
  %v621 = vadd.f32 %v470, %v602
  %v622 = vadd.f32 %v471, %v604
  %v623 = vadd.f32 %v472, %v606
  %v624 = vld [vmem:[%s0 + $0x4] sm:$0xff]
  %v625 = vld [vmem:[%s0 + $0x14] sm:$0xff]
  %v626 = vld [vmem:[%s0 + $0x24] sm:$0xff]
  %v627 = vld [vmem:[%s0 + $0x34] sm:$0xff]
  %s628 = scalar_lea.vmem %s1, 128
  %v629 = vld [vmem:[%s628] sm:$0xf]
  %v630 = vld [vmem:[%s628 + $0x4] sm:$0xf]
  %v631 = vld [vmem:[%s628 + $0x8] sm:$0xf]
  %v632 = vld [vmem:[%s628 + $0xc] sm:$0xf]
  %v633 = vld [vmem:[%s628 + $0x10] sm:$0xf]
  %v634 = vld [vmem:[%s628 + $0x14] sm:$0xf]
  %v635 = vld [vmem:[%s628 + $0x18] sm:$0xf]
  %v636 = vld [vmem:[%s628 + $0x1c] sm:$0xf]
  %v645 = vunpack.c.l.b16 %v629
  %v646 = vunpack.c.l.b16 %v630
  %v647 = vunpack.c.l.b16 %v631
  %v648 = vunpack.c.l.b16 %v632
  %v649 = vunpack.c.l.b16 %v633
  %v650 = vunpack.c.l.b16 %v634
  %v651 = vunpack.c.l.b16 %v635
  %v652 = vunpack.c.l.b16 %v636
  %v653 = vpack.c.b16 %v646, %v645
  %v654 = vpack.c.b16 %v648, %v647
  %v655 = vpack.c.b16 %v650, %v649
  %v656 = vpack.c.b16 %v652, %v651
  %v661 = vunpack.c.l.b16 %v624
  %v662 = vunpack.c.h.b16 %v624
  %v663 = vunpack.c.l.b16 %v625
  %v664 = vunpack.c.h.b16 %v625
  %v665 = vunpack.c.l.b16 %v626
  %v666 = vunpack.c.h.b16 %v626
  %v667 = vunpack.c.l.b16 %v627
  %v668 = vunpack.c.h.b16 %v627
  %v669 = vpack.c.b16 %v663, %v661
  %v670 = vpack.c.b16 %v664, %v662
  %v671 = vpack.c.b16 %v667, %v665
  %v672 = vpack.c.b16 %v668, %v666
  %v678 = vsel %vm110, %v653, 0
  %v681 = vsel %vm110, %v654, 0
  %v684 = vsel %vm110, %v655, 0
  %v687 = vsel %vm110, %v656, 0
  %689 = vmatprep.subr.bf16.mxu0 %v670
  %690 = vmatpush1.bf16.msra.mxu0 %v669
  %691 = vmatprep.subr.bf16.mxu0 %v672
  %692 = vmatpush1.bf16.msra.mxu0 %v671
  %693 = vmatprep.subr.bf16.mxu0 0
  %694 = vmatpush1.bf16.msra.mxu0 0
  %695 = vmatprep.subr.bf16.mxu0 0
  %696 = vmatpush1.bf16.msra.mxu0 0
  %697 = vmatprep.subr.bf16.mxu0 0
  %698 = vmatpush1.bf16.msra.mxu0 0
  %699 = vmatprep.subr.bf16.mxu0 0
  %700 = vmatpush1.bf16.msra.mxu0 0
  %701 = vmatprep.subr.bf16.mxu0 0
  %702 = vmatpush1.bf16.msra.mxu0 0
  %703 = vmatprep.subr.bf16.mxu0 0
  %704 = vmatpush1.bf16.msra.mxu0 0
  %705 = vmatprep.subr.bf16.mxu0 0
  %706 = vmatpush1.bf16.msra.mxu0 0
  %707 = vmatprep.subr.bf16.mxu0 0
  %708 = vmatpush1.bf16.msra.mxu0 0
  %709 = vmatprep.subr.bf16.mxu0 0
  %710 = vmatpush1.bf16.msra.mxu0 0
  %711 = vmatprep.subr.bf16.mxu0 0
  %712 = vmatpush1.bf16.msra.mxu0 0
  %713 = vmatprep.subr.bf16.mxu0 0
  %714 = vmatpush1.bf16.msra.mxu0 0
  %715 = vmatprep.subr.bf16.mxu0 0
  %716 = vmatpush1.bf16.msra.mxu0 0
  %717 = vmatprep.subr.bf16.mxu0 0
  %718 = vmatpush1.bf16.msra.mxu0 0
  %719 = vmatprep.subr.bf16.mxu0 0
  %720 = vmatpush1.bf16.msra.mxu0 0
  %721 = vmatprep.mubr.bf16.mxu0 0
  %722 = vmatmul.mubr.bf16.gmra.mrb[0].mxu0 %v678
  %v723 = vpop.f32.mrb[0].mxu0
  %v724 = vadd.f32 0.0, %v723
  %v725 = vpop.f32.mrb[0].mxu0
  %v726 = vadd.f32 0.0, %v725
  %v727 = vpop.f32.mrb[0].mxu0
  %v728 = vadd.f32 0.0, %v727
  %v729 = vpop.f32.mrb[0].mxu0
  %v730 = vadd.f32 0.0, %v729
  %731 = vmatprep.mubr.bf16.mxu0 0
  %732 = vmatmul.mubr.bf16.gmra.mrb[0].mxu0 %v681
  %v733 = vpop.f32.mrb[0].mxu0
  %v734 = vadd.f32 0.0, %v733
  %v735 = vpop.f32.mrb[0].mxu0
  %v736 = vadd.f32 0.0, %v735
  %v737 = vpop.f32.mrb[0].mxu0
  %v738 = vadd.f32 0.0, %v737
  %v739 = vpop.f32.mrb[0].mxu0
  %v740 = vadd.f32 0.0, %v739
  %741 = vmatprep.mubr.bf16.mxu0 0
  %742 = vmatmul.mubr.bf16.gmra.mrb[0].mxu0 %v684
  %v743 = vpop.f32.mrb[0].mxu0
  %v744 = vadd.f32 0.0, %v743
  %v745 = vpop.f32.mrb[0].mxu0
  %v746 = vadd.f32 0.0, %v745
  %v747 = vpop.f32.mrb[0].mxu0
  %v748 = vadd.f32 0.0, %v747
  %v749 = vpop.f32.mrb[0].mxu0
  %v750 = vadd.f32 0.0, %v749
  %751 = vmatprep.mubr.bf16.mxu0 0
  %752 = vmatmul.mubr.bf16.gmra.mrb[0].mxu0 %v687
  %v753 = vpop.f32.mrb[0].mxu0
  %v754 = vadd.f32 0.0, %v753
  %v755 = vpop.f32.mrb[0].mxu0
  %v756 = vadd.f32 0.0, %v755
  %v757 = vpop.f32.mrb[0].mxu0
  %v758 = vadd.f32 0.0, %v757
  %v759 = vpop.f32.mrb[0].mxu0
  %v760 = vadd.f32 0.0, %v759
  %761 = vdwg.mxu0
  %v762 = vadd.f32 %v608, %v724
  %v763 = vadd.f32 %v609, %v726
  %v764 = vadd.f32 %v610, %v728
  %v765 = vadd.f32 %v611, %v730
  %v766 = vadd.f32 %v612, %v734
  %v767 = vadd.f32 %v613, %v736
  %v768 = vadd.f32 %v614, %v738
  %v769 = vadd.f32 %v615, %v740
  %v770 = vadd.f32 %v616, %v744
  %v771 = vadd.f32 %v617, %v746
  %v772 = vadd.f32 %v618, %v748
  %v773 = vadd.f32 %v619, %v750
  %v774 = vadd.f32 %v620, %v754
  %v775 = vadd.f32 %v621, %v756
  %v776 = vadd.f32 %v622, %v758
  %v777 = vadd.f32 %v623, %v760
  %v778 = vld [vmem:[%s0 + $0x4] sm:$0xff]
  %v779 = vld [vmem:[%s0 + $0xc] sm:$0xf]
  %v780 = vld [vmem:[%s0 + $0x14] sm:$0xff]
  %v781 = vld [vmem:[%s0 + $0x1c] sm:$0xf]
  %v782 = vld [vmem:[%s0 + $0x24] sm:$0xff]
  %v783 = vld [vmem:[%s0 + $0x2c] sm:$0xf]
  %v784 = vld [vmem:[%s0 + $0x34] sm:$0xff]
  %v785 = vld [vmem:[%s0 + $0x3c] sm:$0xf]
  %s786 = scalar_lea.vmem %s1, 160
  %v787 = vld [vmem:[%s786] sm:$0xf]
  %v788 = vld [vmem:[%s786 + $0x4] sm:$0xf]
  %v789 = vld [vmem:[%s786 + $0x8] sm:$0xf]
  %v790 = vld [vmem:[%s786 + $0xc] sm:$0xf]
  %v791 = vld [vmem:[%s786 + $0x10] sm:$0xf]
  %v792 = vld [vmem:[%s786 + $0x14] sm:$0xf]
  %v793 = vld [vmem:[%s786 + $0x18] sm:$0xf]
  %v794 = vld [vmem:[%s786 + $0x1c] sm:$0xf]
  %v803 = vunpack.c.l.b16 %v787
  %v804 = vunpack.c.l.b16 %v788
  %v805 = vunpack.c.l.b16 %v789
  %v806 = vunpack.c.l.b16 %v790
  %v807 = vunpack.c.l.b16 %v791
  %v808 = vunpack.c.l.b16 %v792
  %v809 = vunpack.c.l.b16 %v793
  %v810 = vunpack.c.l.b16 %v794
  %v811 = vpack.c.b16 %v804, %v803
  %v812 = vpack.c.b16 %v806, %v805
  %v813 = vpack.c.b16 %v808, %v807
  %v814 = vpack.c.b16 %v810, %v809
  %v823 = vunpack.c.l.b16 %v778
  %v824 = vunpack.c.h.b16 %v778
  %v825 = vunpack.c.l.b16 %v779
  %v826 = vunpack.c.l.b16 %v780
  %v827 = vunpack.c.h.b16 %v780
  %v828 = vunpack.c.l.b16 %v781
  %v829 = vunpack.c.l.b16 %v782
  %v830 = vunpack.c.h.b16 %v782
  %v831 = vunpack.c.l.b16 %v783
  %v832 = vunpack.c.l.b16 %v784
  %v833 = vunpack.c.h.b16 %v784
  %v834 = vunpack.c.l.b16 %v785
  %v835 = vpack.c.b16 %v826, %v823
  %v836 = vpack.c.b16 %v827, %v824
  %v837 = vpack.c.b16 %v828, %v825
  %v838 = vpack.c.b16 %v832, %v829
  %v839 = vpack.c.b16 %v833, %v830
  %v840 = vpack.c.b16 %v834, %v831
  %841 = vrot.lane.b32.xlu0 %v835, 127
  %v842 = vpop.permute.xlu0 %841
  %843 = vrot.lane.b32.xlu0 %v836, 127
  %v844 = vpop.permute.xlu0 %843
  %845 = vrot.lane.b32.xlu0 %v837, 127
  %v846 = vpop.permute.xlu0 %845
  %847 = vrot.lane.b32.xlu0 %v838, 127
  %v848 = vpop.permute.xlu0 %847
  %849 = vrot.lane.b32.xlu0 %v839, 127
  %v850 = vpop.permute.xlu0 %849
  %851 = vrot.lane.b32.xlu0 %v840, 127
  %v852 = vpop.permute.xlu0 %851
  %vm853 = vcmask 1039360
  %v854 = vsel %vm853, %v842, %v844
  %v855 = vsel %vm853, %v844, %v846
  %v856 = vsel %vm853, %v848, %v850
  %v857 = vsel %vm853, %v850, %v852
  %v863 = vsel %vm110, %v811, 0
  %v866 = vsel %vm110, %v812, 0
  %v869 = vsel %vm110, %v813, 0
  %v872 = vsel %vm110, %v814, 0
  %874 = vmatprep.subr.bf16.mxu0 %v855
  %875 = vmatpush1.bf16.msra.mxu0 %v854
  %876 = vmatprep.subr.bf16.mxu0 %v857
  %877 = vmatpush1.bf16.msra.mxu0 %v856
  %878 = vmatprep.subr.bf16.mxu0 0
  %879 = vmatpush1.bf16.msra.mxu0 0
  %880 = vmatprep.subr.bf16.mxu0 0
  %881 = vmatpush1.bf16.msra.mxu0 0
  %882 = vmatprep.subr.bf16.mxu0 0
  %883 = vmatpush1.bf16.msra.mxu0 0
  %884 = vmatprep.subr.bf16.mxu0 0
  %885 = vmatpush1.bf16.msra.mxu0 0
  %886 = vmatprep.subr.bf16.mxu0 0
  %887 = vmatpush1.bf16.msra.mxu0 0
  %888 = vmatprep.subr.bf16.mxu0 0
  %889 = vmatpush1.bf16.msra.mxu0 0
  %890 = vmatprep.subr.bf16.mxu0 0
  %891 = vmatpush1.bf16.msra.mxu0 0
  %892 = vmatprep.subr.bf16.mxu0 0
  %893 = vmatpush1.bf16.msra.mxu0 0
  %894 = vmatprep.subr.bf16.mxu0 0
  %895 = vmatpush1.bf16.msra.mxu0 0
  %896 = vmatprep.subr.bf16.mxu0 0
  %897 = vmatpush1.bf16.msra.mxu0 0
  %898 = vmatprep.subr.bf16.mxu0 0
  %899 = vmatpush1.bf16.msra.mxu0 0
  %900 = vmatprep.subr.bf16.mxu0 0
  %901 = vmatpush1.bf16.msra.mxu0 0
  %902 = vmatprep.subr.bf16.mxu0 0
  %903 = vmatpush1.bf16.msra.mxu0 0
  %904 = vmatprep.subr.bf16.mxu0 0
  %905 = vmatpush1.bf16.msra.mxu0 0
  %906 = vmatprep.mubr.bf16.mxu0 0
  %907 = vmatmul.mubr.bf16.gmra.mrb[0].mxu0 %v863
  %v908 = vpop.f32.mrb[0].mxu0
  %v909 = vadd.f32 0.0, %v908
  %v910 = vpop.f32.mrb[0].mxu0
  %v911 = vadd.f32 0.0, %v910
  %v912 = vpop.f32.mrb[0].mxu0
  %v913 = vadd.f32 0.0, %v912
  %v914 = vpop.f32.mrb[0].mxu0
  %v915 = vadd.f32 0.0, %v914
  %916 = vmatprep.mubr.bf16.mxu0 0
  %917 = vmatmul.mubr.bf16.gmra.mrb[0].mxu0 %v866
  %v918 = vpop.f32.mrb[0].mxu0
  %v919 = vadd.f32 0.0, %v918
  %v920 = vpop.f32.mrb[0].mxu0
  %v921 = vadd.f32 0.0, %v920
  %v922 = vpop.f32.mrb[0].mxu0
  %v923 = vadd.f32 0.0, %v922
  %v924 = vpop.f32.mrb[0].mxu0
  %v925 = vadd.f32 0.0, %v924
  %926 = vmatprep.mubr.bf16.mxu0 0
  %927 = vmatmul.mubr.bf16.gmra.mrb[0].mxu0 %v869
  %v928 = vpop.f32.mrb[0].mxu0
  %v929 = vadd.f32 0.0, %v928
  %v930 = vpop.f32.mrb[0].mxu0
  %v931 = vadd.f32 0.0, %v930
  %v932 = vpop.f32.mrb[0].mxu0
  %v933 = vadd.f32 0.0, %v932
  %v934 = vpop.f32.mrb[0].mxu0
  %v935 = vadd.f32 0.0, %v934
  %936 = vmatprep.mubr.bf16.mxu0 0
  %937 = vmatmul.mubr.bf16.gmra.mrb[0].mxu0 %v872
  %v938 = vpop.f32.mrb[0].mxu0
  %v939 = vadd.f32 0.0, %v938
  %v940 = vpop.f32.mrb[0].mxu0
  %v941 = vadd.f32 0.0, %v940
  %v942 = vpop.f32.mrb[0].mxu0
  %v943 = vadd.f32 0.0, %v942
  %v944 = vpop.f32.mrb[0].mxu0
  %v945 = vadd.f32 0.0, %v944
  %946 = vdwg.mxu0
  %v947 = vadd.f32 %v762, %v909
  %v948 = vadd.f32 %v763, %v911
  %v949 = vadd.f32 %v764, %v913
  %v950 = vadd.f32 %v765, %v915
  %v951 = vadd.f32 %v766, %v919
  %v952 = vadd.f32 %v767, %v921
  %v953 = vadd.f32 %v768, %v923
  %v954 = vadd.f32 %v769, %v925
  %v955 = vadd.f32 %v770, %v929
  %v956 = vadd.f32 %v771, %v931
  %v957 = vadd.f32 %v772, %v933
  %v958 = vadd.f32 %v773, %v935
  %v959 = vadd.f32 %v774, %v939
  %v960 = vadd.f32 %v775, %v941
  %v961 = vadd.f32 %v776, %v943
  %v962 = vadd.f32 %v777, %v945
  %s963 = scalar_lea.vmem %s1, 192
  %v964 = vld [vmem:[%s963] sm:$0xf]
  %v965 = vld [vmem:[%s963 + $0x4] sm:$0xf]
  %v966 = vld [vmem:[%s963 + $0x8] sm:$0xf]
  %v967 = vld [vmem:[%s963 + $0xc] sm:$0xf]
  %v968 = vld [vmem:[%s963 + $0x10] sm:$0xf]
  %v969 = vld [vmem:[%s963 + $0x14] sm:$0xf]
  %v970 = vld [vmem:[%s963 + $0x18] sm:$0xf]
  %v971 = vld [vmem:[%s963 + $0x1c] sm:$0xf]
  %v980 = vunpack.c.l.b16 %v964
  %v981 = vunpack.c.l.b16 %v965
  %v982 = vunpack.c.l.b16 %v966
  %v983 = vunpack.c.l.b16 %v967
  %v984 = vunpack.c.l.b16 %v968
  %v985 = vunpack.c.l.b16 %v969
  %v986 = vunpack.c.l.b16 %v970
  %v987 = vunpack.c.l.b16 %v971
  %v988 = vpack.c.b16 %v981, %v980
  %v989 = vpack.c.b16 %v983, %v982
  %v990 = vpack.c.b16 %v985, %v984
  %v991 = vpack.c.b16 %v987, %v986
  %992 = vrot.lane.b32.xlu0 %v835, 119
  %v993 = vpop.permute.xlu0 %992
  %994 = vrot.lane.b32.xlu0 %v836, 119
  %v995 = vpop.permute.xlu0 %994
  %996 = vrot.lane.b32.xlu0 %v837, 119
  %v997 = vpop.permute.xlu0 %996
  %998 = vrot.lane.b32.xlu0 %v838, 119
  %v999 = vpop.permute.xlu0 %998
  %1000 = vrot.lane.b32.xlu0 %v839, 119
  %v1001 = vpop.permute.xlu0 %1000
  %1002 = vrot.lane.b32.xlu0 %v840, 119
  %v1003 = vpop.permute.xlu0 %1002
  %vm1004 = vcmask 973824
  %v1005 = vsel %vm1004, %v993, %v995
  %v1006 = vsel %vm1004, %v995, %v997
  %v1007 = vsel %vm1004, %v999, %v1001
  %v1008 = vsel %vm1004, %v1001, %v1003
  %v1014 = vsel %vm110, %v988, 0
  %v1017 = vsel %vm110, %v989, 0
  %v1020 = vsel %vm110, %v990, 0
  %v1023 = vsel %vm110, %v991, 0
  %1025 = vmatprep.subr.bf16.mxu0 %v1006
  %1026 = vmatpush1.bf16.msra.mxu0 %v1005
  %1027 = vmatprep.subr.bf16.mxu0 %v1008
  %1028 = vmatpush1.bf16.msra.mxu0 %v1007
  %1029 = vmatprep.subr.bf16.mxu0 0
  %1030 = vmatpush1.bf16.msra.mxu0 0
  %1031 = vmatprep.subr.bf16.mxu0 0
  %1032 = vmatpush1.bf16.msra.mxu0 0
  %1033 = vmatprep.subr.bf16.mxu0 0
  %1034 = vmatpush1.bf16.msra.mxu0 0
  %1035 = vmatprep.subr.bf16.mxu0 0
  %1036 = vmatpush1.bf16.msra.mxu0 0
  %1037 = vmatprep.subr.bf16.mxu0 0
  %1038 = vmatpush1.bf16.msra.mxu0 0
  %1039 = vmatprep.subr.bf16.mxu0 0
  %1040 = vmatpush1.bf16.msra.mxu0 0
  %1041 = vmatprep.subr.bf16.mxu0 0
  %1042 = vmatpush1.bf16.msra.mxu0 0
  %1043 = vmatprep.subr.bf16.mxu0 0
  %1044 = vmatpush1.bf16.msra.mxu0 0
  %1045 = vmatprep.subr.bf16.mxu0 0
  %1046 = vmatpush1.bf16.msra.mxu0 0
  %1047 = vmatprep.subr.bf16.mxu0 0
  %1048 = vmatpush1.bf16.msra.mxu0 0
  %1049 = vmatprep.subr.bf16.mxu0 0
  %1050 = vmatpush1.bf16.msra.mxu0 0
  %1051 = vmatprep.subr.bf16.mxu0 0
  %1052 = vmatpush1.bf16.msra.mxu0 0
  %1053 = vmatprep.subr.bf16.mxu0 0
  %1054 = vmatpush1.bf16.msra.mxu0 0
  %1055 = vmatprep.subr.bf16.mxu0 0
  %1056 = vmatpush1.bf16.msra.mxu0 0
  %1057 = vmatprep.mubr.bf16.mxu0 0
  %1058 = vmatmul.mubr.bf16.gmra.mrb[0].mxu0 %v1014
  %v1059 = vpop.f32.mrb[0].mxu0
  %v1060 = vadd.f32 0.0, %v1059
  %v1061 = vpop.f32.mrb[0].mxu0
  %v1062 = vadd.f32 0.0, %v1061
  %v1063 = vpop.f32.mrb[0].mxu0
  %v1064 = vadd.f32 0.0, %v1063
  %v1065 = vpop.f32.mrb[0].mxu0
  %v1066 = vadd.f32 0.0, %v1065
  %1067 = vmatprep.mubr.bf16.mxu0 0
  %1068 = vmatmul.mubr.bf16.gmra.mrb[0].mxu0 %v1017
  %v1069 = vpop.f32.mrb[0].mxu0
  %v1070 = vadd.f32 0.0, %v1069
  %v1071 = vpop.f32.mrb[0].mxu0
  %v1072 = vadd.f32 0.0, %v1071
  %v1073 = vpop.f32.mrb[0].mxu0
  %v1074 = vadd.f32 0.0, %v1073
  %v1075 = vpop.f32.mrb[0].mxu0
  %v1076 = vadd.f32 0.0, %v1075
  %1077 = vmatprep.mubr.bf16.mxu0 0
  %1078 = vmatmul.mubr.bf16.gmra.mrb[0].mxu0 %v1020
  %v1079 = vpop.f32.mrb[0].mxu0
  %v1080 = vadd.f32 0.0, %v1079
  %v1081 = vpop.f32.mrb[0].mxu0
  %v1082 = vadd.f32 0.0, %v1081
  %v1083 = vpop.f32.mrb[0].mxu0
  %v1084 = vadd.f32 0.0, %v1083
  %v1085 = vpop.f32.mrb[0].mxu0
  %v1086 = vadd.f32 0.0, %v1085
  %1087 = vmatprep.mubr.bf16.mxu0 0
  %1088 = vmatmul.mubr.bf16.gmra.mrb[0].mxu0 %v1023
  %v1089 = vpop.f32.mrb[0].mxu0
  %v1090 = vadd.f32 0.0, %v1089
  %v1091 = vpop.f32.mrb[0].mxu0
  %v1092 = vadd.f32 0.0, %v1091
  %v1093 = vpop.f32.mrb[0].mxu0
  %v1094 = vadd.f32 0.0, %v1093
  %v1095 = vpop.f32.mrb[0].mxu0
  %v1096 = vadd.f32 0.0, %v1095
  %1097 = vdwg.mxu0
  %v1098 = vadd.f32 %v947, %v1060
  %v1099 = vadd.f32 %v948, %v1062
  %v1100 = vadd.f32 %v949, %v1064
  %v1101 = vadd.f32 %v950, %v1066
  %v1102 = vadd.f32 %v951, %v1070
  %v1103 = vadd.f32 %v952, %v1072
  %v1104 = vadd.f32 %v953, %v1074
  %v1105 = vadd.f32 %v954, %v1076
  %v1106 = vadd.f32 %v955, %v1080
  %v1107 = vadd.f32 %v956, %v1082
  %v1108 = vadd.f32 %v957, %v1084
  %v1109 = vadd.f32 %v958, %v1086
  %v1110 = vadd.f32 %v959, %v1090
  %v1111 = vadd.f32 %v960, %v1092
  %v1112 = vadd.f32 %v961, %v1094
  %v1113 = vadd.f32 %v962, %v1096
  %s1114 = scalar_lea.vmem %s1, 224
  %v1115 = vld [vmem:[%s1114] sm:$0xf]
  %v1116 = vld [vmem:[%s1114 + $0x4] sm:$0xf]
  %v1117 = vld [vmem:[%s1114 + $0x8] sm:$0xf]
  %v1118 = vld [vmem:[%s1114 + $0xc] sm:$0xf]
  %v1119 = vld [vmem:[%s1114 + $0x10] sm:$0xf]
  %v1120 = vld [vmem:[%s1114 + $0x14] sm:$0xf]
  %v1121 = vld [vmem:[%s1114 + $0x18] sm:$0xf]
  %v1122 = vld [vmem:[%s1114 + $0x1c] sm:$0xf]
  %v1131 = vunpack.c.l.b16 %v1115
  %v1132 = vunpack.c.l.b16 %v1116
  %v1133 = vunpack.c.l.b16 %v1117
  %v1134 = vunpack.c.l.b16 %v1118
  %v1135 = vunpack.c.l.b16 %v1119
  %v1136 = vunpack.c.l.b16 %v1120
  %v1137 = vunpack.c.l.b16 %v1121
  %v1138 = vunpack.c.l.b16 %v1122
  %v1139 = vpack.c.b16 %v1132, %v1131
  %v1140 = vpack.c.b16 %v1134, %v1133
  %v1141 = vpack.c.b16 %v1136, %v1135
  %v1142 = vpack.c.b16 %v1138, %v1137
  %1143 = vrot.lane.b32.xlu0 %v835, 118
  %v1144 = vpop.permute.xlu0 %1143
  %1145 = vrot.lane.b32.xlu0 %v836, 118
  %v1146 = vpop.permute.xlu0 %1145
  %1147 = vrot.lane.b32.xlu0 %v837, 118
  %v1148 = vpop.permute.xlu0 %1147
  %1149 = vrot.lane.b32.xlu0 %v838, 118
  %v1150 = vpop.permute.xlu0 %1149
  %1151 = vrot.lane.b32.xlu0 %v839, 118
  %v1152 = vpop.permute.xlu0 %1151
  %1153 = vrot.lane.b32.xlu0 %v840, 118
  %v1154 = vpop.permute.xlu0 %1153
  %vm1155 = vcmask 965632
  %v1156 = vsel %vm1155, %v1144, %v1146
  %v1157 = vsel %vm1155, %v1146, %v1148
  %v1158 = vsel %vm1155, %v1150, %v1152
  %v1159 = vsel %vm1155, %v1152, %v1154
  %v1165 = vsel %vm110, %v1139, 0
  %v1168 = vsel %vm110, %v1140, 0
  %v1171 = vsel %vm110, %v1141, 0
  %v1174 = vsel %vm110, %v1142, 0
  %1176 = vmatprep.subr.bf16.mxu0 %v1157
  %1177 = vmatpush1.bf16.msra.mxu0 %v1156
  %1178 = vmatprep.subr.bf16.mxu0 %v1159
  %1179 = vmatpush1.bf16.msra.mxu0 %v1158
  %1180 = vmatprep.subr.bf16.mxu0 0
  %1181 = vmatpush1.bf16.msra.mxu0 0
  %1182 = vmatprep.subr.bf16.mxu0 0
  %1183 = vmatpush1.bf16.msra.mxu0 0
  %1184 = vmatprep.subr.bf16.mxu0 0
  %1185 = vmatpush1.bf16.msra.mxu0 0
  %1186 = vmatprep.subr.bf16.mxu0 0
  %1187 = vmatpush1.bf16.msra.mxu0 0
  %1188 = vmatprep.subr.bf16.mxu0 0
  %1189 = vmatpush1.bf16.msra.mxu0 0
  %1190 = vmatprep.subr.bf16.mxu0 0
  %1191 = vmatpush1.bf16.msra.mxu0 0
  %1192 = vmatprep.subr.bf16.mxu0 0
  %1193 = vmatpush1.bf16.msra.mxu0 0
  %1194 = vmatprep.subr.bf16.mxu0 0
  %1195 = vmatpush1.bf16.msra.mxu0 0
  %1196 = vmatprep.subr.bf16.mxu0 0
  %1197 = vmatpush1.bf16.msra.mxu0 0
  %1198 = vmatprep.subr.bf16.mxu0 0
  %1199 = vmatpush1.bf16.msra.mxu0 0
  %1200 = vmatprep.subr.bf16.mxu0 0
  %1201 = vmatpush1.bf16.msra.mxu0 0
  %1202 = vmatprep.subr.bf16.mxu0 0
  %1203 = vmatpush1.bf16.msra.mxu0 0
  %1204 = vmatprep.subr.bf16.mxu0 0
  %1205 = vmatpush1.bf16.msra.mxu0 0
  %1206 = vmatprep.subr.bf16.mxu0 0
  %1207 = vmatpush1.bf16.msra.mxu0 0
  %1208 = vmatprep.mubr.bf16.mxu0 0
  %1209 = vmatmul.mubr.bf16.gmra.mrb[0].mxu0 %v1165
  %v1210 = vpop.f32.mrb[0].mxu0
  %v1211 = vadd.f32 0.0, %v1210
  %v1212 = vpop.f32.mrb[0].mxu0
  %v1213 = vadd.f32 0.0, %v1212
  %v1214 = vpop.f32.mrb[0].mxu0
  %v1215 = vadd.f32 0.0, %v1214
  %v1216 = vpop.f32.mrb[0].mxu0
  %v1217 = vadd.f32 0.0, %v1216
  %1218 = vmatprep.mubr.bf16.mxu0 0
  %1219 = vmatmul.mubr.bf16.gmra.mrb[0].mxu0 %v1168
  %v1220 = vpop.f32.mrb[0].mxu0
  %v1221 = vadd.f32 0.0, %v1220
  %v1222 = vpop.f32.mrb[0].mxu0
  %v1223 = vadd.f32 0.0, %v1222
  %v1224 = vpop.f32.mrb[0].mxu0
  %v1225 = vadd.f32 0.0, %v1224
  %v1226 = vpop.f32.mrb[0].mxu0
  %v1227 = vadd.f32 0.0, %v1226
  %1228 = vmatprep.mubr.bf16.mxu0 0
  %1229 = vmatmul.mubr.bf16.gmra.mrb[0].mxu0 %v1171
  %v1230 = vpop.f32.mrb[0].mxu0
  %v1231 = vadd.f32 0.0, %v1230
  %v1232 = vpop.f32.mrb[0].mxu0
  %v1233 = vadd.f32 0.0, %v1232
  %v1234 = vpop.f32.mrb[0].mxu0
  %v1235 = vadd.f32 0.0, %v1234
  %v1236 = vpop.f32.mrb[0].mxu0
  %v1237 = vadd.f32 0.0, %v1236
  %1238 = vmatprep.mubr.bf16.mxu0 0
  %1239 = vmatmul.mubr.bf16.gmra.mrb[0].mxu0 %v1174
  %v1240 = vpop.f32.mrb[0].mxu0
  %v1241 = vadd.f32 0.0, %v1240
  %v1242 = vpop.f32.mrb[0].mxu0
  %v1243 = vadd.f32 0.0, %v1242
  %v1244 = vpop.f32.mrb[0].mxu0
  %v1245 = vadd.f32 0.0, %v1244
  %v1246 = vpop.f32.mrb[0].mxu0
  %v1247 = vadd.f32 0.0, %v1246
  %1248 = vdwg.mxu0
  %v1249 = vadd.f32 %v1098, %v1211
  %v1250 = vadd.f32 %v1099, %v1213
  %v1251 = vadd.f32 %v1100, %v1215
  %v1252 = vadd.f32 %v1101, %v1217
  %v1253 = vadd.f32 %v1102, %v1221
  %v1254 = vadd.f32 %v1103, %v1223
  %v1255 = vadd.f32 %v1104, %v1225
  %v1256 = vadd.f32 %v1105, %v1227
  %v1257 = vadd.f32 %v1106, %v1231
  %v1258 = vadd.f32 %v1107, %v1233
  %v1259 = vadd.f32 %v1108, %v1235
  %v1260 = vadd.f32 %v1109, %v1237
  %v1261 = vadd.f32 %v1110, %v1241
  %v1262 = vadd.f32 %v1111, %v1243
  %v1263 = vadd.f32 %v1112, %v1245
  %v1264 = vadd.f32 %v1113, %v1247
  %s1265 = scalar_lea.vmem %s1, 256
  %v1266 = vld [vmem:[%s1265] sm:$0xf]
  %v1267 = vld [vmem:[%s1265 + $0x4] sm:$0xf]
  %v1268 = vld [vmem:[%s1265 + $0x8] sm:$0xf]
  %v1269 = vld [vmem:[%s1265 + $0xc] sm:$0xf]
  %v1270 = vld [vmem:[%s1265 + $0x10] sm:$0xf]
  %v1271 = vld [vmem:[%s1265 + $0x14] sm:$0xf]
  %v1272 = vld [vmem:[%s1265 + $0x18] sm:$0xf]
  %v1273 = vld [vmem:[%s1265 + $0x1c] sm:$0xf]
  %v1282 = vunpack.c.l.b16 %v1266
  %v1283 = vunpack.c.l.b16 %v1267
  %v1284 = vunpack.c.l.b16 %v1268
  %v1285 = vunpack.c.l.b16 %v1269
  %v1286 = vunpack.c.l.b16 %v1270
  %v1287 = vunpack.c.l.b16 %v1271
  %v1288 = vunpack.c.l.b16 %v1272
  %v1289 = vunpack.c.l.b16 %v1273
  %v1290 = vpack.c.b16 %v1283, %v1282
  %v1291 = vpack.c.b16 %v1285, %v1284
  %v1292 = vpack.c.b16 %v1287, %v1286
  %v1293 = vpack.c.b16 %v1289, %v1288
  %1294 = vrot.lane.b32.xlu0 %v835, 117
  %v1295 = vpop.permute.xlu0 %1294
  %1296 = vrot.lane.b32.xlu0 %v836, 117
  %v1297 = vpop.permute.xlu0 %1296
  %1298 = vrot.lane.b32.xlu0 %v837, 117
  %v1299 = vpop.permute.xlu0 %1298
  %1300 = vrot.lane.b32.xlu0 %v838, 117
  %v1301 = vpop.permute.xlu0 %1300
  %1302 = vrot.lane.b32.xlu0 %v839, 117
  %v1303 = vpop.permute.xlu0 %1302
  %1304 = vrot.lane.b32.xlu0 %v840, 117
  %v1305 = vpop.permute.xlu0 %1304
  %vm1306 = vcmask 957440
  %v1307 = vsel %vm1306, %v1295, %v1297
  %v1308 = vsel %vm1306, %v1297, %v1299
  %v1309 = vsel %vm1306, %v1301, %v1303
  %v1310 = vsel %vm1306, %v1303, %v1305
  %v1316 = vsel %vm110, %v1290, 0
  %v1319 = vsel %vm110, %v1291, 0
  %v1322 = vsel %vm110, %v1292, 0
  %v1325 = vsel %vm110, %v1293, 0
  %1327 = vmatprep.subr.bf16.mxu0 %v1308
  %1328 = vmatpush1.bf16.msra.mxu0 %v1307
  %1329 = vmatprep.subr.bf16.mxu0 %v1310
  %1330 = vmatpush1.bf16.msra.mxu0 %v1309
  %1331 = vmatprep.subr.bf16.mxu0 0
  %1332 = vmatpush1.bf16.msra.mxu0 0
  %1333 = vmatprep.subr.bf16.mxu0 0
  %1334 = vmatpush1.bf16.msra.mxu0 0
  %1335 = vmatprep.subr.bf16.mxu0 0
  %1336 = vmatpush1.bf16.msra.mxu0 0
  %1337 = vmatprep.subr.bf16.mxu0 0
  %1338 = vmatpush1.bf16.msra.mxu0 0
  %1339 = vmatprep.subr.bf16.mxu0 0
  %1340 = vmatpush1.bf16.msra.mxu0 0
  %1341 = vmatprep.subr.bf16.mxu0 0
  %1342 = vmatpush1.bf16.msra.mxu0 0
  %1343 = vmatprep.subr.bf16.mxu0 0
  %1344 = vmatpush1.bf16.msra.mxu0 0
  %1345 = vmatprep.subr.bf16.mxu0 0
  %1346 = vmatpush1.bf16.msra.mxu0 0
  %1347 = vmatprep.subr.bf16.mxu0 0
  %1348 = vmatpush1.bf16.msra.mxu0 0
  %1349 = vmatprep.subr.bf16.mxu0 0
  %1350 = vmatpush1.bf16.msra.mxu0 0
  %1351 = vmatprep.subr.bf16.mxu0 0
  %1352 = vmatpush1.bf16.msra.mxu0 0
  %1353 = vmatprep.subr.bf16.mxu0 0
  %1354 = vmatpush1.bf16.msra.mxu0 0
  %1355 = vmatprep.subr.bf16.mxu0 0
  %1356 = vmatpush1.bf16.msra.mxu0 0
  %1357 = vmatprep.subr.bf16.mxu0 0
  %1358 = vmatpush1.bf16.msra.mxu0 0
  %1359 = vmatprep.mubr.bf16.mxu0 0
  %1360 = vmatmul.mubr.bf16.gmra.mrb[0].mxu0 %v1316
  %v1361 = vpop.f32.mrb[0].mxu0
  %v1362 = vadd.f32 0.0, %v1361
  %v1363 = vpop.f32.mrb[0].mxu0
  %v1364 = vadd.f32 0.0, %v1363
  %v1365 = vpop.f32.mrb[0].mxu0
  %v1366 = vadd.f32 0.0, %v1365
  %v1367 = vpop.f32.mrb[0].mxu0
  %v1368 = vadd.f32 0.0, %v1367
  %1369 = vmatprep.mubr.bf16.mxu0 0
  %1370 = vmatmul.mubr.bf16.gmra.mrb[0].mxu0 %v1319
  %v1371 = vpop.f32.mrb[0].mxu0
  %v1372 = vadd.f32 0.0, %v1371
  %v1373 = vpop.f32.mrb[0].mxu0
  %v1374 = vadd.f32 0.0, %v1373
  %v1375 = vpop.f32.mrb[0].mxu0
  %v1376 = vadd.f32 0.0, %v1375
  %v1377 = vpop.f32.mrb[0].mxu0
  %v1378 = vadd.f32 0.0, %v1377
  %1379 = vmatprep.mubr.bf16.mxu0 0
  %1380 = vmatmul.mubr.bf16.gmra.mrb[0].mxu0 %v1322
  %v1381 = vpop.f32.mrb[0].mxu0
  %v1382 = vadd.f32 0.0, %v1381
  %v1383 = vpop.f32.mrb[0].mxu0
  %v1384 = vadd.f32 0.0, %v1383
  %v1385 = vpop.f32.mrb[0].mxu0
  %v1386 = vadd.f32 0.0, %v1385
  %v1387 = vpop.f32.mrb[0].mxu0
  %v1388 = vadd.f32 0.0, %v1387
  %1389 = vmatprep.mubr.bf16.mxu0 0
  %1390 = vmatmul.mubr.bf16.gmra.mrb[0].mxu0 %v1325
  %v1391 = vpop.f32.mrb[0].mxu0
  %v1392 = vadd.f32 0.0, %v1391
  %v1393 = vpop.f32.mrb[0].mxu0
  %v1394 = vadd.f32 0.0, %v1393
  %v1395 = vpop.f32.mrb[0].mxu0
  %v1396 = vadd.f32 0.0, %v1395
  %v1397 = vpop.f32.mrb[0].mxu0
  %v1398 = vadd.f32 0.0, %v1397
  %1399 = vdwg.mxu0
  %v1400 = vadd.f32 %v1249, %v1362
  %v1401 = vadd.f32 %v1250, %v1364
  %v1402 = vadd.f32 %v1251, %v1366
  %v1403 = vadd.f32 %v1252, %v1368
  %v1404 = vadd.f32 %v1253, %v1372
  %v1405 = vadd.f32 %v1254, %v1374
  %v1406 = vadd.f32 %v1255, %v1376
  %v1407 = vadd.f32 %v1256, %v1378
  %v1408 = vadd.f32 %v1257, %v1382
  %v1409 = vadd.f32 %v1258, %v1384
  %v1410 = vadd.f32 %v1259, %v1386
  %v1411 = vadd.f32 %v1260, %v1388
  %v1412 = vadd.f32 %v1261, %v1392
  %v1413 = vadd.f32 %v1262, %v1394
  %v1414 = vadd.f32 %v1263, %v1396
  %v1415 = vadd.f32 %v1264, %v1398
  %v1416 = vld [vmem:[%s2] sm:$0xff]
  %v1417 = vld [vmem:[%s2 + $0x8] sm:$0xff]
  %v1418 = vld [vmem:[%s2 + $0x10] sm:$0xff]
  %v1419 = vld [vmem:[%s2 + $0x18] sm:$0xff]
  %v1420 = vld [vmem:[%s2 + $0x20] sm:$0xff]
  %v1421 = vld [vmem:[%s2 + $0x28] sm:$0xff]
  %v1422 = vld [vmem:[%s2 + $0x30] sm:$0xff]
  %v1423 = vld [vmem:[%s2 + $0x38] sm:$0xff]
  %1425 = vset.pattern.permute.xlu0 0
  %1426 = vperm.xlu0 %1425, %v1416
  %v1427 = vpop.permute.xlu0 %1426
  %1430 = vset.pattern.permute.xlu0 0
  %1431 = vperm.xlu0 %1430, %v1417
  %v1432 = vpop.permute.xlu0 %1431
  %1435 = vset.pattern.permute.xlu0 0
  %1436 = vperm.xlu0 %1435, %v1418
  %v1437 = vpop.permute.xlu0 %1436
  %1440 = vset.pattern.permute.xlu0 0
  %1441 = vperm.xlu0 %1440, %v1419
  %v1442 = vpop.permute.xlu0 %1441
  %1445 = vset.pattern.permute.xlu0 0
  %1446 = vperm.xlu0 %1445, %v1420
  %v1447 = vpop.permute.xlu0 %1446
  %1450 = vset.pattern.permute.xlu0 0
  %1451 = vperm.xlu0 %1450, %v1421
  %v1452 = vpop.permute.xlu0 %1451
  %1455 = vset.pattern.permute.xlu0 0
  %1456 = vperm.xlu0 %1455, %v1422
  %v1457 = vpop.permute.xlu0 %1456
  %1460 = vset.pattern.permute.xlu0 0
  %1461 = vperm.xlu0 %1460, %v1423
  %v1462 = vpop.permute.xlu0 %1461
  %v1464 = vadd.f32 %v1400, %v1427
  %v1465 = vadd.f32 %v1401, %v1427
  %v1466 = vadd.f32 %v1402, %v1432
  %v1467 = vadd.f32 %v1403, %v1432
  %v1468 = vadd.f32 %v1404, %v1437
  %v1469 = vadd.f32 %v1405, %v1437
  %v1470 = vadd.f32 %v1406, %v1442
  %v1471 = vadd.f32 %v1407, %v1442
  %v1472 = vadd.f32 %v1408, %v1447
  %v1473 = vadd.f32 %v1409, %v1447
  %v1474 = vadd.f32 %v1410, %v1452
  %v1475 = vadd.f32 %v1411, %v1452
  %v1476 = vadd.f32 %v1412, %v1457
  %v1477 = vadd.f32 %v1413, %v1457
  %v1478 = vadd.f32 %v1414, %v1462
  %v1479 = vadd.f32 %v1415, %v1462
  %v1480 = vmax.f32 %v1464, 0.0
  %v1481 = vmax.f32 %v1465, 0.0
  %v1482 = vmax.f32 %v1466, 0.0
  %v1483 = vmax.f32 %v1467, 0.0
  %v1484 = vmax.f32 %v1468, 0.0
  %v1485 = vmax.f32 %v1469, 0.0
  %v1486 = vmax.f32 %v1470, 0.0
  %v1487 = vmax.f32 %v1471, 0.0
  %v1488 = vmax.f32 %v1472, 0.0
  %v1489 = vmax.f32 %v1473, 0.0
  %v1490 = vmax.f32 %v1474, 0.0
  %v1491 = vmax.f32 %v1475, 0.0
  %v1492 = vmax.f32 %v1476, 0.0
  %v1493 = vmax.f32 %v1477, 0.0
  %v1494 = vmax.f32 %v1478, 0.0
  %v1495 = vmax.f32 %v1479, 0.0
  %v1496 = vld [vmem:[%s3] sm:$0x3]
  %v1498 = vlaneseq
  %v1499 = vshrl.u32 %v1498, 7
  %v1500 = vsub.s32 0, %v1499
  %v1501 = vrot.slane %v1496, %v1500
  %v1502 = vlaneseq
  %v1503 = vshrl.u32 %v1502, 7
  %v1504 = vsub.s32 1, %v1503
  %v1505 = vrot.slane %v1496, %v1504
  %v1508 = vmul.f32 %v1480, %v1501
  %v1509 = vmul.f32 %v1481, %v1505
  %v1510 = vmul.f32 %v1482, %v1501
  %v1511 = vmul.f32 %v1483, %v1505
  %v1512 = vmul.f32 %v1484, %v1501
  %v1513 = vmul.f32 %v1485, %v1505
  %v1514 = vmul.f32 %v1486, %v1501
  %v1515 = vmul.f32 %v1487, %v1505
  %v1516 = vmul.f32 %v1488, %v1501
  %v1517 = vmul.f32 %v1489, %v1505
  %v1518 = vmul.f32 %v1490, %v1501
  %v1519 = vmul.f32 %v1491, %v1505
  %v1520 = vmul.f32 %v1492, %v1501
  %v1521 = vmul.f32 %v1493, %v1505
  %v1522 = vmul.f32 %v1494, %v1501
  %v1523 = vmul.f32 %v1495, %v1505
  %1524 = vst [vmem:[%s4] sm:$0xff] 0
  %1525 = vst [vmem:[%s4 + $0x8] sm:$0xff] 0
  %1526 = vst [vmem:[%s4 + $0x10] sm:$0xff] 0
  %1527 = vst [vmem:[%s4 + $0x18] sm:$0xff] 0
  %1528 = vst [vmem:[%s4 + $0x20] sm:$0xff] 0
  %1529 = vst [vmem:[%s4 + $0x28] sm:$0xff] 0
  %1530 = vst [vmem:[%s4 + $0x30] sm:$0xff] 0
  %1531 = vst [vmem:[%s4 + $0x38] sm:$0xff] 0
  %1532 = vst [vmem:[%s4 + $0x40] sm:$0xff] 0
  %1533 = vst [vmem:[%s4 + $0x48] sm:$0xff] 0
  %1534 = vst [vmem:[%s4 + $0x50] sm:$0xff] 0
  %1535 = vst [vmem:[%s4 + $0x58] sm:$0xff] 0
  %1536 = vst [vmem:[%s4 + $0x60] sm:$0xff] 0
  %1537 = vst [vmem:[%s4 + $0x68] sm:$0xff] 0
  %1538 = vst [vmem:[%s4 + $0x70] sm:$0xff] 0
  %1539 = vst [vmem:[%s4 + $0x78] sm:$0xff] 0
  %v1540 = vpack.c.bf16 %v1510, %v1508
  %v1541 = vpack.c.bf16 %v1511, %v1509
  %v1542 = vpack.c.bf16 %v1514, %v1512
  %v1543 = vpack.c.bf16 %v1515, %v1513
  %v1544 = vpack.c.bf16 %v1518, %v1516
  %v1545 = vpack.c.bf16 %v1519, %v1517
  %v1546 = vpack.c.bf16 %v1522, %v1520
  %v1547 = vpack.c.bf16 %v1523, %v1521
  %v1556 = vunpack.c.l.b16 %v1540
  %v1557 = vunpack.c.l.b16 %v1541
  %v1558 = vunpack.c.h.b16 %v1540
  %v1559 = vunpack.c.h.b16 %v1541
  %v1560 = vunpack.c.l.b16 %v1542
  %v1561 = vunpack.c.l.b16 %v1543
  %v1562 = vunpack.c.h.b16 %v1542
  %v1563 = vunpack.c.h.b16 %v1543
  %v1564 = vunpack.c.l.b16 %v1544
  %v1565 = vunpack.c.l.b16 %v1545
  %v1566 = vunpack.c.h.b16 %v1544
  %v1567 = vunpack.c.h.b16 %v1545
  %v1568 = vunpack.c.l.b16 %v1546
  %v1569 = vunpack.c.l.b16 %v1547
  %v1570 = vunpack.c.h.b16 %v1546
  %v1571 = vunpack.c.h.b16 %v1547
  %v1572 = vpack.c.b16 %v1557, %v1556
  %v1573 = vpack.c.b16 %v1559, %v1558
  %v1574 = vpack.c.b16 %v1561, %v1560
  %v1575 = vpack.c.b16 %v1563, %v1562
  %v1576 = vpack.c.b16 %v1565, %v1564
  %v1577 = vpack.c.b16 %v1567, %v1566
  %v1578 = vpack.c.b16 %v1569, %v1568
  %v1579 = vpack.c.b16 %v1571, %v1570
  %1588 = vst [vmem:[%s4 + $0x4] sm:$0xff] %v1572
  %1589 = vst [vmem:[%s4 + $0x14] sm:$0xff] %v1573
  %1590 = vst [vmem:[%s4 + $0x24] sm:$0xff] %v1574
  %1591 = vst [vmem:[%s4 + $0x34] sm:$0xff] %v1575
  %1592 = vst [vmem:[%s4 + $0x44] sm:$0xff] %v1576
  %1593 = vst [vmem:[%s4 + $0x54] sm:$0xff] %v1577
  %1594 = vst [vmem:[%s4 + $0x64] sm:$0xff] %v1578
  %1595 = vst [vmem:[%s4 + $0x74] sm:$0xff] %v1579
  // Predicated region
  $region18: #{this_net_forward.6} parent=0 // pred_check
    _
  $region19: #{this_net_forward.6} parent=0 // pred_check_branch
    %1597 = sbr.rel (0) target = $region21
  $region20: #{this_net_forward.6} parent=0 // pred_region
    _
  $region21: #{this_net_forward.6} parent=0 // pred_fallthru
    _
  // Predicated region
  $region22: #{this_net_forward.6} parent=0 // pred_check
    _
  $region23: #{this_net_forward.6} parent=0 // pred_check_branch
    %1599 = sbr.rel (0) target = $region25
  $region24: #{this_net_forward.6} parent=0 // pred_region
    _
  $region25: #{this_net_forward.6} parent=0 // pred_fallthru
    _

// kernel: this_net_forward.7
$region0: #{this_net_forward.7}
  #allocation0 [shape = 'u32[]', space=smem, size = 0x4, offset = 0x4, fixed_abs, tag = 'smem constant byte address 0x4 - core index']
  #allocation1 [shape = 'u32[144,128]{1,0:T(1,128)}', space=vmem, size = 0x12000, scoped, tag = 'internal scratch']
  %s0 = inlined_call_operand.vmem [shape: bf16[64,1024], index: 0, kind: input, shape index: {}]
  %s1 = inlined_call_operand.vmem [shape: bf16[32,1024], index: 1, kind: input, shape index: {}]
  %s2 = inlined_call_operand.vmem [shape: bf16[9,32,64], index: 2, kind: input, shape index: {}]
  %s3 = inlined_call_operand.vmem [shape: bf16[9,32,32], index: 3, kind: input, shape index: {}]
  %s4 = inlined_call_operand.vmem [shape: f32[32,1], index: 4, kind: input, shape index: {}]
  %s5 = inlined_call_operand.vmem [shape: f32[1,768], index: 5, kind: input, shape index: {}]
  %s6 = inlined_call_operand.vmem [shape: bf16[8,32], index: 6, kind: input, shape index: {}]
  %s7 = inlined_call_operand.vmem [shape: f32[8,1], index: 7, kind: input, shape index: {}]
  %s8 = inlined_call_operand.vmem [shape: f32[8,768], index: 8, kind: output, shape index: {}]
  %s9 = sld [smem:[#allocation0]]
  $region42: #{this_net_forward.7} parent=0
    _
  %s11 = ssub.s32 1, %s9
  %s12 = scalar_select 0, %s11, %s9
  // Predicated region
  $region2: #{this_net_forward.7} parent=0 // pred_check
    _
  $region3: #{this_net_forward.7} parent=0 // pred_check_branch
    %14 = sbr.rel (0) target = $region5
  $region4: #{this_net_forward.7} parent=0 // pred_region
    _
  $region5: #{this_net_forward.7} parent=0 // pred_fallthru
    _
  // Predicated region
  $region6: #{this_net_forward.7} parent=0 // pred_check
    _
  $region7: #{this_net_forward.7} parent=0 // pred_check_branch
    %16 = sbr.rel (0) target = $region9
  $region8: #{this_net_forward.7} parent=0 // pred_region
    _
  $region9: #{this_net_forward.7} parent=0 // pred_fallthru
    _
  // Predicated region
  $region10: #{this_net_forward.7} parent=0 // pred_check
    _
  $region11: #{this_net_forward.7} parent=0 // pred_check_branch
    %18 = sbr.rel (0) target = $region13
  $region12: #{this_net_forward.7} parent=0 // pred_region
    _
  $region13: #{this_net_forward.7} parent=0 // pred_fallthru
    _
  // Predicated region
  $region14: #{this_net_forward.7} parent=0 // pred_check
    _
  $region15: #{this_net_forward.7} parent=0 // pred_check_branch
    %20 = sbr.rel (0) target = $region17
  $region16: #{this_net_forward.7} parent=0 // pred_region
    _
  $region17: #{this_net_forward.7} parent=0 // pred_fallthru
    _
  // Predicated region
  $region18: #{this_net_forward.7} parent=0 // pred_check
    _
  $region19: #{this_net_forward.7} parent=0 // pred_check_branch
    %22 = sbr.rel (0) target = $region21
  $region20: #{this_net_forward.7} parent=0 // pred_region
    _
  $region21: #{this_net_forward.7} parent=0 // pred_fallthru
    _
  // Predicated region
  $region22: #{this_net_forward.7} parent=0 // pred_check
    _
  $region23: #{this_net_forward.7} parent=0 // pred_check_branch
    %24 = sbr.rel (0) target = $region25
  $region24: #{this_net_forward.7} parent=0 // pred_region
    _
  $region25: #{this_net_forward.7} parent=0 // pred_fallthru
    _
  // Predicated region
  $region26: #{this_net_forward.7} parent=0 // pred_check
    _
  $region27: #{this_net_forward.7} parent=0 // pred_check_branch
    %26 = sbr.rel (0) target = $region29
  $region28: #{this_net_forward.7} parent=0 // pred_region
    _
  $region29: #{this_net_forward.7} parent=0 // pred_fallthru
    _
  // Predicated region
  $region30: #{this_net_forward.7} parent=0 // pred_check
    _
  $region31: #{this_net_forward.7} parent=0 // pred_check_branch
    %28 = sbr.rel (0) target = $region33
  $region32: #{this_net_forward.7} parent=0 // pred_region
    _
  $region33: #{this_net_forward.7} parent=0 // pred_fallthru
    _
  %v30 = vld [vmem:[%s2] sm:$0xf]
  %v31 = vld [vmem:[%s2 + $0x4] sm:$0xf]
  %v32 = vld [vmem:[%s2 + $0x8] sm:$0xf]
  %v33 = vld [vmem:[%s2 + $0xc] sm:$0xf]
  %v34 = vld [vmem:[%s0] sm:$0xff]
  %v35 = vld [vmem:[%s0 + $0x8] sm:$0xff]
  %v36 = vld [vmem:[%s0 + $0x10] sm:$0xff]
  %v37 = vld [vmem:[%s0 + $0x18] sm:$0xf]
  %v38 = vld [vmem:[%s0 + $0x20] sm:$0xff]
  %v39 = vld [vmem:[%s0 + $0x28] sm:$0xff]
  %v40 = vld [vmem:[%s0 + $0x30] sm:$0xff]
  %v41 = vld [vmem:[%s0 + $0x38] sm:$0xf]
  %v42 = vld [vmem:[%s0 + $0x40] sm:$0xff]
  %v43 = vld [vmem:[%s0 + $0x48] sm:$0xff]
  %v44 = vld [vmem:[%s0 + $0x50] sm:$0xff]
  %v45 = vld [vmem:[%s0 + $0x58] sm:$0xf]
  %v46 = vld [vmem:[%s0 + $0x60] sm:$0xff]
  %v47 = vld [vmem:[%s0 + $0x68] sm:$0xff]
  %v48 = vld [vmem:[%s0 + $0x70] sm:$0xff]
  %v49 = vld [vmem:[%s0 + $0x78] sm:$0xf]
  %v50 = vld [vmem:[%s0 + $0x80] sm:$0xff]
  %v51 = vld [vmem:[%s0 + $0x88] sm:$0xff]
  %v52 = vld [vmem:[%s0 + $0x90] sm:$0xff]
  %v53 = vld [vmem:[%s0 + $0x98] sm:$0xf]
  %v54 = vld [vmem:[%s0 + $0xa0] sm:$0xff]
  %v55 = vld [vmem:[%s0 + $0xa8] sm:$0xff]
  %v56 = vld [vmem:[%s0 + $0xb0] sm:$0xff]
  %v57 = vld [vmem:[%s0 + $0xb8] sm:$0xf]
  %v58 = vld [vmem:[%s0 + $0xc0] sm:$0xff]
  %v59 = vld [vmem:[%s0 + $0xc8] sm:$0xff]
  %v60 = vld [vmem:[%s0 + $0xd0] sm:$0xff]
  %v61 = vld [vmem:[%s0 + $0xd8] sm:$0xf]
  %v62 = vld [vmem:[%s0 + $0xe0] sm:$0xff]
  %v63 = vld [vmem:[%s0 + $0xe8] sm:$0xff]
  %v64 = vld [vmem:[%s0 + $0xf0] sm:$0xff]
  %v65 = vld [vmem:[%s0 + $0xf8] sm:$0xf]
  %v66 = vld [vmem:[%s3] sm:$0xf]
  %v67 = vld [vmem:[%s3 + $0x4] sm:$0xf]
  %v68 = vld [vmem:[%s3 + $0x8] sm:$0xf]
  %v69 = vld [vmem:[%s3 + $0xc] sm:$0xf]
  %v70 = vld [vmem:[%s1] sm:$0xff]
  %v71 = vld [vmem:[%s1 + $0x8] sm:$0xff]
  %v72 = vld [vmem:[%s1 + $0x10] sm:$0xff]
  %v73 = vld [vmem:[%s1 + $0x18] sm:$0xf]
  %v74 = vld [vmem:[%s1 + $0x20] sm:$0xff]
  %v75 = vld [vmem:[%s1 + $0x28] sm:$0xff]
  %v76 = vld [vmem:[%s1 + $0x30] sm:$0xff]
  %v77 = vld [vmem:[%s1 + $0x38] sm:$0xf]
  %v78 = vld [vmem:[%s1 + $0x40] sm:$0xff]
  %v79 = vld [vmem:[%s1 + $0x48] sm:$0xff]
  %v80 = vld [vmem:[%s1 + $0x50] sm:$0xff]
  %v81 = vld [vmem:[%s1 + $0x58] sm:$0xf]
  %v82 = vld [vmem:[%s1 + $0x60] sm:$0xff]
  %v83 = vld [vmem:[%s1 + $0x68] sm:$0xff]
  %v84 = vld [vmem:[%s1 + $0x70] sm:$0xff]
  %v85 = vld [vmem:[%s1 + $0x78] sm:$0xf]
  %v90 = vunpack.c.l.b16 %v66
  %v91 = vunpack.c.l.b16 %v67
  %v92 = vunpack.c.l.b16 %v68
  %v93 = vunpack.c.l.b16 %v69
  %v94 = vpack.c.b16 %v91, %v90
  %v95 = vpack.c.b16 %v93, %v92
  %v112 = vunpack.c.l.b16 %v70
  %v113 = vunpack.c.h.b16 %v70
  %v114 = vunpack.c.l.b16 %v71
  %v115 = vunpack.c.h.b16 %v71
  %v116 = vunpack.c.l.b16 %v72
  %v117 = vunpack.c.h.b16 %v72
  %v118 = vunpack.c.l.b16 %v73
  %v119 = vunpack.c.l.b16 %v74
  %v120 = vunpack.c.h.b16 %v74
  %v121 = vunpack.c.l.b16 %v75
  %v122 = vunpack.c.h.b16 %v75
  %v123 = vunpack.c.l.b16 %v76
  %v124 = vunpack.c.h.b16 %v76
  %v125 = vunpack.c.l.b16 %v77
  %v126 = vunpack.c.l.b16 %v78
  %v127 = vunpack.c.h.b16 %v78
  %v128 = vunpack.c.l.b16 %v79
  %v129 = vunpack.c.h.b16 %v79
  %v130 = vunpack.c.l.b16 %v80
  %v131 = vunpack.c.h.b16 %v80
  %v132 = vunpack.c.l.b16 %v81
  %v133 = vunpack.c.l.b16 %v82
  %v134 = vunpack.c.h.b16 %v82
  %v135 = vunpack.c.l.b16 %v83
  %v136 = vunpack.c.h.b16 %v83
  %v137 = vunpack.c.l.b16 %v84
  %v138 = vunpack.c.h.b16 %v84
  %v139 = vunpack.c.l.b16 %v85
  %v140 = vpack.c.b16 %v119, %v112
  %v141 = vpack.c.b16 %v120, %v113
  %v142 = vpack.c.b16 %v121, %v114
  %v143 = vpack.c.b16 %v122, %v115
  %v144 = vpack.c.b16 %v123, %v116
  %v145 = vpack.c.b16 %v124, %v117
  %v146 = vpack.c.b16 %v125, %v118
  %v147 = vpack.c.b16 %v133, %v126
  %v148 = vpack.c.b16 %v134, %v127
  %v149 = vpack.c.b16 %v135, %v128
  %v150 = vpack.c.b16 %v136, %v129
  %v151 = vpack.c.b16 %v137, %v130
  %v152 = vpack.c.b16 %v138, %v131
  %v153 = vpack.c.b16 %v139, %v132
  %154 = vrot.lane.b32.xlu0 %v140, 19
  %v155 = vpop.permute.xlu0 %154
  %156 = vrot.lane.b32.xlu0 %v141, 19
  %v157 = vpop.permute.xlu0 %156
  %158 = vrot.lane.b32.xlu0 %v142, 19
  %v159 = vpop.permute.xlu0 %158
  %160 = vrot.lane.b32.xlu0 %v143, 19
  %v161 = vpop.permute.xlu0 %160
  %162 = vrot.lane.b32.xlu0 %v144, 19
  %v163 = vpop.permute.xlu0 %162
  %164 = vrot.lane.b32.xlu0 %v145, 19
  %v165 = vpop.permute.xlu0 %164
  %166 = vrot.lane.b32.xlu0 %v146, 19
  %v167 = vpop.permute.xlu0 %166
  %168 = vrot.lane.b32.xlu0 %v147, 19
  %v169 = vpop.permute.xlu0 %168
  %170 = vrot.lane.b32.xlu0 %v148, 19
  %v171 = vpop.permute.xlu0 %170
  %172 = vrot.lane.b32.xlu0 %v149, 19
  %v173 = vpop.permute.xlu0 %172
  %174 = vrot.lane.b32.xlu0 %v150, 19
  %v175 = vpop.permute.xlu0 %174
  %176 = vrot.lane.b32.xlu0 %v151, 19
  %v177 = vpop.permute.xlu0 %176
  %178 = vrot.lane.b32.xlu0 %v152, 19
  %v179 = vpop.permute.xlu0 %178
  %180 = vrot.lane.b32.xlu0 %v153, 19
  %v181 = vpop.permute.xlu0 %180
  %vm182 = vcmask 154624
  %v183 = vsel %vm182, %v155, %v157
  %v184 = vsel %vm182, %v157, %v159
  %v185 = vsel %vm182, %v159, %v161
  %v186 = vsel %vm182, %v161, %v163
  %v187 = vsel %vm182, %v163, %v165
  %v188 = vsel %vm182, %v165, %v167
  %v189 = vsel %vm182, %v169, %v171
  %v190 = vsel %vm182, %v171, %v173
  %v191 = vsel %vm182, %v173, %v175
  %v192 = vsel %vm182, %v175, %v177
  %v193 = vsel %vm182, %v177, %v179
  %v194 = vsel %vm182, %v179, %v181
  %vm207 = vcmask 261120
  %v209 = vsel %vm207, %v94, 0
  %v212 = vsel %vm207, %v95, 0
  %214 = vmatprep.subr.bf16.mxu0 %v184
  %215 = vmatpush1.bf16.msra.mxu0 %v183
  %216 = vmatprep.subr.bf16.mxu0 %v190
  %217 = vmatpush1.bf16.msra.mxu0 %v189
  %218 = vmatprep.subr.bf16.mxu0 0
  %219 = vmatpush1.bf16.msra.mxu0 0
  %220 = vmatprep.subr.bf16.mxu0 0
  %221 = vmatpush1.bf16.msra.mxu0 0
  %222 = vmatprep.subr.bf16.mxu0 0
  %223 = vmatpush1.bf16.msra.mxu0 0
  %224 = vmatprep.subr.bf16.mxu0 0
  %225 = vmatpush1.bf16.msra.mxu0 0
  %226 = vmatprep.subr.bf16.mxu0 0
  %227 = vmatpush1.bf16.msra.mxu0 0
  %228 = vmatprep.subr.bf16.mxu0 0
  %229 = vmatpush1.bf16.msra.mxu0 0
  %230 = vmatprep.subr.bf16.mxu0 0
  %231 = vmatpush1.bf16.msra.mxu0 0
  %232 = vmatprep.subr.bf16.mxu0 0
  %233 = vmatpush1.bf16.msra.mxu0 0
  %234 = vmatprep.subr.bf16.mxu0 0
  %235 = vmatpush1.bf16.msra.mxu0 0
  %236 = vmatprep.subr.bf16.mxu0 0
  %237 = vmatpush1.bf16.msra.mxu0 0
  %238 = vmatprep.subr.bf16.mxu0 0
  %239 = vmatpush1.bf16.msra.mxu0 0
  %240 = vmatprep.subr.bf16.mxu0 0
  %241 = vmatpush1.bf16.msra.mxu0 0
  %242 = vmatprep.subr.bf16.mxu0 0
  %243 = vmatpush1.bf16.msra.mxu0 0
  %244 = vmatprep.subr.bf16.mxu0 0
  %245 = vmatpush1.bf16.msra.mxu0 0
  %246 = vmatprep.mubr.bf16.mxu0 0
  %247 = vmatmul.mubr.bf16.gmra.mrb[0].mxu0 %v209
  %v248 = vpop.f32.mrb[0].mxu0
  %v249 = vadd.f32 0.0, %v248
  %v250 = vpop.f32.mrb[0].mxu0
  %v251 = vadd.f32 0.0, %v250
  %v252 = vpop.f32.mrb[0].mxu0
  %v253 = vadd.f32 0.0, %v252
  %v254 = vpop.f32.mrb[0].mxu0
  %v255 = vadd.f32 0.0, %v254
  %256 = vmatprep.mubr.bf16.mxu0 0
  %257 = vmatmul.mubr.bf16.gmra.mrb[0].mxu0 %v212
  %v258 = vpop.f32.mrb[0].mxu0
  %v259 = vadd.f32 0.0, %v258
  %v260 = vpop.f32.mrb[0].mxu0
  %v261 = vadd.f32 0.0, %v260
  %v262 = vpop.f32.mrb[0].mxu0
  %v263 = vadd.f32 0.0, %v262
  %v264 = vpop.f32.mrb[0].mxu0
  %v265 = vadd.f32 0.0, %v264
  %266 = vdwg.mxu0
  %267 = vmatprep.subr.bf16.mxu0 %v186
  %268 = vmatpush1.bf16.msra.mxu0 %v185
  %269 = vmatprep.subr.bf16.mxu0 %v192
  %270 = vmatpush1.bf16.msra.mxu0 %v191
  %271 = vmatprep.subr.bf16.mxu0 0
  %272 = vmatpush1.bf16.msra.mxu0 0
  %273 = vmatprep.subr.bf16.mxu0 0
  %274 = vmatpush1.bf16.msra.mxu0 0
  %275 = vmatprep.subr.bf16.mxu0 0
  %276 = vmatpush1.bf16.msra.mxu0 0
  %277 = vmatprep.subr.bf16.mxu0 0
  %278 = vmatpush1.bf16.msra.mxu0 0
  %279 = vmatprep.subr.bf16.mxu0 0
  %280 = vmatpush1.bf16.msra.mxu0 0
  %281 = vmatprep.subr.bf16.mxu0 0
  %282 = vmatpush1.bf16.msra.mxu0 0
  %283 = vmatprep.subr.bf16.mxu0 0
  %284 = vmatpush1.bf16.msra.mxu0 0
  %285 = vmatprep.subr.bf16.mxu0 0
  %286 = vmatpush1.bf16.msra.mxu0 0
  %287 = vmatprep.subr.bf16.mxu0 0
  %288 = vmatpush1.bf16.msra.mxu0 0
  %289 = vmatprep.subr.bf16.mxu0 0
  %290 = vmatpush1.bf16.msra.mxu0 0
  %291 = vmatprep.subr.bf16.mxu0 0
  %292 = vmatpush1.bf16.msra.mxu0 0
  %293 = vmatprep.subr.bf16.mxu0 0
  %294 = vmatpush1.bf16.msra.mxu0 0
  %295 = vmatprep.subr.bf16.mxu0 0
  %296 = vmatpush1.bf16.msra.mxu0 0
  %297 = vmatprep.subr.bf16.mxu0 0
  %298 = vmatpush1.bf16.msra.mxu0 0
  %299 = vmatprep.mubr.bf16.mxu0 0
  %300 = vmatmul.mubr.bf16.gmra.mrb[0].mxu0 %v209
  %v301 = vpop.f32.mrb[0].mxu0
  %v302 = vadd.f32 0.0, %v301
  %v303 = vpop.f32.mrb[0].mxu0
  %v304 = vadd.f32 0.0, %v303
  %v305 = vpop.f32.mrb[0].mxu0
  %v306 = vadd.f32 0.0, %v305
  %v307 = vpop.f32.mrb[0].mxu0
  %v308 = vadd.f32 0.0, %v307
  %309 = vmatprep.mubr.bf16.mxu0 0
  %310 = vmatmul.mubr.bf16.gmra.mrb[0].mxu0 %v212
  %v311 = vpop.f32.mrb[0].mxu0
  %v312 = vadd.f32 0.0, %v311
  %v313 = vpop.f32.mrb[0].mxu0
  %v314 = vadd.f32 0.0, %v313
  %v315 = vpop.f32.mrb[0].mxu0
  %v316 = vadd.f32 0.0, %v315
  %v317 = vpop.f32.mrb[0].mxu0
  %v318 = vadd.f32 0.0, %v317
  %319 = vdwg.mxu0
  %320 = vmatprep.subr.bf16.mxu0 %v188
  %321 = vmatpush1.bf16.msra.mxu0 %v187
  %322 = vmatprep.subr.bf16.mxu0 %v194
  %323 = vmatpush1.bf16.msra.mxu0 %v193
  %324 = vmatprep.subr.bf16.mxu0 0
  %325 = vmatpush1.bf16.msra.mxu0 0
  %326 = vmatprep.subr.bf16.mxu0 0
  %327 = vmatpush1.bf16.msra.mxu0 0
  %328 = vmatprep.subr.bf16.mxu0 0
  %329 = vmatpush1.bf16.msra.mxu0 0
  %330 = vmatprep.subr.bf16.mxu0 0
  %331 = vmatpush1.bf16.msra.mxu0 0
  %332 = vmatprep.subr.bf16.mxu0 0
  %333 = vmatpush1.bf16.msra.mxu0 0
  %334 = vmatprep.subr.bf16.mxu0 0
  %335 = vmatpush1.bf16.msra.mxu0 0
  %336 = vmatprep.subr.bf16.mxu0 0
  %337 = vmatpush1.bf16.msra.mxu0 0
  %338 = vmatprep.subr.bf16.mxu0 0
  %339 = vmatpush1.bf16.msra.mxu0 0
  %340 = vmatprep.subr.bf16.mxu0 0
  %341 = vmatpush1.bf16.msra.mxu0 0
  %342 = vmatprep.subr.bf16.mxu0 0
  %343 = vmatpush1.bf16.msra.mxu0 0
  %344 = vmatprep.subr.bf16.mxu0 0
  %345 = vmatpush1.bf16.msra.mxu0 0
  %346 = vmatprep.subr.bf16.mxu0 0
  %347 = vmatpush1.bf16.msra.mxu0 0
  %348 = vmatprep.subr.bf16.mxu0 0
  %349 = vmatpush1.bf16.msra.mxu0 0
  %350 = vmatprep.subr.bf16.mxu0 0
  %351 = vmatpush1.bf16.msra.mxu0 0
  %352 = vmatprep.mubr.bf16.mxu0 0
  %353 = vmatmul.mubr.bf16.gmra.mrb[0].mxu0 %v209
  %v354 = vpop.f32.mrb[0].mxu0
  %v355 = vadd.f32 0.0, %v354
  %v356 = vpop.f32.mrb[0].mxu0
  %v357 = vadd.f32 0.0, %v356
  %v358 = vpop.f32.mrb[0].mxu0
  %v359 = vadd.f32 0.0, %v358
  %v360 = vpop.f32.mrb[0].mxu0
  %v361 = vadd.f32 0.0, %v360
  %362 = vmatprep.mubr.bf16.mxu0 0
  %363 = vmatmul.mubr.bf16.gmra.mrb[0].mxu0 %v212
  %v364 = vpop.f32.mrb[0].mxu0
  %v365 = vadd.f32 0.0, %v364
  %v366 = vpop.f32.mrb[0].mxu0
  %v367 = vadd.f32 0.0, %v366
  %v368 = vpop.f32.mrb[0].mxu0
  %v369 = vadd.f32 0.0, %v368
  %v370 = vpop.f32.mrb[0].mxu0
  %v371 = vadd.f32 0.0, %v370
  %372 = vdwg.mxu0
  %v377 = vunpack.c.l.b16 %v30
  %v378 = vunpack.c.l.b16 %v31
  %v379 = vunpack.c.l.b16 %v32
  %v380 = vunpack.c.l.b16 %v33
  %v381 = vpack.c.b16 %v378, %v377
  %v382 = vpack.c.b16 %v380, %v379
  %v415 = vunpack.c.l.b16 %v34
  %v416 = vunpack.c.h.b16 %v34
  %v417 = vunpack.c.l.b16 %v35
  %v418 = vunpack.c.h.b16 %v35
  %v419 = vunpack.c.l.b16 %v36
  %v420 = vunpack.c.h.b16 %v36
  %v421 = vunpack.c.l.b16 %v37
  %v422 = vunpack.c.l.b16 %v38
  %v423 = vunpack.c.h.b16 %v38
  %v424 = vunpack.c.l.b16 %v39
  %v425 = vunpack.c.h.b16 %v39
  %v426 = vunpack.c.l.b16 %v40
  %v427 = vunpack.c.h.b16 %v40
  %v428 = vunpack.c.l.b16 %v41
  %v429 = vunpack.c.l.b16 %v42
  %v430 = vunpack.c.h.b16 %v42
  %v431 = vunpack.c.l.b16 %v43
  %v432 = vunpack.c.h.b16 %v43
  %v433 = vunpack.c.l.b16 %v44
  %v434 = vunpack.c.h.b16 %v44
  %v435 = vunpack.c.l.b16 %v45
  %v436 = vunpack.c.l.b16 %v46
  %v437 = vunpack.c.h.b16 %v46
  %v438 = vunpack.c.l.b16 %v47
  %v439 = vunpack.c.h.b16 %v47
  %v440 = vunpack.c.l.b16 %v48
  %v441 = vunpack.c.h.b16 %v48
  %v442 = vunpack.c.l.b16 %v49
  %v443 = vunpack.c.l.b16 %v50
  %v444 = vunpack.c.h.b16 %v50
  %v445 = vunpack.c.l.b16 %v51
  %v446 = vunpack.c.h.b16 %v51
  %v447 = vunpack.c.l.b16 %v52
  %v448 = vunpack.c.h.b16 %v52
  %v449 = vunpack.c.l.b16 %v53
  %v450 = vunpack.c.l.b16 %v54
  %v451 = vunpack.c.h.b16 %v54
  %v452 = vunpack.c.l.b16 %v55
  %v453 = vunpack.c.h.b16 %v55
  %v454 = vunpack.c.l.b16 %v56
  %v455 = vunpack.c.h.b16 %v56
  %v456 = vunpack.c.l.b16 %v57
  %v457 = vunpack.c.l.b16 %v58
  %v458 = vunpack.c.h.b16 %v58
  %v459 = vunpack.c.l.b16 %v59
  %v460 = vunpack.c.h.b16 %v59
  %v461 = vunpack.c.l.b16 %v60
  %v462 = vunpack.c.h.b16 %v60
  %v463 = vunpack.c.l.b16 %v61
  %v464 = vunpack.c.l.b16 %v62
  %v465 = vunpack.c.h.b16 %v62
  %v466 = vunpack.c.l.b16 %v63
  %v467 = vunpack.c.h.b16 %v63
  %v468 = vunpack.c.l.b16 %v64
  %v469 = vunpack.c.h.b16 %v64
  %v470 = vunpack.c.l.b16 %v65
  %v471 = vpack.c.b16 %v422, %v415
  %v472 = vpack.c.b16 %v423, %v416
  %v473 = vpack.c.b16 %v424, %v417
  %v474 = vpack.c.b16 %v425, %v418
  %v475 = vpack.c.b16 %v426, %v419
  %v476 = vpack.c.b16 %v427, %v420
  %v477 = vpack.c.b16 %v428, %v421
  %v478 = vpack.c.b16 %v436, %v429
  %v479 = vpack.c.b16 %v437, %v430
  %v480 = vpack.c.b16 %v438, %v431
  %v481 = vpack.c.b16 %v439, %v432
  %v482 = vpack.c.b16 %v440, %v433
  %v483 = vpack.c.b16 %v441, %v434
  %v484 = vpack.c.b16 %v442, %v435
  %v485 = vpack.c.b16 %v450, %v443
  %v486 = vpack.c.b16 %v451, %v444
  %v487 = vpack.c.b16 %v452, %v445
  %v488 = vpack.c.b16 %v453, %v446
  %v489 = vpack.c.b16 %v454, %v447
  %v490 = vpack.c.b16 %v455, %v448
  %v491 = vpack.c.b16 %v456, %v449
  %v492 = vpack.c.b16 %v464, %v457
  %v493 = vpack.c.b16 %v465, %v458
  %v494 = vpack.c.b16 %v466, %v459
  %v495 = vpack.c.b16 %v467, %v460
  %v496 = vpack.c.b16 %v468, %v461
  %v497 = vpack.c.b16 %v469, %v462
  %v498 = vpack.c.b16 %v470, %v463
  %499 = vrot.lane.b32.xlu0 %v471, 19
  %v500 = vpop.permute.xlu0 %499
  %501 = vrot.lane.b32.xlu0 %v472, 19
  %v502 = vpop.permute.xlu0 %501
  %503 = vrot.lane.b32.xlu0 %v473, 19
  %v504 = vpop.permute.xlu0 %503
  %505 = vrot.lane.b32.xlu0 %v474, 19
  %v506 = vpop.permute.xlu0 %505
  %507 = vrot.lane.b32.xlu0 %v475, 19
  %v508 = vpop.permute.xlu0 %507
  %509 = vrot.lane.b32.xlu0 %v476, 19
  %v510 = vpop.permute.xlu0 %509
  %511 = vrot.lane.b32.xlu0 %v477, 19
  %v512 = vpop.permute.xlu0 %511
  %513 = vrot.lane.b32.xlu0 %v478, 19
  %v514 = vpop.permute.xlu0 %513
  %515 = vrot.lane.b32.xlu0 %v479, 19
  %v516 = vpop.permute.xlu0 %515
  %517 = vrot.lane.b32.xlu0 %v480, 19
  %v518 = vpop.permute.xlu0 %517
  %519 = vrot.lane.b32.xlu0 %v481, 19
  %v520 = vpop.permute.xlu0 %519
  %521 = vrot.lane.b32.xlu0 %v482, 19
  %v522 = vpop.permute.xlu0 %521
  %523 = vrot.lane.b32.xlu0 %v483, 19
  %v524 = vpop.permute.xlu0 %523
  %525 = vrot.lane.b32.xlu0 %v484, 19
  %v526 = vpop.permute.xlu0 %525
  %527 = vrot.lane.b32.xlu0 %v485, 19
  %v528 = vpop.permute.xlu0 %527
  %529 = vrot.lane.b32.xlu0 %v486, 19
  %v530 = vpop.permute.xlu0 %529
  %531 = vrot.lane.b32.xlu0 %v487, 19
  %v532 = vpop.permute.xlu0 %531
  %533 = vrot.lane.b32.xlu0 %v488, 19
  %v534 = vpop.permute.xlu0 %533
  %535 = vrot.lane.b32.xlu0 %v489, 19
  %v536 = vpop.permute.xlu0 %535
  %537 = vrot.lane.b32.xlu0 %v490, 19
  %v538 = vpop.permute.xlu0 %537
  %539 = vrot.lane.b32.xlu0 %v491, 19
  %v540 = vpop.permute.xlu0 %539
  %541 = vrot.lane.b32.xlu0 %v492, 19
  %v542 = vpop.permute.xlu0 %541
  %543 = vrot.lane.b32.xlu0 %v493, 19
  %v544 = vpop.permute.xlu0 %543
  %545 = vrot.lane.b32.xlu0 %v494, 19
  %v546 = vpop.permute.xlu0 %545
  %547 = vrot.lane.b32.xlu0 %v495, 19
  %v548 = vpop.permute.xlu0 %547
  %549 = vrot.lane.b32.xlu0 %v496, 19
  %v550 = vpop.permute.xlu0 %549
  %551 = vrot.lane.b32.xlu0 %v497, 19
  %v552 = vpop.permute.xlu0 %551
  %553 = vrot.lane.b32.xlu0 %v498, 19
  %v554 = vpop.permute.xlu0 %553
  %v555 = vsel %vm182, %v500, %v502
  %v556 = vsel %vm182, %v502, %v504
  %v557 = vsel %vm182, %v504, %v506
  %v558 = vsel %vm182, %v506, %v508
  %v559 = vsel %vm182, %v508, %v510
  %v560 = vsel %vm182, %v510, %v512
  %v561 = vsel %vm182, %v514, %v516
  %v562 = vsel %vm182, %v516, %v518
  %v563 = vsel %vm182, %v518, %v520
  %v564 = vsel %vm182, %v520, %v522
  %v565 = vsel %vm182, %v522, %v524
  %v566 = vsel %vm182, %v524, %v526
  %v567 = vsel %vm182, %v528, %v530
  %v568 = vsel %vm182, %v530, %v532
  %v569 = vsel %vm182, %v532, %v534
  %v570 = vsel %vm182, %v534, %v536
  %v571 = vsel %vm182, %v536, %v538
  %v572 = vsel %vm182, %v538, %v540
  %v573 = vsel %vm182, %v542, %v544
  %v574 = vsel %vm182, %v544, %v546
  %v575 = vsel %vm182, %v546, %v548
  %v576 = vsel %vm182, %v548, %v550
  %v577 = vsel %vm182, %v550, %v552
  %v578 = vsel %vm182, %v552, %v554
  %vm603 = vcmask 523264
  %v605 = vsel %vm603, %v381, 0
  %v608 = vsel %vm603, %v382, 0
  %610 = vmatprep.subr.bf16.mxu0 %v556
  %611 = vmatpush1.bf16.msra.mxu0 %v555
  %612 = vmatprep.subr.bf16.mxu0 %v562
  %613 = vmatpush1.bf16.msra.mxu0 %v561
  %614 = vmatprep.subr.bf16.mxu0 %v568
  %615 = vmatpush1.bf16.msra.mxu0 %v567
  %616 = vmatprep.subr.bf16.mxu0 %v574
  %617 = vmatpush1.bf16.msra.mxu0 %v573
  %618 = vmatprep.subr.bf16.mxu0 0
  %619 = vmatpush1.bf16.msra.mxu0 0
  %620 = vmatprep.subr.bf16.mxu0 0
  %621 = vmatpush1.bf16.msra.mxu0 0
  %622 = vmatprep.subr.bf16.mxu0 0
  %623 = vmatpush1.bf16.msra.mxu0 0
  %624 = vmatprep.subr.bf16.mxu0 0
  %625 = vmatpush1.bf16.msra.mxu0 0
  %626 = vmatprep.subr.bf16.mxu0 0
  %627 = vmatpush1.bf16.msra.mxu0 0
  %628 = vmatprep.subr.bf16.mxu0 0
  %629 = vmatpush1.bf16.msra.mxu0 0
  %630 = vmatprep.subr.bf16.mxu0 0
  %631 = vmatpush1.bf16.msra.mxu0 0
  %632 = vmatprep.subr.bf16.mxu0 0
  %633 = vmatpush1.bf16.msra.mxu0 0
  %634 = vmatprep.subr.bf16.mxu0 0
  %635 = vmatpush1.bf16.msra.mxu0 0
  %636 = vmatprep.subr.bf16.mxu0 0
  %637 = vmatpush1.bf16.msra.mxu0 0
  %638 = vmatprep.subr.bf16.mxu0 0
  %639 = vmatpush1.bf16.msra.mxu0 0
  %640 = vmatprep.subr.bf16.mxu0 0
  %641 = vmatpush1.bf16.msra.mxu0 0
  %642 = vmatprep.mubr.bf16.mxu0 0
  %643 = vmatmul.mubr.bf16.gmra.mrb[0].mxu0 %v605
  %v644 = vpop.f32.mrb[0].mxu0
  %v645 = vadd.f32 %v249, %v644
  %v646 = vpop.f32.mrb[0].mxu0
  %v647 = vadd.f32 %v251, %v646
  %v648 = vpop.f32.mrb[0].mxu0
  %v649 = vadd.f32 %v253, %v648
  %v650 = vpop.f32.mrb[0].mxu0
  %v651 = vadd.f32 %v255, %v650
  %652 = vmatprep.mubr.bf16.mxu0 0
  %653 = vmatmul.mubr.bf16.gmra.mrb[0].mxu0 %v608
  %v654 = vpop.f32.mrb[0].mxu0
  %v655 = vadd.f32 %v259, %v654
  %v656 = vpop.f32.mrb[0].mxu0
  %v657 = vadd.f32 %v261, %v656
  %v658 = vpop.f32.mrb[0].mxu0
  %v659 = vadd.f32 %v263, %v658
  %v660 = vpop.f32.mrb[0].mxu0
  %v661 = vadd.f32 %v265, %v660
  %662 = vdwg.mxu0
  %663 = vmatprep.subr.bf16.mxu0 %v558
  %664 = vmatpush1.bf16.msra.mxu0 %v557
  %665 = vmatprep.subr.bf16.mxu0 %v564
  %666 = vmatpush1.bf16.msra.mxu0 %v563
  %667 = vmatprep.subr.bf16.mxu0 %v570
  %668 = vmatpush1.bf16.msra.mxu0 %v569
  %669 = vmatprep.subr.bf16.mxu0 %v576
  %670 = vmatpush1.bf16.msra.mxu0 %v575
  %671 = vmatprep.subr.bf16.mxu0 0
  %672 = vmatpush1.bf16.msra.mxu0 0
  %673 = vmatprep.subr.bf16.mxu0 0
  %674 = vmatpush1.bf16.msra.mxu0 0
  %675 = vmatprep.subr.bf16.mxu0 0
  %676 = vmatpush1.bf16.msra.mxu0 0
  %677 = vmatprep.subr.bf16.mxu0 0
  %678 = vmatpush1.bf16.msra.mxu0 0
  %679 = vmatprep.subr.bf16.mxu0 0
  %680 = vmatpush1.bf16.msra.mxu0 0
  %681 = vmatprep.subr.bf16.mxu0 0
  %682 = vmatpush1.bf16.msra.mxu0 0
  %683 = vmatprep.subr.bf16.mxu0 0
  %684 = vmatpush1.bf16.msra.mxu0 0
  %685 = vmatprep.subr.bf16.mxu0 0
  %686 = vmatpush1.bf16.msra.mxu0 0
  %687 = vmatprep.subr.bf16.mxu0 0
  %688 = vmatpush1.bf16.msra.mxu0 0
  %689 = vmatprep.subr.bf16.mxu0 0
  %690 = vmatpush1.bf16.msra.mxu0 0
  %691 = vmatprep.subr.bf16.mxu0 0
  %692 = vmatpush1.bf16.msra.mxu0 0
  %693 = vmatprep.subr.bf16.mxu0 0
  %694 = vmatpush1.bf16.msra.mxu0 0
  %695 = vmatprep.mubr.bf16.mxu0 0
  %696 = vmatmul.mubr.bf16.gmra.mrb[0].mxu0 %v605
  %v697 = vpop.f32.mrb[0].mxu0
  %v698 = vadd.f32 %v302, %v697
  %v699 = vpop.f32.mrb[0].mxu0
  %v700 = vadd.f32 %v304, %v699
  %v701 = vpop.f32.mrb[0].mxu0
  %v702 = vadd.f32 %v306, %v701
  %v703 = vpop.f32.mrb[0].mxu0
  %v704 = vadd.f32 %v308, %v703
  %705 = vmatprep.mubr.bf16.mxu0 0
  %706 = vmatmul.mubr.bf16.gmra.mrb[0].mxu0 %v608
  %v707 = vpop.f32.mrb[0].mxu0
  %v708 = vadd.f32 %v312, %v707
  %v709 = vpop.f32.mrb[0].mxu0
  %v710 = vadd.f32 %v314, %v709
  %v711 = vpop.f32.mrb[0].mxu0
  %v712 = vadd.f32 %v316, %v711
  %v713 = vpop.f32.mrb[0].mxu0
  %v714 = vadd.f32 %v318, %v713
  %715 = vdwg.mxu0
  %716 = vmatprep.subr.bf16.mxu0 %v560
  %717 = vmatpush1.bf16.msra.mxu0 %v559
  %718 = vmatprep.subr.bf16.mxu0 %v566
  %719 = vmatpush1.bf16.msra.mxu0 %v565
  %720 = vmatprep.subr.bf16.mxu0 %v572
  %721 = vmatpush1.bf16.msra.mxu0 %v571
  %722 = vmatprep.subr.bf16.mxu0 %v578
  %723 = vmatpush1.bf16.msra.mxu0 %v577
  %724 = vmatprep.subr.bf16.mxu0 0
  %725 = vmatpush1.bf16.msra.mxu0 0
  %726 = vmatprep.subr.bf16.mxu0 0
  %727 = vmatpush1.bf16.msra.mxu0 0
  %728 = vmatprep.subr.bf16.mxu0 0
  %729 = vmatpush1.bf16.msra.mxu0 0
  %730 = vmatprep.subr.bf16.mxu0 0
  %731 = vmatpush1.bf16.msra.mxu0 0
  %732 = vmatprep.subr.bf16.mxu0 0
  %733 = vmatpush1.bf16.msra.mxu0 0
  %734 = vmatprep.subr.bf16.mxu0 0
  %735 = vmatpush1.bf16.msra.mxu0 0
  %736 = vmatprep.subr.bf16.mxu0 0
  %737 = vmatpush1.bf16.msra.mxu0 0
  %738 = vmatprep.subr.bf16.mxu0 0
  %739 = vmatpush1.bf16.msra.mxu0 0
  %740 = vmatprep.subr.bf16.mxu0 0
  %741 = vmatpush1.bf16.msra.mxu0 0
  %742 = vmatprep.subr.bf16.mxu0 0
  %743 = vmatpush1.bf16.msra.mxu0 0
  %744 = vmatprep.subr.bf16.mxu0 0
  %745 = vmatpush1.bf16.msra.mxu0 0
  %746 = vmatprep.subr.bf16.mxu0 0
  %747 = vmatpush1.bf16.msra.mxu0 0
  %748 = vmatprep.mubr.bf16.mxu0 0
  %749 = vmatmul.mubr.bf16.gmra.mrb[0].mxu0 %v605
  %v750 = vpop.f32.mrb[0].mxu0
  %v751 = vadd.f32 %v355, %v750
  %v752 = vpop.f32.mrb[0].mxu0
  %v753 = vadd.f32 %v357, %v752
  %v754 = vpop.f32.mrb[0].mxu0
  %v755 = vadd.f32 %v359, %v754
  %v756 = vpop.f32.mrb[0].mxu0
  %v757 = vadd.f32 %v361, %v756
  %758 = vmatprep.mubr.bf16.mxu0 0
  %759 = vmatmul.mubr.bf16.gmra.mrb[0].mxu0 %v608
  %v760 = vpop.f32.mrb[0].mxu0
  %v761 = vadd.f32 %v365, %v760
  %v762 = vpop.f32.mrb[0].mxu0
  %v763 = vadd.f32 %v367, %v762
  %v764 = vpop.f32.mrb[0].mxu0
  %v765 = vadd.f32 %v369, %v764
  %v766 = vpop.f32.mrb[0].mxu0
  %v767 = vadd.f32 %v371, %v766
  %768 = vdwg.mxu0
  %s769 = scalar_lea.vmem %s2, 16
  %v770 = vld [vmem:[%s769] sm:$0xf]
  %v771 = vld [vmem:[%s769 + $0x4] sm:$0xf]
  %v772 = vld [vmem:[%s769 + $0x8] sm:$0xf]
  %v773 = vld [vmem:[%s769 + $0xc] sm:$0xf]
  %v778 = vunpack.c.l.b16 %v770
  %v779 = vunpack.c.l.b16 %v771
  %v780 = vunpack.c.l.b16 %v772
  %v781 = vunpack.c.l.b16 %v773
  %v782 = vpack.c.b16 %v779, %v778
  %v783 = vpack.c.b16 %v781, %v780
  %784 = vrot.lane.b32.xlu0 %v471, 18
  %v785 = vpop.permute.xlu0 %784
  %786 = vrot.lane.b32.xlu0 %v472, 18
  %v787 = vpop.permute.xlu0 %786
  %788 = vrot.lane.b32.xlu0 %v473, 18
  %v789 = vpop.permute.xlu0 %788
  %790 = vrot.lane.b32.xlu0 %v474, 18
  %v791 = vpop.permute.xlu0 %790
  %792 = vrot.lane.b32.xlu0 %v475, 18
  %v793 = vpop.permute.xlu0 %792
  %794 = vrot.lane.b32.xlu0 %v476, 18
  %v795 = vpop.permute.xlu0 %794
  %796 = vrot.lane.b32.xlu0 %v477, 18
  %v797 = vpop.permute.xlu0 %796
  %798 = vrot.lane.b32.xlu0 %v478, 18
  %v799 = vpop.permute.xlu0 %798
  %800 = vrot.lane.b32.xlu0 %v479, 18
  %v801 = vpop.permute.xlu0 %800
  %802 = vrot.lane.b32.xlu0 %v480, 18
  %v803 = vpop.permute.xlu0 %802
  %804 = vrot.lane.b32.xlu0 %v481, 18
  %v805 = vpop.permute.xlu0 %804
  %806 = vrot.lane.b32.xlu0 %v482, 18
  %v807 = vpop.permute.xlu0 %806
  %808 = vrot.lane.b32.xlu0 %v483, 18
  %v809 = vpop.permute.xlu0 %808
  %810 = vrot.lane.b32.xlu0 %v484, 18
  %v811 = vpop.permute.xlu0 %810
  %812 = vrot.lane.b32.xlu0 %v485, 18
  %v813 = vpop.permute.xlu0 %812
  %814 = vrot.lane.b32.xlu0 %v486, 18
  %v815 = vpop.permute.xlu0 %814
  %816 = vrot.lane.b32.xlu0 %v487, 18
  %v817 = vpop.permute.xlu0 %816
  %818 = vrot.lane.b32.xlu0 %v488, 18
  %v819 = vpop.permute.xlu0 %818
  %820 = vrot.lane.b32.xlu0 %v489, 18
  %v821 = vpop.permute.xlu0 %820
  %822 = vrot.lane.b32.xlu0 %v490, 18
  %v823 = vpop.permute.xlu0 %822
  %824 = vrot.lane.b32.xlu0 %v491, 18
  %v825 = vpop.permute.xlu0 %824
  %826 = vrot.lane.b32.xlu0 %v492, 18
  %v827 = vpop.permute.xlu0 %826
  %828 = vrot.lane.b32.xlu0 %v493, 18
  %v829 = vpop.permute.xlu0 %828
  %830 = vrot.lane.b32.xlu0 %v494, 18
  %v831 = vpop.permute.xlu0 %830
  %832 = vrot.lane.b32.xlu0 %v495, 18
  %v833 = vpop.permute.xlu0 %832
  %834 = vrot.lane.b32.xlu0 %v496, 18
  %v835 = vpop.permute.xlu0 %834
  %836 = vrot.lane.b32.xlu0 %v497, 18
  %v837 = vpop.permute.xlu0 %836
  %838 = vrot.lane.b32.xlu0 %v498, 18
  %v839 = vpop.permute.xlu0 %838
  %vm840 = vcmask 146432
  %v841 = vsel %vm840, %v785, %v787
  %v842 = vsel %vm840, %v787, %v789
  %v843 = vsel %vm840, %v789, %v791
  %v844 = vsel %vm840, %v791, %v793
  %v845 = vsel %vm840, %v793, %v795
  %v846 = vsel %vm840, %v795, %v797
  %v847 = vsel %vm840, %v799, %v801
  %v848 = vsel %vm840, %v801, %v803
  %v849 = vsel %vm840, %v803, %v805
  %v850 = vsel %vm840, %v805, %v807
  %v851 = vsel %vm840, %v807, %v809
  %v852 = vsel %vm840, %v809, %v811
  %v853 = vsel %vm840, %v813, %v815
  %v854 = vsel %vm840, %v815, %v817
  %v855 = vsel %vm840, %v817, %v819
  %v856 = vsel %vm840, %v819, %v821
  %v857 = vsel %vm840, %v821, %v823
  %v858 = vsel %vm840, %v823, %v825
  %v859 = vsel %vm840, %v827, %v829
  %v860 = vsel %vm840, %v829, %v831
  %v861 = vsel %vm840, %v831, %v833
  %v862 = vsel %vm840, %v833, %v835
  %v863 = vsel %vm840, %v835, %v837
  %v864 = vsel %vm840, %v837, %v839
  %v890 = vsel %vm603, %v782, 0
  %v893 = vsel %vm603, %v783, 0
  %895 = vmatprep.subr.bf16.mxu0 %v842
  %896 = vmatpush1.bf16.msra.mxu0 %v841
  %897 = vmatprep.subr.bf16.mxu0 %v848
  %898 = vmatpush1.bf16.msra.mxu0 %v847
  %899 = vmatprep.subr.bf16.mxu0 %v854
  %900 = vmatpush1.bf16.msra.mxu0 %v853
  %901 = vmatprep.subr.bf16.mxu0 %v860
  %902 = vmatpush1.bf16.msra.mxu0 %v859
  %903 = vmatprep.subr.bf16.mxu0 0
  %904 = vmatpush1.bf16.msra.mxu0 0
  %905 = vmatprep.subr.bf16.mxu0 0
  %906 = vmatpush1.bf16.msra.mxu0 0
  %907 = vmatprep.subr.bf16.mxu0 0
  %908 = vmatpush1.bf16.msra.mxu0 0
  %909 = vmatprep.subr.bf16.mxu0 0
  %910 = vmatpush1.bf16.msra.mxu0 0
  %911 = vmatprep.subr.bf16.mxu0 0
  %912 = vmatpush1.bf16.msra.mxu0 0
  %913 = vmatprep.subr.bf16.mxu0 0
  %914 = vmatpush1.bf16.msra.mxu0 0
  %915 = vmatprep.subr.bf16.mxu0 0
  %916 = vmatpush1.bf16.msra.mxu0 0
  %917 = vmatprep.subr.bf16.mxu0 0
  %918 = vmatpush1.bf16.msra.mxu0 0
  %919 = vmatprep.subr.bf16.mxu0 0
  %920 = vmatpush1.bf16.msra.mxu0 0
  %921 = vmatprep.subr.bf16.mxu0 0
  %922 = vmatpush1.bf16.msra.mxu0 0
  %923 = vmatprep.subr.bf16.mxu0 0
  %924 = vmatpush1.bf16.msra.mxu0 0
  %925 = vmatprep.subr.bf16.mxu0 0
  %926 = vmatpush1.bf16.msra.mxu0 0
  %927 = vmatprep.mubr.bf16.mxu0 0
  %928 = vmatmul.mubr.bf16.gmra.mrb[0].mxu0 %v890
  %v929 = vpop.f32.mrb[0].mxu0
  %v930 = vadd.f32 0.0, %v929
  %v931 = vpop.f32.mrb[0].mxu0
  %v932 = vadd.f32 0.0, %v931
  %v933 = vpop.f32.mrb[0].mxu0
  %v934 = vadd.f32 0.0, %v933
  %v935 = vpop.f32.mrb[0].mxu0
  %v936 = vadd.f32 0.0, %v935
  %937 = vmatprep.mubr.bf16.mxu0 0
  %938 = vmatmul.mubr.bf16.gmra.mrb[0].mxu0 %v893
  %v939 = vpop.f32.mrb[0].mxu0
  %v940 = vadd.f32 0.0, %v939
  %v941 = vpop.f32.mrb[0].mxu0
  %v942 = vadd.f32 0.0, %v941
  %v943 = vpop.f32.mrb[0].mxu0
  %v944 = vadd.f32 0.0, %v943
  %v945 = vpop.f32.mrb[0].mxu0
  %v946 = vadd.f32 0.0, %v945
  %947 = vdwg.mxu0
  %948 = vmatprep.subr.bf16.mxu0 %v844
  %949 = vmatpush1.bf16.msra.mxu0 %v843
  %950 = vmatprep.subr.bf16.mxu0 %v850
  %951 = vmatpush1.bf16.msra.mxu0 %v849
  %952 = vmatprep.subr.bf16.mxu0 %v856
  %953 = vmatpush1.bf16.msra.mxu0 %v855
  %954 = vmatprep.subr.bf16.mxu0 %v862
  %955 = vmatpush1.bf16.msra.mxu0 %v861
  %956 = vmatprep.subr.bf16.mxu0 0
  %957 = vmatpush1.bf16.msra.mxu0 0
  %958 = vmatprep.subr.bf16.mxu0 0
  %959 = vmatpush1.bf16.msra.mxu0 0
  %960 = vmatprep.subr.bf16.mxu0 0
  %961 = vmatpush1.bf16.msra.mxu0 0
  %962 = vmatprep.subr.bf16.mxu0 0
  %963 = vmatpush1.bf16.msra.mxu0 0
  %964 = vmatprep.subr.bf16.mxu0 0
  %965 = vmatpush1.bf16.msra.mxu0 0
  %966 = vmatprep.subr.bf16.mxu0 0
  %967 = vmatpush1.bf16.msra.mxu0 0
  %968 = vmatprep.subr.bf16.mxu0 0
  %969 = vmatpush1.bf16.msra.mxu0 0
  %970 = vmatprep.subr.bf16.mxu0 0
  %971 = vmatpush1.bf16.msra.mxu0 0
  %972 = vmatprep.subr.bf16.mxu0 0
  %973 = vmatpush1.bf16.msra.mxu0 0
  %974 = vmatprep.subr.bf16.mxu0 0
  %975 = vmatpush1.bf16.msra.mxu0 0
  %976 = vmatprep.subr.bf16.mxu0 0
  %977 = vmatpush1.bf16.msra.mxu0 0
  %978 = vmatprep.subr.bf16.mxu0 0
  %979 = vmatpush1.bf16.msra.mxu0 0
  %980 = vmatprep.mubr.bf16.mxu0 0
  %981 = vmatmul.mubr.bf16.gmra.mrb[0].mxu0 %v890
  %v982 = vpop.f32.mrb[0].mxu0
  %v983 = vadd.f32 0.0, %v982
  %v984 = vpop.f32.mrb[0].mxu0
  %v985 = vadd.f32 0.0, %v984
  %v986 = vpop.f32.mrb[0].mxu0
  %v987 = vadd.f32 0.0, %v986
  %v988 = vpop.f32.mrb[0].mxu0
  %v989 = vadd.f32 0.0, %v988
  %990 = vmatprep.mubr.bf16.mxu0 0
  %991 = vmatmul.mubr.bf16.gmra.mrb[0].mxu0 %v893
  %v992 = vpop.f32.mrb[0].mxu0
  %v993 = vadd.f32 0.0, %v992
  %v994 = vpop.f32.mrb[0].mxu0
  %v995 = vadd.f32 0.0, %v994
  %v996 = vpop.f32.mrb[0].mxu0
  %v997 = vadd.f32 0.0, %v996
  %v998 = vpop.f32.mrb[0].mxu0
  %v999 = vadd.f32 0.0, %v998
  %1000 = vdwg.mxu0
  %1001 = vmatprep.subr.bf16.mxu0 %v846
  %1002 = vmatpush1.bf16.msra.mxu0 %v845
  %1003 = vmatprep.subr.bf16.mxu0 %v852
  %1004 = vmatpush1.bf16.msra.mxu0 %v851
  %1005 = vmatprep.subr.bf16.mxu0 %v858
  %1006 = vmatpush1.bf16.msra.mxu0 %v857
  %1007 = vmatprep.subr.bf16.mxu0 %v864
  %1008 = vmatpush1.bf16.msra.mxu0 %v863
  %1009 = vmatprep.subr.bf16.mxu0 0
  %1010 = vmatpush1.bf16.msra.mxu0 0
  %1011 = vmatprep.subr.bf16.mxu0 0
  %1012 = vmatpush1.bf16.msra.mxu0 0
  %1013 = vmatprep.subr.bf16.mxu0 0
  %1014 = vmatpush1.bf16.msra.mxu0 0
  %1015 = vmatprep.subr.bf16.mxu0 0
  %1016 = vmatpush1.bf16.msra.mxu0 0
  %1017 = vmatprep.subr.bf16.mxu0 0
  %1018 = vmatpush1.bf16.msra.mxu0 0
  %1019 = vmatprep.subr.bf16.mxu0 0
  %1020 = vmatpush1.bf16.msra.mxu0 0
  %1021 = vmatprep.subr.bf16.mxu0 0
  %1022 = vmatpush1.bf16.msra.mxu0 0
  %1023 = vmatprep.subr.bf16.mxu0 0
  %1024 = vmatpush1.bf16.msra.mxu0 0
  %1025 = vmatprep.subr.bf16.mxu0 0
  %1026 = vmatpush1.bf16.msra.mxu0 0
  %1027 = vmatprep.subr.bf16.mxu0 0
  %1028 = vmatpush1.bf16.msra.mxu0 0
  %1029 = vmatprep.subr.bf16.mxu0 0
  %1030 = vmatpush1.bf16.msra.mxu0 0
  %1031 = vmatprep.subr.bf16.mxu0 0
  %1032 = vmatpush1.bf16.msra.mxu0 0
  %1033 = vmatprep.mubr.bf16.mxu0 0
  %1034 = vmatmul.mubr.bf16.gmra.mrb[0].mxu0 %v890
  %v1035 = vpop.f32.mrb[0].mxu0
  %v1036 = vadd.f32 0.0, %v1035
  %v1037 = vpop.f32.mrb[0].mxu0
  %v1038 = vadd.f32 0.0, %v1037
  %v1039 = vpop.f32.mrb[0].mxu0
  %v1040 = vadd.f32 0.0, %v1039
  %v1041 = vpop.f32.mrb[0].mxu0
  %v1042 = vadd.f32 0.0, %v1041
  %1043 = vmatprep.mubr.bf16.mxu0 0
  %1044 = vmatmul.mubr.bf16.gmra.mrb[0].mxu0 %v893
  %v1045 = vpop.f32.mrb[0].mxu0
  %v1046 = vadd.f32 0.0, %v1045
  %v1047 = vpop.f32.mrb[0].mxu0
  %v1048 = vadd.f32 0.0, %v1047
  %v1049 = vpop.f32.mrb[0].mxu0
  %v1050 = vadd.f32 0.0, %v1049
  %v1051 = vpop.f32.mrb[0].mxu0
  %v1052 = vadd.f32 0.0, %v1051
  %1053 = vdwg.mxu0
  %v1054 = vadd.f32 %v645, %v930
  %v1055 = vadd.f32 %v647, %v932
  %v1056 = vadd.f32 %v698, %v983
  %v1057 = vadd.f32 %v700, %v985
  %v1058 = vadd.f32 %v751, %v1036
  %v1059 = vadd.f32 %v753, %v1038
  %v1060 = vadd.f32 %v649, %v934
  %v1061 = vadd.f32 %v651, %v936
  %v1062 = vadd.f32 %v702, %v987
  %v1063 = vadd.f32 %v704, %v989
  %v1064 = vadd.f32 %v755, %v1040
  %v1065 = vadd.f32 %v757, %v1042
  %v1066 = vadd.f32 %v655, %v940
  %v1067 = vadd.f32 %v657, %v942
  %v1068 = vadd.f32 %v708, %v993
  %v1069 = vadd.f32 %v710, %v995
  %v1070 = vadd.f32 %v761, %v1046
  %v1071 = vadd.f32 %v763, %v1048
  %v1072 = vadd.f32 %v659, %v944
  %v1073 = vadd.f32 %v661, %v946
  %v1074 = vadd.f32 %v712, %v997
  %v1075 = vadd.f32 %v714, %v999
  %v1076 = vadd.f32 %v765, %v1050
  %v1077 = vadd.f32 %v767, %v1052
  %s1078 = scalar_lea.vmem %s3, 16
  %v1079 = vld [vmem:[%s1078] sm:$0xf]
  %v1080 = vld [vmem:[%s1078 + $0x4] sm:$0xf]
  %v1081 = vld [vmem:[%s1078 + $0x8] sm:$0xf]
  %v1082 = vld [vmem:[%s1078 + $0xc] sm:$0xf]
  %v1087 = vunpack.c.l.b16 %v1079
  %v1088 = vunpack.c.l.b16 %v1080
  %v1089 = vunpack.c.l.b16 %v1081
  %v1090 = vunpack.c.l.b16 %v1082
  %v1091 = vpack.c.b16 %v1088, %v1087
  %v1092 = vpack.c.b16 %v1090, %v1089
  %1093 = vrot.lane.b32.xlu0 %v140, 18
  %v1094 = vpop.permute.xlu0 %1093
  %1095 = vrot.lane.b32.xlu0 %v141, 18
  %v1096 = vpop.permute.xlu0 %1095
  %1097 = vrot.lane.b32.xlu0 %v142, 18
  %v1098 = vpop.permute.xlu0 %1097
  %1099 = vrot.lane.b32.xlu0 %v143, 18
  %v1100 = vpop.permute.xlu0 %1099
  %1101 = vrot.lane.b32.xlu0 %v144, 18
  %v1102 = vpop.permute.xlu0 %1101
  %1103 = vrot.lane.b32.xlu0 %v145, 18
  %v1104 = vpop.permute.xlu0 %1103
  %1105 = vrot.lane.b32.xlu0 %v146, 18
  %v1106 = vpop.permute.xlu0 %1105
  %1107 = vrot.lane.b32.xlu0 %v147, 18
  %v1108 = vpop.permute.xlu0 %1107
  %1109 = vrot.lane.b32.xlu0 %v148, 18
  %v1110 = vpop.permute.xlu0 %1109
  %1111 = vrot.lane.b32.xlu0 %v149, 18
  %v1112 = vpop.permute.xlu0 %1111
  %1113 = vrot.lane.b32.xlu0 %v150, 18
  %v1114 = vpop.permute.xlu0 %1113
  %1115 = vrot.lane.b32.xlu0 %v151, 18
  %v1116 = vpop.permute.xlu0 %1115
  %1117 = vrot.lane.b32.xlu0 %v152, 18
  %v1118 = vpop.permute.xlu0 %1117
  %1119 = vrot.lane.b32.xlu0 %v153, 18
  %v1120 = vpop.permute.xlu0 %1119
  %v1121 = vsel %vm840, %v1094, %v1096
  %v1122 = vsel %vm840, %v1096, %v1098
  %v1123 = vsel %vm840, %v1098, %v1100
  %v1124 = vsel %vm840, %v1100, %v1102
  %v1125 = vsel %vm840, %v1102, %v1104
  %v1126 = vsel %vm840, %v1104, %v1106
  %v1127 = vsel %vm840, %v1108, %v1110
  %v1128 = vsel %vm840, %v1110, %v1112
  %v1129 = vsel %vm840, %v1112, %v1114
  %v1130 = vsel %vm840, %v1114, %v1116
  %v1131 = vsel %vm840, %v1116, %v1118
  %v1132 = vsel %vm840, %v1118, %v1120
  %v1146 = vsel %vm207, %v1091, 0
  %v1149 = vsel %vm207, %v1092, 0
  %1151 = vmatprep.subr.bf16.mxu0 %v1122
  %1152 = vmatpush1.bf16.msra.mxu0 %v1121
  %1153 = vmatprep.subr.bf16.mxu0 %v1128
  %1154 = vmatpush1.bf16.msra.mxu0 %v1127
  %1155 = vmatprep.subr.bf16.mxu0 0
  %1156 = vmatpush1.bf16.msra.mxu0 0
  %1157 = vmatprep.subr.bf16.mxu0 0
  %1158 = vmatpush1.bf16.msra.mxu0 0
  %1159 = vmatprep.subr.bf16.mxu0 0
  %1160 = vmatpush1.bf16.msra.mxu0 0
  %1161 = vmatprep.subr.bf16.mxu0 0
  %1162 = vmatpush1.bf16.msra.mxu0 0
  %1163 = vmatprep.subr.bf16.mxu0 0
  %1164 = vmatpush1.bf16.msra.mxu0 0
  %1165 = vmatprep.subr.bf16.mxu0 0
  %1166 = vmatpush1.bf16.msra.mxu0 0
  %1167 = vmatprep.subr.bf16.mxu0 0
  %1168 = vmatpush1.bf16.msra.mxu0 0
  %1169 = vmatprep.subr.bf16.mxu0 0
  %1170 = vmatpush1.bf16.msra.mxu0 0
  %1171 = vmatprep.subr.bf16.mxu0 0
  %1172 = vmatpush1.bf16.msra.mxu0 0
  %1173 = vmatprep.subr.bf16.mxu0 0
  %1174 = vmatpush1.bf16.msra.mxu0 0
  %1175 = vmatprep.subr.bf16.mxu0 0
  %1176 = vmatpush1.bf16.msra.mxu0 0
  %1177 = vmatprep.subr.bf16.mxu0 0
  %1178 = vmatpush1.bf16.msra.mxu0 0
  %1179 = vmatprep.subr.bf16.mxu0 0
  %1180 = vmatpush1.bf16.msra.mxu0 0
  %1181 = vmatprep.subr.bf16.mxu0 0
  %1182 = vmatpush1.bf16.msra.mxu0 0
  %1183 = vmatprep.mubr.bf16.mxu0 0
  %1184 = vmatmul.mubr.bf16.gmra.mrb[0].mxu0 %v1146
  %v1185 = vpop.f32.mrb[0].mxu0
  %v1186 = vadd.f32 0.0, %v1185
  %v1187 = vpop.f32.mrb[0].mxu0
  %v1188 = vadd.f32 0.0, %v1187
  %v1189 = vpop.f32.mrb[0].mxu0
  %v1190 = vadd.f32 0.0, %v1189
  %v1191 = vpop.f32.mrb[0].mxu0
  %v1192 = vadd.f32 0.0, %v1191
  %1193 = vmatprep.mubr.bf16.mxu0 0
  %1194 = vmatmul.mubr.bf16.gmra.mrb[0].mxu0 %v1149
  %v1195 = vpop.f32.mrb[0].mxu0
  %v1196 = vadd.f32 0.0, %v1195
  %v1197 = vpop.f32.mrb[0].mxu0
  %v1198 = vadd.f32 0.0, %v1197
  %v1199 = vpop.f32.mrb[0].mxu0
  %v1200 = vadd.f32 0.0, %v1199
  %v1201 = vpop.f32.mrb[0].mxu0
  %v1202 = vadd.f32 0.0, %v1201
  %1203 = vdwg.mxu0
  %1204 = vmatprep.subr.bf16.mxu0 %v1124
  %1205 = vmatpush1.bf16.msra.mxu0 %v1123
  %1206 = vmatprep.subr.bf16.mxu0 %v1130
  %1207 = vmatpush1.bf16.msra.mxu0 %v1129
  %1208 = vmatprep.subr.bf16.mxu0 0
  %1209 = vmatpush1.bf16.msra.mxu0 0
  %1210 = vmatprep.subr.bf16.mxu0 0
  %1211 = vmatpush1.bf16.msra.mxu0 0
  %1212 = vmatprep.subr.bf16.mxu0 0
  %1213 = vmatpush1.bf16.msra.mxu0 0
  %1214 = vmatprep.subr.bf16.mxu0 0
  %1215 = vmatpush1.bf16.msra.mxu0 0
  %1216 = vmatprep.subr.bf16.mxu0 0
  %1217 = vmatpush1.bf16.msra.mxu0 0
  %1218 = vmatprep.subr.bf16.mxu0 0
  %1219 = vmatpush1.bf16.msra.mxu0 0
  %1220 = vmatprep.subr.bf16.mxu0 0
  %1221 = vmatpush1.bf16.msra.mxu0 0
  %1222 = vmatprep.subr.bf16.mxu0 0
  %1223 = vmatpush1.bf16.msra.mxu0 0
  %1224 = vmatprep.subr.bf16.mxu0 0
  %1225 = vmatpush1.bf16.msra.mxu0 0
  %1226 = vmatprep.subr.bf16.mxu0 0
  %1227 = vmatpush1.bf16.msra.mxu0 0
  %1228 = vmatprep.subr.bf16.mxu0 0
  %1229 = vmatpush1.bf16.msra.mxu0 0
  %1230 = vmatprep.subr.bf16.mxu0 0
  %1231 = vmatpush1.bf16.msra.mxu0 0
  %1232 = vmatprep.subr.bf16.mxu0 0
  %1233 = vmatpush1.bf16.msra.mxu0 0
  %1234 = vmatprep.subr.bf16.mxu0 0
  %1235 = vmatpush1.bf16.msra.mxu0 0
  %1236 = vmatprep.mubr.bf16.mxu0 0
  %1237 = vmatmul.mubr.bf16.gmra.mrb[0].mxu0 %v1146
  %v1238 = vpop.f32.mrb[0].mxu0
  %v1239 = vadd.f32 0.0, %v1238
  %v1240 = vpop.f32.mrb[0].mxu0
  %v1241 = vadd.f32 0.0, %v1240
  %v1242 = vpop.f32.mrb[0].mxu0
  %v1243 = vadd.f32 0.0, %v1242
  %v1244 = vpop.f32.mrb[0].mxu0
  %v1245 = vadd.f32 0.0, %v1244
  %1246 = vmatprep.mubr.bf16.mxu0 0
  %1247 = vmatmul.mubr.bf16.gmra.mrb[0].mxu0 %v1149
  %v1248 = vpop.f32.mrb[0].mxu0
  %v1249 = vadd.f32 0.0, %v1248
  %v1250 = vpop.f32.mrb[0].mxu0
  %v1251 = vadd.f32 0.0, %v1250
  %v1252 = vpop.f32.mrb[0].mxu0
  %v1253 = vadd.f32 0.0, %v1252
  %v1254 = vpop.f32.mrb[0].mxu0
  %v1255 = vadd.f32 0.0, %v1254
  %1256 = vdwg.mxu0
  %1257 = vmatprep.subr.bf16.mxu0 %v1126
  %1258 = vmatpush1.bf16.msra.mxu0 %v1125
  %1259 = vmatprep.subr.bf16.mxu0 %v1132
  %1260 = vmatpush1.bf16.msra.mxu0 %v1131
  %1261 = vmatprep.subr.bf16.mxu0 0
  %1262 = vmatpush1.bf16.msra.mxu0 0
  %1263 = vmatprep.subr.bf16.mxu0 0
  %1264 = vmatpush1.bf16.msra.mxu0 0
  %1265 = vmatprep.subr.bf16.mxu0 0
  %1266 = vmatpush1.bf16.msra.mxu0 0
  %1267 = vmatprep.subr.bf16.mxu0 0
  %1268 = vmatpush1.bf16.msra.mxu0 0
  %1269 = vmatprep.subr.bf16.mxu0 0
  %1270 = vmatpush1.bf16.msra.mxu0 0
  %1271 = vmatprep.subr.bf16.mxu0 0
  %1272 = vmatpush1.bf16.msra.mxu0 0
  %1273 = vmatprep.subr.bf16.mxu0 0
  %1274 = vmatpush1.bf16.msra.mxu0 0
  %1275 = vmatprep.subr.bf16.mxu0 0
  %1276 = vmatpush1.bf16.msra.mxu0 0
  %1277 = vmatprep.subr.bf16.mxu0 0
  %1278 = vmatpush1.bf16.msra.mxu0 0
  %1279 = vmatprep.subr.bf16.mxu0 0
  %1280 = vmatpush1.bf16.msra.mxu0 0
  %1281 = vmatprep.subr.bf16.mxu0 0
  %1282 = vmatpush1.bf16.msra.mxu0 0
  %1283 = vmatprep.subr.bf16.mxu0 0
  %1284 = vmatpush1.bf16.msra.mxu0 0
  %1285 = vmatprep.subr.bf16.mxu0 0
  %1286 = vmatpush1.bf16.msra.mxu0 0
  %1287 = vmatprep.subr.bf16.mxu0 0
  %1288 = vmatpush1.bf16.msra.mxu0 0
  %1289 = vmatprep.mubr.bf16.mxu0 0
  %1290 = vmatmul.mubr.bf16.gmra.mrb[0].mxu0 %v1146
  %v1291 = vpop.f32.mrb[0].mxu0
  %v1292 = vadd.f32 0.0, %v1291
  %v1293 = vpop.f32.mrb[0].mxu0
  %v1294 = vadd.f32 0.0, %v1293
  %v1295 = vpop.f32.mrb[0].mxu0
  %v1296 = vadd.f32 0.0, %v1295
  %v1297 = vpop.f32.mrb[0].mxu0
  %v1298 = vadd.f32 0.0, %v1297
  %1299 = vmatprep.mubr.bf16.mxu0 0
  %1300 = vmatmul.mubr.bf16.gmra.mrb[0].mxu0 %v1149
  %v1301 = vpop.f32.mrb[0].mxu0
  %v1302 = vadd.f32 0.0, %v1301
  %v1303 = vpop.f32.mrb[0].mxu0
  %v1304 = vadd.f32 0.0, %v1303
  %v1305 = vpop.f32.mrb[0].mxu0
  %v1306 = vadd.f32 0.0, %v1305
  %v1307 = vpop.f32.mrb[0].mxu0
  %v1308 = vadd.f32 0.0, %v1307
  %1309 = vdwg.mxu0
  %v1310 = vadd.f32 %v1054, %v1186
  %v1311 = vadd.f32 %v1055, %v1188
  %v1312 = vadd.f32 %v1056, %v1239
  %v1313 = vadd.f32 %v1057, %v1241
  %v1314 = vadd.f32 %v1058, %v1292
  %v1315 = vadd.f32 %v1059, %v1294
  %v1316 = vadd.f32 %v1060, %v1190
  %v1317 = vadd.f32 %v1061, %v1192
  %v1318 = vadd.f32 %v1062, %v1243
  %v1319 = vadd.f32 %v1063, %v1245
  %v1320 = vadd.f32 %v1064, %v1296
  %v1321 = vadd.f32 %v1065, %v1298
  %v1322 = vadd.f32 %v1066, %v1196
  %v1323 = vadd.f32 %v1067, %v1198
  %v1324 = vadd.f32 %v1068, %v1249
  %v1325 = vadd.f32 %v1069, %v1251
  %v1326 = vadd.f32 %v1070, %v1302
  %v1327 = vadd.f32 %v1071, %v1304
  %v1328 = vadd.f32 %v1072, %v1200
  %v1329 = vadd.f32 %v1073, %v1202
  %v1330 = vadd.f32 %v1074, %v1253
  %v1331 = vadd.f32 %v1075, %v1255
  %v1332 = vadd.f32 %v1076, %v1306
  %v1333 = vadd.f32 %v1077, %v1308
  %s1334 = scalar_lea.vmem %s2, 32
  %v1335 = vld [vmem:[%s1334] sm:$0xf]
  %v1336 = vld [vmem:[%s1334 + $0x4] sm:$0xf]
  %v1337 = vld [vmem:[%s1334 + $0x8] sm:$0xf]
  %v1338 = vld [vmem:[%s1334 + $0xc] sm:$0xf]
  %v1343 = vunpack.c.l.b16 %v1335
  %v1344 = vunpack.c.l.b16 %v1336
  %v1345 = vunpack.c.l.b16 %v1337
  %v1346 = vunpack.c.l.b16 %v1338
  %v1347 = vpack.c.b16 %v1344, %v1343
  %v1348 = vpack.c.b16 %v1346, %v1345
  %1349 = vrot.lane.b32.xlu0 %v471, 17
  %v1350 = vpop.permute.xlu0 %1349
  %1351 = vrot.lane.b32.xlu0 %v472, 17
  %v1352 = vpop.permute.xlu0 %1351
  %1353 = vrot.lane.b32.xlu0 %v473, 17
  %v1354 = vpop.permute.xlu0 %1353
  %1355 = vrot.lane.b32.xlu0 %v474, 17
  %v1356 = vpop.permute.xlu0 %1355
  %1357 = vrot.lane.b32.xlu0 %v475, 17
  %v1358 = vpop.permute.xlu0 %1357
  %1359 = vrot.lane.b32.xlu0 %v476, 17
  %v1360 = vpop.permute.xlu0 %1359
  %1361 = vrot.lane.b32.xlu0 %v477, 17
  %v1362 = vpop.permute.xlu0 %1361
  %1363 = vrot.lane.b32.xlu0 %v478, 17
  %v1364 = vpop.permute.xlu0 %1363
  %1365 = vrot.lane.b32.xlu0 %v479, 17
  %v1366 = vpop.permute.xlu0 %1365
  %1367 = vrot.lane.b32.xlu0 %v480, 17
  %v1368 = vpop.permute.xlu0 %1367
  %1369 = vrot.lane.b32.xlu0 %v481, 17
  %v1370 = vpop.permute.xlu0 %1369
  %1371 = vrot.lane.b32.xlu0 %v482, 17
  %v1372 = vpop.permute.xlu0 %1371
  %1373 = vrot.lane.b32.xlu0 %v483, 17
  %v1374 = vpop.permute.xlu0 %1373
  %1375 = vrot.lane.b32.xlu0 %v484, 17
  %v1376 = vpop.permute.xlu0 %1375
  %1377 = vrot.lane.b32.xlu0 %v485, 17
  %v1378 = vpop.permute.xlu0 %1377
  %1379 = vrot.lane.b32.xlu0 %v486, 17
  %v1380 = vpop.permute.xlu0 %1379
  %1381 = vrot.lane.b32.xlu0 %v487, 17
  %v1382 = vpop.permute.xlu0 %1381
  %1383 = vrot.lane.b32.xlu0 %v488, 17
  %v1384 = vpop.permute.xlu0 %1383
  %1385 = vrot.lane.b32.xlu0 %v489, 17
  %v1386 = vpop.permute.xlu0 %1385
  %1387 = vrot.lane.b32.xlu0 %v490, 17
  %v1388 = vpop.permute.xlu0 %1387
  %1389 = vrot.lane.b32.xlu0 %v491, 17
  %v1390 = vpop.permute.xlu0 %1389
  %1391 = vrot.lane.b32.xlu0 %v492, 17
  %v1392 = vpop.permute.xlu0 %1391
  %1393 = vrot.lane.b32.xlu0 %v493, 17
  %v1394 = vpop.permute.xlu0 %1393
  %1395 = vrot.lane.b32.xlu0 %v494, 17
  %v1396 = vpop.permute.xlu0 %1395
  %1397 = vrot.lane.b32.xlu0 %v495, 17
  %v1398 = vpop.permute.xlu0 %1397
  %1399 = vrot.lane.b32.xlu0 %v496, 17
  %v1400 = vpop.permute.xlu0 %1399
  %1401 = vrot.lane.b32.xlu0 %v497, 17
  %v1402 = vpop.permute.xlu0 %1401
  %1403 = vrot.lane.b32.xlu0 %v498, 17
  %v1404 = vpop.permute.xlu0 %1403
  %vm1405 = vcmask 138240
  %v1406 = vsel %vm1405, %v1350, %v1352
  %v1407 = vsel %vm1405, %v1352, %v1354
  %v1408 = vsel %vm1405, %v1354, %v1356
  %v1409 = vsel %vm1405, %v1356, %v1358
  %v1410 = vsel %vm1405, %v1358, %v1360
  %v1411 = vsel %vm1405, %v1360, %v1362
  %v1412 = vsel %vm1405, %v1364, %v1366
  %v1413 = vsel %vm1405, %v1366, %v1368
  %v1414 = vsel %vm1405, %v1368, %v1370
  %v1415 = vsel %vm1405, %v1370, %v1372
  %v1416 = vsel %vm1405, %v1372, %v1374
  %v1417 = vsel %vm1405, %v1374, %v1376
  %v1418 = vsel %vm1405, %v1378, %v1380
  %v1419 = vsel %vm1405, %v1380, %v1382
  %v1420 = vsel %vm1405, %v1382, %v1384
  %v1421 = vsel %vm1405, %v1384, %v1386
  %v1422 = vsel %vm1405, %v1386, %v1388
  %v1423 = vsel %vm1405, %v1388, %v1390
  %v1424 = vsel %vm1405, %v1392, %v1394
  %v1425 = vsel %vm1405, %v1394, %v1396
  %v1426 = vsel %vm1405, %v1396, %v1398
  %v1427 = vsel %vm1405, %v1398, %v1400
  %v1428 = vsel %vm1405, %v1400, %v1402
  %v1429 = vsel %vm1405, %v1402, %v1404
  %v1455 = vsel %vm603, %v1347, 0
  %v1458 = vsel %vm603, %v1348, 0
  %1460 = vmatprep.subr.bf16.mxu0 %v1407
  %1461 = vmatpush1.bf16.msra.mxu0 %v1406
  %1462 = vmatprep.subr.bf16.mxu0 %v1413
  %1463 = vmatpush1.bf16.msra.mxu0 %v1412
  %1464 = vmatprep.subr.bf16.mxu0 %v1419
  %1465 = vmatpush1.bf16.msra.mxu0 %v1418
  %1466 = vmatprep.subr.bf16.mxu0 %v1425
  %1467 = vmatpush1.bf16.msra.mxu0 %v1424
  %1468 = vmatprep.subr.bf16.mxu0 0
  %1469 = vmatpush1.bf16.msra.mxu0 0
  %1470 = vmatprep.subr.bf16.mxu0 0
  %1471 = vmatpush1.bf16.msra.mxu0 0
  %1472 = vmatprep.subr.bf16.mxu0 0
  %1473 = vmatpush1.bf16.msra.mxu0 0
  %1474 = vmatprep.subr.bf16.mxu0 0
  %1475 = vmatpush1.bf16.msra.mxu0 0
  %1476 = vmatprep.subr.bf16.mxu0 0
  %1477 = vmatpush1.bf16.msra.mxu0 0
  %1478 = vmatprep.subr.bf16.mxu0 0
  %1479 = vmatpush1.bf16.msra.mxu0 0
  %1480 = vmatprep.subr.bf16.mxu0 0
  %1481 = vmatpush1.bf16.msra.mxu0 0
  %1482 = vmatprep.subr.bf16.mxu0 0
  %1483 = vmatpush1.bf16.msra.mxu0 0
  %1484 = vmatprep.subr.bf16.mxu0 0
  %1485 = vmatpush1.bf16.msra.mxu0 0
  %1486 = vmatprep.subr.bf16.mxu0 0
  %1487 = vmatpush1.bf16.msra.mxu0 0
  %1488 = vmatprep.subr.bf16.mxu0 0
  %1489 = vmatpush1.bf16.msra.mxu0 0
  %1490 = vmatprep.subr.bf16.mxu0 0
  %1491 = vmatpush1.bf16.msra.mxu0 0
  %1492 = vmatprep.mubr.bf16.mxu0 0
  %1493 = vmatmul.mubr.bf16.gmra.mrb[0].mxu0 %v1455
  %v1494 = vpop.f32.mrb[0].mxu0
  %v1495 = vadd.f32 0.0, %v1494
  %v1496 = vpop.f32.mrb[0].mxu0
  %v1497 = vadd.f32 0.0, %v1496
  %v1498 = vpop.f32.mrb[0].mxu0
  %v1499 = vadd.f32 0.0, %v1498
  %v1500 = vpop.f32.mrb[0].mxu0
  %v1501 = vadd.f32 0.0, %v1500
  %1502 = vmatprep.mubr.bf16.mxu0 0
  %1503 = vmatmul.mubr.bf16.gmra.mrb[0].mxu0 %v1458
  %v1504 = vpop.f32.mrb[0].mxu0
  %v1505 = vadd.f32 0.0, %v1504
  %v1506 = vpop.f32.mrb[0].mxu0
  %v1507 = vadd.f32 0.0, %v1506
  %v1508 = vpop.f32.mrb[0].mxu0
  %v1509 = vadd.f32 0.0, %v1508
  %v1510 = vpop.f32.mrb[0].mxu0
  %v1511 = vadd.f32 0.0, %v1510
  %1512 = vdwg.mxu0
  %1513 = vmatprep.subr.bf16.mxu0 %v1409
  %1514 = vmatpush1.bf16.msra.mxu0 %v1408
  %1515 = vmatprep.subr.bf16.mxu0 %v1415
  %1516 = vmatpush1.bf16.msra.mxu0 %v1414
  %1517 = vmatprep.subr.bf16.mxu0 %v1421
  %1518 = vmatpush1.bf16.msra.mxu0 %v1420
  %1519 = vmatprep.subr.bf16.mxu0 %v1427
  %1520 = vmatpush1.bf16.msra.mxu0 %v1426
  %1521 = vmatprep.subr.bf16.mxu0 0
  %1522 = vmatpush1.bf16.msra.mxu0 0
  %1523 = vmatprep.subr.bf16.mxu0 0
  %1524 = vmatpush1.bf16.msra.mxu0 0
  %1525 = vmatprep.subr.bf16.mxu0 0
  %1526 = vmatpush1.bf16.msra.mxu0 0
  %1527 = vmatprep.subr.bf16.mxu0 0
  %1528 = vmatpush1.bf16.msra.mxu0 0
  %1529 = vmatprep.subr.bf16.mxu0 0
  %1530 = vmatpush1.bf16.msra.mxu0 0
  %1531 = vmatprep.subr.bf16.mxu0 0
  %1532 = vmatpush1.bf16.msra.mxu0 0
  %1533 = vmatprep.subr.bf16.mxu0 0
  %1534 = vmatpush1.bf16.msra.mxu0 0
  %1535 = vmatprep.subr.bf16.mxu0 0
  %1536 = vmatpush1.bf16.msra.mxu0 0
  %1537 = vmatprep.subr.bf16.mxu0 0
  %1538 = vmatpush1.bf16.msra.mxu0 0
  %1539 = vmatprep.subr.bf16.mxu0 0
  %1540 = vmatpush1.bf16.msra.mxu0 0
  %1541 = vmatprep.subr.bf16.mxu0 0
  %1542 = vmatpush1.bf16.msra.mxu0 0
  %1543 = vmatprep.subr.bf16.mxu0 0
  %1544 = vmatpush1.bf16.msra.mxu0 0
  %1545 = vmatprep.mubr.bf16.mxu0 0
  %1546 = vmatmul.mubr.bf16.gmra.mrb[0].mxu0 %v1455
  %v1547 = vpop.f32.mrb[0].mxu0
  %v1548 = vadd.f32 0.0, %v1547
  %v1549 = vpop.f32.mrb[0].mxu0
  %v1550 = vadd.f32 0.0, %v1549
  %v1551 = vpop.f32.mrb[0].mxu0
  %v1552 = vadd.f32 0.0, %v1551
  %v1553 = vpop.f32.mrb[0].mxu0
  %v1554 = vadd.f32 0.0, %v1553
  %1555 = vmatprep.mubr.bf16.mxu0 0
  %1556 = vmatmul.mubr.bf16.gmra.mrb[0].mxu0 %v1458
  %v1557 = vpop.f32.mrb[0].mxu0
  %v1558 = vadd.f32 0.0, %v1557
  %v1559 = vpop.f32.mrb[0].mxu0
  %v1560 = vadd.f32 0.0, %v1559
  %v1561 = vpop.f32.mrb[0].mxu0
  %v1562 = vadd.f32 0.0, %v1561
  %v1563 = vpop.f32.mrb[0].mxu0
  %v1564 = vadd.f32 0.0, %v1563
  %1565 = vdwg.mxu0
  %1566 = vmatprep.subr.bf16.mxu0 %v1411
  %1567 = vmatpush1.bf16.msra.mxu0 %v1410
  %1568 = vmatprep.subr.bf16.mxu0 %v1417
  %1569 = vmatpush1.bf16.msra.mxu0 %v1416
  %1570 = vmatprep.subr.bf16.mxu0 %v1423
  %1571 = vmatpush1.bf16.msra.mxu0 %v1422
  %1572 = vmatprep.subr.bf16.mxu0 %v1429
  %1573 = vmatpush1.bf16.msra.mxu0 %v1428
  %1574 = vmatprep.subr.bf16.mxu0 0
  %1575 = vmatpush1.bf16.msra.mxu0 0
  %1576 = vmatprep.subr.bf16.mxu0 0
  %1577 = vmatpush1.bf16.msra.mxu0 0
  %1578 = vmatprep.subr.bf16.mxu0 0
  %1579 = vmatpush1.bf16.msra.mxu0 0
  %1580 = vmatprep.subr.bf16.mxu0 0
  %1581 = vmatpush1.bf16.msra.mxu0 0
  %1582 = vmatprep.subr.bf16.mxu0 0
  %1583 = vmatpush1.bf16.msra.mxu0 0
  %1584 = vmatprep.subr.bf16.mxu0 0
  %1585 = vmatpush1.bf16.msra.mxu0 0
  %1586 = vmatprep.subr.bf16.mxu0 0
  %1587 = vmatpush1.bf16.msra.mxu0 0
  %1588 = vmatprep.subr.bf16.mxu0 0
  %1589 = vmatpush1.bf16.msra.mxu0 0
  %1590 = vmatprep.subr.bf16.mxu0 0
  %1591 = vmatpush1.bf16.msra.mxu0 0
  %1592 = vmatprep.subr.bf16.mxu0 0
  %1593 = vmatpush1.bf16.msra.mxu0 0
  %1594 = vmatprep.subr.bf16.mxu0 0
  %1595 = vmatpush1.bf16.msra.mxu0 0
  %1596 = vmatprep.subr.bf16.mxu0 0
  %1597 = vmatpush1.bf16.msra.mxu0 0
  %1598 = vmatprep.mubr.bf16.mxu0 0
  %1599 = vmatmul.mubr.bf16.gmra.mrb[0].mxu0 %v1455
  %v1600 = vpop.f32.mrb[0].mxu0
  %v1601 = vadd.f32 0.0, %v1600
  %v1602 = vpop.f32.mrb[0].mxu0
  %v1603 = vadd.f32 0.0, %v1602
  %v1604 = vpop.f32.mrb[0].mxu0
  %v1605 = vadd.f32 0.0, %v1604
  %v1606 = vpop.f32.mrb[0].mxu0
  %v1607 = vadd.f32 0.0, %v1606
  %1608 = vmatprep.mubr.bf16.mxu0 0
  %1609 = vmatmul.mubr.bf16.gmra.mrb[0].mxu0 %v1458
  %v1610 = vpop.f32.mrb[0].mxu0
  %v1611 = vadd.f32 0.0, %v1610
  %v1612 = vpop.f32.mrb[0].mxu0
  %v1613 = vadd.f32 0.0, %v1612
  %v1614 = vpop.f32.mrb[0].mxu0
  %v1615 = vadd.f32 0.0, %v1614
  %v1616 = vpop.f32.mrb[0].mxu0
  %v1617 = vadd.f32 0.0, %v1616
  %1618 = vdwg.mxu0
  %v1619 = vadd.f32 %v1310, %v1495
  %v1620 = vadd.f32 %v1311, %v1497
  %v1621 = vadd.f32 %v1312, %v1548
  %v1622 = vadd.f32 %v1313, %v1550
  %v1623 = vadd.f32 %v1314, %v1601
  %v1624 = vadd.f32 %v1315, %v1603
  %v1625 = vadd.f32 %v1316, %v1499
  %v1626 = vadd.f32 %v1317, %v1501
  %v1627 = vadd.f32 %v1318, %v1552
  %v1628 = vadd.f32 %v1319, %v1554
  %v1629 = vadd.f32 %v1320, %v1605
  %v1630 = vadd.f32 %v1321, %v1607
  %v1631 = vadd.f32 %v1322, %v1505
  %v1632 = vadd.f32 %v1323, %v1507
  %v1633 = vadd.f32 %v1324, %v1558
  %v1634 = vadd.f32 %v1325, %v1560
  %v1635 = vadd.f32 %v1326, %v1611
  %v1636 = vadd.f32 %v1327, %v1613
  %v1637 = vadd.f32 %v1328, %v1509
  %v1638 = vadd.f32 %v1329, %v1511
  %v1639 = vadd.f32 %v1330, %v1562
  %v1640 = vadd.f32 %v1331, %v1564
  %v1641 = vadd.f32 %v1332, %v1615
  %v1642 = vadd.f32 %v1333, %v1617
  %s1643 = scalar_lea.vmem %s3, 32
  %v1644 = vld [vmem:[%s1643] sm:$0xf]
  %v1645 = vld [vmem:[%s1643 + $0x4] sm:$0xf]
  %v1646 = vld [vmem:[%s1643 + $0x8] sm:$0xf]
  %v1647 = vld [vmem:[%s1643 + $0xc] sm:$0xf]
  %v1652 = vunpack.c.l.b16 %v1644
  %v1653 = vunpack.c.l.b16 %v1645
  %v1654 = vunpack.c.l.b16 %v1646
  %v1655 = vunpack.c.l.b16 %v1647
  %v1656 = vpack.c.b16 %v1653, %v1652
  %v1657 = vpack.c.b16 %v1655, %v1654
  %1658 = vrot.lane.b32.xlu0 %v140, 17
  %v1659 = vpop.permute.xlu0 %1658
  %1660 = vrot.lane.b32.xlu0 %v141, 17
  %v1661 = vpop.permute.xlu0 %1660
  %1662 = vrot.lane.b32.xlu0 %v142, 17
  %v1663 = vpop.permute.xlu0 %1662
  %1664 = vrot.lane.b32.xlu0 %v143, 17
  %v1665 = vpop.permute.xlu0 %1664
  %1666 = vrot.lane.b32.xlu0 %v144, 17
  %v1667 = vpop.permute.xlu0 %1666
  %1668 = vrot.lane.b32.xlu0 %v145, 17
  %v1669 = vpop.permute.xlu0 %1668
  %1670 = vrot.lane.b32.xlu0 %v146, 17
  %v1671 = vpop.permute.xlu0 %1670
  %1672 = vrot.lane.b32.xlu0 %v147, 17
  %v1673 = vpop.permute.xlu0 %1672
  %1674 = vrot.lane.b32.xlu0 %v148, 17
  %v1675 = vpop.permute.xlu0 %1674
  %1676 = vrot.lane.b32.xlu0 %v149, 17
  %v1677 = vpop.permute.xlu0 %1676
  %1678 = vrot.lane.b32.xlu0 %v150, 17
  %v1679 = vpop.permute.xlu0 %1678
  %1680 = vrot.lane.b32.xlu0 %v151, 17
  %v1681 = vpop.permute.xlu0 %1680
  %1682 = vrot.lane.b32.xlu0 %v152, 17
  %v1683 = vpop.permute.xlu0 %1682
  %1684 = vrot.lane.b32.xlu0 %v153, 17
  %v1685 = vpop.permute.xlu0 %1684
  %v1686 = vsel %vm1405, %v1659, %v1661
  %v1687 = vsel %vm1405, %v1661, %v1663
  %v1688 = vsel %vm1405, %v1663, %v1665
  %v1689 = vsel %vm1405, %v1665, %v1667
  %v1690 = vsel %vm1405, %v1667, %v1669
  %v1691 = vsel %vm1405, %v1669, %v1671
  %v1692 = vsel %vm1405, %v1673, %v1675
  %v1693 = vsel %vm1405, %v1675, %v1677
  %v1694 = vsel %vm1405, %v1677, %v1679
  %v1695 = vsel %vm1405, %v1679, %v1681
  %v1696 = vsel %vm1405, %v1681, %v1683
  %v1697 = vsel %vm1405, %v1683, %v1685
  %v1711 = vsel %vm207, %v1656, 0
  %v1714 = vsel %vm207, %v1657, 0
  %1716 = vmatprep.subr.bf16.mxu0 %v1687
  %1717 = vmatpush1.bf16.msra.mxu0 %v1686
  %1718 = vmatprep.subr.bf16.mxu0 %v1693
  %1719 = vmatpush1.bf16.msra.mxu0 %v1692
  %1720 = vmatprep.subr.bf16.mxu0 0
  %1721 = vmatpush1.bf16.msra.mxu0 0
  %1722 = vmatprep.subr.bf16.mxu0 0
  %1723 = vmatpush1.bf16.msra.mxu0 0
  %1724 = vmatprep.subr.bf16.mxu0 0
  %1725 = vmatpush1.bf16.msra.mxu0 0
  %1726 = vmatprep.subr.bf16.mxu0 0
  %1727 = vmatpush1.bf16.msra.mxu0 0
  %1728 = vmatprep.subr.bf16.mxu0 0
  %1729 = vmatpush1.bf16.msra.mxu0 0
  %1730 = vmatprep.subr.bf16.mxu0 0
  %1731 = vmatpush1.bf16.msra.mxu0 0
  %1732 = vmatprep.subr.bf16.mxu0 0
  %1733 = vmatpush1.bf16.msra.mxu0 0
  %1734 = vmatprep.subr.bf16.mxu0 0
  %1735 = vmatpush1.bf16.msra.mxu0 0
  %1736 = vmatprep.subr.bf16.mxu0 0
  %1737 = vmatpush1.bf16.msra.mxu0 0
  %1738 = vmatprep.subr.bf16.mxu0 0
  %1739 = vmatpush1.bf16.msra.mxu0 0
  %1740 = vmatprep.subr.bf16.mxu0 0
  %1741 = vmatpush1.bf16.msra.mxu0 0
  %1742 = vmatprep.subr.bf16.mxu0 0
  %1743 = vmatpush1.bf16.msra.mxu0 0
  %1744 = vmatprep.subr.bf16.mxu0 0
  %1745 = vmatpush1.bf16.msra.mxu0 0
  %1746 = vmatprep.subr.bf16.mxu0 0
  %1747 = vmatpush1.bf16.msra.mxu0 0
  %1748 = vmatprep.mubr.bf16.mxu0 0
  %1749 = vmatmul.mubr.bf16.gmra.mrb[0].mxu0 %v1711
  %v1750 = vpop.f32.mrb[0].mxu0
  %v1751 = vadd.f32 0.0, %v1750
  %v1752 = vpop.f32.mrb[0].mxu0
  %v1753 = vadd.f32 0.0, %v1752
  %v1754 = vpop.f32.mrb[0].mxu0
  %v1755 = vadd.f32 0.0, %v1754
  %v1756 = vpop.f32.mrb[0].mxu0
  %v1757 = vadd.f32 0.0, %v1756
  %1758 = vmatprep.mubr.bf16.mxu0 0
  %1759 = vmatmul.mubr.bf16.gmra.mrb[0].mxu0 %v1714
  %v1760 = vpop.f32.mrb[0].mxu0
  %v1761 = vadd.f32 0.0, %v1760
  %v1762 = vpop.f32.mrb[0].mxu0
  %v1763 = vadd.f32 0.0, %v1762
  %v1764 = vpop.f32.mrb[0].mxu0
  %v1765 = vadd.f32 0.0, %v1764
  %v1766 = vpop.f32.mrb[0].mxu0
  %v1767 = vadd.f32 0.0, %v1766
  %1768 = vdwg.mxu0
  %1769 = vmatprep.subr.bf16.mxu0 %v1689
  %1770 = vmatpush1.bf16.msra.mxu0 %v1688
  %1771 = vmatprep.subr.bf16.mxu0 %v1695
  %1772 = vmatpush1.bf16.msra.mxu0 %v1694
  %1773 = vmatprep.subr.bf16.mxu0 0
  %1774 = vmatpush1.bf16.msra.mxu0 0
  %1775 = vmatprep.subr.bf16.mxu0 0
  %1776 = vmatpush1.bf16.msra.mxu0 0
  %1777 = vmatprep.subr.bf16.mxu0 0
  %1778 = vmatpush1.bf16.msra.mxu0 0
  %1779 = vmatprep.subr.bf16.mxu0 0
  %1780 = vmatpush1.bf16.msra.mxu0 0
  %1781 = vmatprep.subr.bf16.mxu0 0
  %1782 = vmatpush1.bf16.msra.mxu0 0
  %1783 = vmatprep.subr.bf16.mxu0 0
  %1784 = vmatpush1.bf16.msra.mxu0 0
  %1785 = vmatprep.subr.bf16.mxu0 0
  %1786 = vmatpush1.bf16.msra.mxu0 0
  %1787 = vmatprep.subr.bf16.mxu0 0
  %1788 = vmatpush1.bf16.msra.mxu0 0
  %1789 = vmatprep.subr.bf16.mxu0 0
  %1790 = vmatpush1.bf16.msra.mxu0 0
  %1791 = vmatprep.subr.bf16.mxu0 0
  %1792 = vmatpush1.bf16.msra.mxu0 0
  %1793 = vmatprep.subr.bf16.mxu0 0
  %1794 = vmatpush1.bf16.msra.mxu0 0
  %1795 = vmatprep.subr.bf16.mxu0 0
  %1796 = vmatpush1.bf16.msra.mxu0 0
  %1797 = vmatprep.subr.bf16.mxu0 0
  %1798 = vmatpush1.bf16.msra.mxu0 0
  %1799 = vmatprep.subr.bf16.mxu0 0
  %1800 = vmatpush1.bf16.msra.mxu0 0
  %1801 = vmatprep.mubr.bf16.mxu0 0
  %1802 = vmatmul.mubr.bf16.gmra.mrb[0].mxu0 %v1711
  %v1803 = vpop.f32.mrb[0].mxu0
  %v1804 = vadd.f32 0.0, %v1803
  %v1805 = vpop.f32.mrb[0].mxu0
  %v1806 = vadd.f32 0.0, %v1805
  %v1807 = vpop.f32.mrb[0].mxu0
  %v1808 = vadd.f32 0.0, %v1807
  %v1809 = vpop.f32.mrb[0].mxu0
  %v1810 = vadd.f32 0.0, %v1809
  %1811 = vmatprep.mubr.bf16.mxu0 0
  %1812 = vmatmul.mubr.bf16.gmra.mrb[0].mxu0 %v1714
  %v1813 = vpop.f32.mrb[0].mxu0
  %v1814 = vadd.f32 0.0, %v1813
  %v1815 = vpop.f32.mrb[0].mxu0
  %v1816 = vadd.f32 0.0, %v1815
  %v1817 = vpop.f32.mrb[0].mxu0
  %v1818 = vadd.f32 0.0, %v1817
  %v1819 = vpop.f32.mrb[0].mxu0
  %v1820 = vadd.f32 0.0, %v1819
  %1821 = vdwg.mxu0
  %1822 = vmatprep.subr.bf16.mxu0 %v1691
  %1823 = vmatpush1.bf16.msra.mxu0 %v1690
  %1824 = vmatprep.subr.bf16.mxu0 %v1697
  %1825 = vmatpush1.bf16.msra.mxu0 %v1696
  %1826 = vmatprep.subr.bf16.mxu0 0
  %1827 = vmatpush1.bf16.msra.mxu0 0
  %1828 = vmatprep.subr.bf16.mxu0 0
  %1829 = vmatpush1.bf16.msra.mxu0 0
  %1830 = vmatprep.subr.bf16.mxu0 0
  %1831 = vmatpush1.bf16.msra.mxu0 0
  %1832 = vmatprep.subr.bf16.mxu0 0
  %1833 = vmatpush1.bf16.msra.mxu0 0
  %1834 = vmatprep.subr.bf16.mxu0 0
  %1835 = vmatpush1.bf16.msra.mxu0 0
  %1836 = vmatprep.subr.bf16.mxu0 0
  %1837 = vmatpush1.bf16.msra.mxu0 0
  %1838 = vmatprep.subr.bf16.mxu0 0
  %1839 = vmatpush1.bf16.msra.mxu0 0
  %1840 = vmatprep.subr.bf16.mxu0 0
  %1841 = vmatpush1.bf16.msra.mxu0 0
  %1842 = vmatprep.subr.bf16.mxu0 0
  %1843 = vmatpush1.bf16.msra.mxu0 0
  %1844 = vmatprep.subr.bf16.mxu0 0
  %1845 = vmatpush1.bf16.msra.mxu0 0
  %1846 = vmatprep.subr.bf16.mxu0 0
  %1847 = vmatpush1.bf16.msra.mxu0 0
  %1848 = vmatprep.subr.bf16.mxu0 0
  %1849 = vmatpush1.bf16.msra.mxu0 0
  %1850 = vmatprep.subr.bf16.mxu0 0
  %1851 = vmatpush1.bf16.msra.mxu0 0
  %1852 = vmatprep.subr.bf16.mxu0 0
  %1853 = vmatpush1.bf16.msra.mxu0 0
  %1854 = vmatprep.mubr.bf16.mxu0 0
  %1855 = vmatmul.mubr.bf16.gmra.mrb[0].mxu0 %v1711
  %v1856 = vpop.f32.mrb[0].mxu0
  %v1857 = vadd.f32 0.0, %v1856
  %v1858 = vpop.f32.mrb[0].mxu0
  %v1859 = vadd.f32 0.0, %v1858
  %v1860 = vpop.f32.mrb[0].mxu0
  %v1861 = vadd.f32 0.0, %v1860
  %v1862 = vpop.f32.mrb[0].mxu0
  %v1863 = vadd.f32 0.0, %v1862
  %1864 = vmatprep.mubr.bf16.mxu0 0
  %1865 = vmatmul.mubr.bf16.gmra.mrb[0].mxu0 %v1714
  %v1866 = vpop.f32.mrb[0].mxu0
  %v1867 = vadd.f32 0.0, %v1866
  %v1868 = vpop.f32.mrb[0].mxu0
  %v1869 = vadd.f32 0.0, %v1868
  %v1870 = vpop.f32.mrb[0].mxu0
  %v1871 = vadd.f32 0.0, %v1870
  %v1872 = vpop.f32.mrb[0].mxu0
  %v1873 = vadd.f32 0.0, %v1872
  %1874 = vdwg.mxu0
  %v1875 = vadd.f32 %v1619, %v1751
  %v1876 = vadd.f32 %v1620, %v1753
  %v1877 = vadd.f32 %v1621, %v1804
  %v1878 = vadd.f32 %v1622, %v1806
  %v1879 = vadd.f32 %v1623, %v1857
  %v1880 = vadd.f32 %v1624, %v1859
  %v1881 = vadd.f32 %v1625, %v1755
  %v1882 = vadd.f32 %v1626, %v1757
  %v1883 = vadd.f32 %v1627, %v1808
  %v1884 = vadd.f32 %v1628, %v1810
  %v1885 = vadd.f32 %v1629, %v1861
  %v1886 = vadd.f32 %v1630, %v1863
  %v1887 = vadd.f32 %v1631, %v1761
  %v1888 = vadd.f32 %v1632, %v1763
  %v1889 = vadd.f32 %v1633, %v1814
  %v1890 = vadd.f32 %v1634, %v1816
  %v1891 = vadd.f32 %v1635, %v1867
  %v1892 = vadd.f32 %v1636, %v1869
  %v1893 = vadd.f32 %v1637, %v1765
  %v1894 = vadd.f32 %v1638, %v1767
  %v1895 = vadd.f32 %v1639, %v1818
  %v1896 = vadd.f32 %v1640, %v1820
  %v1897 = vadd.f32 %v1641, %v1871
  %v1898 = vadd.f32 %v1642, %v1873
  %s1899 = scalar_lea.vmem %s2, 48
  %v1900 = vld [vmem:[%s1899] sm:$0xf]
  %v1901 = vld [vmem:[%s1899 + $0x4] sm:$0xf]
  %v1902 = vld [vmem:[%s1899 + $0x8] sm:$0xf]
  %v1903 = vld [vmem:[%s1899 + $0xc] sm:$0xf]
  %v1908 = vunpack.c.l.b16 %v1900
  %v1909 = vunpack.c.l.b16 %v1901
  %v1910 = vunpack.c.l.b16 %v1902
  %v1911 = vunpack.c.l.b16 %v1903
  %v1912 = vpack.c.b16 %v1909, %v1908
  %v1913 = vpack.c.b16 %v1911, %v1910
  %1914 = vrot.lane.b32.xlu0 %v471, 1
  %v1915 = vpop.permute.xlu0 %1914
  %1916 = vrot.lane.b32.xlu0 %v472, 1
  %v1917 = vpop.permute.xlu0 %1916
  %1918 = vrot.lane.b32.xlu0 %v473, 1
  %v1919 = vpop.permute.xlu0 %1918
  %1920 = vrot.lane.b32.xlu0 %v474, 1
  %v1921 = vpop.permute.xlu0 %1920
  %1922 = vrot.lane.b32.xlu0 %v475, 1
  %v1923 = vpop.permute.xlu0 %1922
  %1924 = vrot.lane.b32.xlu0 %v476, 1
  %v1925 = vpop.permute.xlu0 %1924
  %1926 = vrot.lane.b32.xlu0 %v477, 1
  %v1927 = vpop.permute.xlu0 %1926
  %1928 = vrot.lane.b32.xlu0 %v478, 1
  %v1929 = vpop.permute.xlu0 %1928
  %1930 = vrot.lane.b32.xlu0 %v479, 1
  %v1931 = vpop.permute.xlu0 %1930
  %1932 = vrot.lane.b32.xlu0 %v480, 1
  %v1933 = vpop.permute.xlu0 %1932
  %1934 = vrot.lane.b32.xlu0 %v481, 1
  %v1935 = vpop.permute.xlu0 %1934
  %1936 = vrot.lane.b32.xlu0 %v482, 1
  %v1937 = vpop.permute.xlu0 %1936
  %1938 = vrot.lane.b32.xlu0 %v483, 1
  %v1939 = vpop.permute.xlu0 %1938
  %1940 = vrot.lane.b32.xlu0 %v484, 1
  %v1941 = vpop.permute.xlu0 %1940
  %1942 = vrot.lane.b32.xlu0 %v485, 1
  %v1943 = vpop.permute.xlu0 %1942
  %1944 = vrot.lane.b32.xlu0 %v486, 1
  %v1945 = vpop.permute.xlu0 %1944
  %1946 = vrot.lane.b32.xlu0 %v487, 1
  %v1947 = vpop.permute.xlu0 %1946
  %1948 = vrot.lane.b32.xlu0 %v488, 1
  %v1949 = vpop.permute.xlu0 %1948
  %1950 = vrot.lane.b32.xlu0 %v489, 1
  %v1951 = vpop.permute.xlu0 %1950
  %1952 = vrot.lane.b32.xlu0 %v490, 1
  %v1953 = vpop.permute.xlu0 %1952
  %1954 = vrot.lane.b32.xlu0 %v491, 1
  %v1955 = vpop.permute.xlu0 %1954
  %1956 = vrot.lane.b32.xlu0 %v492, 1
  %v1957 = vpop.permute.xlu0 %1956
  %1958 = vrot.lane.b32.xlu0 %v493, 1
  %v1959 = vpop.permute.xlu0 %1958
  %1960 = vrot.lane.b32.xlu0 %v494, 1
  %v1961 = vpop.permute.xlu0 %1960
  %1962 = vrot.lane.b32.xlu0 %v495, 1
  %v1963 = vpop.permute.xlu0 %1962
  %1964 = vrot.lane.b32.xlu0 %v496, 1
  %v1965 = vpop.permute.xlu0 %1964
  %1966 = vrot.lane.b32.xlu0 %v497, 1
  %v1967 = vpop.permute.xlu0 %1966
  %1968 = vrot.lane.b32.xlu0 %v498, 1
  %v1969 = vpop.permute.xlu0 %1968
  %vm1970 = vcmask 7168
  %v1971 = vsel %vm1970, %v1915, %v1917
  %v1972 = vsel %vm1970, %v1917, %v1919
  %v1973 = vsel %vm1970, %v1919, %v1921
  %v1974 = vsel %vm1970, %v1921, %v1923
  %v1975 = vsel %vm1970, %v1923, %v1925
  %v1976 = vsel %vm1970, %v1925, %v1927
  %v1977 = vsel %vm1970, %v1929, %v1931
  %v1978 = vsel %vm1970, %v1931, %v1933
  %v1979 = vsel %vm1970, %v1933, %v1935
  %v1980 = vsel %vm1970, %v1935, %v1937
  %v1981 = vsel %vm1970, %v1937, %v1939
  %v1982 = vsel %vm1970, %v1939, %v1941
  %v1983 = vsel %vm1970, %v1943, %v1945
  %v1984 = vsel %vm1970, %v1945, %v1947
  %v1985 = vsel %vm1970, %v1947, %v1949
  %v1986 = vsel %vm1970, %v1949, %v1951
  %v1987 = vsel %vm1970, %v1951, %v1953
  %v1988 = vsel %vm1970, %v1953, %v1955
  %v1989 = vsel %vm1970, %v1957, %v1959
  %v1990 = vsel %vm1970, %v1959, %v1961
  %v1991 = vsel %vm1970, %v1961, %v1963
  %v1992 = vsel %vm1970, %v1963, %v1965
  %v1993 = vsel %vm1970, %v1965, %v1967
  %v1994 = vsel %vm1970, %v1967, %v1969
  %v2020 = vsel %vm603, %v1912, 0
  %v2023 = vsel %vm603, %v1913, 0
  %2025 = vmatprep.subr.bf16.mxu0 %v1972
  %2026 = vmatpush1.bf16.msra.mxu0 %v1971
  %2027 = vmatprep.subr.bf16.mxu0 %v1978
  %2028 = vmatpush1.bf16.msra.mxu0 %v1977
  %2029 = vmatprep.subr.bf16.mxu0 %v1984
  %2030 = vmatpush1.bf16.msra.mxu0 %v1983
  %2031 = vmatprep.subr.bf16.mxu0 %v1990
  %2032 = vmatpush1.bf16.msra.mxu0 %v1989
  %2033 = vmatprep.subr.bf16.mxu0 0
  %2034 = vmatpush1.bf16.msra.mxu0 0
  %2035 = vmatprep.subr.bf16.mxu0 0
  %2036 = vmatpush1.bf16.msra.mxu0 0
  %2037 = vmatprep.subr.bf16.mxu0 0
  %2038 = vmatpush1.bf16.msra.mxu0 0
  %2039 = vmatprep.subr.bf16.mxu0 0
  %2040 = vmatpush1.bf16.msra.mxu0 0
  %2041 = vmatprep.subr.bf16.mxu0 0
  %2042 = vmatpush1.bf16.msra.mxu0 0
  %2043 = vmatprep.subr.bf16.mxu0 0
  %2044 = vmatpush1.bf16.msra.mxu0 0
  %2045 = vmatprep.subr.bf16.mxu0 0
  %2046 = vmatpush1.bf16.msra.mxu0 0
  %2047 = vmatprep.subr.bf16.mxu0 0
  %2048 = vmatpush1.bf16.msra.mxu0 0
  %2049 = vmatprep.subr.bf16.mxu0 0
  %2050 = vmatpush1.bf16.msra.mxu0 0
  %2051 = vmatprep.subr.bf16.mxu0 0
  %2052 = vmatpush1.bf16.msra.mxu0 0
  %2053 = vmatprep.subr.bf16.mxu0 0
  %2054 = vmatpush1.bf16.msra.mxu0 0
  %2055 = vmatprep.subr.bf16.mxu0 0
  %2056 = vmatpush1.bf16.msra.mxu0 0
  %2057 = vmatprep.mubr.bf16.mxu0 0
  %2058 = vmatmul.mubr.bf16.gmra.mrb[0].mxu0 %v2020
  %v2059 = vpop.f32.mrb[0].mxu0
  %v2060 = vadd.f32 0.0, %v2059
  %v2061 = vpop.f32.mrb[0].mxu0
  %v2062 = vadd.f32 0.0, %v2061
  %v2063 = vpop.f32.mrb[0].mxu0
  %v2064 = vadd.f32 0.0, %v2063
  %v2065 = vpop.f32.mrb[0].mxu0
  %v2066 = vadd.f32 0.0, %v2065
  %2067 = vmatprep.mubr.bf16.mxu0 0
  %2068 = vmatmul.mubr.bf16.gmra.mrb[0].mxu0 %v2023
  %v2069 = vpop.f32.mrb[0].mxu0
  %v2070 = vadd.f32 0.0, %v2069
  %v2071 = vpop.f32.mrb[0].mxu0
  %v2072 = vadd.f32 0.0, %v2071
  %v2073 = vpop.f32.mrb[0].mxu0
  %v2074 = vadd.f32 0.0, %v2073
  %v2075 = vpop.f32.mrb[0].mxu0
  %v2076 = vadd.f32 0.0, %v2075
  %2077 = vdwg.mxu0
  %2078 = vmatprep.subr.bf16.mxu0 %v1974
  %2079 = vmatpush1.bf16.msra.mxu0 %v1973
  %2080 = vmatprep.subr.bf16.mxu0 %v1980
  %2081 = vmatpush1.bf16.msra.mxu0 %v1979
  %2082 = vmatprep.subr.bf16.mxu0 %v1986
  %2083 = vmatpush1.bf16.msra.mxu0 %v1985
  %2084 = vmatprep.subr.bf16.mxu0 %v1992
  %2085 = vmatpush1.bf16.msra.mxu0 %v1991
  %2086 = vmatprep.subr.bf16.mxu0 0
  %2087 = vmatpush1.bf16.msra.mxu0 0
  %2088 = vmatprep.subr.bf16.mxu0 0
  %2089 = vmatpush1.bf16.msra.mxu0 0
  %2090 = vmatprep.subr.bf16.mxu0 0
  %2091 = vmatpush1.bf16.msra.mxu0 0
  %2092 = vmatprep.subr.bf16.mxu0 0
  %2093 = vmatpush1.bf16.msra.mxu0 0
  %2094 = vmatprep.subr.bf16.mxu0 0
  %2095 = vmatpush1.bf16.msra.mxu0 0
  %2096 = vmatprep.subr.bf16.mxu0 0
  %2097 = vmatpush1.bf16.msra.mxu0 0
  %2098 = vmatprep.subr.bf16.mxu0 0
  %2099 = vmatpush1.bf16.msra.mxu0 0
  %2100 = vmatprep.subr.bf16.mxu0 0
  %2101 = vmatpush1.bf16.msra.mxu0 0
  %2102 = vmatprep.subr.bf16.mxu0 0
  %2103 = vmatpush1.bf16.msra.mxu0 0
  %2104 = vmatprep.subr.bf16.mxu0 0
  %2105 = vmatpush1.bf16.msra.mxu0 0
  %2106 = vmatprep.subr.bf16.mxu0 0
  %2107 = vmatpush1.bf16.msra.mxu0 0
  %2108 = vmatprep.subr.bf16.mxu0 0
  %2109 = vmatpush1.bf16.msra.mxu0 0
  %2110 = vmatprep.mubr.bf16.mxu0 0
  %2111 = vmatmul.mubr.bf16.gmra.mrb[0].mxu0 %v2020
  %v2112 = vpop.f32.mrb[0].mxu0
  %v2113 = vadd.f32 0.0, %v2112
  %v2114 = vpop.f32.mrb[0].mxu0
  %v2115 = vadd.f32 0.0, %v2114
  %v2116 = vpop.f32.mrb[0].mxu0
  %v2117 = vadd.f32 0.0, %v2116
  %v2118 = vpop.f32.mrb[0].mxu0
  %v2119 = vadd.f32 0.0, %v2118
  %2120 = vmatprep.mubr.bf16.mxu0 0
  %2121 = vmatmul.mubr.bf16.gmra.mrb[0].mxu0 %v2023
  %v2122 = vpop.f32.mrb[0].mxu0
  %v2123 = vadd.f32 0.0, %v2122
  %v2124 = vpop.f32.mrb[0].mxu0
  %v2125 = vadd.f32 0.0, %v2124
  %v2126 = vpop.f32.mrb[0].mxu0
  %v2127 = vadd.f32 0.0, %v2126
  %v2128 = vpop.f32.mrb[0].mxu0
  %v2129 = vadd.f32 0.0, %v2128
  %2130 = vdwg.mxu0
  %2131 = vmatprep.subr.bf16.mxu0 %v1976
  %2132 = vmatpush1.bf16.msra.mxu0 %v1975
  %2133 = vmatprep.subr.bf16.mxu0 %v1982
  %2134 = vmatpush1.bf16.msra.mxu0 %v1981
  %2135 = vmatprep.subr.bf16.mxu0 %v1988
  %2136 = vmatpush1.bf16.msra.mxu0 %v1987
  %2137 = vmatprep.subr.bf16.mxu0 %v1994
  %2138 = vmatpush1.bf16.msra.mxu0 %v1993
  %2139 = vmatprep.subr.bf16.mxu0 0
  %2140 = vmatpush1.bf16.msra.mxu0 0
  %2141 = vmatprep.subr.bf16.mxu0 0
  %2142 = vmatpush1.bf16.msra.mxu0 0
  %2143 = vmatprep.subr.bf16.mxu0 0
  %2144 = vmatpush1.bf16.msra.mxu0 0
  %2145 = vmatprep.subr.bf16.mxu0 0
  %2146 = vmatpush1.bf16.msra.mxu0 0
  %2147 = vmatprep.subr.bf16.mxu0 0
  %2148 = vmatpush1.bf16.msra.mxu0 0
  %2149 = vmatprep.subr.bf16.mxu0 0
  %2150 = vmatpush1.bf16.msra.mxu0 0
  %2151 = vmatprep.subr.bf16.mxu0 0
  %2152 = vmatpush1.bf16.msra.mxu0 0
  %2153 = vmatprep.subr.bf16.mxu0 0
  %2154 = vmatpush1.bf16.msra.mxu0 0
  %2155 = vmatprep.subr.bf16.mxu0 0
  %2156 = vmatpush1.bf16.msra.mxu0 0
  %2157 = vmatprep.subr.bf16.mxu0 0
  %2158 = vmatpush1.bf16.msra.mxu0 0
  %2159 = vmatprep.subr.bf16.mxu0 0
  %2160 = vmatpush1.bf16.msra.mxu0 0
  %2161 = vmatprep.subr.bf16.mxu0 0
  %2162 = vmatpush1.bf16.msra.mxu0 0
  %2163 = vmatprep.mubr.bf16.mxu0 0
  %2164 = vmatmul.mubr.bf16.gmra.mrb[0].mxu0 %v2020
  %v2165 = vpop.f32.mrb[0].mxu0
  %v2166 = vadd.f32 0.0, %v2165
  %v2167 = vpop.f32.mrb[0].mxu0
  %v2168 = vadd.f32 0.0, %v2167
  %v2169 = vpop.f32.mrb[0].mxu0
  %v2170 = vadd.f32 0.0, %v2169
  %v2171 = vpop.f32.mrb[0].mxu0
  %v2172 = vadd.f32 0.0, %v2171
  %2173 = vmatprep.mubr.bf16.mxu0 0
  %2174 = vmatmul.mubr.bf16.gmra.mrb[0].mxu0 %v2023
  %v2175 = vpop.f32.mrb[0].mxu0
  %v2176 = vadd.f32 0.0, %v2175
  %v2177 = vpop.f32.mrb[0].mxu0
  %v2178 = vadd.f32 0.0, %v2177
  %v2179 = vpop.f32.mrb[0].mxu0
  %v2180 = vadd.f32 0.0, %v2179
  %v2181 = vpop.f32.mrb[0].mxu0
  %v2182 = vadd.f32 0.0, %v2181
  %2183 = vdwg.mxu0
  %v2184 = vadd.f32 %v1875, %v2060
  %v2185 = vadd.f32 %v1876, %v2062
  %v2186 = vadd.f32 %v1877, %v2113
  %v2187 = vadd.f32 %v1878, %v2115
  %v2188 = vadd.f32 %v1879, %v2166
  %v2189 = vadd.f32 %v1880, %v2168
  %v2190 = vadd.f32 %v1881, %v2064
  %v2191 = vadd.f32 %v1882, %v2066
  %v2192 = vadd.f32 %v1883, %v2117
  %v2193 = vadd.f32 %v1884, %v2119
  %v2194 = vadd.f32 %v1885, %v2170
  %v2195 = vadd.f32 %v1886, %v2172
  %v2196 = vadd.f32 %v1887, %v2070
  %v2197 = vadd.f32 %v1888, %v2072
  %v2198 = vadd.f32 %v1889, %v2123
  %v2199 = vadd.f32 %v1890, %v2125
  %v2200 = vadd.f32 %v1891, %v2176
  %v2201 = vadd.f32 %v1892, %v2178
  %v2202 = vadd.f32 %v1893, %v2074
  %v2203 = vadd.f32 %v1894, %v2076
  %v2204 = vadd.f32 %v1895, %v2127
  %v2205 = vadd.f32 %v1896, %v2129
  %v2206 = vadd.f32 %v1897, %v2180
  %v2207 = vadd.f32 %v1898, %v2182
  %s2208 = scalar_lea.vmem %s3, 48
  %v2209 = vld [vmem:[%s2208] sm:$0xf]
  %v2210 = vld [vmem:[%s2208 + $0x4] sm:$0xf]
  %v2211 = vld [vmem:[%s2208 + $0x8] sm:$0xf]
  %v2212 = vld [vmem:[%s2208 + $0xc] sm:$0xf]
  %v2217 = vunpack.c.l.b16 %v2209
  %v2218 = vunpack.c.l.b16 %v2210
  %v2219 = vunpack.c.l.b16 %v2211
  %v2220 = vunpack.c.l.b16 %v2212
  %v2221 = vpack.c.b16 %v2218, %v2217
  %v2222 = vpack.c.b16 %v2220, %v2219
  %2223 = vrot.lane.b32.xlu0 %v140, 1
  %v2224 = vpop.permute.xlu0 %2223
  %2225 = vrot.lane.b32.xlu0 %v141, 1
  %v2226 = vpop.permute.xlu0 %2225
  %2227 = vrot.lane.b32.xlu0 %v142, 1
  %v2228 = vpop.permute.xlu0 %2227
  %2229 = vrot.lane.b32.xlu0 %v143, 1
  %v2230 = vpop.permute.xlu0 %2229
  %2231 = vrot.lane.b32.xlu0 %v144, 1
  %v2232 = vpop.permute.xlu0 %2231
  %2233 = vrot.lane.b32.xlu0 %v145, 1
  %v2234 = vpop.permute.xlu0 %2233
  %2235 = vrot.lane.b32.xlu0 %v146, 1
  %v2236 = vpop.permute.xlu0 %2235
  %2237 = vrot.lane.b32.xlu0 %v147, 1
  %v2238 = vpop.permute.xlu0 %2237
  %2239 = vrot.lane.b32.xlu0 %v148, 1
  %v2240 = vpop.permute.xlu0 %2239
  %2241 = vrot.lane.b32.xlu0 %v149, 1
  %v2242 = vpop.permute.xlu0 %2241
  %2243 = vrot.lane.b32.xlu0 %v150, 1
  %v2244 = vpop.permute.xlu0 %2243
  %2245 = vrot.lane.b32.xlu0 %v151, 1
  %v2246 = vpop.permute.xlu0 %2245
  %2247 = vrot.lane.b32.xlu0 %v152, 1
  %v2248 = vpop.permute.xlu0 %2247
  %2249 = vrot.lane.b32.xlu0 %v153, 1
  %v2250 = vpop.permute.xlu0 %2249
  %v2251 = vsel %vm1970, %v2224, %v2226
  %v2252 = vsel %vm1970, %v2226, %v2228
  %v2253 = vsel %vm1970, %v2228, %v2230
  %v2254 = vsel %vm1970, %v2230, %v2232
  %v2255 = vsel %vm1970, %v2232, %v2234
  %v2256 = vsel %vm1970, %v2234, %v2236
  %v2257 = vsel %vm1970, %v2238, %v2240
  %v2258 = vsel %vm1970, %v2240, %v2242
  %v2259 = vsel %vm1970, %v2242, %v2244
  %v2260 = vsel %vm1970, %v2244, %v2246
  %v2261 = vsel %vm1970, %v2246, %v2248
  %v2262 = vsel %vm1970, %v2248, %v2250
  %v2276 = vsel %vm207, %v2221, 0
  %v2279 = vsel %vm207, %v2222, 0
  %2281 = vmatprep.subr.bf16.mxu0 %v2252
  %2282 = vmatpush1.bf16.msra.mxu0 %v2251
  %2283 = vmatprep.subr.bf16.mxu0 %v2258
  %2284 = vmatpush1.bf16.msra.mxu0 %v2257
  %2285 = vmatprep.subr.bf16.mxu0 0
  %2286 = vmatpush1.bf16.msra.mxu0 0
  %2287 = vmatprep.subr.bf16.mxu0 0
  %2288 = vmatpush1.bf16.msra.mxu0 0
  %2289 = vmatprep.subr.bf16.mxu0 0
  %2290 = vmatpush1.bf16.msra.mxu0 0
  %2291 = vmatprep.subr.bf16.mxu0 0
  %2292 = vmatpush1.bf16.msra.mxu0 0
  %2293 = vmatprep.subr.bf16.mxu0 0
  %2294 = vmatpush1.bf16.msra.mxu0 0
  %2295 = vmatprep.subr.bf16.mxu0 0
  %2296 = vmatpush1.bf16.msra.mxu0 0
  %2297 = vmatprep.subr.bf16.mxu0 0
  %2298 = vmatpush1.bf16.msra.mxu0 0
  %2299 = vmatprep.subr.bf16.mxu0 0
  %2300 = vmatpush1.bf16.msra.mxu0 0
  %2301 = vmatprep.subr.bf16.mxu0 0
  %2302 = vmatpush1.bf16.msra.mxu0 0
  %2303 = vmatprep.subr.bf16.mxu0 0
  %2304 = vmatpush1.bf16.msra.mxu0 0
  %2305 = vmatprep.subr.bf16.mxu0 0
  %2306 = vmatpush1.bf16.msra.mxu0 0
  %2307 = vmatprep.subr.bf16.mxu0 0
  %2308 = vmatpush1.bf16.msra.mxu0 0
  %2309 = vmatprep.subr.bf16.mxu0 0
  %2310 = vmatpush1.bf16.msra.mxu0 0
  %2311 = vmatprep.subr.bf16.mxu0 0
  %2312 = vmatpush1.bf16.msra.mxu0 0
  %2313 = vmatprep.mubr.bf16.mxu0 0
  %2314 = vmatmul.mubr.bf16.gmra.mrb[0].mxu0 %v2276
  %v2315 = vpop.f32.mrb[0].mxu0
  %v2316 = vadd.f32 0.0, %v2315
  %v2317 = vpop.f32.mrb[0].mxu0
  %v2318 = vadd.f32 0.0, %v2317
  %v2319 = vpop.f32.mrb[0].mxu0
  %v2320 = vadd.f32 0.0, %v2319
  %v2321 = vpop.f32.mrb[0].mxu0
  %v2322 = vadd.f32 0.0, %v2321
  %2323 = vmatprep.mubr.bf16.mxu0 0
  %2324 = vmatmul.mubr.bf16.gmra.mrb[0].mxu0 %v2279
  %v2325 = vpop.f32.mrb[0].mxu0
  %v2326 = vadd.f32 0.0, %v2325
  %v2327 = vpop.f32.mrb[0].mxu0
  %v2328 = vadd.f32 0.0, %v2327
  %v2329 = vpop.f32.mrb[0].mxu0
  %v2330 = vadd.f32 0.0, %v2329
  %v2331 = vpop.f32.mrb[0].mxu0
  %v2332 = vadd.f32 0.0, %v2331
  %2333 = vdwg.mxu0
  %2334 = vmatprep.subr.bf16.mxu0 %v2254
  %2335 = vmatpush1.bf16.msra.mxu0 %v2253
  %2336 = vmatprep.subr.bf16.mxu0 %v2260
  %2337 = vmatpush1.bf16.msra.mxu0 %v2259
  %2338 = vmatprep.subr.bf16.mxu0 0
  %2339 = vmatpush1.bf16.msra.mxu0 0
  %2340 = vmatprep.subr.bf16.mxu0 0
  %2341 = vmatpush1.bf16.msra.mxu0 0
  %2342 = vmatprep.subr.bf16.mxu0 0
  %2343 = vmatpush1.bf16.msra.mxu0 0
  %2344 = vmatprep.subr.bf16.mxu0 0
  %2345 = vmatpush1.bf16.msra.mxu0 0
  %2346 = vmatprep.subr.bf16.mxu0 0
  %2347 = vmatpush1.bf16.msra.mxu0 0
  %2348 = vmatprep.subr.bf16.mxu0 0
  %2349 = vmatpush1.bf16.msra.mxu0 0
  %2350 = vmatprep.subr.bf16.mxu0 0
  %2351 = vmatpush1.bf16.msra.mxu0 0
  %2352 = vmatprep.subr.bf16.mxu0 0
  %2353 = vmatpush1.bf16.msra.mxu0 0
  %2354 = vmatprep.subr.bf16.mxu0 0
  %2355 = vmatpush1.bf16.msra.mxu0 0
  %2356 = vmatprep.subr.bf16.mxu0 0
  %2357 = vmatpush1.bf16.msra.mxu0 0
  %2358 = vmatprep.subr.bf16.mxu0 0
  %2359 = vmatpush1.bf16.msra.mxu0 0
  %2360 = vmatprep.subr.bf16.mxu0 0
  %2361 = vmatpush1.bf16.msra.mxu0 0
  %2362 = vmatprep.subr.bf16.mxu0 0
  %2363 = vmatpush1.bf16.msra.mxu0 0
  %2364 = vmatprep.subr.bf16.mxu0 0
  %2365 = vmatpush1.bf16.msra.mxu0 0
  %2366 = vmatprep.mubr.bf16.mxu0 0
  %2367 = vmatmul.mubr.bf16.gmra.mrb[0].mxu0 %v2276
  %v2368 = vpop.f32.mrb[0].mxu0
  %v2369 = vadd.f32 0.0, %v2368
  %v2370 = vpop.f32.mrb[0].mxu0
  %v2371 = vadd.f32 0.0, %v2370
  %v2372 = vpop.f32.mrb[0].mxu0
  %v2373 = vadd.f32 0.0, %v2372
  %v2374 = vpop.f32.mrb[0].mxu0
  %v2375 = vadd.f32 0.0, %v2374
  %2376 = vmatprep.mubr.bf16.mxu0 0
  %2377 = vmatmul.mubr.bf16.gmra.mrb[0].mxu0 %v2279
  %v2378 = vpop.f32.mrb[0].mxu0
  %v2379 = vadd.f32 0.0, %v2378
  %v2380 = vpop.f32.mrb[0].mxu0
  %v2381 = vadd.f32 0.0, %v2380
  %v2382 = vpop.f32.mrb[0].mxu0
  %v2383 = vadd.f32 0.0, %v2382
  %v2384 = vpop.f32.mrb[0].mxu0
  %v2385 = vadd.f32 0.0, %v2384
  %2386 = vdwg.mxu0
  %2387 = vmatprep.subr.bf16.mxu0 %v2256
  %2388 = vmatpush1.bf16.msra.mxu0 %v2255
  %2389 = vmatprep.subr.bf16.mxu0 %v2262
  %2390 = vmatpush1.bf16.msra.mxu0 %v2261
  %2391 = vmatprep.subr.bf16.mxu0 0
  %2392 = vmatpush1.bf16.msra.mxu0 0
  %2393 = vmatprep.subr.bf16.mxu0 0
  %2394 = vmatpush1.bf16.msra.mxu0 0
  %2395 = vmatprep.subr.bf16.mxu0 0
  %2396 = vmatpush1.bf16.msra.mxu0 0
  %2397 = vmatprep.subr.bf16.mxu0 0
  %2398 = vmatpush1.bf16.msra.mxu0 0
  %2399 = vmatprep.subr.bf16.mxu0 0
  %2400 = vmatpush1.bf16.msra.mxu0 0
  %2401 = vmatprep.subr.bf16.mxu0 0
  %2402 = vmatpush1.bf16.msra.mxu0 0
  %2403 = vmatprep.subr.bf16.mxu0 0
  %2404 = vmatpush1.bf16.msra.mxu0 0
  %2405 = vmatprep.subr.bf16.mxu0 0
  %2406 = vmatpush1.bf16.msra.mxu0 0
  %2407 = vmatprep.subr.bf16.mxu0 0
  %2408 = vmatpush1.bf16.msra.mxu0 0
  %2409 = vmatprep.subr.bf16.mxu0 0
  %2410 = vmatpush1.bf16.msra.mxu0 0
  %2411 = vmatprep.subr.bf16.mxu0 0
  %2412 = vmatpush1.bf16.msra.mxu0 0
  %2413 = vmatprep.subr.bf16.mxu0 0
  %2414 = vmatpush1.bf16.msra.mxu0 0
  %2415 = vmatprep.subr.bf16.mxu0 0
  %2416 = vmatpush1.bf16.msra.mxu0 0
  %2417 = vmatprep.subr.bf16.mxu0 0
  %2418 = vmatpush1.bf16.msra.mxu0 0
  %2419 = vmatprep.mubr.bf16.mxu0 0
  %2420 = vmatmul.mubr.bf16.gmra.mrb[0].mxu0 %v2276
  %v2421 = vpop.f32.mrb[0].mxu0
  %v2422 = vadd.f32 0.0, %v2421
  %v2423 = vpop.f32.mrb[0].mxu0
  %v2424 = vadd.f32 0.0, %v2423
  %v2425 = vpop.f32.mrb[0].mxu0
  %v2426 = vadd.f32 0.0, %v2425
  %v2427 = vpop.f32.mrb[0].mxu0
  %v2428 = vadd.f32 0.0, %v2427
  %2429 = vmatprep.mubr.bf16.mxu0 0
  %2430 = vmatmul.mubr.bf16.gmra.mrb[0].mxu0 %v2279
  %v2431 = vpop.f32.mrb[0].mxu0
  %v2432 = vadd.f32 0.0, %v2431
  %v2433 = vpop.f32.mrb[0].mxu0
  %v2434 = vadd.f32 0.0, %v2433
  %v2435 = vpop.f32.mrb[0].mxu0
  %v2436 = vadd.f32 0.0, %v2435
  %v2437 = vpop.f32.mrb[0].mxu0
  %v2438 = vadd.f32 0.0, %v2437
  %2439 = vdwg.mxu0
  %v2440 = vadd.f32 %v2184, %v2316
  %v2441 = vadd.f32 %v2185, %v2318
  %v2442 = vadd.f32 %v2186, %v2369
  %v2443 = vadd.f32 %v2187, %v2371
  %v2444 = vadd.f32 %v2188, %v2422
  %v2445 = vadd.f32 %v2189, %v2424
  %v2446 = vadd.f32 %v2190, %v2320
  %v2447 = vadd.f32 %v2191, %v2322
  %v2448 = vadd.f32 %v2192, %v2373
  %v2449 = vadd.f32 %v2193, %v2375
  %v2450 = vadd.f32 %v2194, %v2426
  %v2451 = vadd.f32 %v2195, %v2428
  %v2452 = vadd.f32 %v2196, %v2326
  %v2453 = vadd.f32 %v2197, %v2328
  %v2454 = vadd.f32 %v2198, %v2379
  %v2455 = vadd.f32 %v2199, %v2381
  %v2456 = vadd.f32 %v2200, %v2432
  %v2457 = vadd.f32 %v2201, %v2434
  %v2458 = vadd.f32 %v2202, %v2330
  %v2459 = vadd.f32 %v2203, %v2332
  %v2460 = vadd.f32 %v2204, %v2383
  %v2461 = vadd.f32 %v2205, %v2385
  %v2462 = vadd.f32 %v2206, %v2436
  %v2463 = vadd.f32 %v2207, %v2438
  %s2464 = scalar_lea.vmem %s2, 64
  %v2465 = vld [vmem:[%s2464] sm:$0xf]
  %v2466 = vld [vmem:[%s2464 + $0x4] sm:$0xf]
  %v2467 = vld [vmem:[%s2464 + $0x8] sm:$0xf]
  %v2468 = vld [vmem:[%s2464 + $0xc] sm:$0xf]
  %v2469 = vld [vmem:[%s0 + $0x4] sm:$0xff]
  %v2470 = vld [vmem:[%s0 + $0xc] sm:$0xff]
  %v2471 = vld [vmem:[%s0 + $0x14] sm:$0xff]
  %v2472 = vld [vmem:[%s0 + $0x24] sm:$0xff]
  %v2473 = vld [vmem:[%s0 + $0x2c] sm:$0xff]
  %v2474 = vld [vmem:[%s0 + $0x34] sm:$0xff]
  %v2475 = vld [vmem:[%s0 + $0x44] sm:$0xff]
  %v2476 = vld [vmem:[%s0 + $0x4c] sm:$0xff]
  %v2477 = vld [vmem:[%s0 + $0x54] sm:$0xff]
  %v2478 = vld [vmem:[%s0 + $0x64] sm:$0xff]
  %v2479 = vld [vmem:[%s0 + $0x6c] sm:$0xff]
  %v2480 = vld [vmem:[%s0 + $0x74] sm:$0xff]
  %v2481 = vld [vmem:[%s0 + $0x84] sm:$0xff]
  %v2482 = vld [vmem:[%s0 + $0x8c] sm:$0xff]
  %v2483 = vld [vmem:[%s0 + $0x94] sm:$0xff]
  %v2484 = vld [vmem:[%s0 + $0xa4] sm:$0xff]
  %v2485 = vld [vmem:[%s0 + $0xac] sm:$0xff]
  %v2486 = vld [vmem:[%s0 + $0xb4] sm:$0xff]
  %v2487 = vld [vmem:[%s0 + $0xc4] sm:$0xff]
  %v2488 = vld [vmem:[%s0 + $0xcc] sm:$0xff]
  %v2489 = vld [vmem:[%s0 + $0xd4] sm:$0xff]
  %v2490 = vld [vmem:[%s0 + $0xe4] sm:$0xff]
  %v2491 = vld [vmem:[%s0 + $0xec] sm:$0xff]
  %v2492 = vld [vmem:[%s0 + $0xf4] sm:$0xff]
  %v2497 = vunpack.c.l.b16 %v2465
  %v2498 = vunpack.c.l.b16 %v2466
  %v2499 = vunpack.c.l.b16 %v2467
  %v2500 = vunpack.c.l.b16 %v2468
  %v2501 = vpack.c.b16 %v2498, %v2497
  %v2502 = vpack.c.b16 %v2500, %v2499
  %v2527 = vunpack.c.l.b16 %v2469
  %v2528 = vunpack.c.h.b16 %v2469
  %v2529 = vunpack.c.l.b16 %v2470
  %v2530 = vunpack.c.h.b16 %v2470
  %v2531 = vunpack.c.l.b16 %v2471
  %v2532 = vunpack.c.h.b16 %v2471
  %v2533 = vunpack.c.l.b16 %v2472
  %v2534 = vunpack.c.h.b16 %v2472
  %v2535 = vunpack.c.l.b16 %v2473
  %v2536 = vunpack.c.h.b16 %v2473
  %v2537 = vunpack.c.l.b16 %v2474
  %v2538 = vunpack.c.h.b16 %v2474
  %v2539 = vunpack.c.l.b16 %v2475
  %v2540 = vunpack.c.h.b16 %v2475
  %v2541 = vunpack.c.l.b16 %v2476
  %v2542 = vunpack.c.h.b16 %v2476
  %v2543 = vunpack.c.l.b16 %v2477
  %v2544 = vunpack.c.h.b16 %v2477
  %v2545 = vunpack.c.l.b16 %v2478
  %v2546 = vunpack.c.h.b16 %v2478
  %v2547 = vunpack.c.l.b16 %v2479
  %v2548 = vunpack.c.h.b16 %v2479
  %v2549 = vunpack.c.l.b16 %v2480
  %v2550 = vunpack.c.h.b16 %v2480
  %v2551 = vunpack.c.l.b16 %v2481
  %v2552 = vunpack.c.h.b16 %v2481
  %v2553 = vunpack.c.l.b16 %v2482
  %v2554 = vunpack.c.h.b16 %v2482
  %v2555 = vunpack.c.l.b16 %v2483
  %v2556 = vunpack.c.h.b16 %v2483
  %v2557 = vunpack.c.l.b16 %v2484
  %v2558 = vunpack.c.h.b16 %v2484
  %v2559 = vunpack.c.l.b16 %v2485
  %v2560 = vunpack.c.h.b16 %v2485
  %v2561 = vunpack.c.l.b16 %v2486
  %v2562 = vunpack.c.h.b16 %v2486
  %v2563 = vunpack.c.l.b16 %v2487
  %v2564 = vunpack.c.h.b16 %v2487
  %v2565 = vunpack.c.l.b16 %v2488
  %v2566 = vunpack.c.h.b16 %v2488
  %v2567 = vunpack.c.l.b16 %v2489
  %v2568 = vunpack.c.h.b16 %v2489
  %v2569 = vunpack.c.l.b16 %v2490
  %v2570 = vunpack.c.h.b16 %v2490
  %v2571 = vunpack.c.l.b16 %v2491
  %v2572 = vunpack.c.h.b16 %v2491
  %v2573 = vunpack.c.l.b16 %v2492
  %v2574 = vunpack.c.h.b16 %v2492
  %v2575 = vpack.c.b16 %v2533, %v2527
  %v2576 = vpack.c.b16 %v2534, %v2528
  %v2577 = vpack.c.b16 %v2535, %v2529
  %v2578 = vpack.c.b16 %v2536, %v2530
  %v2579 = vpack.c.b16 %v2537, %v2531
  %v2580 = vpack.c.b16 %v2538, %v2532
  %v2581 = vpack.c.b16 %v2545, %v2539
  %v2582 = vpack.c.b16 %v2546, %v2540
  %v2583 = vpack.c.b16 %v2547, %v2541
  %v2584 = vpack.c.b16 %v2548, %v2542
  %v2585 = vpack.c.b16 %v2549, %v2543
  %v2586 = vpack.c.b16 %v2550, %v2544
  %v2587 = vpack.c.b16 %v2557, %v2551
  %v2588 = vpack.c.b16 %v2558, %v2552
  %v2589 = vpack.c.b16 %v2559, %v2553
  %v2590 = vpack.c.b16 %v2560, %v2554
  %v2591 = vpack.c.b16 %v2561, %v2555
  %v2592 = vpack.c.b16 %v2562, %v2556
  %v2593 = vpack.c.b16 %v2569, %v2563
  %v2594 = vpack.c.b16 %v2570, %v2564
  %v2595 = vpack.c.b16 %v2571, %v2565
  %v2596 = vpack.c.b16 %v2572, %v2566
  %v2597 = vpack.c.b16 %v2573, %v2567
  %v2598 = vpack.c.b16 %v2574, %v2568
  %v2624 = vsel %vm603, %v2501, 0
  %v2627 = vsel %vm603, %v2502, 0
  %2629 = vmatprep.subr.bf16.mxu0 %v2576
  %2630 = vmatpush1.bf16.msra.mxu0 %v2575
  %2631 = vmatprep.subr.bf16.mxu0 %v2582
  %2632 = vmatpush1.bf16.msra.mxu0 %v2581
  %2633 = vmatprep.subr.bf16.mxu0 %v2588
  %2634 = vmatpush1.bf16.msra.mxu0 %v2587
  %2635 = vmatprep.subr.bf16.mxu0 %v2594
  %2636 = vmatpush1.bf16.msra.mxu0 %v2593
  %2637 = vmatprep.subr.bf16.mxu0 0
  %2638 = vmatpush1.bf16.msra.mxu0 0
  %2639 = vmatprep.subr.bf16.mxu0 0
  %2640 = vmatpush1.bf16.msra.mxu0 0
  %2641 = vmatprep.subr.bf16.mxu0 0
  %2642 = vmatpush1.bf16.msra.mxu0 0
  %2643 = vmatprep.subr.bf16.mxu0 0
  %2644 = vmatpush1.bf16.msra.mxu0 0
  %2645 = vmatprep.subr.bf16.mxu0 0
  %2646 = vmatpush1.bf16.msra.mxu0 0
  %2647 = vmatprep.subr.bf16.mxu0 0
  %2648 = vmatpush1.bf16.msra.mxu0 0
  %2649 = vmatprep.subr.bf16.mxu0 0
  %2650 = vmatpush1.bf16.msra.mxu0 0
  %2651 = vmatprep.subr.bf16.mxu0 0
  %2652 = vmatpush1.bf16.msra.mxu0 0
  %2653 = vmatprep.subr.bf16.mxu0 0
  %2654 = vmatpush1.bf16.msra.mxu0 0
  %2655 = vmatprep.subr.bf16.mxu0 0
  %2656 = vmatpush1.bf16.msra.mxu0 0
  %2657 = vmatprep.subr.bf16.mxu0 0
  %2658 = vmatpush1.bf16.msra.mxu0 0
  %2659 = vmatprep.subr.bf16.mxu0 0
  %2660 = vmatpush1.bf16.msra.mxu0 0
  %2661 = vmatprep.mubr.bf16.mxu0 0
  %2662 = vmatmul.mubr.bf16.gmra.mrb[0].mxu0 %v2624
  %v2663 = vpop.f32.mrb[0].mxu0
  %v2664 = vadd.f32 0.0, %v2663
  %v2665 = vpop.f32.mrb[0].mxu0
  %v2666 = vadd.f32 0.0, %v2665
  %v2667 = vpop.f32.mrb[0].mxu0
  %v2668 = vadd.f32 0.0, %v2667
  %v2669 = vpop.f32.mrb[0].mxu0
  %v2670 = vadd.f32 0.0, %v2669
  %2671 = vmatprep.mubr.bf16.mxu0 0
  %2672 = vmatmul.mubr.bf16.gmra.mrb[0].mxu0 %v2627
  %v2673 = vpop.f32.mrb[0].mxu0
  %v2674 = vadd.f32 0.0, %v2673
  %v2675 = vpop.f32.mrb[0].mxu0
  %v2676 = vadd.f32 0.0, %v2675
  %v2677 = vpop.f32.mrb[0].mxu0
  %v2678 = vadd.f32 0.0, %v2677
  %v2679 = vpop.f32.mrb[0].mxu0
  %v2680 = vadd.f32 0.0, %v2679
  %2681 = vdwg.mxu0
  %2682 = vmatprep.subr.bf16.mxu0 %v2578
  %2683 = vmatpush1.bf16.msra.mxu0 %v2577
  %2684 = vmatprep.subr.bf16.mxu0 %v2584
  %2685 = vmatpush1.bf16.msra.mxu0 %v2583
  %2686 = vmatprep.subr.bf16.mxu0 %v2590
  %2687 = vmatpush1.bf16.msra.mxu0 %v2589
  %2688 = vmatprep.subr.bf16.mxu0 %v2596
  %2689 = vmatpush1.bf16.msra.mxu0 %v2595
  %2690 = vmatprep.subr.bf16.mxu0 0
  %2691 = vmatpush1.bf16.msra.mxu0 0
  %2692 = vmatprep.subr.bf16.mxu0 0
  %2693 = vmatpush1.bf16.msra.mxu0 0
  %2694 = vmatprep.subr.bf16.mxu0 0
  %2695 = vmatpush1.bf16.msra.mxu0 0
  %2696 = vmatprep.subr.bf16.mxu0 0
  %2697 = vmatpush1.bf16.msra.mxu0 0
  %2698 = vmatprep.subr.bf16.mxu0 0
  %2699 = vmatpush1.bf16.msra.mxu0 0
  %2700 = vmatprep.subr.bf16.mxu0 0
  %2701 = vmatpush1.bf16.msra.mxu0 0
  %2702 = vmatprep.subr.bf16.mxu0 0
  %2703 = vmatpush1.bf16.msra.mxu0 0
  %2704 = vmatprep.subr.bf16.mxu0 0
  %2705 = vmatpush1.bf16.msra.mxu0 0
  %2706 = vmatprep.subr.bf16.mxu0 0
  %2707 = vmatpush1.bf16.msra.mxu0 0
  %2708 = vmatprep.subr.bf16.mxu0 0
  %2709 = vmatpush1.bf16.msra.mxu0 0
  %2710 = vmatprep.subr.bf16.mxu0 0
  %2711 = vmatpush1.bf16.msra.mxu0 0
  %2712 = vmatprep.subr.bf16.mxu0 0
  %2713 = vmatpush1.bf16.msra.mxu0 0
  %2714 = vmatprep.mubr.bf16.mxu0 0
  %2715 = vmatmul.mubr.bf16.gmra.mrb[0].mxu0 %v2624
  %v2716 = vpop.f32.mrb[0].mxu0
  %v2717 = vadd.f32 0.0, %v2716
  %v2718 = vpop.f32.mrb[0].mxu0
  %v2719 = vadd.f32 0.0, %v2718
  %v2720 = vpop.f32.mrb[0].mxu0
  %v2721 = vadd.f32 0.0, %v2720
  %v2722 = vpop.f32.mrb[0].mxu0
  %v2723 = vadd.f32 0.0, %v2722
  %2724 = vmatprep.mubr.bf16.mxu0 0
  %2725 = vmatmul.mubr.bf16.gmra.mrb[0].mxu0 %v2627
  %v2726 = vpop.f32.mrb[0].mxu0
  %v2727 = vadd.f32 0.0, %v2726
  %v2728 = vpop.f32.mrb[0].mxu0
  %v2729 = vadd.f32 0.0, %v2728
  %v2730 = vpop.f32.mrb[0].mxu0
  %v2731 = vadd.f32 0.0, %v2730
  %v2732 = vpop.f32.mrb[0].mxu0
  %v2733 = vadd.f32 0.0, %v2732
  %2734 = vdwg.mxu0
  %2735 = vmatprep.subr.bf16.mxu0 %v2580
  %2736 = vmatpush1.bf16.msra.mxu0 %v2579
  %2737 = vmatprep.subr.bf16.mxu0 %v2586
  %2738 = vmatpush1.bf16.msra.mxu0 %v2585
  %2739 = vmatprep.subr.bf16.mxu0 %v2592
  %2740 = vmatpush1.bf16.msra.mxu0 %v2591
  %2741 = vmatprep.subr.bf16.mxu0 %v2598
  %2742 = vmatpush1.bf16.msra.mxu0 %v2597
  %2743 = vmatprep.subr.bf16.mxu0 0
  %2744 = vmatpush1.bf16.msra.mxu0 0
  %2745 = vmatprep.subr.bf16.mxu0 0
  %2746 = vmatpush1.bf16.msra.mxu0 0
  %2747 = vmatprep.subr.bf16.mxu0 0
  %2748 = vmatpush1.bf16.msra.mxu0 0
  %2749 = vmatprep.subr.bf16.mxu0 0
  %2750 = vmatpush1.bf16.msra.mxu0 0
  %2751 = vmatprep.subr.bf16.mxu0 0
  %2752 = vmatpush1.bf16.msra.mxu0 0
  %2753 = vmatprep.subr.bf16.mxu0 0
  %2754 = vmatpush1.bf16.msra.mxu0 0
  %2755 = vmatprep.subr.bf16.mxu0 0
  %2756 = vmatpush1.bf16.msra.mxu0 0
  %2757 = vmatprep.subr.bf16.mxu0 0
  %2758 = vmatpush1.bf16.msra.mxu0 0
  %2759 = vmatprep.subr.bf16.mxu0 0
  %2760 = vmatpush1.bf16.msra.mxu0 0
  %2761 = vmatprep.subr.bf16.mxu0 0
  %2762 = vmatpush1.bf16.msra.mxu0 0
  %2763 = vmatprep.subr.bf16.mxu0 0
  %2764 = vmatpush1.bf16.msra.mxu0 0
  %2765 = vmatprep.subr.bf16.mxu0 0
  %2766 = vmatpush1.bf16.msra.mxu0 0
  %2767 = vmatprep.mubr.bf16.mxu0 0
  %2768 = vmatmul.mubr.bf16.gmra.mrb[0].mxu0 %v2624
  %v2769 = vpop.f32.mrb[0].mxu0
  %v2770 = vadd.f32 0.0, %v2769
  %v2771 = vpop.f32.mrb[0].mxu0
  %v2772 = vadd.f32 0.0, %v2771
  %v2773 = vpop.f32.mrb[0].mxu0
  %v2774 = vadd.f32 0.0, %v2773
  %v2775 = vpop.f32.mrb[0].mxu0
  %v2776 = vadd.f32 0.0, %v2775
  %2777 = vmatprep.mubr.bf16.mxu0 0
  %2778 = vmatmul.mubr.bf16.gmra.mrb[0].mxu0 %v2627
  %v2779 = vpop.f32.mrb[0].mxu0
  %v2780 = vadd.f32 0.0, %v2779
  %v2781 = vpop.f32.mrb[0].mxu0
  %v2782 = vadd.f32 0.0, %v2781
  %v2783 = vpop.f32.mrb[0].mxu0
  %v2784 = vadd.f32 0.0, %v2783
  %v2785 = vpop.f32.mrb[0].mxu0
  %v2786 = vadd.f32 0.0, %v2785
  %2787 = vdwg.mxu0
  %v2788 = vadd.f32 %v2440, %v2664
  %v2789 = vadd.f32 %v2441, %v2666
  %v2790 = vadd.f32 %v2442, %v2717
  %v2791 = vadd.f32 %v2443, %v2719
  %v2792 = vadd.f32 %v2444, %v2770
  %v2793 = vadd.f32 %v2445, %v2772
  %v2794 = vadd.f32 %v2446, %v2668
  %v2795 = vadd.f32 %v2447, %v2670
  %v2796 = vadd.f32 %v2448, %v2721
  %v2797 = vadd.f32 %v2449, %v2723
  %v2798 = vadd.f32 %v2450, %v2774
  %v2799 = vadd.f32 %v2451, %v2776
  %v2800 = vadd.f32 %v2452, %v2674
  %v2801 = vadd.f32 %v2453, %v2676
  %v2802 = vadd.f32 %v2454, %v2727
  %v2803 = vadd.f32 %v2455, %v2729
  %v2804 = vadd.f32 %v2456, %v2780
  %v2805 = vadd.f32 %v2457, %v2782
  %v2806 = vadd.f32 %v2458, %v2678
  %v2807 = vadd.f32 %v2459, %v2680
  %v2808 = vadd.f32 %v2460, %v2731
  %v2809 = vadd.f32 %v2461, %v2733
  %v2810 = vadd.f32 %v2462, %v2784
  %v2811 = vadd.f32 %v2463, %v2786
  %s2812 = scalar_lea.vmem %s3, 64
  %v2813 = vld [vmem:[%s2812] sm:$0xf]
  %v2814 = vld [vmem:[%s2812 + $0x4] sm:$0xf]
  %v2815 = vld [vmem:[%s2812 + $0x8] sm:$0xf]
  %v2816 = vld [vmem:[%s2812 + $0xc] sm:$0xf]
  %v2817 = vld [vmem:[%s1 + $0x4] sm:$0xff]
  %v2818 = vld [vmem:[%s1 + $0xc] sm:$0xff]
  %v2819 = vld [vmem:[%s1 + $0x14] sm:$0xff]
  %v2820 = vld [vmem:[%s1 + $0x24] sm:$0xff]
  %v2821 = vld [vmem:[%s1 + $0x2c] sm:$0xff]
  %v2822 = vld [vmem:[%s1 + $0x34] sm:$0xff]
  %v2823 = vld [vmem:[%s1 + $0x44] sm:$0xff]
  %v2824 = vld [vmem:[%s1 + $0x4c] sm:$0xff]
  %v2825 = vld [vmem:[%s1 + $0x54] sm:$0xff]
  %v2826 = vld [vmem:[%s1 + $0x64] sm:$0xff]
  %v2827 = vld [vmem:[%s1 + $0x6c] sm:$0xff]
  %v2828 = vld [vmem:[%s1 + $0x74] sm:$0xff]
  %v2833 = vunpack.c.l.b16 %v2813
  %v2834 = vunpack.c.l.b16 %v2814
  %v2835 = vunpack.c.l.b16 %v2815
  %v2836 = vunpack.c.l.b16 %v2816
  %v2837 = vpack.c.b16 %v2834, %v2833
  %v2838 = vpack.c.b16 %v2836, %v2835
  %v2851 = vunpack.c.l.b16 %v2817
  %v2852 = vunpack.c.h.b16 %v2817
  %v2853 = vunpack.c.l.b16 %v2818
  %v2854 = vunpack.c.h.b16 %v2818
  %v2855 = vunpack.c.l.b16 %v2819
  %v2856 = vunpack.c.h.b16 %v2819
  %v2857 = vunpack.c.l.b16 %v2820
  %v2858 = vunpack.c.h.b16 %v2820
  %v2859 = vunpack.c.l.b16 %v2821
  %v2860 = vunpack.c.h.b16 %v2821
  %v2861 = vunpack.c.l.b16 %v2822
  %v2862 = vunpack.c.h.b16 %v2822
  %v2863 = vunpack.c.l.b16 %v2823
  %v2864 = vunpack.c.h.b16 %v2823
  %v2865 = vunpack.c.l.b16 %v2824
  %v2866 = vunpack.c.h.b16 %v2824
  %v2867 = vunpack.c.l.b16 %v2825
  %v2868 = vunpack.c.h.b16 %v2825
  %v2869 = vunpack.c.l.b16 %v2826
  %v2870 = vunpack.c.h.b16 %v2826
  %v2871 = vunpack.c.l.b16 %v2827
  %v2872 = vunpack.c.h.b16 %v2827
  %v2873 = vunpack.c.l.b16 %v2828
  %v2874 = vunpack.c.h.b16 %v2828
  %v2875 = vpack.c.b16 %v2857, %v2851
  %v2876 = vpack.c.b16 %v2858, %v2852
  %v2877 = vpack.c.b16 %v2859, %v2853
  %v2878 = vpack.c.b16 %v2860, %v2854
  %v2879 = vpack.c.b16 %v2861, %v2855
  %v2880 = vpack.c.b16 %v2862, %v2856
  %v2881 = vpack.c.b16 %v2869, %v2863
  %v2882 = vpack.c.b16 %v2870, %v2864
  %v2883 = vpack.c.b16 %v2871, %v2865
  %v2884 = vpack.c.b16 %v2872, %v2866
  %v2885 = vpack.c.b16 %v2873, %v2867
  %v2886 = vpack.c.b16 %v2874, %v2868
  %v2900 = vsel %vm207, %v2837, 0
  %v2903 = vsel %vm207, %v2838, 0
  %2905 = vmatprep.subr.bf16.mxu0 %v2876
  %2906 = vmatpush1.bf16.msra.mxu0 %v2875
  %2907 = vmatprep.subr.bf16.mxu0 %v2882
  %2908 = vmatpush1.bf16.msra.mxu0 %v2881
  %2909 = vmatprep.subr.bf16.mxu0 0
  %2910 = vmatpush1.bf16.msra.mxu0 0
  %2911 = vmatprep.subr.bf16.mxu0 0
  %2912 = vmatpush1.bf16.msra.mxu0 0
  %2913 = vmatprep.subr.bf16.mxu0 0
  %2914 = vmatpush1.bf16.msra.mxu0 0
  %2915 = vmatprep.subr.bf16.mxu0 0
  %2916 = vmatpush1.bf16.msra.mxu0 0
  %2917 = vmatprep.subr.bf16.mxu0 0
  %2918 = vmatpush1.bf16.msra.mxu0 0
  %2919 = vmatprep.subr.bf16.mxu0 0
  %2920 = vmatpush1.bf16.msra.mxu0 0
  %2921 = vmatprep.subr.bf16.mxu0 0
  %2922 = vmatpush1.bf16.msra.mxu0 0
  %2923 = vmatprep.subr.bf16.mxu0 0
  %2924 = vmatpush1.bf16.msra.mxu0 0
  %2925 = vmatprep.subr.bf16.mxu0 0
  %2926 = vmatpush1.bf16.msra.mxu0 0
  %2927 = vmatprep.subr.bf16.mxu0 0
  %2928 = vmatpush1.bf16.msra.mxu0 0
  %2929 = vmatprep.subr.bf16.mxu0 0
  %2930 = vmatpush1.bf16.msra.mxu0 0
  %2931 = vmatprep.subr.bf16.mxu0 0
  %2932 = vmatpush1.bf16.msra.mxu0 0
  %2933 = vmatprep.subr.bf16.mxu0 0
  %2934 = vmatpush1.bf16.msra.mxu0 0
  %2935 = vmatprep.subr.bf16.mxu0 0
  %2936 = vmatpush1.bf16.msra.mxu0 0
  %2937 = vmatprep.mubr.bf16.mxu0 0
  %2938 = vmatmul.mubr.bf16.gmra.mrb[0].mxu0 %v2900
  %v2939 = vpop.f32.mrb[0].mxu0
  %v2940 = vadd.f32 0.0, %v2939
  %v2941 = vpop.f32.mrb[0].mxu0
  %v2942 = vadd.f32 0.0, %v2941
  %v2943 = vpop.f32.mrb[0].mxu0
  %v2944 = vadd.f32 0.0, %v2943
  %v2945 = vpop.f32.mrb[0].mxu0
  %v2946 = vadd.f32 0.0, %v2945
  %2947 = vmatprep.mubr.bf16.mxu0 0
  %2948 = vmatmul.mubr.bf16.gmra.mrb[0].mxu0 %v2903
  %v2949 = vpop.f32.mrb[0].mxu0
  %v2950 = vadd.f32 0.0, %v2949
  %v2951 = vpop.f32.mrb[0].mxu0
  %v2952 = vadd.f32 0.0, %v2951
  %v2953 = vpop.f32.mrb[0].mxu0
  %v2954 = vadd.f32 0.0, %v2953
  %v2955 = vpop.f32.mrb[0].mxu0
  %v2956 = vadd.f32 0.0, %v2955
  %2957 = vdwg.mxu0
  %2958 = vmatprep.subr.bf16.mxu0 %v2878
  %2959 = vmatpush1.bf16.msra.mxu0 %v2877
  %2960 = vmatprep.subr.bf16.mxu0 %v2884
  %2961 = vmatpush1.bf16.msra.mxu0 %v2883
  %2962 = vmatprep.subr.bf16.mxu0 0
  %2963 = vmatpush1.bf16.msra.mxu0 0
  %2964 = vmatprep.subr.bf16.mxu0 0
  %2965 = vmatpush1.bf16.msra.mxu0 0
  %2966 = vmatprep.subr.bf16.mxu0 0
  %2967 = vmatpush1.bf16.msra.mxu0 0
  %2968 = vmatprep.subr.bf16.mxu0 0
  %2969 = vmatpush1.bf16.msra.mxu0 0
  %2970 = vmatprep.subr.bf16.mxu0 0
  %2971 = vmatpush1.bf16.msra.mxu0 0
  %2972 = vmatprep.subr.bf16.mxu0 0
  %2973 = vmatpush1.bf16.msra.mxu0 0
  %2974 = vmatprep.subr.bf16.mxu0 0
  %2975 = vmatpush1.bf16.msra.mxu0 0
  %2976 = vmatprep.subr.bf16.mxu0 0
  %2977 = vmatpush1.bf16.msra.mxu0 0
  %2978 = vmatprep.subr.bf16.mxu0 0
  %2979 = vmatpush1.bf16.msra.mxu0 0
  %2980 = vmatprep.subr.bf16.mxu0 0
  %2981 = vmatpush1.bf16.msra.mxu0 0
  %2982 = vmatprep.subr.bf16.mxu0 0
  %2983 = vmatpush1.bf16.msra.mxu0 0
  %2984 = vmatprep.subr.bf16.mxu0 0
  %2985 = vmatpush1.bf16.msra.mxu0 0
  %2986 = vmatprep.subr.bf16.mxu0 0
  %2987 = vmatpush1.bf16.msra.mxu0 0
  %2988 = vmatprep.subr.bf16.mxu0 0
  %2989 = vmatpush1.bf16.msra.mxu0 0
  %2990 = vmatprep.mubr.bf16.mxu0 0
  %2991 = vmatmul.mubr.bf16.gmra.mrb[0].mxu0 %v2900
  %v2992 = vpop.f32.mrb[0].mxu0
  %v2993 = vadd.f32 0.0, %v2992
  %v2994 = vpop.f32.mrb[0].mxu0
  %v2995 = vadd.f32 0.0, %v2994
  %v2996 = vpop.f32.mrb[0].mxu0
  %v2997 = vadd.f32 0.0, %v2996
  %v2998 = vpop.f32.mrb[0].mxu0
  %v2999 = vadd.f32 0.0, %v2998
  %3000 = vmatprep.mubr.bf16.mxu0 0
  %3001 = vmatmul.mubr.bf16.gmra.mrb[0].mxu0 %v2903
  %v3002 = vpop.f32.mrb[0].mxu0
  %v3003 = vadd.f32 0.0, %v3002
  %v3004 = vpop.f32.mrb[0].mxu0
  %v3005 = vadd.f32 0.0, %v3004
  %v3006 = vpop.f32.mrb[0].mxu0
  %v3007 = vadd.f32 0.0, %v3006
  %v3008 = vpop.f32.mrb[0].mxu0
  %v3009 = vadd.f32 0.0, %v3008
  %3010 = vdwg.mxu0
  %3011 = vmatprep.subr.bf16.mxu0 %v2880
  %3012 = vmatpush1.bf16.msra.mxu0 %v2879
  %3013 = vmatprep.subr.bf16.mxu0 %v2886
  %3014 = vmatpush1.bf16.msra.mxu0 %v2885
  %3015 = vmatprep.subr.bf16.mxu0 0
  %3016 = vmatpush1.bf16.msra.mxu0 0
  %3017 = vmatprep.subr.bf16.mxu0 0
  %3018 = vmatpush1.bf16.msra.mxu0 0
  %3019 = vmatprep.subr.bf16.mxu0 0
  %3020 = vmatpush1.bf16.msra.mxu0 0
  %3021 = vmatprep.subr.bf16.mxu0 0
  %3022 = vmatpush1.bf16.msra.mxu0 0
  %3023 = vmatprep.subr.bf16.mxu0 0
  %3024 = vmatpush1.bf16.msra.mxu0 0
  %3025 = vmatprep.subr.bf16.mxu0 0
  %3026 = vmatpush1.bf16.msra.mxu0 0
  %3027 = vmatprep.subr.bf16.mxu0 0
  %3028 = vmatpush1.bf16.msra.mxu0 0
  %3029 = vmatprep.subr.bf16.mxu0 0
  %3030 = vmatpush1.bf16.msra.mxu0 0
  %3031 = vmatprep.subr.bf16.mxu0 0
  %3032 = vmatpush1.bf16.msra.mxu0 0
  %3033 = vmatprep.subr.bf16.mxu0 0
  %3034 = vmatpush1.bf16.msra.mxu0 0
  %3035 = vmatprep.subr.bf16.mxu0 0
  %3036 = vmatpush1.bf16.msra.mxu0 0
  %3037 = vmatprep.subr.bf16.mxu0 0
  %3038 = vmatpush1.bf16.msra.mxu0 0
  %3039 = vmatprep.subr.bf16.mxu0 0
  %3040 = vmatpush1.bf16.msra.mxu0 0
  %3041 = vmatprep.subr.bf16.mxu0 0
  %3042 = vmatpush1.bf16.msra.mxu0 0
  %3043 = vmatprep.mubr.bf16.mxu0 0
  %3044 = vmatmul.mubr.bf16.gmra.mrb[0].mxu0 %v2900
  %v3045 = vpop.f32.mrb[0].mxu0
  %v3046 = vadd.f32 0.0, %v3045
  %v3047 = vpop.f32.mrb[0].mxu0
  %v3048 = vadd.f32 0.0, %v3047
  %v3049 = vpop.f32.mrb[0].mxu0
  %v3050 = vadd.f32 0.0, %v3049
  %v3051 = vpop.f32.mrb[0].mxu0
  %v3052 = vadd.f32 0.0, %v3051
  %3053 = vmatprep.mubr.bf16.mxu0 0
  %3054 = vmatmul.mubr.bf16.gmra.mrb[0].mxu0 %v2903
  %v3055 = vpop.f32.mrb[0].mxu0
  %v3056 = vadd.f32 0.0, %v3055
  %v3057 = vpop.f32.mrb[0].mxu0
  %v3058 = vadd.f32 0.0, %v3057
  %v3059 = vpop.f32.mrb[0].mxu0
  %v3060 = vadd.f32 0.0, %v3059
  %v3061 = vpop.f32.mrb[0].mxu0
  %v3062 = vadd.f32 0.0, %v3061
  %3063 = vdwg.mxu0
  %v3064 = vadd.f32 %v2788, %v2940
  %v3065 = vadd.f32 %v2789, %v2942
  %v3066 = vadd.f32 %v2790, %v2993
  %v3067 = vadd.f32 %v2791, %v2995
  %v3068 = vadd.f32 %v2792, %v3046
  %v3069 = vadd.f32 %v2793, %v3048
  %v3070 = vadd.f32 %v2794, %v2944
  %v3071 = vadd.f32 %v2795, %v2946
  %v3072 = vadd.f32 %v2796, %v2997
  %v3073 = vadd.f32 %v2797, %v2999
  %v3074 = vadd.f32 %v2798, %v3050
  %v3075 = vadd.f32 %v2799, %v3052
  %v3076 = vadd.f32 %v2800, %v2950
  %v3077 = vadd.f32 %v2801, %v2952
  %v3078 = vadd.f32 %v2802, %v3003
  %v3079 = vadd.f32 %v2803, %v3005
  %v3080 = vadd.f32 %v2804, %v3056
  %v3081 = vadd.f32 %v2805, %v3058
  %v3082 = vadd.f32 %v2806, %v2954
  %v3083 = vadd.f32 %v2807, %v2956
  %v3084 = vadd.f32 %v2808, %v3007
  %v3085 = vadd.f32 %v2809, %v3009
  %v3086 = vadd.f32 %v2810, %v3060
  %v3087 = vadd.f32 %v2811, %v3062
  %s3088 = scalar_lea.vmem %s2, 80
  %v3089 = vld [vmem:[%s3088] sm:$0xf]
  %v3090 = vld [vmem:[%s3088 + $0x4] sm:$0xf]
  %v3091 = vld [vmem:[%s3088 + $0x8] sm:$0xf]
  %v3092 = vld [vmem:[%s3088 + $0xc] sm:$0xf]
  %v3093 = vld [vmem:[%s0 + $0x4] sm:$0xff]
  %v3094 = vld [vmem:[%s0 + $0xc] sm:$0xff]
  %v3095 = vld [vmem:[%s0 + $0x14] sm:$0xff]
  %v3096 = vld [vmem:[%s0 + $0x1c] sm:$0xf]
  %v3097 = vld [vmem:[%s0 + $0x24] sm:$0xff]
  %v3098 = vld [vmem:[%s0 + $0x2c] sm:$0xff]
  %v3099 = vld [vmem:[%s0 + $0x34] sm:$0xff]
  %v3100 = vld [vmem:[%s0 + $0x3c] sm:$0xf]
  %v3101 = vld [vmem:[%s0 + $0x44] sm:$0xff]
  %v3102 = vld [vmem:[%s0 + $0x4c] sm:$0xff]
  %v3103 = vld [vmem:[%s0 + $0x54] sm:$0xff]
  %v3104 = vld [vmem:[%s0 + $0x5c] sm:$0xf]
  %v3105 = vld [vmem:[%s0 + $0x64] sm:$0xff]
  %v3106 = vld [vmem:[%s0 + $0x6c] sm:$0xff]
  %v3107 = vld [vmem:[%s0 + $0x74] sm:$0xff]
  %v3108 = vld [vmem:[%s0 + $0x7c] sm:$0xf]
  %v3109 = vld [vmem:[%s0 + $0x84] sm:$0xff]
  %v3110 = vld [vmem:[%s0 + $0x8c] sm:$0xff]
  %v3111 = vld [vmem:[%s0 + $0x94] sm:$0xff]
  %v3112 = vld [vmem:[%s0 + $0x9c] sm:$0xf]
  %v3113 = vld [vmem:[%s0 + $0xa4] sm:$0xff]
  %v3114 = vld [vmem:[%s0 + $0xac] sm:$0xff]
  %v3115 = vld [vmem:[%s0 + $0xb4] sm:$0xff]
  %v3116 = vld [vmem:[%s0 + $0xbc] sm:$0xf]
  %v3117 = vld [vmem:[%s0 + $0xc4] sm:$0xff]
  %v3118 = vld [vmem:[%s0 + $0xcc] sm:$0xff]
  %v3119 = vld [vmem:[%s0 + $0xd4] sm:$0xff]
  %v3120 = vld [vmem:[%s0 + $0xdc] sm:$0xf]
  %v3121 = vld [vmem:[%s0 + $0xe4] sm:$0xff]
  %v3122 = vld [vmem:[%s0 + $0xec] sm:$0xff]
  %v3123 = vld [vmem:[%s0 + $0xf4] sm:$0xff]
  %v3124 = vld [vmem:[%s0 + $0xfc] sm:$0xf]
  %v3129 = vunpack.c.l.b16 %v3089
  %v3130 = vunpack.c.l.b16 %v3090
  %v3131 = vunpack.c.l.b16 %v3091
  %v3132 = vunpack.c.l.b16 %v3092
  %v3133 = vpack.c.b16 %v3130, %v3129
  %v3134 = vpack.c.b16 %v3132, %v3131
  %v3167 = vunpack.c.l.b16 %v3093
  %v3168 = vunpack.c.h.b16 %v3093
  %v3169 = vunpack.c.l.b16 %v3094
  %v3170 = vunpack.c.h.b16 %v3094
  %v3171 = vunpack.c.l.b16 %v3095
  %v3172 = vunpack.c.h.b16 %v3095
  %v3173 = vunpack.c.l.b16 %v3096
  %v3174 = vunpack.c.l.b16 %v3097
  %v3175 = vunpack.c.h.b16 %v3097
  %v3176 = vunpack.c.l.b16 %v3098
  %v3177 = vunpack.c.h.b16 %v3098
  %v3178 = vunpack.c.l.b16 %v3099
  %v3179 = vunpack.c.h.b16 %v3099
  %v3180 = vunpack.c.l.b16 %v3100
  %v3181 = vunpack.c.l.b16 %v3101
  %v3182 = vunpack.c.h.b16 %v3101
  %v3183 = vunpack.c.l.b16 %v3102
  %v3184 = vunpack.c.h.b16 %v3102
  %v3185 = vunpack.c.l.b16 %v3103
  %v3186 = vunpack.c.h.b16 %v3103
  %v3187 = vunpack.c.l.b16 %v3104
  %v3188 = vunpack.c.l.b16 %v3105
  %v3189 = vunpack.c.h.b16 %v3105
  %v3190 = vunpack.c.l.b16 %v3106
  %v3191 = vunpack.c.h.b16 %v3106
  %v3192 = vunpack.c.l.b16 %v3107
  %v3193 = vunpack.c.h.b16 %v3107
  %v3194 = vunpack.c.l.b16 %v3108
  %v3195 = vunpack.c.l.b16 %v3109
  %v3196 = vunpack.c.h.b16 %v3109
  %v3197 = vunpack.c.l.b16 %v3110
  %v3198 = vunpack.c.h.b16 %v3110
  %v3199 = vunpack.c.l.b16 %v3111
  %v3200 = vunpack.c.h.b16 %v3111
  %v3201 = vunpack.c.l.b16 %v3112
  %v3202 = vunpack.c.l.b16 %v3113
  %v3203 = vunpack.c.h.b16 %v3113
  %v3204 = vunpack.c.l.b16 %v3114
  %v3205 = vunpack.c.h.b16 %v3114
  %v3206 = vunpack.c.l.b16 %v3115
  %v3207 = vunpack.c.h.b16 %v3115
  %v3208 = vunpack.c.l.b16 %v3116
  %v3209 = vunpack.c.l.b16 %v3117
  %v3210 = vunpack.c.h.b16 %v3117
  %v3211 = vunpack.c.l.b16 %v3118
  %v3212 = vunpack.c.h.b16 %v3118
  %v3213 = vunpack.c.l.b16 %v3119
  %v3214 = vunpack.c.h.b16 %v3119
  %v3215 = vunpack.c.l.b16 %v3120
  %v3216 = vunpack.c.l.b16 %v3121
  %v3217 = vunpack.c.h.b16 %v3121
  %v3218 = vunpack.c.l.b16 %v3122
  %v3219 = vunpack.c.h.b16 %v3122
  %v3220 = vunpack.c.l.b16 %v3123
  %v3221 = vunpack.c.h.b16 %v3123
  %v3222 = vunpack.c.l.b16 %v3124
  %v3223 = vpack.c.b16 %v3174, %v3167
  %v3224 = vpack.c.b16 %v3175, %v3168
  %v3225 = vpack.c.b16 %v3176, %v3169
  %v3226 = vpack.c.b16 %v3177, %v3170
  %v3227 = vpack.c.b16 %v3178, %v3171
  %v3228 = vpack.c.b16 %v3179, %v3172
  %v3229 = vpack.c.b16 %v3180, %v3173
  %v3230 = vpack.c.b16 %v3188, %v3181
  %v3231 = vpack.c.b16 %v3189, %v3182
  %v3232 = vpack.c.b16 %v3190, %v3183
  %v3233 = vpack.c.b16 %v3191, %v3184
  %v3234 = vpack.c.b16 %v3192, %v3185
  %v3235 = vpack.c.b16 %v3193, %v3186
  %v3236 = vpack.c.b16 %v3194, %v3187
  %v3237 = vpack.c.b16 %v3202, %v3195
  %v3238 = vpack.c.b16 %v3203, %v3196
  %v3239 = vpack.c.b16 %v3204, %v3197
  %v3240 = vpack.c.b16 %v3205, %v3198
  %v3241 = vpack.c.b16 %v3206, %v3199
  %v3242 = vpack.c.b16 %v3207, %v3200
  %v3243 = vpack.c.b16 %v3208, %v3201
  %v3244 = vpack.c.b16 %v3216, %v3209
  %v3245 = vpack.c.b16 %v3217, %v3210
  %v3246 = vpack.c.b16 %v3218, %v3211
  %v3247 = vpack.c.b16 %v3219, %v3212
  %v3248 = vpack.c.b16 %v3220, %v3213
  %v3249 = vpack.c.b16 %v3221, %v3214
  %v3250 = vpack.c.b16 %v3222, %v3215
  %3251 = vrot.lane.b32.xlu0 %v3223, 127
  %v3252 = vpop.permute.xlu0 %3251
  %3253 = vrot.lane.b32.xlu0 %v3224, 127
  %v3254 = vpop.permute.xlu0 %3253
  %3255 = vrot.lane.b32.xlu0 %v3225, 127
  %v3256 = vpop.permute.xlu0 %3255
  %3257 = vrot.lane.b32.xlu0 %v3226, 127
  %v3258 = vpop.permute.xlu0 %3257
  %3259 = vrot.lane.b32.xlu0 %v3227, 127
  %v3260 = vpop.permute.xlu0 %3259
  %3261 = vrot.lane.b32.xlu0 %v3228, 127
  %v3262 = vpop.permute.xlu0 %3261
  %3263 = vrot.lane.b32.xlu0 %v3229, 127
  %v3264 = vpop.permute.xlu0 %3263
  %3265 = vrot.lane.b32.xlu0 %v3230, 127
  %v3266 = vpop.permute.xlu0 %3265
  %3267 = vrot.lane.b32.xlu0 %v3231, 127
  %v3268 = vpop.permute.xlu0 %3267
  %3269 = vrot.lane.b32.xlu0 %v3232, 127
  %v3270 = vpop.permute.xlu0 %3269
  %3271 = vrot.lane.b32.xlu0 %v3233, 127
  %v3272 = vpop.permute.xlu0 %3271
  %3273 = vrot.lane.b32.xlu0 %v3234, 127
  %v3274 = vpop.permute.xlu0 %3273
  %3275 = vrot.lane.b32.xlu0 %v3235, 127
  %v3276 = vpop.permute.xlu0 %3275
  %3277 = vrot.lane.b32.xlu0 %v3236, 127
  %v3278 = vpop.permute.xlu0 %3277
  %3279 = vrot.lane.b32.xlu0 %v3237, 127
  %v3280 = vpop.permute.xlu0 %3279
  %3281 = vrot.lane.b32.xlu0 %v3238, 127
  %v3282 = vpop.permute.xlu0 %3281
  %3283 = vrot.lane.b32.xlu0 %v3239, 127
  %v3284 = vpop.permute.xlu0 %3283
  %3285 = vrot.lane.b32.xlu0 %v3240, 127
  %v3286 = vpop.permute.xlu0 %3285
  %3287 = vrot.lane.b32.xlu0 %v3241, 127
  %v3288 = vpop.permute.xlu0 %3287
  %3289 = vrot.lane.b32.xlu0 %v3242, 127
  %v3290 = vpop.permute.xlu0 %3289
  %3291 = vrot.lane.b32.xlu0 %v3243, 127
  %v3292 = vpop.permute.xlu0 %3291
  %3293 = vrot.lane.b32.xlu0 %v3244, 127
  %v3294 = vpop.permute.xlu0 %3293
  %3295 = vrot.lane.b32.xlu0 %v3245, 127
  %v3296 = vpop.permute.xlu0 %3295
  %3297 = vrot.lane.b32.xlu0 %v3246, 127
  %v3298 = vpop.permute.xlu0 %3297
  %3299 = vrot.lane.b32.xlu0 %v3247, 127
  %v3300 = vpop.permute.xlu0 %3299
  %3301 = vrot.lane.b32.xlu0 %v3248, 127
  %v3302 = vpop.permute.xlu0 %3301
  %3303 = vrot.lane.b32.xlu0 %v3249, 127
  %v3304 = vpop.permute.xlu0 %3303
  %3305 = vrot.lane.b32.xlu0 %v3250, 127
  %v3306 = vpop.permute.xlu0 %3305
  %vm3307 = vcmask 1039360
  %v3308 = vsel %vm3307, %v3252, %v3254
  %v3309 = vsel %vm3307, %v3254, %v3256
  %v3310 = vsel %vm3307, %v3256, %v3258
  %v3311 = vsel %vm3307, %v3258, %v3260
  %v3312 = vsel %vm3307, %v3260, %v3262
  %v3313 = vsel %vm3307, %v3262, %v3264
  %v3314 = vsel %vm3307, %v3266, %v3268
  %v3315 = vsel %vm3307, %v3268, %v3270
  %v3316 = vsel %vm3307, %v3270, %v3272
  %v3317 = vsel %vm3307, %v3272, %v3274
  %v3318 = vsel %vm3307, %v3274, %v3276
  %v3319 = vsel %vm3307, %v3276, %v3278
  %v3320 = vsel %vm3307, %v3280, %v3282
  %v3321 = vsel %vm3307, %v3282, %v3284
  %v3322 = vsel %vm3307, %v3284, %v3286
  %v3323 = vsel %vm3307, %v3286, %v3288
  %v3324 = vsel %vm3307, %v3288, %v3290
  %v3325 = vsel %vm3307, %v3290, %v3292
  %v3326 = vsel %vm3307, %v3294, %v3296
  %v3327 = vsel %vm3307, %v3296, %v3298
  %v3328 = vsel %vm3307, %v3298, %v3300
  %v3329 = vsel %vm3307, %v3300, %v3302
  %v3330 = vsel %vm3307, %v3302, %v3304
  %v3331 = vsel %vm3307, %v3304, %v3306
  %v3357 = vsel %vm603, %v3133, 0
  %v3360 = vsel %vm603, %v3134, 0
  %3362 = vmatprep.subr.bf16.mxu0 %v3309
  %3363 = vmatpush1.bf16.msra.mxu0 %v3308
  %3364 = vmatprep.subr.bf16.mxu0 %v3315
  %3365 = vmatpush1.bf16.msra.mxu0 %v3314
  %3366 = vmatprep.subr.bf16.mxu0 %v3321
  %3367 = vmatpush1.bf16.msra.mxu0 %v3320
  %3368 = vmatprep.subr.bf16.mxu0 %v3327
  %3369 = vmatpush1.bf16.msra.mxu0 %v3326
  %3370 = vmatprep.subr.bf16.mxu0 0
  %3371 = vmatpush1.bf16.msra.mxu0 0
  %3372 = vmatprep.subr.bf16.mxu0 0
  %3373 = vmatpush1.bf16.msra.mxu0 0
  %3374 = vmatprep.subr.bf16.mxu0 0
  %3375 = vmatpush1.bf16.msra.mxu0 0
  %3376 = vmatprep.subr.bf16.mxu0 0
  %3377 = vmatpush1.bf16.msra.mxu0 0
  %3378 = vmatprep.subr.bf16.mxu0 0
  %3379 = vmatpush1.bf16.msra.mxu0 0
  %3380 = vmatprep.subr.bf16.mxu0 0
  %3381 = vmatpush1.bf16.msra.mxu0 0
  %3382 = vmatprep.subr.bf16.mxu0 0
  %3383 = vmatpush1.bf16.msra.mxu0 0
  %3384 = vmatprep.subr.bf16.mxu0 0
  %3385 = vmatpush1.bf16.msra.mxu0 0
  %3386 = vmatprep.subr.bf16.mxu0 0
  %3387 = vmatpush1.bf16.msra.mxu0 0
  %3388 = vmatprep.subr.bf16.mxu0 0
  %3389 = vmatpush1.bf16.msra.mxu0 0
  %3390 = vmatprep.subr.bf16.mxu0 0
  %3391 = vmatpush1.bf16.msra.mxu0 0
  %3392 = vmatprep.subr.bf16.mxu0 0
  %3393 = vmatpush1.bf16.msra.mxu0 0
  %3394 = vmatprep.mubr.bf16.mxu0 0
  %3395 = vmatmul.mubr.bf16.gmra.mrb[0].mxu0 %v3357
  %v3396 = vpop.f32.mrb[0].mxu0
  %v3397 = vadd.f32 0.0, %v3396
  %v3398 = vpop.f32.mrb[0].mxu0
  %v3399 = vadd.f32 0.0, %v3398
  %v3400 = vpop.f32.mrb[0].mxu0
  %v3401 = vadd.f32 0.0, %v3400
  %v3402 = vpop.f32.mrb[0].mxu0
  %v3403 = vadd.f32 0.0, %v3402
  %3404 = vmatprep.mubr.bf16.mxu0 0
  %3405 = vmatmul.mubr.bf16.gmra.mrb[0].mxu0 %v3360
  %v3406 = vpop.f32.mrb[0].mxu0
  %v3407 = vadd.f32 0.0, %v3406
  %v3408 = vpop.f32.mrb[0].mxu0
  %v3409 = vadd.f32 0.0, %v3408
  %v3410 = vpop.f32.mrb[0].mxu0
  %v3411 = vadd.f32 0.0, %v3410
  %v3412 = vpop.f32.mrb[0].mxu0
  %v3413 = vadd.f32 0.0, %v3412
  %3414 = vdwg.mxu0
  %3415 = vmatprep.subr.bf16.mxu0 %v3311
  %3416 = vmatpush1.bf16.msra.mxu0 %v3310
  %3417 = vmatprep.subr.bf16.mxu0 %v3317
  %3418 = vmatpush1.bf16.msra.mxu0 %v3316
  %3419 = vmatprep.subr.bf16.mxu0 %v3323
  %3420 = vmatpush1.bf16.msra.mxu0 %v3322
  %3421 = vmatprep.subr.bf16.mxu0 %v3329
  %3422 = vmatpush1.bf16.msra.mxu0 %v3328
  %3423 = vmatprep.subr.bf16.mxu0 0
  %3424 = vmatpush1.bf16.msra.mxu0 0
  %3425 = vmatprep.subr.bf16.mxu0 0
  %3426 = vmatpush1.bf16.msra.mxu0 0
  %3427 = vmatprep.subr.bf16.mxu0 0
  %3428 = vmatpush1.bf16.msra.mxu0 0
  %3429 = vmatprep.subr.bf16.mxu0 0
  %3430 = vmatpush1.bf16.msra.mxu0 0
  %3431 = vmatprep.subr.bf16.mxu0 0
  %3432 = vmatpush1.bf16.msra.mxu0 0
  %3433 = vmatprep.subr.bf16.mxu0 0
  %3434 = vmatpush1.bf16.msra.mxu0 0
  %3435 = vmatprep.subr.bf16.mxu0 0
  %3436 = vmatpush1.bf16.msra.mxu0 0
  %3437 = vmatprep.subr.bf16.mxu0 0
  %3438 = vmatpush1.bf16.msra.mxu0 0
  %3439 = vmatprep.subr.bf16.mxu0 0
  %3440 = vmatpush1.bf16.msra.mxu0 0
  %3441 = vmatprep.subr.bf16.mxu0 0
  %3442 = vmatpush1.bf16.msra.mxu0 0
  %3443 = vmatprep.subr.bf16.mxu0 0
  %3444 = vmatpush1.bf16.msra.mxu0 0
  %3445 = vmatprep.subr.bf16.mxu0 0
  %3446 = vmatpush1.bf16.msra.mxu0 0
  %3447 = vmatprep.mubr.bf16.mxu0 0
  %3448 = vmatmul.mubr.bf16.gmra.mrb[0].mxu0 %v3357
  %v3449 = vpop.f32.mrb[0].mxu0
  %v3450 = vadd.f32 0.0, %v3449
  %v3451 = vpop.f32.mrb[0].mxu0
  %v3452 = vadd.f32 0.0, %v3451
  %v3453 = vpop.f32.mrb[0].mxu0
  %v3454 = vadd.f32 0.0, %v3453
  %v3455 = vpop.f32.mrb[0].mxu0
  %v3456 = vadd.f32 0.0, %v3455
  %3457 = vmatprep.mubr.bf16.mxu0 0
  %3458 = vmatmul.mubr.bf16.gmra.mrb[0].mxu0 %v3360
  %v3459 = vpop.f32.mrb[0].mxu0
  %v3460 = vadd.f32 0.0, %v3459
  %v3461 = vpop.f32.mrb[0].mxu0
  %v3462 = vadd.f32 0.0, %v3461
  %v3463 = vpop.f32.mrb[0].mxu0
  %v3464 = vadd.f32 0.0, %v3463
  %v3465 = vpop.f32.mrb[0].mxu0
  %v3466 = vadd.f32 0.0, %v3465
  %3467 = vdwg.mxu0
  %3468 = vmatprep.subr.bf16.mxu0 %v3313
  %3469 = vmatpush1.bf16.msra.mxu0 %v3312
  %3470 = vmatprep.subr.bf16.mxu0 %v3319
  %3471 = vmatpush1.bf16.msra.mxu0 %v3318
  %3472 = vmatprep.subr.bf16.mxu0 %v3325
  %3473 = vmatpush1.bf16.msra.mxu0 %v3324
  %3474 = vmatprep.subr.bf16.mxu0 %v3331
  %3475 = vmatpush1.bf16.msra.mxu0 %v3330
  %3476 = vmatprep.subr.bf16.mxu0 0
  %3477 = vmatpush1.bf16.msra.mxu0 0
  %3478 = vmatprep.subr.bf16.mxu0 0
  %3479 = vmatpush1.bf16.msra.mxu0 0
  %3480 = vmatprep.subr.bf16.mxu0 0
  %3481 = vmatpush1.bf16.msra.mxu0 0
  %3482 = vmatprep.subr.bf16.mxu0 0
  %3483 = vmatpush1.bf16.msra.mxu0 0
  %3484 = vmatprep.subr.bf16.mxu0 0
  %3485 = vmatpush1.bf16.msra.mxu0 0
  %3486 = vmatprep.subr.bf16.mxu0 0
  %3487 = vmatpush1.bf16.msra.mxu0 0
  %3488 = vmatprep.subr.bf16.mxu0 0
  %3489 = vmatpush1.bf16.msra.mxu0 0
  %3490 = vmatprep.subr.bf16.mxu0 0
  %3491 = vmatpush1.bf16.msra.mxu0 0
  %3492 = vmatprep.subr.bf16.mxu0 0
  %3493 = vmatpush1.bf16.msra.mxu0 0
  %3494 = vmatprep.subr.bf16.mxu0 0
  %3495 = vmatpush1.bf16.msra.mxu0 0
  %3496 = vmatprep.subr.bf16.mxu0 0
  %3497 = vmatpush1.bf16.msra.mxu0 0
  %3498 = vmatprep.subr.bf16.mxu0 0
  %3499 = vmatpush1.bf16.msra.mxu0 0
  %3500 = vmatprep.mubr.bf16.mxu0 0
  %3501 = vmatmul.mubr.bf16.gmra.mrb[0].mxu0 %v3357
  %v3502 = vpop.f32.mrb[0].mxu0
  %v3503 = vadd.f32 0.0, %v3502
  %v3504 = vpop.f32.mrb[0].mxu0
  %v3505 = vadd.f32 0.0, %v3504
  %v3506 = vpop.f32.mrb[0].mxu0
  %v3507 = vadd.f32 0.0, %v3506
  %v3508 = vpop.f32.mrb[0].mxu0
  %v3509 = vadd.f32 0.0, %v3508
  %3510 = vmatprep.mubr.bf16.mxu0 0
  %3511 = vmatmul.mubr.bf16.gmra.mrb[0].mxu0 %v3360
  %v3512 = vpop.f32.mrb[0].mxu0
  %v3513 = vadd.f32 0.0, %v3512
  %v3514 = vpop.f32.mrb[0].mxu0
  %v3515 = vadd.f32 0.0, %v3514
  %v3516 = vpop.f32.mrb[0].mxu0
  %v3517 = vadd.f32 0.0, %v3516
  %v3518 = vpop.f32.mrb[0].mxu0
  %v3519 = vadd.f32 0.0, %v3518
  %3520 = vdwg.mxu0
  %v3521 = vadd.f32 %v3064, %v3397
  %v3522 = vadd.f32 %v3065, %v3399
  %v3523 = vadd.f32 %v3066, %v3450
  %v3524 = vadd.f32 %v3067, %v3452
  %v3525 = vadd.f32 %v3068, %v3503
  %v3526 = vadd.f32 %v3069, %v3505
  %v3527 = vadd.f32 %v3070, %v3401
  %v3528 = vadd.f32 %v3071, %v3403
  %v3529 = vadd.f32 %v3072, %v3454
  %v3530 = vadd.f32 %v3073, %v3456
  %v3531 = vadd.f32 %v3074, %v3507
  %v3532 = vadd.f32 %v3075, %v3509
  %v3533 = vadd.f32 %v3076, %v3407
  %v3534 = vadd.f32 %v3077, %v3409
  %v3535 = vadd.f32 %v3078, %v3460
  %v3536 = vadd.f32 %v3079, %v3462
  %v3537 = vadd.f32 %v3080, %v3513
  %v3538 = vadd.f32 %v3081, %v3515
  %v3539 = vadd.f32 %v3082, %v3411
  %v3540 = vadd.f32 %v3083, %v3413
  %v3541 = vadd.f32 %v3084, %v3464
  %v3542 = vadd.f32 %v3085, %v3466
  %v3543 = vadd.f32 %v3086, %v3517
  %v3544 = vadd.f32 %v3087, %v3519
  %s3545 = scalar_lea.vmem %s3, 80
  %v3546 = vld [vmem:[%s3545] sm:$0xf]
  %v3547 = vld [vmem:[%s3545 + $0x4] sm:$0xf]
  %v3548 = vld [vmem:[%s3545 + $0x8] sm:$0xf]
  %v3549 = vld [vmem:[%s3545 + $0xc] sm:$0xf]
  %v3550 = vld [vmem:[%s1 + $0x4] sm:$0xff]
  %v3551 = vld [vmem:[%s1 + $0xc] sm:$0xff]
  %v3552 = vld [vmem:[%s1 + $0x14] sm:$0xff]
  %v3553 = vld [vmem:[%s1 + $0x1c] sm:$0xf]
  %v3554 = vld [vmem:[%s1 + $0x24] sm:$0xff]
  %v3555 = vld [vmem:[%s1 + $0x2c] sm:$0xff]
  %v3556 = vld [vmem:[%s1 + $0x34] sm:$0xff]
  %v3557 = vld [vmem:[%s1 + $0x3c] sm:$0xf]
  %v3558 = vld [vmem:[%s1 + $0x44] sm:$0xff]
  %v3559 = vld [vmem:[%s1 + $0x4c] sm:$0xff]
  %v3560 = vld [vmem:[%s1 + $0x54] sm:$0xff]
  %v3561 = vld [vmem:[%s1 + $0x5c] sm:$0xf]
  %v3562 = vld [vmem:[%s1 + $0x64] sm:$0xff]
  %v3563 = vld [vmem:[%s1 + $0x6c] sm:$0xff]
  %v3564 = vld [vmem:[%s1 + $0x74] sm:$0xff]
  %v3565 = vld [vmem:[%s1 + $0x7c] sm:$0xf]
  %v3570 = vunpack.c.l.b16 %v3546
  %v3571 = vunpack.c.l.b16 %v3547
  %v3572 = vunpack.c.l.b16 %v3548
  %v3573 = vunpack.c.l.b16 %v3549
  %v3574 = vpack.c.b16 %v3571, %v3570
  %v3575 = vpack.c.b16 %v3573, %v3572
  %v3592 = vunpack.c.l.b16 %v3550
  %v3593 = vunpack.c.h.b16 %v3550
  %v3594 = vunpack.c.l.b16 %v3551
  %v3595 = vunpack.c.h.b16 %v3551
  %v3596 = vunpack.c.l.b16 %v3552
  %v3597 = vunpack.c.h.b16 %v3552
  %v3598 = vunpack.c.l.b16 %v3553
  %v3599 = vunpack.c.l.b16 %v3554
  %v3600 = vunpack.c.h.b16 %v3554
  %v3601 = vunpack.c.l.b16 %v3555
  %v3602 = vunpack.c.h.b16 %v3555
  %v3603 = vunpack.c.l.b16 %v3556
  %v3604 = vunpack.c.h.b16 %v3556
  %v3605 = vunpack.c.l.b16 %v3557
  %v3606 = vunpack.c.l.b16 %v3558
  %v3607 = vunpack.c.h.b16 %v3558
  %v3608 = vunpack.c.l.b16 %v3559
  %v3609 = vunpack.c.h.b16 %v3559
  %v3610 = vunpack.c.l.b16 %v3560
  %v3611 = vunpack.c.h.b16 %v3560
  %v3612 = vunpack.c.l.b16 %v3561
  %v3613 = vunpack.c.l.b16 %v3562
  %v3614 = vunpack.c.h.b16 %v3562
  %v3615 = vunpack.c.l.b16 %v3563
  %v3616 = vunpack.c.h.b16 %v3563
  %v3617 = vunpack.c.l.b16 %v3564
  %v3618 = vunpack.c.h.b16 %v3564
  %v3619 = vunpack.c.l.b16 %v3565
  %v3620 = vpack.c.b16 %v3599, %v3592
  %v3621 = vpack.c.b16 %v3600, %v3593
  %v3622 = vpack.c.b16 %v3601, %v3594
  %v3623 = vpack.c.b16 %v3602, %v3595
  %v3624 = vpack.c.b16 %v3603, %v3596
  %v3625 = vpack.c.b16 %v3604, %v3597
  %v3626 = vpack.c.b16 %v3605, %v3598
  %v3627 = vpack.c.b16 %v3613, %v3606
  %v3628 = vpack.c.b16 %v3614, %v3607
  %v3629 = vpack.c.b16 %v3615, %v3608
  %v3630 = vpack.c.b16 %v3616, %v3609
  %v3631 = vpack.c.b16 %v3617, %v3610
  %v3632 = vpack.c.b16 %v3618, %v3611
  %v3633 = vpack.c.b16 %v3619, %v3612
  %3634 = vrot.lane.b32.xlu0 %v3620, 127
  %v3635 = vpop.permute.xlu0 %3634
  %3636 = vrot.lane.b32.xlu0 %v3621, 127
  %v3637 = vpop.permute.xlu0 %3636
  %3638 = vrot.lane.b32.xlu0 %v3622, 127
  %v3639 = vpop.permute.xlu0 %3638
  %3640 = vrot.lane.b32.xlu0 %v3623, 127
  %v3641 = vpop.permute.xlu0 %3640
  %3642 = vrot.lane.b32.xlu0 %v3624, 127
  %v3643 = vpop.permute.xlu0 %3642
  %3644 = vrot.lane.b32.xlu0 %v3625, 127
  %v3645 = vpop.permute.xlu0 %3644
  %3646 = vrot.lane.b32.xlu0 %v3626, 127
  %v3647 = vpop.permute.xlu0 %3646
  %3648 = vrot.lane.b32.xlu0 %v3627, 127
  %v3649 = vpop.permute.xlu0 %3648
  %3650 = vrot.lane.b32.xlu0 %v3628, 127
  %v3651 = vpop.permute.xlu0 %3650
  %3652 = vrot.lane.b32.xlu0 %v3629, 127
  %v3653 = vpop.permute.xlu0 %3652
  %3654 = vrot.lane.b32.xlu0 %v3630, 127
  %v3655 = vpop.permute.xlu0 %3654
  %3656 = vrot.lane.b32.xlu0 %v3631, 127
  %v3657 = vpop.permute.xlu0 %3656
  %3658 = vrot.lane.b32.xlu0 %v3632, 127
  %v3659 = vpop.permute.xlu0 %3658
  %3660 = vrot.lane.b32.xlu0 %v3633, 127
  %v3661 = vpop.permute.xlu0 %3660
  %v3662 = vsel %vm3307, %v3635, %v3637
  %v3663 = vsel %vm3307, %v3637, %v3639
  %v3664 = vsel %vm3307, %v3639, %v3641
  %v3665 = vsel %vm3307, %v3641, %v3643
  %v3666 = vsel %vm3307, %v3643, %v3645
  %v3667 = vsel %vm3307, %v3645, %v3647
  %v3668 = vsel %vm3307, %v3649, %v3651
  %v3669 = vsel %vm3307, %v3651, %v3653
  %v3670 = vsel %vm3307, %v3653, %v3655
  %v3671 = vsel %vm3307, %v3655, %v3657
  %v3672 = vsel %vm3307, %v3657, %v3659
  %v3673 = vsel %vm3307, %v3659, %v3661
  %v3687 = vsel %vm207, %v3574, 0
  %v3690 = vsel %vm207, %v3575, 0
  %3692 = vmatprep.subr.bf16.mxu0 %v3663
  %3693 = vmatpush1.bf16.msra.mxu0 %v3662
  %3694 = vmatprep.subr.bf16.mxu0 %v3669
  %3695 = vmatpush1.bf16.msra.mxu0 %v3668
  %3696 = vmatprep.subr.bf16.mxu0 0
  %3697 = vmatpush1.bf16.msra.mxu0 0
  %3698 = vmatprep.subr.bf16.mxu0 0
  %3699 = vmatpush1.bf16.msra.mxu0 0
  %3700 = vmatprep.subr.bf16.mxu0 0
  %3701 = vmatpush1.bf16.msra.mxu0 0
  %3702 = vmatprep.subr.bf16.mxu0 0
  %3703 = vmatpush1.bf16.msra.mxu0 0
  %3704 = vmatprep.subr.bf16.mxu0 0
  %3705 = vmatpush1.bf16.msra.mxu0 0
  %3706 = vmatprep.subr.bf16.mxu0 0
  %3707 = vmatpush1.bf16.msra.mxu0 0
  %3708 = vmatprep.subr.bf16.mxu0 0
  %3709 = vmatpush1.bf16.msra.mxu0 0
  %3710 = vmatprep.subr.bf16.mxu0 0
  %3711 = vmatpush1.bf16.msra.mxu0 0
  %3712 = vmatprep.subr.bf16.mxu0 0
  %3713 = vmatpush1.bf16.msra.mxu0 0
  %3714 = vmatprep.subr.bf16.mxu0 0
  %3715 = vmatpush1.bf16.msra.mxu0 0
  %3716 = vmatprep.subr.bf16.mxu0 0
  %3717 = vmatpush1.bf16.msra.mxu0 0
  %3718 = vmatprep.subr.bf16.mxu0 0
  %3719 = vmatpush1.bf16.msra.mxu0 0
  %3720 = vmatprep.subr.bf16.mxu0 0
  %3721 = vmatpush1.bf16.msra.mxu0 0
  %3722 = vmatprep.subr.bf16.mxu0 0
  %3723 = vmatpush1.bf16.msra.mxu0 0
  %3724 = vmatprep.mubr.bf16.mxu0 0
  %3725 = vmatmul.mubr.bf16.gmra.mrb[0].mxu0 %v3687
  %v3726 = vpop.f32.mrb[0].mxu0
  %v3727 = vadd.f32 0.0, %v3726
  %v3728 = vpop.f32.mrb[0].mxu0
  %v3729 = vadd.f32 0.0, %v3728
  %v3730 = vpop.f32.mrb[0].mxu0
  %v3731 = vadd.f32 0.0, %v3730
  %v3732 = vpop.f32.mrb[0].mxu0
  %v3733 = vadd.f32 0.0, %v3732
  %3734 = vmatprep.mubr.bf16.mxu0 0
  %3735 = vmatmul.mubr.bf16.gmra.mrb[0].mxu0 %v3690
  %v3736 = vpop.f32.mrb[0].mxu0
  %v3737 = vadd.f32 0.0, %v3736
  %v3738 = vpop.f32.mrb[0].mxu0
  %v3739 = vadd.f32 0.0, %v3738
  %v3740 = vpop.f32.mrb[0].mxu0
  %v3741 = vadd.f32 0.0, %v3740
  %v3742 = vpop.f32.mrb[0].mxu0
  %v3743 = vadd.f32 0.0, %v3742
  %3744 = vdwg.mxu0
  %3745 = vmatprep.subr.bf16.mxu0 %v3665
  %3746 = vmatpush1.bf16.msra.mxu0 %v3664
  %3747 = vmatprep.subr.bf16.mxu0 %v3671
  %3748 = vmatpush1.bf16.msra.mxu0 %v3670
  %3749 = vmatprep.subr.bf16.mxu0 0
  %3750 = vmatpush1.bf16.msra.mxu0 0
  %3751 = vmatprep.subr.bf16.mxu0 0
  %3752 = vmatpush1.bf16.msra.mxu0 0
  %3753 = vmatprep.subr.bf16.mxu0 0
  %3754 = vmatpush1.bf16.msra.mxu0 0
  %3755 = vmatprep.subr.bf16.mxu0 0
  %3756 = vmatpush1.bf16.msra.mxu0 0
  %3757 = vmatprep.subr.bf16.mxu0 0
  %3758 = vmatpush1.bf16.msra.mxu0 0
  %3759 = vmatprep.subr.bf16.mxu0 0
  %3760 = vmatpush1.bf16.msra.mxu0 0
  %3761 = vmatprep.subr.bf16.mxu0 0
  %3762 = vmatpush1.bf16.msra.mxu0 0
  %3763 = vmatprep.subr.bf16.mxu0 0
  %3764 = vmatpush1.bf16.msra.mxu0 0
  %3765 = vmatprep.subr.bf16.mxu0 0
  %3766 = vmatpush1.bf16.msra.mxu0 0
  %3767 = vmatprep.subr.bf16.mxu0 0
  %3768 = vmatpush1.bf16.msra.mxu0 0
  %3769 = vmatprep.subr.bf16.mxu0 0
  %3770 = vmatpush1.bf16.msra.mxu0 0
  %3771 = vmatprep.subr.bf16.mxu0 0
  %3772 = vmatpush1.bf16.msra.mxu0 0
  %3773 = vmatprep.subr.bf16.mxu0 0
  %3774 = vmatpush1.bf16.msra.mxu0 0
  %3775 = vmatprep.subr.bf16.mxu0 0
  %3776 = vmatpush1.bf16.msra.mxu0 0
  %3777 = vmatprep.mubr.bf16.mxu0 0
  %3778 = vmatmul.mubr.bf16.gmra.mrb[0].mxu0 %v3687
  %v3779 = vpop.f32.mrb[0].mxu0
  %v3780 = vadd.f32 0.0, %v3779
  %v3781 = vpop.f32.mrb[0].mxu0
  %v3782 = vadd.f32 0.0, %v3781
  %v3783 = vpop.f32.mrb[0].mxu0
  %v3784 = vadd.f32 0.0, %v3783
  %v3785 = vpop.f32.mrb[0].mxu0
  %v3786 = vadd.f32 0.0, %v3785
  %3787 = vmatprep.mubr.bf16.mxu0 0
  %3788 = vmatmul.mubr.bf16.gmra.mrb[0].mxu0 %v3690
  %v3789 = vpop.f32.mrb[0].mxu0
  %v3790 = vadd.f32 0.0, %v3789
  %v3791 = vpop.f32.mrb[0].mxu0
  %v3792 = vadd.f32 0.0, %v3791
  %v3793 = vpop.f32.mrb[0].mxu0
  %v3794 = vadd.f32 0.0, %v3793
  %v3795 = vpop.f32.mrb[0].mxu0
  %v3796 = vadd.f32 0.0, %v3795
  %3797 = vdwg.mxu0
  %3798 = vmatprep.subr.bf16.mxu0 %v3667
  %3799 = vmatpush1.bf16.msra.mxu0 %v3666
  %3800 = vmatprep.subr.bf16.mxu0 %v3673
  %3801 = vmatpush1.bf16.msra.mxu0 %v3672
  %3802 = vmatprep.subr.bf16.mxu0 0
  %3803 = vmatpush1.bf16.msra.mxu0 0
  %3804 = vmatprep.subr.bf16.mxu0 0
  %3805 = vmatpush1.bf16.msra.mxu0 0
  %3806 = vmatprep.subr.bf16.mxu0 0
  %3807 = vmatpush1.bf16.msra.mxu0 0
  %3808 = vmatprep.subr.bf16.mxu0 0
  %3809 = vmatpush1.bf16.msra.mxu0 0
  %3810 = vmatprep.subr.bf16.mxu0 0
  %3811 = vmatpush1.bf16.msra.mxu0 0
  %3812 = vmatprep.subr.bf16.mxu0 0
  %3813 = vmatpush1.bf16.msra.mxu0 0
  %3814 = vmatprep.subr.bf16.mxu0 0
  %3815 = vmatpush1.bf16.msra.mxu0 0
  %3816 = vmatprep.subr.bf16.mxu0 0
  %3817 = vmatpush1.bf16.msra.mxu0 0
  %3818 = vmatprep.subr.bf16.mxu0 0
  %3819 = vmatpush1.bf16.msra.mxu0 0
  %3820 = vmatprep.subr.bf16.mxu0 0
  %3821 = vmatpush1.bf16.msra.mxu0 0
  %3822 = vmatprep.subr.bf16.mxu0 0
  %3823 = vmatpush1.bf16.msra.mxu0 0
  %3824 = vmatprep.subr.bf16.mxu0 0
  %3825 = vmatpush1.bf16.msra.mxu0 0
  %3826 = vmatprep.subr.bf16.mxu0 0
  %3827 = vmatpush1.bf16.msra.mxu0 0
  %3828 = vmatprep.subr.bf16.mxu0 0
  %3829 = vmatpush1.bf16.msra.mxu0 0
  %3830 = vmatprep.mubr.bf16.mxu0 0
  %3831 = vmatmul.mubr.bf16.gmra.mrb[0].mxu0 %v3687
  %v3832 = vpop.f32.mrb[0].mxu0
  %v3833 = vadd.f32 0.0, %v3832
  %v3834 = vpop.f32.mrb[0].mxu0
  %v3835 = vadd.f32 0.0, %v3834
  %v3836 = vpop.f32.mrb[0].mxu0
  %v3837 = vadd.f32 0.0, %v3836
  %v3838 = vpop.f32.mrb[0].mxu0
  %v3839 = vadd.f32 0.0, %v3838
  %3840 = vmatprep.mubr.bf16.mxu0 0
  %3841 = vmatmul.mubr.bf16.gmra.mrb[0].mxu0 %v3690
  %v3842 = vpop.f32.mrb[0].mxu0
  %v3843 = vadd.f32 0.0, %v3842
  %v3844 = vpop.f32.mrb[0].mxu0
  %v3845 = vadd.f32 0.0, %v3844
  %v3846 = vpop.f32.mrb[0].mxu0
  %v3847 = vadd.f32 0.0, %v3846
  %v3848 = vpop.f32.mrb[0].mxu0
  %v3849 = vadd.f32 0.0, %v3848
  %3850 = vdwg.mxu0
  %v3851 = vadd.f32 %v3521, %v3727
  %v3852 = vadd.f32 %v3522, %v3729
  %v3853 = vadd.f32 %v3523, %v3780
  %v3854 = vadd.f32 %v3524, %v3782
  %v3855 = vadd.f32 %v3525, %v3833
  %v3856 = vadd.f32 %v3526, %v3835
  %v3857 = vadd.f32 %v3527, %v3731
  %v3858 = vadd.f32 %v3528, %v3733
  %v3859 = vadd.f32 %v3529, %v3784
  %v3860 = vadd.f32 %v3530, %v3786
  %v3861 = vadd.f32 %v3531, %v3837
  %v3862 = vadd.f32 %v3532, %v3839
  %v3863 = vadd.f32 %v3533, %v3737
  %v3864 = vadd.f32 %v3534, %v3739
  %v3865 = vadd.f32 %v3535, %v3790
  %v3866 = vadd.f32 %v3536, %v3792
  %v3867 = vadd.f32 %v3537, %v3843
  %v3868 = vadd.f32 %v3538, %v3845
  %v3869 = vadd.f32 %v3539, %v3741
  %v3870 = vadd.f32 %v3540, %v3743
  %v3871 = vadd.f32 %v3541, %v3794
  %v3872 = vadd.f32 %v3542, %v3796
  %v3873 = vadd.f32 %v3543, %v3847
  %v3874 = vadd.f32 %v3544, %v3849
  %s3875 = scalar_lea.vmem %s2, 96
  %v3876 = vld [vmem:[%s3875] sm:$0xf]
  %v3877 = vld [vmem:[%s3875 + $0x4] sm:$0xf]
  %v3878 = vld [vmem:[%s3875 + $0x8] sm:$0xf]
  %v3879 = vld [vmem:[%s3875 + $0xc] sm:$0xf]
  %v3884 = vunpack.c.l.b16 %v3876
  %v3885 = vunpack.c.l.b16 %v3877
  %v3886 = vunpack.c.l.b16 %v3878
  %v3887 = vunpack.c.l.b16 %v3879
  %v3888 = vpack.c.b16 %v3885, %v3884
  %v3889 = vpack.c.b16 %v3887, %v3886
  %3890 = vrot.lane.b32.xlu0 %v3223, 111
  %v3891 = vpop.permute.xlu0 %3890
  %3892 = vrot.lane.b32.xlu0 %v3224, 111
  %v3893 = vpop.permute.xlu0 %3892
  %3894 = vrot.lane.b32.xlu0 %v3225, 111
  %v3895 = vpop.permute.xlu0 %3894
  %3896 = vrot.lane.b32.xlu0 %v3226, 111
  %v3897 = vpop.permute.xlu0 %3896
  %3898 = vrot.lane.b32.xlu0 %v3227, 111
  %v3899 = vpop.permute.xlu0 %3898
  %3900 = vrot.lane.b32.xlu0 %v3228, 111
  %v3901 = vpop.permute.xlu0 %3900
  %3902 = vrot.lane.b32.xlu0 %v3229, 111
  %v3903 = vpop.permute.xlu0 %3902
  %3904 = vrot.lane.b32.xlu0 %v3230, 111
  %v3905 = vpop.permute.xlu0 %3904
  %3906 = vrot.lane.b32.xlu0 %v3231, 111
  %v3907 = vpop.permute.xlu0 %3906
  %3908 = vrot.lane.b32.xlu0 %v3232, 111
  %v3909 = vpop.permute.xlu0 %3908
  %3910 = vrot.lane.b32.xlu0 %v3233, 111
  %v3911 = vpop.permute.xlu0 %3910
  %3912 = vrot.lane.b32.xlu0 %v3234, 111
  %v3913 = vpop.permute.xlu0 %3912
  %3914 = vrot.lane.b32.xlu0 %v3235, 111
  %v3915 = vpop.permute.xlu0 %3914
  %3916 = vrot.lane.b32.xlu0 %v3236, 111
  %v3917 = vpop.permute.xlu0 %3916
  %3918 = vrot.lane.b32.xlu0 %v3237, 111
  %v3919 = vpop.permute.xlu0 %3918
  %3920 = vrot.lane.b32.xlu0 %v3238, 111
  %v3921 = vpop.permute.xlu0 %3920
  %3922 = vrot.lane.b32.xlu0 %v3239, 111
  %v3923 = vpop.permute.xlu0 %3922
  %3924 = vrot.lane.b32.xlu0 %v3240, 111
  %v3925 = vpop.permute.xlu0 %3924
  %3926 = vrot.lane.b32.xlu0 %v3241, 111
  %v3927 = vpop.permute.xlu0 %3926
  %3928 = vrot.lane.b32.xlu0 %v3242, 111
  %v3929 = vpop.permute.xlu0 %3928
  %3930 = vrot.lane.b32.xlu0 %v3243, 111
  %v3931 = vpop.permute.xlu0 %3930
  %3932 = vrot.lane.b32.xlu0 %v3244, 111
  %v3933 = vpop.permute.xlu0 %3932
  %3934 = vrot.lane.b32.xlu0 %v3245, 111
  %v3935 = vpop.permute.xlu0 %3934
  %3936 = vrot.lane.b32.xlu0 %v3246, 111
  %v3937 = vpop.permute.xlu0 %3936
  %3938 = vrot.lane.b32.xlu0 %v3247, 111
  %v3939 = vpop.permute.xlu0 %3938
  %3940 = vrot.lane.b32.xlu0 %v3248, 111
  %v3941 = vpop.permute.xlu0 %3940
  %3942 = vrot.lane.b32.xlu0 %v3249, 111
  %v3943 = vpop.permute.xlu0 %3942
  %3944 = vrot.lane.b32.xlu0 %v3250, 111
  %v3945 = vpop.permute.xlu0 %3944
  %vm3946 = vcmask 908288
  %v3947 = vsel %vm3946, %v3891, %v3893
  %v3948 = vsel %vm3946, %v3893, %v3895
  %v3949 = vsel %vm3946, %v3895, %v3897
  %v3950 = vsel %vm3946, %v3897, %v3899
  %v3951 = vsel %vm3946, %v3899, %v3901
  %v3952 = vsel %vm3946, %v3901, %v3903
  %v3953 = vsel %vm3946, %v3905, %v3907
  %v3954 = vsel %vm3946, %v3907, %v3909
  %v3955 = vsel %vm3946, %v3909, %v3911
  %v3956 = vsel %vm3946, %v3911, %v3913
  %v3957 = vsel %vm3946, %v3913, %v3915
  %v3958 = vsel %vm3946, %v3915, %v3917
  %v3959 = vsel %vm3946, %v3919, %v3921
  %v3960 = vsel %vm3946, %v3921, %v3923
  %v3961 = vsel %vm3946, %v3923, %v3925
  %v3962 = vsel %vm3946, %v3925, %v3927
  %v3963 = vsel %vm3946, %v3927, %v3929
  %v3964 = vsel %vm3946, %v3929, %v3931
  %v3965 = vsel %vm3946, %v3933, %v3935
  %v3966 = vsel %vm3946, %v3935, %v3937
  %v3967 = vsel %vm3946, %v3937, %v3939
  %v3968 = vsel %vm3946, %v3939, %v3941
  %v3969 = vsel %vm3946, %v3941, %v3943
  %v3970 = vsel %vm3946, %v3943, %v3945
  %v3996 = vsel %vm603, %v3888, 0
  %v3999 = vsel %vm603, %v3889, 0
  %4001 = vmatprep.subr.bf16.mxu0 %v3948
  %4002 = vmatpush1.bf16.msra.mxu0 %v3947
  %4003 = vmatprep.subr.bf16.mxu0 %v3954
  %4004 = vmatpush1.bf16.msra.mxu0 %v3953
  %4005 = vmatprep.subr.bf16.mxu0 %v3960
  %4006 = vmatpush1.bf16.msra.mxu0 %v3959
  %4007 = vmatprep.subr.bf16.mxu0 %v3966
  %4008 = vmatpush1.bf16.msra.mxu0 %v3965
  %4009 = vmatprep.subr.bf16.mxu0 0
  %4010 = vmatpush1.bf16.msra.mxu0 0
  %4011 = vmatprep.subr.bf16.mxu0 0
  %4012 = vmatpush1.bf16.msra.mxu0 0
  %4013 = vmatprep.subr.bf16.mxu0 0
  %4014 = vmatpush1.bf16.msra.mxu0 0
  %4015 = vmatprep.subr.bf16.mxu0 0
  %4016 = vmatpush1.bf16.msra.mxu0 0
  %4017 = vmatprep.subr.bf16.mxu0 0
  %4018 = vmatpush1.bf16.msra.mxu0 0
  %4019 = vmatprep.subr.bf16.mxu0 0
  %4020 = vmatpush1.bf16.msra.mxu0 0
  %4021 = vmatprep.subr.bf16.mxu0 0
  %4022 = vmatpush1.bf16.msra.mxu0 0
  %4023 = vmatprep.subr.bf16.mxu0 0
  %4024 = vmatpush1.bf16.msra.mxu0 0
  %4025 = vmatprep.subr.bf16.mxu0 0
  %4026 = vmatpush1.bf16.msra.mxu0 0
  %4027 = vmatprep.subr.bf16.mxu0 0
  %4028 = vmatpush1.bf16.msra.mxu0 0
  %4029 = vmatprep.subr.bf16.mxu0 0
  %4030 = vmatpush1.bf16.msra.mxu0 0
  %4031 = vmatprep.subr.bf16.mxu0 0
  %4032 = vmatpush1.bf16.msra.mxu0 0
  %4033 = vmatprep.mubr.bf16.mxu0 0
  %4034 = vmatmul.mubr.bf16.gmra.mrb[0].mxu0 %v3996
  %v4035 = vpop.f32.mrb[0].mxu0
  %v4036 = vadd.f32 0.0, %v4035
  %v4037 = vpop.f32.mrb[0].mxu0
  %v4038 = vadd.f32 0.0, %v4037
  %v4039 = vpop.f32.mrb[0].mxu0
  %v4040 = vadd.f32 0.0, %v4039
  %v4041 = vpop.f32.mrb[0].mxu0
  %v4042 = vadd.f32 0.0, %v4041
  %4043 = vmatprep.mubr.bf16.mxu0 0
  %4044 = vmatmul.mubr.bf16.gmra.mrb[0].mxu0 %v3999
  %v4045 = vpop.f32.mrb[0].mxu0
  %v4046 = vadd.f32 0.0, %v4045
  %v4047 = vpop.f32.mrb[0].mxu0
  %v4048 = vadd.f32 0.0, %v4047
  %v4049 = vpop.f32.mrb[0].mxu0
  %v4050 = vadd.f32 0.0, %v4049
  %v4051 = vpop.f32.mrb[0].mxu0
  %v4052 = vadd.f32 0.0, %v4051
  %4053 = vdwg.mxu0
  %4054 = vmatprep.subr.bf16.mxu0 %v3950
  %4055 = vmatpush1.bf16.msra.mxu0 %v3949
  %4056 = vmatprep.subr.bf16.mxu0 %v3956
  %4057 = vmatpush1.bf16.msra.mxu0 %v3955
  %4058 = vmatprep.subr.bf16.mxu0 %v3962
  %4059 = vmatpush1.bf16.msra.mxu0 %v3961
  %4060 = vmatprep.subr.bf16.mxu0 %v3968
  %4061 = vmatpush1.bf16.msra.mxu0 %v3967
  %4062 = vmatprep.subr.bf16.mxu0 0
  %4063 = vmatpush1.bf16.msra.mxu0 0
  %4064 = vmatprep.subr.bf16.mxu0 0
  %4065 = vmatpush1.bf16.msra.mxu0 0
  %4066 = vmatprep.subr.bf16.mxu0 0
  %4067 = vmatpush1.bf16.msra.mxu0 0
  %4068 = vmatprep.subr.bf16.mxu0 0
  %4069 = vmatpush1.bf16.msra.mxu0 0
  %4070 = vmatprep.subr.bf16.mxu0 0
  %4071 = vmatpush1.bf16.msra.mxu0 0
  %4072 = vmatprep.subr.bf16.mxu0 0
  %4073 = vmatpush1.bf16.msra.mxu0 0
  %4074 = vmatprep.subr.bf16.mxu0 0
  %4075 = vmatpush1.bf16.msra.mxu0 0
  %4076 = vmatprep.subr.bf16.mxu0 0
  %4077 = vmatpush1.bf16.msra.mxu0 0
  %4078 = vmatprep.subr.bf16.mxu0 0
  %4079 = vmatpush1.bf16.msra.mxu0 0
  %4080 = vmatprep.subr.bf16.mxu0 0
  %4081 = vmatpush1.bf16.msra.mxu0 0
  %4082 = vmatprep.subr.bf16.mxu0 0
  %4083 = vmatpush1.bf16.msra.mxu0 0
  %4084 = vmatprep.subr.bf16.mxu0 0
  %4085 = vmatpush1.bf16.msra.mxu0 0
  %4086 = vmatprep.mubr.bf16.mxu0 0
  %4087 = vmatmul.mubr.bf16.gmra.mrb[0].mxu0 %v3996
  %v4088 = vpop.f32.mrb[0].mxu0
  %v4089 = vadd.f32 0.0, %v4088
  %v4090 = vpop.f32.mrb[0].mxu0
  %v4091 = vadd.f32 0.0, %v4090
  %v4092 = vpop.f32.mrb[0].mxu0
  %v4093 = vadd.f32 0.0, %v4092
  %v4094 = vpop.f32.mrb[0].mxu0
  %v4095 = vadd.f32 0.0, %v4094
  %4096 = vmatprep.mubr.bf16.mxu0 0
  %4097 = vmatmul.mubr.bf16.gmra.mrb[0].mxu0 %v3999
  %v4098 = vpop.f32.mrb[0].mxu0
  %v4099 = vadd.f32 0.0, %v4098
  %v4100 = vpop.f32.mrb[0].mxu0
  %v4101 = vadd.f32 0.0, %v4100
  %v4102 = vpop.f32.mrb[0].mxu0
  %v4103 = vadd.f32 0.0, %v4102
  %v4104 = vpop.f32.mrb[0].mxu0
  %v4105 = vadd.f32 0.0, %v4104
  %4106 = vdwg.mxu0
  %4107 = vmatprep.subr.bf16.mxu0 %v3952
  %4108 = vmatpush1.bf16.msra.mxu0 %v3951
  %4109 = vmatprep.subr.bf16.mxu0 %v3958
  %4110 = vmatpush1.bf16.msra.mxu0 %v3957
  %4111 = vmatprep.subr.bf16.mxu0 %v3964
  %4112 = vmatpush1.bf16.msra.mxu0 %v3963
  %4113 = vmatprep.subr.bf16.mxu0 %v3970
  %4114 = vmatpush1.bf16.msra.mxu0 %v3969
  %4115 = vmatprep.subr.bf16.mxu0 0
  %4116 = vmatpush1.bf16.msra.mxu0 0
  %4117 = vmatprep.subr.bf16.mxu0 0
  %4118 = vmatpush1.bf16.msra.mxu0 0
  %4119 = vmatprep.subr.bf16.mxu0 0
  %4120 = vmatpush1.bf16.msra.mxu0 0
  %4121 = vmatprep.subr.bf16.mxu0 0
  %4122 = vmatpush1.bf16.msra.mxu0 0
  %4123 = vmatprep.subr.bf16.mxu0 0
  %4124 = vmatpush1.bf16.msra.mxu0 0
  %4125 = vmatprep.subr.bf16.mxu0 0
  %4126 = vmatpush1.bf16.msra.mxu0 0
  %4127 = vmatprep.subr.bf16.mxu0 0
  %4128 = vmatpush1.bf16.msra.mxu0 0
  %4129 = vmatprep.subr.bf16.mxu0 0
  %4130 = vmatpush1.bf16.msra.mxu0 0
  %4131 = vmatprep.subr.bf16.mxu0 0
  %4132 = vmatpush1.bf16.msra.mxu0 0
  %4133 = vmatprep.subr.bf16.mxu0 0
  %4134 = vmatpush1.bf16.msra.mxu0 0
  %4135 = vmatprep.subr.bf16.mxu0 0
  %4136 = vmatpush1.bf16.msra.mxu0 0
  %4137 = vmatprep.subr.bf16.mxu0 0
  %4138 = vmatpush1.bf16.msra.mxu0 0
  %4139 = vmatprep.mubr.bf16.mxu0 0
  %4140 = vmatmul.mubr.bf16.gmra.mrb[0].mxu0 %v3996
  %v4141 = vpop.f32.mrb[0].mxu0
  %v4142 = vadd.f32 0.0, %v4141
  %v4143 = vpop.f32.mrb[0].mxu0
  %v4144 = vadd.f32 0.0, %v4143
  %v4145 = vpop.f32.mrb[0].mxu0
  %v4146 = vadd.f32 0.0, %v4145
  %v4147 = vpop.f32.mrb[0].mxu0
  %v4148 = vadd.f32 0.0, %v4147
  %4149 = vmatprep.mubr.bf16.mxu0 0
  %4150 = vmatmul.mubr.bf16.gmra.mrb[0].mxu0 %v3999
  %v4151 = vpop.f32.mrb[0].mxu0
  %v4152 = vadd.f32 0.0, %v4151
  %v4153 = vpop.f32.mrb[0].mxu0
  %v4154 = vadd.f32 0.0, %v4153
  %v4155 = vpop.f32.mrb[0].mxu0
  %v4156 = vadd.f32 0.0, %v4155
  %v4157 = vpop.f32.mrb[0].mxu0
  %v4158 = vadd.f32 0.0, %v4157
  %4159 = vdwg.mxu0
  %v4160 = vadd.f32 %v3851, %v4036
  %v4161 = vadd.f32 %v3852, %v4038
  %v4162 = vadd.f32 %v3853, %v4089
  %v4163 = vadd.f32 %v3854, %v4091
  %v4164 = vadd.f32 %v3855, %v4142
  %v4165 = vadd.f32 %v3856, %v4144
  %v4166 = vadd.f32 %v3857, %v4040
  %v4167 = vadd.f32 %v3858, %v4042
  %v4168 = vadd.f32 %v3859, %v4093
  %v4169 = vadd.f32 %v3860, %v4095
  %v4170 = vadd.f32 %v3861, %v4146
  %v4171 = vadd.f32 %v3862, %v4148
  %v4172 = vadd.f32 %v3863, %v4046
  %v4173 = vadd.f32 %v3864, %v4048
  %v4174 = vadd.f32 %v3865, %v4099
  %v4175 = vadd.f32 %v3866, %v4101
  %v4176 = vadd.f32 %v3867, %v4152
  %v4177 = vadd.f32 %v3868, %v4154
  %v4178 = vadd.f32 %v3869, %v4050
  %v4179 = vadd.f32 %v3870, %v4052
  %v4180 = vadd.f32 %v3871, %v4103
  %v4181 = vadd.f32 %v3872, %v4105
  %v4182 = vadd.f32 %v3873, %v4156
  %v4183 = vadd.f32 %v3874, %v4158
  %s4184 = scalar_lea.vmem %s3, 96
  %v4185 = vld [vmem:[%s4184] sm:$0xf]
  %v4186 = vld [vmem:[%s4184 + $0x4] sm:$0xf]
  %v4187 = vld [vmem:[%s4184 + $0x8] sm:$0xf]
  %v4188 = vld [vmem:[%s4184 + $0xc] sm:$0xf]
  %v4193 = vunpack.c.l.b16 %v4185
  %v4194 = vunpack.c.l.b16 %v4186
  %v4195 = vunpack.c.l.b16 %v4187
  %v4196 = vunpack.c.l.b16 %v4188
  %v4197 = vpack.c.b16 %v4194, %v4193
  %v4198 = vpack.c.b16 %v4196, %v4195
  %4199 = vrot.lane.b32.xlu0 %v3620, 111
  %v4200 = vpop.permute.xlu0 %4199
  %4201 = vrot.lane.b32.xlu0 %v3621, 111
  %v4202 = vpop.permute.xlu0 %4201
  %4203 = vrot.lane.b32.xlu0 %v3622, 111
  %v4204 = vpop.permute.xlu0 %4203
  %4205 = vrot.lane.b32.xlu0 %v3623, 111
  %v4206 = vpop.permute.xlu0 %4205
  %4207 = vrot.lane.b32.xlu0 %v3624, 111
  %v4208 = vpop.permute.xlu0 %4207
  %4209 = vrot.lane.b32.xlu0 %v3625, 111
  %v4210 = vpop.permute.xlu0 %4209
  %4211 = vrot.lane.b32.xlu0 %v3626, 111
  %v4212 = vpop.permute.xlu0 %4211
  %4213 = vrot.lane.b32.xlu0 %v3627, 111
  %v4214 = vpop.permute.xlu0 %4213
  %4215 = vrot.lane.b32.xlu0 %v3628, 111
  %v4216 = vpop.permute.xlu0 %4215
  %4217 = vrot.lane.b32.xlu0 %v3629, 111
  %v4218 = vpop.permute.xlu0 %4217
  %4219 = vrot.lane.b32.xlu0 %v3630, 111
  %v4220 = vpop.permute.xlu0 %4219
  %4221 = vrot.lane.b32.xlu0 %v3631, 111
  %v4222 = vpop.permute.xlu0 %4221
  %4223 = vrot.lane.b32.xlu0 %v3632, 111
  %v4224 = vpop.permute.xlu0 %4223
  %4225 = vrot.lane.b32.xlu0 %v3633, 111
  %v4226 = vpop.permute.xlu0 %4225
  %v4227 = vsel %vm3946, %v4200, %v4202
  %v4228 = vsel %vm3946, %v4202, %v4204
  %v4229 = vsel %vm3946, %v4204, %v4206
  %v4230 = vsel %vm3946, %v4206, %v4208
  %v4231 = vsel %vm3946, %v4208, %v4210
  %v4232 = vsel %vm3946, %v4210, %v4212
  %v4233 = vsel %vm3946, %v4214, %v4216
  %v4234 = vsel %vm3946, %v4216, %v4218
  %v4235 = vsel %vm3946, %v4218, %v4220
  %v4236 = vsel %vm3946, %v4220, %v4222
  %v4237 = vsel %vm3946, %v4222, %v4224
  %v4238 = vsel %vm3946, %v4224, %v4226
  %v4252 = vsel %vm207, %v4197, 0
  %v4255 = vsel %vm207, %v4198, 0
  %4257 = vmatprep.subr.bf16.mxu0 %v4228
  %4258 = vmatpush1.bf16.msra.mxu0 %v4227
  %4259 = vmatprep.subr.bf16.mxu0 %v4234
  %4260 = vmatpush1.bf16.msra.mxu0 %v4233
  %4261 = vmatprep.subr.bf16.mxu0 0
  %4262 = vmatpush1.bf16.msra.mxu0 0
  %4263 = vmatprep.subr.bf16.mxu0 0
  %4264 = vmatpush1.bf16.msra.mxu0 0
  %4265 = vmatprep.subr.bf16.mxu0 0
  %4266 = vmatpush1.bf16.msra.mxu0 0
  %4267 = vmatprep.subr.bf16.mxu0 0
  %4268 = vmatpush1.bf16.msra.mxu0 0
  %4269 = vmatprep.subr.bf16.mxu0 0
  %4270 = vmatpush1.bf16.msra.mxu0 0
  %4271 = vmatprep.subr.bf16.mxu0 0
  %4272 = vmatpush1.bf16.msra.mxu0 0
  %4273 = vmatprep.subr.bf16.mxu0 0
  %4274 = vmatpush1.bf16.msra.mxu0 0
  %4275 = vmatprep.subr.bf16.mxu0 0
  %4276 = vmatpush1.bf16.msra.mxu0 0
  %4277 = vmatprep.subr.bf16.mxu0 0
  %4278 = vmatpush1.bf16.msra.mxu0 0
  %4279 = vmatprep.subr.bf16.mxu0 0
  %4280 = vmatpush1.bf16.msra.mxu0 0
  %4281 = vmatprep.subr.bf16.mxu0 0
  %4282 = vmatpush1.bf16.msra.mxu0 0
  %4283 = vmatprep.subr.bf16.mxu0 0
  %4284 = vmatpush1.bf16.msra.mxu0 0
  %4285 = vmatprep.subr.bf16.mxu0 0
  %4286 = vmatpush1.bf16.msra.mxu0 0
  %4287 = vmatprep.subr.bf16.mxu0 0
  %4288 = vmatpush1.bf16.msra.mxu0 0
  %4289 = vmatprep.mubr.bf16.mxu0 0
  %4290 = vmatmul.mubr.bf16.gmra.mrb[0].mxu0 %v4252
  %v4291 = vpop.f32.mrb[0].mxu0
  %v4292 = vadd.f32 0.0, %v4291
  %v4293 = vpop.f32.mrb[0].mxu0
  %v4294 = vadd.f32 0.0, %v4293
  %v4295 = vpop.f32.mrb[0].mxu0
  %v4296 = vadd.f32 0.0, %v4295
  %v4297 = vpop.f32.mrb[0].mxu0
  %v4298 = vadd.f32 0.0, %v4297
  %4299 = vmatprep.mubr.bf16.mxu0 0
  %4300 = vmatmul.mubr.bf16.gmra.mrb[0].mxu0 %v4255
  %v4301 = vpop.f32.mrb[0].mxu0
  %v4302 = vadd.f32 0.0, %v4301
  %v4303 = vpop.f32.mrb[0].mxu0
  %v4304 = vadd.f32 0.0, %v4303
  %v4305 = vpop.f32.mrb[0].mxu0
  %v4306 = vadd.f32 0.0, %v4305
  %v4307 = vpop.f32.mrb[0].mxu0
  %v4308 = vadd.f32 0.0, %v4307
  %4309 = vdwg.mxu0
  %4310 = vmatprep.subr.bf16.mxu0 %v4230
  %4311 = vmatpush1.bf16.msra.mxu0 %v4229
  %4312 = vmatprep.subr.bf16.mxu0 %v4236
  %4313 = vmatpush1.bf16.msra.mxu0 %v4235
  %4314 = vmatprep.subr.bf16.mxu0 0
  %4315 = vmatpush1.bf16.msra.mxu0 0
  %4316 = vmatprep.subr.bf16.mxu0 0
  %4317 = vmatpush1.bf16.msra.mxu0 0
  %4318 = vmatprep.subr.bf16.mxu0 0
  %4319 = vmatpush1.bf16.msra.mxu0 0
  %4320 = vmatprep.subr.bf16.mxu0 0
  %4321 = vmatpush1.bf16.msra.mxu0 0
  %4322 = vmatprep.subr.bf16.mxu0 0
  %4323 = vmatpush1.bf16.msra.mxu0 0
  %4324 = vmatprep.subr.bf16.mxu0 0
  %4325 = vmatpush1.bf16.msra.mxu0 0
  %4326 = vmatprep.subr.bf16.mxu0 0
  %4327 = vmatpush1.bf16.msra.mxu0 0
  %4328 = vmatprep.subr.bf16.mxu0 0
  %4329 = vmatpush1.bf16.msra.mxu0 0
  %4330 = vmatprep.subr.bf16.mxu0 0
  %4331 = vmatpush1.bf16.msra.mxu0 0
  %4332 = vmatprep.subr.bf16.mxu0 0
  %4333 = vmatpush1.bf16.msra.mxu0 0
  %4334 = vmatprep.subr.bf16.mxu0 0
  %4335 = vmatpush1.bf16.msra.mxu0 0
  %4336 = vmatprep.subr.bf16.mxu0 0
  %4337 = vmatpush1.bf16.msra.mxu0 0
  %4338 = vmatprep.subr.bf16.mxu0 0
  %4339 = vmatpush1.bf16.msra.mxu0 0
  %4340 = vmatprep.subr.bf16.mxu0 0
  %4341 = vmatpush1.bf16.msra.mxu0 0
  %4342 = vmatprep.mubr.bf16.mxu0 0
  %4343 = vmatmul.mubr.bf16.gmra.mrb[0].mxu0 %v4252
  %v4344 = vpop.f32.mrb[0].mxu0
  %v4345 = vadd.f32 0.0, %v4344
  %v4346 = vpop.f32.mrb[0].mxu0
  %v4347 = vadd.f32 0.0, %v4346
  %v4348 = vpop.f32.mrb[0].mxu0
  %v4349 = vadd.f32 0.0, %v4348
  %v4350 = vpop.f32.mrb[0].mxu0
  %v4351 = vadd.f32 0.0, %v4350
  %4352 = vmatprep.mubr.bf16.mxu0 0
  %4353 = vmatmul.mubr.bf16.gmra.mrb[0].mxu0 %v4255
  %v4354 = vpop.f32.mrb[0].mxu0
  %v4355 = vadd.f32 0.0, %v4354
  %v4356 = vpop.f32.mrb[0].mxu0
  %v4357 = vadd.f32 0.0, %v4356
  %v4358 = vpop.f32.mrb[0].mxu0
  %v4359 = vadd.f32 0.0, %v4358
  %v4360 = vpop.f32.mrb[0].mxu0
  %v4361 = vadd.f32 0.0, %v4360
  %4362 = vdwg.mxu0
  %4363 = vmatprep.subr.bf16.mxu0 %v4232
  %4364 = vmatpush1.bf16.msra.mxu0 %v4231
  %4365 = vmatprep.subr.bf16.mxu0 %v4238
  %4366 = vmatpush1.bf16.msra.mxu0 %v4237
  %4367 = vmatprep.subr.bf16.mxu0 0
  %4368 = vmatpush1.bf16.msra.mxu0 0
  %4369 = vmatprep.subr.bf16.mxu0 0
  %4370 = vmatpush1.bf16.msra.mxu0 0
  %4371 = vmatprep.subr.bf16.mxu0 0
  %4372 = vmatpush1.bf16.msra.mxu0 0
  %4373 = vmatprep.subr.bf16.mxu0 0
  %4374 = vmatpush1.bf16.msra.mxu0 0
  %4375 = vmatprep.subr.bf16.mxu0 0
  %4376 = vmatpush1.bf16.msra.mxu0 0
  %4377 = vmatprep.subr.bf16.mxu0 0
  %4378 = vmatpush1.bf16.msra.mxu0 0
  %4379 = vmatprep.subr.bf16.mxu0 0
  %4380 = vmatpush1.bf16.msra.mxu0 0
  %4381 = vmatprep.subr.bf16.mxu0 0
  %4382 = vmatpush1.bf16.msra.mxu0 0
  %4383 = vmatprep.subr.bf16.mxu0 0
  %4384 = vmatpush1.bf16.msra.mxu0 0
  %4385 = vmatprep.subr.bf16.mxu0 0
  %4386 = vmatpush1.bf16.msra.mxu0 0
  %4387 = vmatprep.subr.bf16.mxu0 0
  %4388 = vmatpush1.bf16.msra.mxu0 0
  %4389 = vmatprep.subr.bf16.mxu0 0
  %4390 = vmatpush1.bf16.msra.mxu0 0
  %4391 = vmatprep.subr.bf16.mxu0 0
  %4392 = vmatpush1.bf16.msra.mxu0 0
  %4393 = vmatprep.subr.bf16.mxu0 0
  %4394 = vmatpush1.bf16.msra.mxu0 0
  %4395 = vmatprep.mubr.bf16.mxu0 0
  %4396 = vmatmul.mubr.bf16.gmra.mrb[0].mxu0 %v4252
  %v4397 = vpop.f32.mrb[0].mxu0
  %v4398 = vadd.f32 0.0, %v4397
  %v4399 = vpop.f32.mrb[0].mxu0
  %v4400 = vadd.f32 0.0, %v4399
  %v4401 = vpop.f32.mrb[0].mxu0
  %v4402 = vadd.f32 0.0, %v4401
  %v4403 = vpop.f32.mrb[0].mxu0
  %v4404 = vadd.f32 0.0, %v4403
  %4405 = vmatprep.mubr.bf16.mxu0 0
  %4406 = vmatmul.mubr.bf16.gmra.mrb[0].mxu0 %v4255
  %v4407 = vpop.f32.mrb[0].mxu0
  %v4408 = vadd.f32 0.0, %v4407
  %v4409 = vpop.f32.mrb[0].mxu0
  %v4410 = vadd.f32 0.0, %v4409
  %v4411 = vpop.f32.mrb[0].mxu0
  %v4412 = vadd.f32 0.0, %v4411
  %v4413 = vpop.f32.mrb[0].mxu0
  %v4414 = vadd.f32 0.0, %v4413
  %4415 = vdwg.mxu0
  %v4416 = vadd.f32 %v4160, %v4292
  %v4417 = vadd.f32 %v4161, %v4294
  %v4418 = vadd.f32 %v4162, %v4345
  %v4419 = vadd.f32 %v4163, %v4347
  %v4420 = vadd.f32 %v4164, %v4398
  %v4421 = vadd.f32 %v4165, %v4400
  %v4422 = vadd.f32 %v4166, %v4296
  %v4423 = vadd.f32 %v4167, %v4298
  %v4424 = vadd.f32 %v4168, %v4349
  %v4425 = vadd.f32 %v4169, %v4351
  %v4426 = vadd.f32 %v4170, %v4402
  %v4427 = vadd.f32 %v4171, %v4404
  %v4428 = vadd.f32 %v4172, %v4302
  %v4429 = vadd.f32 %v4173, %v4304
  %v4430 = vadd.f32 %v4174, %v4355
  %v4431 = vadd.f32 %v4175, %v4357
  %v4432 = vadd.f32 %v4176, %v4408
  %v4433 = vadd.f32 %v4177, %v4410
  %v4434 = vadd.f32 %v4178, %v4306
  %v4435 = vadd.f32 %v4179, %v4308
  %v4436 = vadd.f32 %v4180, %v4359
  %v4437 = vadd.f32 %v4181, %v4361
  %v4438 = vadd.f32 %v4182, %v4412
  %v4439 = vadd.f32 %v4183, %v4414
  %s4440 = scalar_lea.vmem %s2, 112
  %v4441 = vld [vmem:[%s4440] sm:$0xf]
  %v4442 = vld [vmem:[%s4440 + $0x4] sm:$0xf]
  %v4443 = vld [vmem:[%s4440 + $0x8] sm:$0xf]
  %v4444 = vld [vmem:[%s4440 + $0xc] sm:$0xf]
  %v4449 = vunpack.c.l.b16 %v4441
  %v4450 = vunpack.c.l.b16 %v4442
  %v4451 = vunpack.c.l.b16 %v4443
  %v4452 = vunpack.c.l.b16 %v4444
  %v4453 = vpack.c.b16 %v4450, %v4449
  %v4454 = vpack.c.b16 %v4452, %v4451
  %4455 = vrot.lane.b32.xlu0 %v3223, 110
  %v4456 = vpop.permute.xlu0 %4455
  %4457 = vrot.lane.b32.xlu0 %v3224, 110
  %v4458 = vpop.permute.xlu0 %4457
  %4459 = vrot.lane.b32.xlu0 %v3225, 110
  %v4460 = vpop.permute.xlu0 %4459
  %4461 = vrot.lane.b32.xlu0 %v3226, 110
  %v4462 = vpop.permute.xlu0 %4461
  %4463 = vrot.lane.b32.xlu0 %v3227, 110
  %v4464 = vpop.permute.xlu0 %4463
  %4465 = vrot.lane.b32.xlu0 %v3228, 110
  %v4466 = vpop.permute.xlu0 %4465
  %4467 = vrot.lane.b32.xlu0 %v3229, 110
  %v4468 = vpop.permute.xlu0 %4467
  %4469 = vrot.lane.b32.xlu0 %v3230, 110
  %v4470 = vpop.permute.xlu0 %4469
  %4471 = vrot.lane.b32.xlu0 %v3231, 110
  %v4472 = vpop.permute.xlu0 %4471
  %4473 = vrot.lane.b32.xlu0 %v3232, 110
  %v4474 = vpop.permute.xlu0 %4473
  %4475 = vrot.lane.b32.xlu0 %v3233, 110
  %v4476 = vpop.permute.xlu0 %4475
  %4477 = vrot.lane.b32.xlu0 %v3234, 110
  %v4478 = vpop.permute.xlu0 %4477
  %4479 = vrot.lane.b32.xlu0 %v3235, 110
  %v4480 = vpop.permute.xlu0 %4479
  %4481 = vrot.lane.b32.xlu0 %v3236, 110
  %v4482 = vpop.permute.xlu0 %4481
  %4483 = vrot.lane.b32.xlu0 %v3237, 110
  %v4484 = vpop.permute.xlu0 %4483
  %4485 = vrot.lane.b32.xlu0 %v3238, 110
  %v4486 = vpop.permute.xlu0 %4485
  %4487 = vrot.lane.b32.xlu0 %v3239, 110
  %v4488 = vpop.permute.xlu0 %4487
  %4489 = vrot.lane.b32.xlu0 %v3240, 110
  %v4490 = vpop.permute.xlu0 %4489
  %4491 = vrot.lane.b32.xlu0 %v3241, 110
  %v4492 = vpop.permute.xlu0 %4491
  %4493 = vrot.lane.b32.xlu0 %v3242, 110
  %v4494 = vpop.permute.xlu0 %4493
  %4495 = vrot.lane.b32.xlu0 %v3243, 110
  %v4496 = vpop.permute.xlu0 %4495
  %4497 = vrot.lane.b32.xlu0 %v3244, 110
  %v4498 = vpop.permute.xlu0 %4497
  %4499 = vrot.lane.b32.xlu0 %v3245, 110
  %v4500 = vpop.permute.xlu0 %4499
  %4501 = vrot.lane.b32.xlu0 %v3246, 110
  %v4502 = vpop.permute.xlu0 %4501
  %4503 = vrot.lane.b32.xlu0 %v3247, 110
  %v4504 = vpop.permute.xlu0 %4503
  %4505 = vrot.lane.b32.xlu0 %v3248, 110
  %v4506 = vpop.permute.xlu0 %4505
  %4507 = vrot.lane.b32.xlu0 %v3249, 110
  %v4508 = vpop.permute.xlu0 %4507
  %4509 = vrot.lane.b32.xlu0 %v3250, 110
  %v4510 = vpop.permute.xlu0 %4509
  %vm4511 = vcmask 900096
  %v4512 = vsel %vm4511, %v4456, %v4458
  %v4513 = vsel %vm4511, %v4458, %v4460
  %v4514 = vsel %vm4511, %v4460, %v4462
  %v4515 = vsel %vm4511, %v4462, %v4464
  %v4516 = vsel %vm4511, %v4464, %v4466
  %v4517 = vsel %vm4511, %v4466, %v4468
  %v4518 = vsel %vm4511, %v4470, %v4472
  %v4519 = vsel %vm4511, %v4472, %v4474
  %v4520 = vsel %vm4511, %v4474, %v4476
  %v4521 = vsel %vm4511, %v4476, %v4478
  %v4522 = vsel %vm4511, %v4478, %v4480
  %v4523 = vsel %vm4511, %v4480, %v4482
  %v4524 = vsel %vm4511, %v4484, %v4486
  %v4525 = vsel %vm4511, %v4486, %v4488
  %v4526 = vsel %vm4511, %v4488, %v4490
  %v4527 = vsel %vm4511, %v4490, %v4492
  %v4528 = vsel %vm4511, %v4492, %v4494
  %v4529 = vsel %vm4511, %v4494, %v4496
  %v4530 = vsel %vm4511, %v4498, %v4500
  %v4531 = vsel %vm4511, %v4500, %v4502
  %v4532 = vsel %vm4511, %v4502, %v4504
  %v4533 = vsel %vm4511, %v4504, %v4506
  %v4534 = vsel %vm4511, %v4506, %v4508
  %v4535 = vsel %vm4511, %v4508, %v4510
  %v4561 = vsel %vm603, %v4453, 0
  %v4564 = vsel %vm603, %v4454, 0
  %4566 = vmatprep.subr.bf16.mxu0 %v4513
  %4567 = vmatpush1.bf16.msra.mxu0 %v4512
  %4568 = vmatprep.subr.bf16.mxu0 %v4519
  %4569 = vmatpush1.bf16.msra.mxu0 %v4518
  %4570 = vmatprep.subr.bf16.mxu0 %v4525
  %4571 = vmatpush1.bf16.msra.mxu0 %v4524
  %4572 = vmatprep.subr.bf16.mxu0 %v4531
  %4573 = vmatpush1.bf16.msra.mxu0 %v4530
  %4574 = vmatprep.subr.bf16.mxu0 0
  %4575 = vmatpush1.bf16.msra.mxu0 0
  %4576 = vmatprep.subr.bf16.mxu0 0
  %4577 = vmatpush1.bf16.msra.mxu0 0
  %4578 = vmatprep.subr.bf16.mxu0 0
  %4579 = vmatpush1.bf16.msra.mxu0 0
  %4580 = vmatprep.subr.bf16.mxu0 0
  %4581 = vmatpush1.bf16.msra.mxu0 0
  %4582 = vmatprep.subr.bf16.mxu0 0
  %4583 = vmatpush1.bf16.msra.mxu0 0
  %4584 = vmatprep.subr.bf16.mxu0 0
  %4585 = vmatpush1.bf16.msra.mxu0 0
  %4586 = vmatprep.subr.bf16.mxu0 0
  %4587 = vmatpush1.bf16.msra.mxu0 0
  %4588 = vmatprep.subr.bf16.mxu0 0
  %4589 = vmatpush1.bf16.msra.mxu0 0
  %4590 = vmatprep.subr.bf16.mxu0 0
  %4591 = vmatpush1.bf16.msra.mxu0 0
  %4592 = vmatprep.subr.bf16.mxu0 0
  %4593 = vmatpush1.bf16.msra.mxu0 0
  %4594 = vmatprep.subr.bf16.mxu0 0
  %4595 = vmatpush1.bf16.msra.mxu0 0
  %4596 = vmatprep.subr.bf16.mxu0 0
  %4597 = vmatpush1.bf16.msra.mxu0 0
  %4598 = vmatprep.mubr.bf16.mxu0 0
  %4599 = vmatmul.mubr.bf16.gmra.mrb[0].mxu0 %v4561
  %v4600 = vpop.f32.mrb[0].mxu0
  %v4601 = vadd.f32 0.0, %v4600
  %v4602 = vpop.f32.mrb[0].mxu0
  %v4603 = vadd.f32 0.0, %v4602
  %v4604 = vpop.f32.mrb[0].mxu0
  %v4605 = vadd.f32 0.0, %v4604
  %v4606 = vpop.f32.mrb[0].mxu0
  %v4607 = vadd.f32 0.0, %v4606
  %4608 = vmatprep.mubr.bf16.mxu0 0
  %4609 = vmatmul.mubr.bf16.gmra.mrb[0].mxu0 %v4564
  %v4610 = vpop.f32.mrb[0].mxu0
  %v4611 = vadd.f32 0.0, %v4610
  %v4612 = vpop.f32.mrb[0].mxu0
  %v4613 = vadd.f32 0.0, %v4612
  %v4614 = vpop.f32.mrb[0].mxu0
  %v4615 = vadd.f32 0.0, %v4614
  %v4616 = vpop.f32.mrb[0].mxu0
  %v4617 = vadd.f32 0.0, %v4616
  %4618 = vdwg.mxu0
  %4619 = vmatprep.subr.bf16.mxu0 %v4515
  %4620 = vmatpush1.bf16.msra.mxu0 %v4514
  %4621 = vmatprep.subr.bf16.mxu0 %v4521
  %4622 = vmatpush1.bf16.msra.mxu0 %v4520
  %4623 = vmatprep.subr.bf16.mxu0 %v4527
  %4624 = vmatpush1.bf16.msra.mxu0 %v4526
  %4625 = vmatprep.subr.bf16.mxu0 %v4533
  %4626 = vmatpush1.bf16.msra.mxu0 %v4532
  %4627 = vmatprep.subr.bf16.mxu0 0
  %4628 = vmatpush1.bf16.msra.mxu0 0
  %4629 = vmatprep.subr.bf16.mxu0 0
  %4630 = vmatpush1.bf16.msra.mxu0 0
  %4631 = vmatprep.subr.bf16.mxu0 0
  %4632 = vmatpush1.bf16.msra.mxu0 0
  %4633 = vmatprep.subr.bf16.mxu0 0
  %4634 = vmatpush1.bf16.msra.mxu0 0
  %4635 = vmatprep.subr.bf16.mxu0 0
  %4636 = vmatpush1.bf16.msra.mxu0 0
  %4637 = vmatprep.subr.bf16.mxu0 0
  %4638 = vmatpush1.bf16.msra.mxu0 0
  %4639 = vmatprep.subr.bf16.mxu0 0
  %4640 = vmatpush1.bf16.msra.mxu0 0
  %4641 = vmatprep.subr.bf16.mxu0 0
  %4642 = vmatpush1.bf16.msra.mxu0 0
  %4643 = vmatprep.subr.bf16.mxu0 0
  %4644 = vmatpush1.bf16.msra.mxu0 0
  %4645 = vmatprep.subr.bf16.mxu0 0
  %4646 = vmatpush1.bf16.msra.mxu0 0
  %4647 = vmatprep.subr.bf16.mxu0 0
  %4648 = vmatpush1.bf16.msra.mxu0 0
  %4649 = vmatprep.subr.bf16.mxu0 0
  %4650 = vmatpush1.bf16.msra.mxu0 0
  %4651 = vmatprep.mubr.bf16.mxu0 0
  %4652 = vmatmul.mubr.bf16.gmra.mrb[0].mxu0 %v4561
  %v4653 = vpop.f32.mrb[0].mxu0
  %v4654 = vadd.f32 0.0, %v4653
  %v4655 = vpop.f32.mrb[0].mxu0
  %v4656 = vadd.f32 0.0, %v4655
  %v4657 = vpop.f32.mrb[0].mxu0
  %v4658 = vadd.f32 0.0, %v4657
  %v4659 = vpop.f32.mrb[0].mxu0
  %v4660 = vadd.f32 0.0, %v4659
  %4661 = vmatprep.mubr.bf16.mxu0 0
  %4662 = vmatmul.mubr.bf16.gmra.mrb[0].mxu0 %v4564
  %v4663 = vpop.f32.mrb[0].mxu0
  %v4664 = vadd.f32 0.0, %v4663
  %v4665 = vpop.f32.mrb[0].mxu0
  %v4666 = vadd.f32 0.0, %v4665
  %v4667 = vpop.f32.mrb[0].mxu0
  %v4668 = vadd.f32 0.0, %v4667
  %v4669 = vpop.f32.mrb[0].mxu0
  %v4670 = vadd.f32 0.0, %v4669
  %4671 = vdwg.mxu0
  %4672 = vmatprep.subr.bf16.mxu0 %v4517
  %4673 = vmatpush1.bf16.msra.mxu0 %v4516
  %4674 = vmatprep.subr.bf16.mxu0 %v4523
  %4675 = vmatpush1.bf16.msra.mxu0 %v4522
  %4676 = vmatprep.subr.bf16.mxu0 %v4529
  %4677 = vmatpush1.bf16.msra.mxu0 %v4528
  %4678 = vmatprep.subr.bf16.mxu0 %v4535
  %4679 = vmatpush1.bf16.msra.mxu0 %v4534
  %4680 = vmatprep.subr.bf16.mxu0 0
  %4681 = vmatpush1.bf16.msra.mxu0 0
  %4682 = vmatprep.subr.bf16.mxu0 0
  %4683 = vmatpush1.bf16.msra.mxu0 0
  %4684 = vmatprep.subr.bf16.mxu0 0
  %4685 = vmatpush1.bf16.msra.mxu0 0
  %4686 = vmatprep.subr.bf16.mxu0 0
  %4687 = vmatpush1.bf16.msra.mxu0 0
  %4688 = vmatprep.subr.bf16.mxu0 0
  %4689 = vmatpush1.bf16.msra.mxu0 0
  %4690 = vmatprep.subr.bf16.mxu0 0
  %4691 = vmatpush1.bf16.msra.mxu0 0
  %4692 = vmatprep.subr.bf16.mxu0 0
  %4693 = vmatpush1.bf16.msra.mxu0 0
  %4694 = vmatprep.subr.bf16.mxu0 0
  %4695 = vmatpush1.bf16.msra.mxu0 0
  %4696 = vmatprep.subr.bf16.mxu0 0
  %4697 = vmatpush1.bf16.msra.mxu0 0
  %4698 = vmatprep.subr.bf16.mxu0 0
  %4699 = vmatpush1.bf16.msra.mxu0 0
  %4700 = vmatprep.subr.bf16.mxu0 0
  %4701 = vmatpush1.bf16.msra.mxu0 0
  %4702 = vmatprep.subr.bf16.mxu0 0
  %4703 = vmatpush1.bf16.msra.mxu0 0
  %4704 = vmatprep.mubr.bf16.mxu0 0
  %4705 = vmatmul.mubr.bf16.gmra.mrb[0].mxu0 %v4561
  %v4706 = vpop.f32.mrb[0].mxu0
  %v4707 = vadd.f32 0.0, %v4706
  %v4708 = vpop.f32.mrb[0].mxu0
  %v4709 = vadd.f32 0.0, %v4708
  %v4710 = vpop.f32.mrb[0].mxu0
  %v4711 = vadd.f32 0.0, %v4710
  %v4712 = vpop.f32.mrb[0].mxu0
  %v4713 = vadd.f32 0.0, %v4712
  %4714 = vmatprep.mubr.bf16.mxu0 0
  %4715 = vmatmul.mubr.bf16.gmra.mrb[0].mxu0 %v4564
  %v4716 = vpop.f32.mrb[0].mxu0
  %v4717 = vadd.f32 0.0, %v4716
  %v4718 = vpop.f32.mrb[0].mxu0
  %v4719 = vadd.f32 0.0, %v4718
  %v4720 = vpop.f32.mrb[0].mxu0
  %v4721 = vadd.f32 0.0, %v4720
  %v4722 = vpop.f32.mrb[0].mxu0
  %v4723 = vadd.f32 0.0, %v4722
  %4724 = vdwg.mxu0
  %v4725 = vadd.f32 %v4416, %v4601
  %v4726 = vadd.f32 %v4417, %v4603
  %v4727 = vadd.f32 %v4418, %v4654
  %v4728 = vadd.f32 %v4419, %v4656
  %v4729 = vadd.f32 %v4420, %v4707
  %v4730 = vadd.f32 %v4421, %v4709
  %v4731 = vadd.f32 %v4422, %v4605
  %v4732 = vadd.f32 %v4423, %v4607
  %v4733 = vadd.f32 %v4424, %v4658
  %v4734 = vadd.f32 %v4425, %v4660
  %v4735 = vadd.f32 %v4426, %v4711
  %v4736 = vadd.f32 %v4427, %v4713
  %v4737 = vadd.f32 %v4428, %v4611
  %v4738 = vadd.f32 %v4429, %v4613
  %v4739 = vadd.f32 %v4430, %v4664
  %v4740 = vadd.f32 %v4431, %v4666
  %v4741 = vadd.f32 %v4432, %v4717
  %v4742 = vadd.f32 %v4433, %v4719
  %v4743 = vadd.f32 %v4434, %v4615
  %v4744 = vadd.f32 %v4435, %v4617
  %v4745 = vadd.f32 %v4436, %v4668
  %v4746 = vadd.f32 %v4437, %v4670
  %v4747 = vadd.f32 %v4438, %v4721
  %v4748 = vadd.f32 %v4439, %v4723
  %s4749 = scalar_lea.vmem %s3, 112
  %v4750 = vld [vmem:[%s4749] sm:$0xf]
  %v4751 = vld [vmem:[%s4749 + $0x4] sm:$0xf]
  %v4752 = vld [vmem:[%s4749 + $0x8] sm:$0xf]
  %v4753 = vld [vmem:[%s4749 + $0xc] sm:$0xf]
  %v4758 = vunpack.c.l.b16 %v4750
  %v4759 = vunpack.c.l.b16 %v4751
  %v4760 = vunpack.c.l.b16 %v4752
  %v4761 = vunpack.c.l.b16 %v4753
  %v4762 = vpack.c.b16 %v4759, %v4758
  %v4763 = vpack.c.b16 %v4761, %v4760
  %4764 = vrot.lane.b32.xlu0 %v3620, 110
  %v4765 = vpop.permute.xlu0 %4764
  %4766 = vrot.lane.b32.xlu0 %v3621, 110
  %v4767 = vpop.permute.xlu0 %4766
  %4768 = vrot.lane.b32.xlu0 %v3622, 110
  %v4769 = vpop.permute.xlu0 %4768
  %4770 = vrot.lane.b32.xlu0 %v3623, 110
  %v4771 = vpop.permute.xlu0 %4770
  %4772 = vrot.lane.b32.xlu0 %v3624, 110
  %v4773 = vpop.permute.xlu0 %4772
  %4774 = vrot.lane.b32.xlu0 %v3625, 110
  %v4775 = vpop.permute.xlu0 %4774
  %4776 = vrot.lane.b32.xlu0 %v3626, 110
  %v4777 = vpop.permute.xlu0 %4776
  %4778 = vrot.lane.b32.xlu0 %v3627, 110
  %v4779 = vpop.permute.xlu0 %4778
  %4780 = vrot.lane.b32.xlu0 %v3628, 110
  %v4781 = vpop.permute.xlu0 %4780
  %4782 = vrot.lane.b32.xlu0 %v3629, 110
  %v4783 = vpop.permute.xlu0 %4782
  %4784 = vrot.lane.b32.xlu0 %v3630, 110
  %v4785 = vpop.permute.xlu0 %4784
  %4786 = vrot.lane.b32.xlu0 %v3631, 110
  %v4787 = vpop.permute.xlu0 %4786
  %4788 = vrot.lane.b32.xlu0 %v3632, 110
  %v4789 = vpop.permute.xlu0 %4788
  %4790 = vrot.lane.b32.xlu0 %v3633, 110
  %v4791 = vpop.permute.xlu0 %4790
  %v4792 = vsel %vm4511, %v4765, %v4767
  %v4793 = vsel %vm4511, %v4767, %v4769
  %v4794 = vsel %vm4511, %v4769, %v4771
  %v4795 = vsel %vm4511, %v4771, %v4773
  %v4796 = vsel %vm4511, %v4773, %v4775
  %v4797 = vsel %vm4511, %v4775, %v4777
  %v4798 = vsel %vm4511, %v4779, %v4781
  %v4799 = vsel %vm4511, %v4781, %v4783
  %v4800 = vsel %vm4511, %v4783, %v4785
  %v4801 = vsel %vm4511, %v4785, %v4787
  %v4802 = vsel %vm4511, %v4787, %v4789
  %v4803 = vsel %vm4511, %v4789, %v4791
  %v4817 = vsel %vm207, %v4762, 0
  %v4820 = vsel %vm207, %v4763, 0
  %4822 = vmatprep.subr.bf16.mxu0 %v4793
  %4823 = vmatpush1.bf16.msra.mxu0 %v4792
  %4824 = vmatprep.subr.bf16.mxu0 %v4799
  %4825 = vmatpush1.bf16.msra.mxu0 %v4798
  %4826 = vmatprep.subr.bf16.mxu0 0
  %4827 = vmatpush1.bf16.msra.mxu0 0
  %4828 = vmatprep.subr.bf16.mxu0 0
  %4829 = vmatpush1.bf16.msra.mxu0 0
  %4830 = vmatprep.subr.bf16.mxu0 0
  %4831 = vmatpush1.bf16.msra.mxu0 0
  %4832 = vmatprep.subr.bf16.mxu0 0
  %4833 = vmatpush1.bf16.msra.mxu0 0
  %4834 = vmatprep.subr.bf16.mxu0 0
  %4835 = vmatpush1.bf16.msra.mxu0 0
  %4836 = vmatprep.subr.bf16.mxu0 0
  %4837 = vmatpush1.bf16.msra.mxu0 0
  %4838 = vmatprep.subr.bf16.mxu0 0
  %4839 = vmatpush1.bf16.msra.mxu0 0
  %4840 = vmatprep.subr.bf16.mxu0 0
  %4841 = vmatpush1.bf16.msra.mxu0 0
  %4842 = vmatprep.subr.bf16.mxu0 0
  %4843 = vmatpush1.bf16.msra.mxu0 0
  %4844 = vmatprep.subr.bf16.mxu0 0
  %4845 = vmatpush1.bf16.msra.mxu0 0
  %4846 = vmatprep.subr.bf16.mxu0 0
  %4847 = vmatpush1.bf16.msra.mxu0 0
  %4848 = vmatprep.subr.bf16.mxu0 0
  %4849 = vmatpush1.bf16.msra.mxu0 0
  %4850 = vmatprep.subr.bf16.mxu0 0
  %4851 = vmatpush1.bf16.msra.mxu0 0
  %4852 = vmatprep.subr.bf16.mxu0 0
  %4853 = vmatpush1.bf16.msra.mxu0 0
  %4854 = vmatprep.mubr.bf16.mxu0 0
  %4855 = vmatmul.mubr.bf16.gmra.mrb[0].mxu0 %v4817
  %v4856 = vpop.f32.mrb[0].mxu0
  %v4857 = vadd.f32 0.0, %v4856
  %v4858 = vpop.f32.mrb[0].mxu0
  %v4859 = vadd.f32 0.0, %v4858
  %v4860 = vpop.f32.mrb[0].mxu0
  %v4861 = vadd.f32 0.0, %v4860
  %v4862 = vpop.f32.mrb[0].mxu0
  %v4863 = vadd.f32 0.0, %v4862
  %4864 = vmatprep.mubr.bf16.mxu0 0
  %4865 = vmatmul.mubr.bf16.gmra.mrb[0].mxu0 %v4820
  %v4866 = vpop.f32.mrb[0].mxu0
  %v4867 = vadd.f32 0.0, %v4866
  %v4868 = vpop.f32.mrb[0].mxu0
  %v4869 = vadd.f32 0.0, %v4868
  %v4870 = vpop.f32.mrb[0].mxu0
  %v4871 = vadd.f32 0.0, %v4870
  %v4872 = vpop.f32.mrb[0].mxu0
  %v4873 = vadd.f32 0.0, %v4872
  %4874 = vdwg.mxu0
  %4875 = vmatprep.subr.bf16.mxu0 %v4795
  %4876 = vmatpush1.bf16.msra.mxu0 %v4794
  %4877 = vmatprep.subr.bf16.mxu0 %v4801
  %4878 = vmatpush1.bf16.msra.mxu0 %v4800
  %4879 = vmatprep.subr.bf16.mxu0 0
  %4880 = vmatpush1.bf16.msra.mxu0 0
  %4881 = vmatprep.subr.bf16.mxu0 0
  %4882 = vmatpush1.bf16.msra.mxu0 0
  %4883 = vmatprep.subr.bf16.mxu0 0
  %4884 = vmatpush1.bf16.msra.mxu0 0
  %4885 = vmatprep.subr.bf16.mxu0 0
  %4886 = vmatpush1.bf16.msra.mxu0 0
  %4887 = vmatprep.subr.bf16.mxu0 0
  %4888 = vmatpush1.bf16.msra.mxu0 0
  %4889 = vmatprep.subr.bf16.mxu0 0
  %4890 = vmatpush1.bf16.msra.mxu0 0
  %4891 = vmatprep.subr.bf16.mxu0 0
  %4892 = vmatpush1.bf16.msra.mxu0 0
  %4893 = vmatprep.subr.bf16.mxu0 0
  %4894 = vmatpush1.bf16.msra.mxu0 0
  %4895 = vmatprep.subr.bf16.mxu0 0
  %4896 = vmatpush1.bf16.msra.mxu0 0
  %4897 = vmatprep.subr.bf16.mxu0 0
  %4898 = vmatpush1.bf16.msra.mxu0 0
  %4899 = vmatprep.subr.bf16.mxu0 0
  %4900 = vmatpush1.bf16.msra.mxu0 0
  %4901 = vmatprep.subr.bf16.mxu0 0
  %4902 = vmatpush1.bf16.msra.mxu0 0
  %4903 = vmatprep.subr.bf16.mxu0 0
  %4904 = vmatpush1.bf16.msra.mxu0 0
  %4905 = vmatprep.subr.bf16.mxu0 0
  %4906 = vmatpush1.bf16.msra.mxu0 0
  %4907 = vmatprep.mubr.bf16.mxu0 0
  %4908 = vmatmul.mubr.bf16.gmra.mrb[0].mxu0 %v4817
  %v4909 = vpop.f32.mrb[0].mxu0
  %v4910 = vadd.f32 0.0, %v4909
  %v4911 = vpop.f32.mrb[0].mxu0
  %v4912 = vadd.f32 0.0, %v4911
  %v4913 = vpop.f32.mrb[0].mxu0
  %v4914 = vadd.f32 0.0, %v4913
  %v4915 = vpop.f32.mrb[0].mxu0
  %v4916 = vadd.f32 0.0, %v4915
  %4917 = vmatprep.mubr.bf16.mxu0 0
  %4918 = vmatmul.mubr.bf16.gmra.mrb[0].mxu0 %v4820
  %v4919 = vpop.f32.mrb[0].mxu0
  %v4920 = vadd.f32 0.0, %v4919
  %v4921 = vpop.f32.mrb[0].mxu0
  %v4922 = vadd.f32 0.0, %v4921
  %v4923 = vpop.f32.mrb[0].mxu0
  %v4924 = vadd.f32 0.0, %v4923
  %v4925 = vpop.f32.mrb[0].mxu0
  %v4926 = vadd.f32 0.0, %v4925
  %4927 = vdwg.mxu0
  %4928 = vmatprep.subr.bf16.mxu0 %v4797
  %4929 = vmatpush1.bf16.msra.mxu0 %v4796
  %4930 = vmatprep.subr.bf16.mxu0 %v4803
  %4931 = vmatpush1.bf16.msra.mxu0 %v4802
  %4932 = vmatprep.subr.bf16.mxu0 0
  %4933 = vmatpush1.bf16.msra.mxu0 0
  %4934 = vmatprep.subr.bf16.mxu0 0
  %4935 = vmatpush1.bf16.msra.mxu0 0
  %4936 = vmatprep.subr.bf16.mxu0 0
  %4937 = vmatpush1.bf16.msra.mxu0 0
  %4938 = vmatprep.subr.bf16.mxu0 0
  %4939 = vmatpush1.bf16.msra.mxu0 0
  %4940 = vmatprep.subr.bf16.mxu0 0
  %4941 = vmatpush1.bf16.msra.mxu0 0
  %4942 = vmatprep.subr.bf16.mxu0 0
  %4943 = vmatpush1.bf16.msra.mxu0 0
  %4944 = vmatprep.subr.bf16.mxu0 0
  %4945 = vmatpush1.bf16.msra.mxu0 0
  %4946 = vmatprep.subr.bf16.mxu0 0
  %4947 = vmatpush1.bf16.msra.mxu0 0
  %4948 = vmatprep.subr.bf16.mxu0 0
  %4949 = vmatpush1.bf16.msra.mxu0 0
  %4950 = vmatprep.subr.bf16.mxu0 0
  %4951 = vmatpush1.bf16.msra.mxu0 0
  %4952 = vmatprep.subr.bf16.mxu0 0
  %4953 = vmatpush1.bf16.msra.mxu0 0
  %4954 = vmatprep.subr.bf16.mxu0 0
  %4955 = vmatpush1.bf16.msra.mxu0 0
  %4956 = vmatprep.subr.bf16.mxu0 0
  %4957 = vmatpush1.bf16.msra.mxu0 0
  %4958 = vmatprep.subr.bf16.mxu0 0
  %4959 = vmatpush1.bf16.msra.mxu0 0
  %4960 = vmatprep.mubr.bf16.mxu0 0
  %4961 = vmatmul.mubr.bf16.gmra.mrb[0].mxu0 %v4817
  %v4962 = vpop.f32.mrb[0].mxu0
  %v4963 = vadd.f32 0.0, %v4962
  %v4964 = vpop.f32.mrb[0].mxu0
  %v4965 = vadd.f32 0.0, %v4964
  %v4966 = vpop.f32.mrb[0].mxu0
  %v4967 = vadd.f32 0.0, %v4966
  %v4968 = vpop.f32.mrb[0].mxu0
  %v4969 = vadd.f32 0.0, %v4968
  %4970 = vmatprep.mubr.bf16.mxu0 0
  %4971 = vmatmul.mubr.bf16.gmra.mrb[0].mxu0 %v4820
  %v4972 = vpop.f32.mrb[0].mxu0
  %v4973 = vadd.f32 0.0, %v4972
  %v4974 = vpop.f32.mrb[0].mxu0
  %v4975 = vadd.f32 0.0, %v4974
  %v4976 = vpop.f32.mrb[0].mxu0
  %v4977 = vadd.f32 0.0, %v4976
  %v4978 = vpop.f32.mrb[0].mxu0
  %v4979 = vadd.f32 0.0, %v4978
  %4980 = vdwg.mxu0
  %v4981 = vadd.f32 %v4725, %v4857
  %v4982 = vadd.f32 %v4726, %v4859
  %v4983 = vadd.f32 %v4727, %v4910
  %v4984 = vadd.f32 %v4728, %v4912
  %v4985 = vadd.f32 %v4729, %v4963
  %v4986 = vadd.f32 %v4730, %v4965
  %v4987 = vadd.f32 %v4731, %v4861
  %v4988 = vadd.f32 %v4732, %v4863
  %v4989 = vadd.f32 %v4733, %v4914
  %v4990 = vadd.f32 %v4734, %v4916
  %v4991 = vadd.f32 %v4735, %v4967
  %v4992 = vadd.f32 %v4736, %v4969
  %v4993 = vadd.f32 %v4737, %v4867
  %v4994 = vadd.f32 %v4738, %v4869
  %v4995 = vadd.f32 %v4739, %v4920
  %v4996 = vadd.f32 %v4740, %v4922
  %v4997 = vadd.f32 %v4741, %v4973
  %v4998 = vadd.f32 %v4742, %v4975
  %v4999 = vadd.f32 %v4743, %v4871
  %v5000 = vadd.f32 %v4744, %v4873
  %v5001 = vadd.f32 %v4745, %v4924
  %v5002 = vadd.f32 %v4746, %v4926
  %v5003 = vadd.f32 %v4747, %v4977
  %v5004 = vadd.f32 %v4748, %v4979
  %s5005 = scalar_lea.vmem %s2, 128
  %v5006 = vld [vmem:[%s5005] sm:$0xf]
  %v5007 = vld [vmem:[%s5005 + $0x4] sm:$0xf]
  %v5008 = vld [vmem:[%s5005 + $0x8] sm:$0xf]
  %v5009 = vld [vmem:[%s5005 + $0xc] sm:$0xf]
  %v5014 = vunpack.c.l.b16 %v5006
  %v5015 = vunpack.c.l.b16 %v5007
  %v5016 = vunpack.c.l.b16 %v5008
  %v5017 = vunpack.c.l.b16 %v5009
  %v5018 = vpack.c.b16 %v5015, %v5014
  %v5019 = vpack.c.b16 %v5017, %v5016
  %5020 = vrot.lane.b32.xlu0 %v3223, 109
  %v5021 = vpop.permute.xlu0 %5020
  %5022 = vrot.lane.b32.xlu0 %v3224, 109
  %v5023 = vpop.permute.xlu0 %5022
  %5024 = vrot.lane.b32.xlu0 %v3225, 109
  %v5025 = vpop.permute.xlu0 %5024
  %5026 = vrot.lane.b32.xlu0 %v3226, 109
  %v5027 = vpop.permute.xlu0 %5026
  %5028 = vrot.lane.b32.xlu0 %v3227, 109
  %v5029 = vpop.permute.xlu0 %5028
  %5030 = vrot.lane.b32.xlu0 %v3228, 109
  %v5031 = vpop.permute.xlu0 %5030
  %5032 = vrot.lane.b32.xlu0 %v3229, 109
  %v5033 = vpop.permute.xlu0 %5032
  %5034 = vrot.lane.b32.xlu0 %v3230, 109
  %v5035 = vpop.permute.xlu0 %5034
  %5036 = vrot.lane.b32.xlu0 %v3231, 109
  %v5037 = vpop.permute.xlu0 %5036
  %5038 = vrot.lane.b32.xlu0 %v3232, 109
  %v5039 = vpop.permute.xlu0 %5038
  %5040 = vrot.lane.b32.xlu0 %v3233, 109
  %v5041 = vpop.permute.xlu0 %5040
  %5042 = vrot.lane.b32.xlu0 %v3234, 109
  %v5043 = vpop.permute.xlu0 %5042
  %5044 = vrot.lane.b32.xlu0 %v3235, 109
  %v5045 = vpop.permute.xlu0 %5044
  %5046 = vrot.lane.b32.xlu0 %v3236, 109
  %v5047 = vpop.permute.xlu0 %5046
  %5048 = vrot.lane.b32.xlu0 %v3237, 109
  %v5049 = vpop.permute.xlu0 %5048
  %5050 = vrot.lane.b32.xlu0 %v3238, 109
  %v5051 = vpop.permute.xlu0 %5050
  %5052 = vrot.lane.b32.xlu0 %v3239, 109
  %v5053 = vpop.permute.xlu0 %5052
  %5054 = vrot.lane.b32.xlu0 %v3240, 109
  %v5055 = vpop.permute.xlu0 %5054
  %5056 = vrot.lane.b32.xlu0 %v3241, 109
  %v5057 = vpop.permute.xlu0 %5056
  %5058 = vrot.lane.b32.xlu0 %v3242, 109
  %v5059 = vpop.permute.xlu0 %5058
  %5060 = vrot.lane.b32.xlu0 %v3243, 109
  %v5061 = vpop.permute.xlu0 %5060
  %5062 = vrot.lane.b32.xlu0 %v3244, 109
  %v5063 = vpop.permute.xlu0 %5062
  %5064 = vrot.lane.b32.xlu0 %v3245, 109
  %v5065 = vpop.permute.xlu0 %5064
  %5066 = vrot.lane.b32.xlu0 %v3246, 109
  %v5067 = vpop.permute.xlu0 %5066
  %5068 = vrot.lane.b32.xlu0 %v3247, 109
  %v5069 = vpop.permute.xlu0 %5068
  %5070 = vrot.lane.b32.xlu0 %v3248, 109
  %v5071 = vpop.permute.xlu0 %5070
  %5072 = vrot.lane.b32.xlu0 %v3249, 109
  %v5073 = vpop.permute.xlu0 %5072
  %5074 = vrot.lane.b32.xlu0 %v3250, 109
  %v5075 = vpop.permute.xlu0 %5074
  %vm5076 = vcmask 891904
  %v5077 = vsel %vm5076, %v5021, %v5023
  %v5078 = vsel %vm5076, %v5023, %v5025
  %v5079 = vsel %vm5076, %v5025, %v5027
  %v5080 = vsel %vm5076, %v5027, %v5029
  %v5081 = vsel %vm5076, %v5029, %v5031
  %v5082 = vsel %vm5076, %v5031, %v5033
  %v5083 = vsel %vm5076, %v5035, %v5037
  %v5084 = vsel %vm5076, %v5037, %v5039
  %v5085 = vsel %vm5076, %v5039, %v5041
  %v5086 = vsel %vm5076, %v5041, %v5043
  %v5087 = vsel %vm5076, %v5043, %v5045
  %v5088 = vsel %vm5076, %v5045, %v5047
  %v5089 = vsel %vm5076, %v5049, %v5051
  %v5090 = vsel %vm5076, %v5051, %v5053
  %v5091 = vsel %vm5076, %v5053, %v5055
  %v5092 = vsel %vm5076, %v5055, %v5057
  %v5093 = vsel %vm5076, %v5057, %v5059
  %v5094 = vsel %vm5076, %v5059, %v5061
  %v5095 = vsel %vm5076, %v5063, %v5065
  %v5096 = vsel %vm5076, %v5065, %v5067
  %v5097 = vsel %vm5076, %v5067, %v5069
  %v5098 = vsel %vm5076, %v5069, %v5071
  %v5099 = vsel %vm5076, %v5071, %v5073
  %v5100 = vsel %vm5076, %v5073, %v5075
  %v5126 = vsel %vm603, %v5018, 0
  %v5129 = vsel %vm603, %v5019, 0
  %5131 = vmatprep.subr.bf16.mxu0 %v5078
  %5132 = vmatpush1.bf16.msra.mxu0 %v5077
  %5133 = vmatprep.subr.bf16.mxu0 %v5084
  %5134 = vmatpush1.bf16.msra.mxu0 %v5083
  %5135 = vmatprep.subr.bf16.mxu0 %v5090
  %5136 = vmatpush1.bf16.msra.mxu0 %v5089
  %5137 = vmatprep.subr.bf16.mxu0 %v5096
  %5138 = vmatpush1.bf16.msra.mxu0 %v5095
  %5139 = vmatprep.subr.bf16.mxu0 0
  %5140 = vmatpush1.bf16.msra.mxu0 0
  %5141 = vmatprep.subr.bf16.mxu0 0
  %5142 = vmatpush1.bf16.msra.mxu0 0
  %5143 = vmatprep.subr.bf16.mxu0 0
  %5144 = vmatpush1.bf16.msra.mxu0 0
  %5145 = vmatprep.subr.bf16.mxu0 0
  %5146 = vmatpush1.bf16.msra.mxu0 0
  %5147 = vmatprep.subr.bf16.mxu0 0
  %5148 = vmatpush1.bf16.msra.mxu0 0
  %5149 = vmatprep.subr.bf16.mxu0 0
  %5150 = vmatpush1.bf16.msra.mxu0 0
  %5151 = vmatprep.subr.bf16.mxu0 0
  %5152 = vmatpush1.bf16.msra.mxu0 0
  %5153 = vmatprep.subr.bf16.mxu0 0
  %5154 = vmatpush1.bf16.msra.mxu0 0
  %5155 = vmatprep.subr.bf16.mxu0 0
  %5156 = vmatpush1.bf16.msra.mxu0 0
  %5157 = vmatprep.subr.bf16.mxu0 0
  %5158 = vmatpush1.bf16.msra.mxu0 0
  %5159 = vmatprep.subr.bf16.mxu0 0
  %5160 = vmatpush1.bf16.msra.mxu0 0
  %5161 = vmatprep.subr.bf16.mxu0 0
  %5162 = vmatpush1.bf16.msra.mxu0 0
  %5163 = vmatprep.mubr.bf16.mxu0 0
  %5164 = vmatmul.mubr.bf16.gmra.mrb[0].mxu0 %v5126
  %v5165 = vpop.f32.mrb[0].mxu0
  %v5166 = vadd.f32 0.0, %v5165
  %v5167 = vpop.f32.mrb[0].mxu0
  %v5168 = vadd.f32 0.0, %v5167
  %v5169 = vpop.f32.mrb[0].mxu0
  %v5170 = vadd.f32 0.0, %v5169
  %v5171 = vpop.f32.mrb[0].mxu0
  %v5172 = vadd.f32 0.0, %v5171
  %5173 = vmatprep.mubr.bf16.mxu0 0
  %5174 = vmatmul.mubr.bf16.gmra.mrb[0].mxu0 %v5129
  %v5175 = vpop.f32.mrb[0].mxu0
  %v5176 = vadd.f32 0.0, %v5175
  %v5177 = vpop.f32.mrb[0].mxu0
  %v5178 = vadd.f32 0.0, %v5177
  %v5179 = vpop.f32.mrb[0].mxu0
  %v5180 = vadd.f32 0.0, %v5179
  %v5181 = vpop.f32.mrb[0].mxu0
  %v5182 = vadd.f32 0.0, %v5181
  %5183 = vdwg.mxu0
  %5184 = vmatprep.subr.bf16.mxu0 %v5080
  %5185 = vmatpush1.bf16.msra.mxu0 %v5079
  %5186 = vmatprep.subr.bf16.mxu0 %v5086
  %5187 = vmatpush1.bf16.msra.mxu0 %v5085
  %5188 = vmatprep.subr.bf16.mxu0 %v5092
  %5189 = vmatpush1.bf16.msra.mxu0 %v5091
  %5190 = vmatprep.subr.bf16.mxu0 %v5098
  %5191 = vmatpush1.bf16.msra.mxu0 %v5097
  %5192 = vmatprep.subr.bf16.mxu0 0
  %5193 = vmatpush1.bf16.msra.mxu0 0
  %5194 = vmatprep.subr.bf16.mxu0 0
  %5195 = vmatpush1.bf16.msra.mxu0 0
  %5196 = vmatprep.subr.bf16.mxu0 0
  %5197 = vmatpush1.bf16.msra.mxu0 0
  %5198 = vmatprep.subr.bf16.mxu0 0
  %5199 = vmatpush1.bf16.msra.mxu0 0
  %5200 = vmatprep.subr.bf16.mxu0 0
  %5201 = vmatpush1.bf16.msra.mxu0 0
  %5202 = vmatprep.subr.bf16.mxu0 0
  %5203 = vmatpush1.bf16.msra.mxu0 0
  %5204 = vmatprep.subr.bf16.mxu0 0
  %5205 = vmatpush1.bf16.msra.mxu0 0
  %5206 = vmatprep.subr.bf16.mxu0 0
  %5207 = vmatpush1.bf16.msra.mxu0 0
  %5208 = vmatprep.subr.bf16.mxu0 0
  %5209 = vmatpush1.bf16.msra.mxu0 0
  %5210 = vmatprep.subr.bf16.mxu0 0
  %5211 = vmatpush1.bf16.msra.mxu0 0
  %5212 = vmatprep.subr.bf16.mxu0 0
  %5213 = vmatpush1.bf16.msra.mxu0 0
  %5214 = vmatprep.subr.bf16.mxu0 0
  %5215 = vmatpush1.bf16.msra.mxu0 0
  %5216 = vmatprep.mubr.bf16.mxu0 0
  %5217 = vmatmul.mubr.bf16.gmra.mrb[0].mxu0 %v5126
  %v5218 = vpop.f32.mrb[0].mxu0
  %v5219 = vadd.f32 0.0, %v5218
  %v5220 = vpop.f32.mrb[0].mxu0
  %v5221 = vadd.f32 0.0, %v5220
  %v5222 = vpop.f32.mrb[0].mxu0
  %v5223 = vadd.f32 0.0, %v5222
  %v5224 = vpop.f32.mrb[0].mxu0
  %v5225 = vadd.f32 0.0, %v5224
  %5226 = vmatprep.mubr.bf16.mxu0 0
  %5227 = vmatmul.mubr.bf16.gmra.mrb[0].mxu0 %v5129
  %v5228 = vpop.f32.mrb[0].mxu0
  %v5229 = vadd.f32 0.0, %v5228
  %v5230 = vpop.f32.mrb[0].mxu0
  %v5231 = vadd.f32 0.0, %v5230
  %v5232 = vpop.f32.mrb[0].mxu0
  %v5233 = vadd.f32 0.0, %v5232
  %v5234 = vpop.f32.mrb[0].mxu0
  %v5235 = vadd.f32 0.0, %v5234
  %5236 = vdwg.mxu0
  %5237 = vmatprep.subr.bf16.mxu0 %v5082
  %5238 = vmatpush1.bf16.msra.mxu0 %v5081
  %5239 = vmatprep.subr.bf16.mxu0 %v5088
  %5240 = vmatpush1.bf16.msra.mxu0 %v5087
  %5241 = vmatprep.subr.bf16.mxu0 %v5094
  %5242 = vmatpush1.bf16.msra.mxu0 %v5093
  %5243 = vmatprep.subr.bf16.mxu0 %v5100
  %5244 = vmatpush1.bf16.msra.mxu0 %v5099
  %5245 = vmatprep.subr.bf16.mxu0 0
  %5246 = vmatpush1.bf16.msra.mxu0 0
  %5247 = vmatprep.subr.bf16.mxu0 0
  %5248 = vmatpush1.bf16.msra.mxu0 0
  %5249 = vmatprep.subr.bf16.mxu0 0
  %5250 = vmatpush1.bf16.msra.mxu0 0
  %5251 = vmatprep.subr.bf16.mxu0 0
  %5252 = vmatpush1.bf16.msra.mxu0 0
  %5253 = vmatprep.subr.bf16.mxu0 0
  %5254 = vmatpush1.bf16.msra.mxu0 0
  %5255 = vmatprep.subr.bf16.mxu0 0
  %5256 = vmatpush1.bf16.msra.mxu0 0
  %5257 = vmatprep.subr.bf16.mxu0 0
  %5258 = vmatpush1.bf16.msra.mxu0 0
  %5259 = vmatprep.subr.bf16.mxu0 0
  %5260 = vmatpush1.bf16.msra.mxu0 0
  %5261 = vmatprep.subr.bf16.mxu0 0
  %5262 = vmatpush1.bf16.msra.mxu0 0
  %5263 = vmatprep.subr.bf16.mxu0 0
  %5264 = vmatpush1.bf16.msra.mxu0 0
  %5265 = vmatprep.subr.bf16.mxu0 0
  %5266 = vmatpush1.bf16.msra.mxu0 0
  %5267 = vmatprep.subr.bf16.mxu0 0
  %5268 = vmatpush1.bf16.msra.mxu0 0
  %5269 = vmatprep.mubr.bf16.mxu0 0
  %5270 = vmatmul.mubr.bf16.gmra.mrb[0].mxu0 %v5126
  %v5271 = vpop.f32.mrb[0].mxu0
  %v5272 = vadd.f32 0.0, %v5271
  %v5273 = vpop.f32.mrb[0].mxu0
  %v5274 = vadd.f32 0.0, %v5273
  %v5275 = vpop.f32.mrb[0].mxu0
  %v5276 = vadd.f32 0.0, %v5275
  %v5277 = vpop.f32.mrb[0].mxu0
  %v5278 = vadd.f32 0.0, %v5277
  %5279 = vmatprep.mubr.bf16.mxu0 0
  %5280 = vmatmul.mubr.bf16.gmra.mrb[0].mxu0 %v5129
  %v5281 = vpop.f32.mrb[0].mxu0
  %v5282 = vadd.f32 0.0, %v5281
  %v5283 = vpop.f32.mrb[0].mxu0
  %v5284 = vadd.f32 0.0, %v5283
  %v5285 = vpop.f32.mrb[0].mxu0
  %v5286 = vadd.f32 0.0, %v5285
  %v5287 = vpop.f32.mrb[0].mxu0
  %v5288 = vadd.f32 0.0, %v5287
  %5289 = vdwg.mxu0
  %v5290 = vadd.f32 %v4981, %v5166
  %v5291 = vadd.f32 %v4982, %v5168
  %v5292 = vadd.f32 %v4983, %v5219
  %v5293 = vadd.f32 %v4984, %v5221
  %v5294 = vadd.f32 %v4985, %v5272
  %v5295 = vadd.f32 %v4986, %v5274
  %v5296 = vadd.f32 %v4987, %v5170
  %v5297 = vadd.f32 %v4988, %v5172
  %v5298 = vadd.f32 %v4989, %v5223
  %v5299 = vadd.f32 %v4990, %v5225
  %v5300 = vadd.f32 %v4991, %v5276
  %v5301 = vadd.f32 %v4992, %v5278
  %v5302 = vadd.f32 %v4993, %v5176
  %v5303 = vadd.f32 %v4994, %v5178
  %v5304 = vadd.f32 %v4995, %v5229
  %v5305 = vadd.f32 %v4996, %v5231
  %v5306 = vadd.f32 %v4997, %v5282
  %v5307 = vadd.f32 %v4998, %v5284
  %v5308 = vadd.f32 %v4999, %v5180
  %v5309 = vadd.f32 %v5000, %v5182
  %v5310 = vadd.f32 %v5001, %v5233
  %v5311 = vadd.f32 %v5002, %v5235
  %v5312 = vadd.f32 %v5003, %v5286
  %v5313 = vadd.f32 %v5004, %v5288
  %s5314 = scalar_lea.vmem %s3, 128
  %v5315 = vld [vmem:[%s5314] sm:$0xf]
  %v5316 = vld [vmem:[%s5314 + $0x4] sm:$0xf]
  %v5317 = vld [vmem:[%s5314 + $0x8] sm:$0xf]
  %v5318 = vld [vmem:[%s5314 + $0xc] sm:$0xf]
  %v5323 = vunpack.c.l.b16 %v5315
  %v5324 = vunpack.c.l.b16 %v5316
  %v5325 = vunpack.c.l.b16 %v5317
  %v5326 = vunpack.c.l.b16 %v5318
  %v5327 = vpack.c.b16 %v5324, %v5323
  %v5328 = vpack.c.b16 %v5326, %v5325
  %5329 = vrot.lane.b32.xlu0 %v3620, 109
  %v5330 = vpop.permute.xlu0 %5329
  %5331 = vrot.lane.b32.xlu0 %v3621, 109
  %v5332 = vpop.permute.xlu0 %5331
  %5333 = vrot.lane.b32.xlu0 %v3622, 109
  %v5334 = vpop.permute.xlu0 %5333
  %5335 = vrot.lane.b32.xlu0 %v3623, 109
  %v5336 = vpop.permute.xlu0 %5335
  %5337 = vrot.lane.b32.xlu0 %v3624, 109
  %v5338 = vpop.permute.xlu0 %5337
  %5339 = vrot.lane.b32.xlu0 %v3625, 109
  %v5340 = vpop.permute.xlu0 %5339
  %5341 = vrot.lane.b32.xlu0 %v3626, 109
  %v5342 = vpop.permute.xlu0 %5341
  %5343 = vrot.lane.b32.xlu0 %v3627, 109
  %v5344 = vpop.permute.xlu0 %5343
  %5345 = vrot.lane.b32.xlu0 %v3628, 109
  %v5346 = vpop.permute.xlu0 %5345
  %5347 = vrot.lane.b32.xlu0 %v3629, 109
  %v5348 = vpop.permute.xlu0 %5347
  %5349 = vrot.lane.b32.xlu0 %v3630, 109
  %v5350 = vpop.permute.xlu0 %5349
  %5351 = vrot.lane.b32.xlu0 %v3631, 109
  %v5352 = vpop.permute.xlu0 %5351
  %5353 = vrot.lane.b32.xlu0 %v3632, 109
  %v5354 = vpop.permute.xlu0 %5353
  %5355 = vrot.lane.b32.xlu0 %v3633, 109
  %v5356 = vpop.permute.xlu0 %5355
  %v5357 = vsel %vm5076, %v5330, %v5332
  %v5358 = vsel %vm5076, %v5332, %v5334
  %v5359 = vsel %vm5076, %v5334, %v5336
  %v5360 = vsel %vm5076, %v5336, %v5338
  %v5361 = vsel %vm5076, %v5338, %v5340
  %v5362 = vsel %vm5076, %v5340, %v5342
  %v5363 = vsel %vm5076, %v5344, %v5346
  %v5364 = vsel %vm5076, %v5346, %v5348
  %v5365 = vsel %vm5076, %v5348, %v5350
  %v5366 = vsel %vm5076, %v5350, %v5352
  %v5367 = vsel %vm5076, %v5352, %v5354
  %v5368 = vsel %vm5076, %v5354, %v5356
  %v5382 = vsel %vm207, %v5327, 0
  %v5385 = vsel %vm207, %v5328, 0
  %5387 = vmatprep.subr.bf16.mxu0 %v5358
  %5388 = vmatpush1.bf16.msra.mxu0 %v5357
  %5389 = vmatprep.subr.bf16.mxu0 %v5364
  %5390 = vmatpush1.bf16.msra.mxu0 %v5363
  %5391 = vmatprep.subr.bf16.mxu0 0
  %5392 = vmatpush1.bf16.msra.mxu0 0
  %5393 = vmatprep.subr.bf16.mxu0 0
  %5394 = vmatpush1.bf16.msra.mxu0 0
  %5395 = vmatprep.subr.bf16.mxu0 0
  %5396 = vmatpush1.bf16.msra.mxu0 0
  %5397 = vmatprep.subr.bf16.mxu0 0
  %5398 = vmatpush1.bf16.msra.mxu0 0
  %5399 = vmatprep.subr.bf16.mxu0 0
  %5400 = vmatpush1.bf16.msra.mxu0 0
  %5401 = vmatprep.subr.bf16.mxu0 0
  %5402 = vmatpush1.bf16.msra.mxu0 0
  %5403 = vmatprep.subr.bf16.mxu0 0
  %5404 = vmatpush1.bf16.msra.mxu0 0
  %5405 = vmatprep.subr.bf16.mxu0 0
  %5406 = vmatpush1.bf16.msra.mxu0 0
  %5407 = vmatprep.subr.bf16.mxu0 0
  %5408 = vmatpush1.bf16.msra.mxu0 0
  %5409 = vmatprep.subr.bf16.mxu0 0
  %5410 = vmatpush1.bf16.msra.mxu0 0
  %5411 = vmatprep.subr.bf16.mxu0 0
  %5412 = vmatpush1.bf16.msra.mxu0 0
  %5413 = vmatprep.subr.bf16.mxu0 0
  %5414 = vmatpush1.bf16.msra.mxu0 0
  %5415 = vmatprep.subr.bf16.mxu0 0
  %5416 = vmatpush1.bf16.msra.mxu0 0
  %5417 = vmatprep.subr.bf16.mxu0 0
  %5418 = vmatpush1.bf16.msra.mxu0 0
  %5419 = vmatprep.mubr.bf16.mxu0 0
  %5420 = vmatmul.mubr.bf16.gmra.mrb[0].mxu0 %v5382
  %v5421 = vpop.f32.mrb[0].mxu0
  %v5422 = vadd.f32 0.0, %v5421
  %v5423 = vpop.f32.mrb[0].mxu0
  %v5424 = vadd.f32 0.0, %v5423
  %v5425 = vpop.f32.mrb[0].mxu0
  %v5426 = vadd.f32 0.0, %v5425
  %v5427 = vpop.f32.mrb[0].mxu0
  %v5428 = vadd.f32 0.0, %v5427
  %5429 = vmatprep.mubr.bf16.mxu0 0
  %5430 = vmatmul.mubr.bf16.gmra.mrb[0].mxu0 %v5385
  %v5431 = vpop.f32.mrb[0].mxu0
  %v5432 = vadd.f32 0.0, %v5431
  %v5433 = vpop.f32.mrb[0].mxu0
  %v5434 = vadd.f32 0.0, %v5433
  %v5435 = vpop.f32.mrb[0].mxu0
  %v5436 = vadd.f32 0.0, %v5435
  %v5437 = vpop.f32.mrb[0].mxu0
  %v5438 = vadd.f32 0.0, %v5437
  %5439 = vdwg.mxu0
  %5440 = vmatprep.subr.bf16.mxu0 %v5360
  %5441 = vmatpush1.bf16.msra.mxu0 %v5359
  %5442 = vmatprep.subr.bf16.mxu0 %v5366
  %5443 = vmatpush1.bf16.msra.mxu0 %v5365
  %5444 = vmatprep.subr.bf16.mxu0 0
  %5445 = vmatpush1.bf16.msra.mxu0 0
  %5446 = vmatprep.subr.bf16.mxu0 0
  %5447 = vmatpush1.bf16.msra.mxu0 0
  %5448 = vmatprep.subr.bf16.mxu0 0
  %5449 = vmatpush1.bf16.msra.mxu0 0
  %5450 = vmatprep.subr.bf16.mxu0 0
  %5451 = vmatpush1.bf16.msra.mxu0 0
  %5452 = vmatprep.subr.bf16.mxu0 0
  %5453 = vmatpush1.bf16.msra.mxu0 0
  %5454 = vmatprep.subr.bf16.mxu0 0
  %5455 = vmatpush1.bf16.msra.mxu0 0
  %5456 = vmatprep.subr.bf16.mxu0 0
  %5457 = vmatpush1.bf16.msra.mxu0 0
  %5458 = vmatprep.subr.bf16.mxu0 0
  %5459 = vmatpush1.bf16.msra.mxu0 0
  %5460 = vmatprep.subr.bf16.mxu0 0
  %5461 = vmatpush1.bf16.msra.mxu0 0
  %5462 = vmatprep.subr.bf16.mxu0 0
  %5463 = vmatpush1.bf16.msra.mxu0 0
  %5464 = vmatprep.subr.bf16.mxu0 0
  %5465 = vmatpush1.bf16.msra.mxu0 0
  %5466 = vmatprep.subr.bf16.mxu0 0
  %5467 = vmatpush1.bf16.msra.mxu0 0
  %5468 = vmatprep.subr.bf16.mxu0 0
  %5469 = vmatpush1.bf16.msra.mxu0 0
  %5470 = vmatprep.subr.bf16.mxu0 0
  %5471 = vmatpush1.bf16.msra.mxu0 0
  %5472 = vmatprep.mubr.bf16.mxu0 0
  %5473 = vmatmul.mubr.bf16.gmra.mrb[0].mxu0 %v5382
  %v5474 = vpop.f32.mrb[0].mxu0
  %v5475 = vadd.f32 0.0, %v5474
  %v5476 = vpop.f32.mrb[0].mxu0
  %v5477 = vadd.f32 0.0, %v5476
  %v5478 = vpop.f32.mrb[0].mxu0
  %v5479 = vadd.f32 0.0, %v5478
  %v5480 = vpop.f32.mrb[0].mxu0
  %v5481 = vadd.f32 0.0, %v5480
  %5482 = vmatprep.mubr.bf16.mxu0 0
  %5483 = vmatmul.mubr.bf16.gmra.mrb[0].mxu0 %v5385
  %v5484 = vpop.f32.mrb[0].mxu0
  %v5485 = vadd.f32 0.0, %v5484
  %v5486 = vpop.f32.mrb[0].mxu0
  %v5487 = vadd.f32 0.0, %v5486
  %v5488 = vpop.f32.mrb[0].mxu0
  %v5489 = vadd.f32 0.0, %v5488
  %v5490 = vpop.f32.mrb[0].mxu0
  %v5491 = vadd.f32 0.0, %v5490
  %5492 = vdwg.mxu0
  %5493 = vmatprep.subr.bf16.mxu0 %v5362
  %5494 = vmatpush1.bf16.msra.mxu0 %v5361
  %5495 = vmatprep.subr.bf16.mxu0 %v5368
  %5496 = vmatpush1.bf16.msra.mxu0 %v5367
  %5497 = vmatprep.subr.bf16.mxu0 0
  %5498 = vmatpush1.bf16.msra.mxu0 0
  %5499 = vmatprep.subr.bf16.mxu0 0
  %5500 = vmatpush1.bf16.msra.mxu0 0
  %5501 = vmatprep.subr.bf16.mxu0 0
  %5502 = vmatpush1.bf16.msra.mxu0 0
  %5503 = vmatprep.subr.bf16.mxu0 0
  %5504 = vmatpush1.bf16.msra.mxu0 0
  %5505 = vmatprep.subr.bf16.mxu0 0
  %5506 = vmatpush1.bf16.msra.mxu0 0
  %5507 = vmatprep.subr.bf16.mxu0 0
  %5508 = vmatpush1.bf16.msra.mxu0 0
  %5509 = vmatprep.subr.bf16.mxu0 0
  %5510 = vmatpush1.bf16.msra.mxu0 0
  %5511 = vmatprep.subr.bf16.mxu0 0
  %5512 = vmatpush1.bf16.msra.mxu0 0
  %5513 = vmatprep.subr.bf16.mxu0 0
  %5514 = vmatpush1.bf16.msra.mxu0 0
  %5515 = vmatprep.subr.bf16.mxu0 0
  %5516 = vmatpush1.bf16.msra.mxu0 0
  %5517 = vmatprep.subr.bf16.mxu0 0
  %5518 = vmatpush1.bf16.msra.mxu0 0
  %5519 = vmatprep.subr.bf16.mxu0 0
  %5520 = vmatpush1.bf16.msra.mxu0 0
  %5521 = vmatprep.subr.bf16.mxu0 0
  %5522 = vmatpush1.bf16.msra.mxu0 0
  %5523 = vmatprep.subr.bf16.mxu0 0
  %5524 = vmatpush1.bf16.msra.mxu0 0
  %5525 = vmatprep.mubr.bf16.mxu0 0
  %5526 = vmatmul.mubr.bf16.gmra.mrb[0].mxu0 %v5382
  %v5527 = vpop.f32.mrb[0].mxu0
  %v5528 = vadd.f32 0.0, %v5527
  %v5529 = vpop.f32.mrb[0].mxu0
  %v5530 = vadd.f32 0.0, %v5529
  %v5531 = vpop.f32.mrb[0].mxu0
  %v5532 = vadd.f32 0.0, %v5531
  %v5533 = vpop.f32.mrb[0].mxu0
  %v5534 = vadd.f32 0.0, %v5533
  %5535 = vmatprep.mubr.bf16.mxu0 0
  %5536 = vmatmul.mubr.bf16.gmra.mrb[0].mxu0 %v5385
  %v5537 = vpop.f32.mrb[0].mxu0
  %v5538 = vadd.f32 0.0, %v5537
  %v5539 = vpop.f32.mrb[0].mxu0
  %v5540 = vadd.f32 0.0, %v5539
  %v5541 = vpop.f32.mrb[0].mxu0
  %v5542 = vadd.f32 0.0, %v5541
  %v5543 = vpop.f32.mrb[0].mxu0
  %v5544 = vadd.f32 0.0, %v5543
  %5545 = vdwg.mxu0
  %v5546 = vadd.f32 %v5290, %v5422
  %v5547 = vadd.f32 %v5291, %v5424
  %v5548 = vadd.f32 %v5292, %v5475
  %v5549 = vadd.f32 %v5293, %v5477
  %v5550 = vadd.f32 %v5294, %v5528
  %v5551 = vadd.f32 %v5295, %v5530
  %v5552 = vadd.f32 %v5296, %v5426
  %v5553 = vadd.f32 %v5297, %v5428
  %v5554 = vadd.f32 %v5298, %v5479
  %v5555 = vadd.f32 %v5299, %v5481
  %v5556 = vadd.f32 %v5300, %v5532
  %v5557 = vadd.f32 %v5301, %v5534
  %v5558 = vadd.f32 %v5302, %v5432
  %v5559 = vadd.f32 %v5303, %v5434
  %v5560 = vadd.f32 %v5304, %v5485
  %v5561 = vadd.f32 %v5305, %v5487
  %v5562 = vadd.f32 %v5306, %v5538
  %v5563 = vadd.f32 %v5307, %v5540
  %v5564 = vadd.f32 %v5308, %v5436
  %v5565 = vadd.f32 %v5309, %v5438
  %v5566 = vadd.f32 %v5310, %v5489
  %v5567 = vadd.f32 %v5311, %v5491
  %v5568 = vadd.f32 %v5312, %v5542
  %v5569 = vadd.f32 %v5313, %v5544
  %v5570 = vld [vmem:[%s4] sm:$0xff]
  %v5571 = vld [vmem:[%s4 + $0x8] sm:$0xff]
  %v5572 = vld [vmem:[%s4 + $0x10] sm:$0xff]
  %v5573 = vld [vmem:[%s4 + $0x18] sm:$0xff]
  %5575 = vset.pattern.permute.xlu0 0
  %5576 = vperm.xlu0 %5575, %v5570
  %v5577 = vpop.permute.xlu0 %5576
  %5580 = vset.pattern.permute.xlu0 0
  %5581 = vperm.xlu0 %5580, %v5571
  %v5582 = vpop.permute.xlu0 %5581
  %5585 = vset.pattern.permute.xlu0 0
  %5586 = vperm.xlu0 %5585, %v5572
  %v5587 = vpop.permute.xlu0 %5586
  %5590 = vset.pattern.permute.xlu0 0
  %5591 = vperm.xlu0 %5590, %v5573
  %v5592 = vpop.permute.xlu0 %5591
  %v5594 = vadd.f32 %v5546, %v5577
  %v5595 = vadd.f32 %v5547, %v5577
  %v5596 = vadd.f32 %v5548, %v5577
  %v5597 = vadd.f32 %v5549, %v5577
  %v5598 = vadd.f32 %v5550, %v5577
  %v5599 = vadd.f32 %v5551, %v5577
  %v5600 = vadd.f32 %v5552, %v5582
  %v5601 = vadd.f32 %v5553, %v5582
  %v5602 = vadd.f32 %v5554, %v5582
  %v5603 = vadd.f32 %v5555, %v5582
  %v5604 = vadd.f32 %v5556, %v5582
  %v5605 = vadd.f32 %v5557, %v5582
  %v5606 = vadd.f32 %v5558, %v5587
  %v5607 = vadd.f32 %v5559, %v5587
  %v5608 = vadd.f32 %v5560, %v5587
  %v5609 = vadd.f32 %v5561, %v5587
  %v5610 = vadd.f32 %v5562, %v5587
  %v5611 = vadd.f32 %v5563, %v5587
  %v5612 = vadd.f32 %v5564, %v5592
  %v5613 = vadd.f32 %v5565, %v5592
  %v5614 = vadd.f32 %v5566, %v5592
  %v5615 = vadd.f32 %v5567, %v5592
  %v5616 = vadd.f32 %v5568, %v5592
  %v5617 = vadd.f32 %v5569, %v5592
  %v5618 = vmax.f32 %v5594, 0.0
  %v5619 = vmax.f32 %v5595, 0.0
  %v5620 = vmax.f32 %v5596, 0.0
  %v5621 = vmax.f32 %v5597, 0.0
  %v5622 = vmax.f32 %v5598, 0.0
  %v5623 = vmax.f32 %v5599, 0.0
  %v5624 = vmax.f32 %v5600, 0.0
  %v5625 = vmax.f32 %v5601, 0.0
  %v5626 = vmax.f32 %v5602, 0.0
  %v5627 = vmax.f32 %v5603, 0.0
  %v5628 = vmax.f32 %v5604, 0.0
  %v5629 = vmax.f32 %v5605, 0.0
  %v5630 = vmax.f32 %v5606, 0.0
  %v5631 = vmax.f32 %v5607, 0.0
  %v5632 = vmax.f32 %v5608, 0.0
  %v5633 = vmax.f32 %v5609, 0.0
  %v5634 = vmax.f32 %v5610, 0.0
  %v5635 = vmax.f32 %v5611, 0.0
  %v5636 = vmax.f32 %v5612, 0.0
  %v5637 = vmax.f32 %v5613, 0.0
  %v5638 = vmax.f32 %v5614, 0.0
  %v5639 = vmax.f32 %v5615, 0.0
  %v5640 = vmax.f32 %v5616, 0.0
  %v5641 = vmax.f32 %v5617, 0.0
  %v5642 = vld [vmem:[%s5] sm:$0x3f]
  %v5644 = vlaneseq
  %v5645 = vshrl.u32 %v5644, 7
  %v5646 = vsub.s32 0, %v5645
  %v5647 = vrot.slane %v5642, %v5646
  %v5648 = vlaneseq
  %v5649 = vshrl.u32 %v5648, 7
  %v5650 = vsub.s32 1, %v5649
  %v5651 = vrot.slane %v5642, %v5650
  %v5652 = vlaneseq
  %v5653 = vshrl.u32 %v5652, 7
  %v5654 = vsub.s32 2, %v5653
  %v5655 = vrot.slane %v5642, %v5654
  %v5656 = vlaneseq
  %v5657 = vshrl.u32 %v5656, 7
  %v5658 = vsub.s32 3, %v5657
  %v5659 = vrot.slane %v5642, %v5658
  %v5660 = vlaneseq
  %v5661 = vshrl.u32 %v5660, 7
  %v5662 = vsub.s32 4, %v5661
  %v5663 = vrot.slane %v5642, %v5662
  %v5664 = vlaneseq
  %v5665 = vshrl.u32 %v5664, 7
  %v5666 = vsub.s32 5, %v5665
  %v5667 = vrot.slane %v5642, %v5666
  %v5674 = vmul.f32 %v5618, %v5647
  %v5675 = vmul.f32 %v5619, %v5651
  %v5676 = vmul.f32 %v5620, %v5655
  %v5677 = vmul.f32 %v5621, %v5659
  %v5678 = vmul.f32 %v5622, %v5663
  %v5679 = vmul.f32 %v5623, %v5667
  %v5680 = vmul.f32 %v5624, %v5647
  %v5681 = vmul.f32 %v5625, %v5651
  %v5682 = vmul.f32 %v5626, %v5655
  %v5683 = vmul.f32 %v5627, %v5659
  %v5684 = vmul.f32 %v5628, %v5663
  %v5685 = vmul.f32 %v5629, %v5667
  %v5686 = vmul.f32 %v5630, %v5647
  %v5687 = vmul.f32 %v5631, %v5651
  %v5688 = vmul.f32 %v5632, %v5655
  %v5689 = vmul.f32 %v5633, %v5659
  %v5690 = vmul.f32 %v5634, %v5663
  %v5691 = vmul.f32 %v5635, %v5667
  %v5692 = vmul.f32 %v5636, %v5647
  %v5693 = vmul.f32 %v5637, %v5651
  %v5694 = vmul.f32 %v5638, %v5655
  %v5695 = vmul.f32 %v5639, %v5659
  %v5696 = vmul.f32 %v5640, %v5663
  %v5697 = vmul.f32 %v5641, %v5667
  %v5698 = vld [vmem:[%s6] sm:$0xf]
  %v5699 = vpack.c.bf16 %v5680, %v5674
  %v5700 = vpack.c.bf16 %v5681, %v5675
  %v5701 = vpack.c.bf16 %v5682, %v5676
  %v5702 = vpack.c.bf16 %v5683, %v5677
  %v5703 = vpack.c.bf16 %v5684, %v5678
  %v5704 = vpack.c.bf16 %v5685, %v5679
  %v5705 = vpack.c.bf16 %v5692, %v5686
  %v5706 = vpack.c.bf16 %v5693, %v5687
  %v5707 = vpack.c.bf16 %v5694, %v5688
  %v5708 = vpack.c.bf16 %v5695, %v5689
  %v5709 = vpack.c.bf16 %v5696, %v5690
  %v5710 = vpack.c.bf16 %v5697, %v5691
  %v5711 = vld [vmem:[%s7] sm:$0xff]
  %5713 = vset.pattern.permute.xlu0 0
  %5714 = vperm.xlu0 %5713, %v5711
  %v5715 = vpop.permute.xlu0 %5714
  %v5718 = vsel %vm207, %v5698, 0
  %5720 = vmatprep.subr.bf16.mxu0 %v5700
  %5721 = vmatpush1.bf16.msra.mxu0 %v5699
  %5722 = vmatprep.subr.bf16.mxu0 %v5706
  %5723 = vmatpush1.bf16.msra.mxu0 %v5705
  %5724 = vmatprep.subr.bf16.mxu0 0
  %5725 = vmatpush1.bf16.msra.mxu0 0
  %5726 = vmatprep.subr.bf16.mxu0 0
  %5727 = vmatpush1.bf16.msra.mxu0 0
  %5728 = vmatprep.subr.bf16.mxu0 0
  %5729 = vmatpush1.bf16.msra.mxu0 0
  %5730 = vmatprep.subr.bf16.mxu0 0
  %5731 = vmatpush1.bf16.msra.mxu0 0
  %5732 = vmatprep.subr.bf16.mxu0 0
  %5733 = vmatpush1.bf16.msra.mxu0 0
  %5734 = vmatprep.subr.bf16.mxu0 0
  %5735 = vmatpush1.bf16.msra.mxu0 0
  %5736 = vmatprep.subr.bf16.mxu0 0
  %5737 = vmatpush1.bf16.msra.mxu0 0
  %5738 = vmatprep.subr.bf16.mxu0 0
  %5739 = vmatpush1.bf16.msra.mxu0 0
  %5740 = vmatprep.subr.bf16.mxu0 0
  %5741 = vmatpush1.bf16.msra.mxu0 0
  %5742 = vmatprep.subr.bf16.mxu0 0
  %5743 = vmatpush1.bf16.msra.mxu0 0
  %5744 = vmatprep.subr.bf16.mxu0 0
  %5745 = vmatpush1.bf16.msra.mxu0 0
  %5746 = vmatprep.subr.bf16.mxu0 0
  %5747 = vmatpush1.bf16.msra.mxu0 0
  %5748 = vmatprep.subr.bf16.mxu0 0
  %5749 = vmatpush1.bf16.msra.mxu0 0
  %5750 = vmatprep.subr.bf16.mxu0 0
  %5751 = vmatpush1.bf16.msra.mxu0 0
  %5752 = vmatprep.mubr.bf16.mxu0 0
  %5753 = vmatmul.mubr.bf16.gmra.mrb[0].mxu0 %v5718
  %v5754 = vpop.f32.mrb[0].mxu0
  %v5755 = vadd.f32 %v5715, %v5754
  %v5756 = vpop.f32.mrb[0].mxu0
  %v5757 = vadd.f32 %v5715, %v5756
  %v5758 = vpop.f32.mrb[0].mxu0
  %v5759 = vpop.f32.mrb[0].mxu0
  %5760 = vdwg.mxu0
  %5761 = vmatprep.subr.bf16.mxu0 %v5702
  %5762 = vmatpush1.bf16.msra.mxu0 %v5701
  %5763 = vmatprep.subr.bf16.mxu0 %v5708
  %5764 = vmatpush1.bf16.msra.mxu0 %v5707
  %5765 = vmatprep.subr.bf16.mxu0 0
  %5766 = vmatpush1.bf16.msra.mxu0 0
  %5767 = vmatprep.subr.bf16.mxu0 0
  %5768 = vmatpush1.bf16.msra.mxu0 0
  %5769 = vmatprep.subr.bf16.mxu0 0
  %5770 = vmatpush1.bf16.msra.mxu0 0
  %5771 = vmatprep.subr.bf16.mxu0 0
  %5772 = vmatpush1.bf16.msra.mxu0 0
  %5773 = vmatprep.subr.bf16.mxu0 0
  %5774 = vmatpush1.bf16.msra.mxu0 0
  %5775 = vmatprep.subr.bf16.mxu0 0
  %5776 = vmatpush1.bf16.msra.mxu0 0
  %5777 = vmatprep.subr.bf16.mxu0 0
  %5778 = vmatpush1.bf16.msra.mxu0 0
  %5779 = vmatprep.subr.bf16.mxu0 0
  %5780 = vmatpush1.bf16.msra.mxu0 0
  %5781 = vmatprep.subr.bf16.mxu0 0
  %5782 = vmatpush1.bf16.msra.mxu0 0
  %5783 = vmatprep.subr.bf16.mxu0 0
  %5784 = vmatpush1.bf16.msra.mxu0 0
  %5785 = vmatprep.subr.bf16.mxu0 0
  %5786 = vmatpush1.bf16.msra.mxu0 0
  %5787 = vmatprep.subr.bf16.mxu0 0
  %5788 = vmatpush1.bf16.msra.mxu0 0
  %5789 = vmatprep.subr.bf16.mxu0 0
  %5790 = vmatpush1.bf16.msra.mxu0 0
  %5791 = vmatprep.subr.bf16.mxu0 0
  %5792 = vmatpush1.bf16.msra.mxu0 0
  %5793 = vmatprep.mubr.bf16.mxu0 0
  %5794 = vmatmul.mubr.bf16.gmra.mrb[0].mxu0 %v5718
  %v5795 = vpop.f32.mrb[0].mxu0
  %v5796 = vadd.f32 %v5715, %v5795
  %v5797 = vpop.f32.mrb[0].mxu0
  %v5798 = vadd.f32 %v5715, %v5797
  %v5799 = vpop.f32.mrb[0].mxu0
  %v5800 = vpop.f32.mrb[0].mxu0
  %5801 = vdwg.mxu0
  %5802 = vmatprep.subr.bf16.mxu0 %v5704
  %5803 = vmatpush1.bf16.msra.mxu0 %v5703
  %5804 = vmatprep.subr.bf16.mxu0 %v5710
  %5805 = vmatpush1.bf16.msra.mxu0 %v5709
  %5806 = vmatprep.subr.bf16.mxu0 0
  %5807 = vmatpush1.bf16.msra.mxu0 0
  %5808 = vmatprep.subr.bf16.mxu0 0
  %5809 = vmatpush1.bf16.msra.mxu0 0
  %5810 = vmatprep.subr.bf16.mxu0 0
  %5811 = vmatpush1.bf16.msra.mxu0 0
  %5812 = vmatprep.subr.bf16.mxu0 0
  %5813 = vmatpush1.bf16.msra.mxu0 0
  %5814 = vmatprep.subr.bf16.mxu0 0
  %5815 = vmatpush1.bf16.msra.mxu0 0
  %5816 = vmatprep.subr.bf16.mxu0 0
  %5817 = vmatpush1.bf16.msra.mxu0 0
  %5818 = vmatprep.subr.bf16.mxu0 0
  %5819 = vmatpush1.bf16.msra.mxu0 0
  %5820 = vmatprep.subr.bf16.mxu0 0
  %5821 = vmatpush1.bf16.msra.mxu0 0
  %5822 = vmatprep.subr.bf16.mxu0 0
  %5823 = vmatpush1.bf16.msra.mxu0 0
  %5824 = vmatprep.subr.bf16.mxu0 0
  %5825 = vmatpush1.bf16.msra.mxu0 0
  %5826 = vmatprep.subr.bf16.mxu0 0
  %5827 = vmatpush1.bf16.msra.mxu0 0
  %5828 = vmatprep.subr.bf16.mxu0 0
  %5829 = vmatpush1.bf16.msra.mxu0 0
  %5830 = vmatprep.subr.bf16.mxu0 0
  %5831 = vmatpush1.bf16.msra.mxu0 0
  %5832 = vmatprep.subr.bf16.mxu0 0
  %5833 = vmatpush1.bf16.msra.mxu0 0
  %5834 = vmatprep.mubr.bf16.mxu0 0
  %5835 = vmatmul.mubr.bf16.gmra.mrb[0].mxu0 %v5718
  %v5836 = vpop.f32.mrb[0].mxu0
  %v5837 = vadd.f32 %v5715, %v5836
  %v5838 = vpop.f32.mrb[0].mxu0
  %v5839 = vadd.f32 %v5715, %v5838
  %v5840 = vpop.f32.mrb[0].mxu0
  %v5841 = vpop.f32.mrb[0].mxu0
  %5842 = vdwg.mxu0
  %5843 = vst [vmem:[%s8] sm:$0xff] %v5755
  %5844 = vst [vmem:[%s8 + $0x8] sm:$0xff] %v5757
  %5845 = vst [vmem:[%s8 + $0x10] sm:$0xff] %v5796
  %5846 = vst [vmem:[%s8 + $0x18] sm:$0xff] %v5798
  %5847 = vst [vmem:[%s8 + $0x20] sm:$0xff] %v5837
  %5848 = vst [vmem:[%s8 + $0x28] sm:$0xff] %v5839
  // Predicated region
  $region34: #{this_net_forward.7} parent=0 // pred_check
    _
  $region35: #{this_net_forward.7} parent=0 // pred_check_branch
    %5850 = sbr.rel (0) target = $region37
  $region36: #{this_net_forward.7} parent=0 // pred_region
    _
  $region37: #{this_net_forward.7} parent=0 // pred_fallthru
    _
  // Predicated region
  $region38: #{this_net_forward.7} parent=0 // pred_check
    _
  $region39: #{this_net_forward.7} parent=0 // pred_check_branch
    %5852 = sbr.rel (0) target = $region41
  $region40: #{this_net_forward.7} parent=0 // pred_region
    _
  $region41: #{this_net_forward.7} parent=0 // pred_fallthru
    _

</llo_original>
